<compile_context>
chip_gen: v5e
topology: v5e:2x2
jax: 0.10.0
libtpu: 0.0.40
codegen_flags: <defaults>
</compile_context>

<pallas_src>
import numpy as np
import jax
import jax.numpy as jnp
from jax.experimental import pallas as pl
from jax.experimental.pallas import tpu as pltpu

LATENT_DIM = 2
NLAT = 2 * LATENT_DIM
SIZE = 28                       # 28x28 branch of ConvVAE
CDTYPE = jnp.bfloat16           # storage dtype of the folded conv constants
MAX_IMGS_PER_STEP = 8           # images stacked per grid step (sublane axis)


# ----------------------------------------------------------------------------
# Host-side, one-time weight folding (outside jit; weights are static)
# ----------------------------------------------------------------------------
def prepare_params(p, imgs):
    """Fold ConvVAE weights into kernel-ready constants for `imgs` images/step."""
    f32 = np.float32

    def conv_M(w, win):
        # Conv2d(k=4, s=2) -> M[kh]: (win*cin, wo*cout), contraction over (wi, ci, kw)
        w = np.asarray(w, f32)                              # (cout, cin, 4, 4)
        cout, cin, k, _ = w.shape
        wo = (win - k) // 2 + 1
        cs = (np.arange(win)[None, :, None] ==
              2 * np.arange(wo)[None, None, :] +
              np.arange(k)[:, None, None]).astype(f32)      # (kw, wi, wo)
        m = np.einsum("kvw,ochk->hvcwo", cs, w).reshape(k, win * cin, wo * cout)
        return m, wo

    def deconv_M(w, win, crop):
        # ConvTranspose2d(k=4, s=2); crop folds the final [1:-1] column crop in.
        w = np.asarray(w, f32)                              # (cin, cout, 4, 4)
        cin, cout, k, _ = w.shape
        wo_full = 2 * (win - 1) + k
        wo = np.arange(1, wo_full - 1) if crop else np.arange(wo_full)
        cs = (wo[None, None, :] ==
              2 * np.arange(win)[None, :, None] +
              np.arange(k)[:, None, None]).astype(f32)      # (kw, wi, wo)
        m = np.einsum("kvw,cohk->hvcwo", cs, w).reshape(k, win * cin, len(wo) * cout)
        return m, len(wo)

    def enc_select(hin, ho, h_major_out):
        # R[kh]: 0/1 row gather, block-diagonal over the stacked images.
        r = np.zeros((4, imgs * ho, imgs * hin), f32)
        for kh in range(4):
            for g in range(imgs):
                for i in range(ho):
                    ro = i * imgs + g if h_major_out else g * ho + i
                    r[kh, ro, g * hin + 2 * i + kh] = 1.0
        return r

    def dec_scatter(hin, ho, crop, h_major_in):
        # S[kh]: 0/1 row scatter (out = 2*in + kh - crop), block-diagonal per image.
        s = np.zeros((4, imgs * ho, imgs * hin), f32)
        off = 1 if crop else 0
        for kh in range(4):
            for g in range(imgs):
                for hi in range(hin):
                    io = 2 * hi + kh - off
                    if 0 <= io < ho:
                        ri = hi * imgs + g if h_major_in else g * hin + hi
                        s[kh, g * ho + io, ri] = 1.0
        return s

    # encoder: 28 -> 13 -> 5
    mc1, w1 = conv_M(p["enc_w1"], SIZE)                    # (4, 28, 416), w1 = 13
    mc2, w2 = conv_M(p["enc_w2"], w1)                      # (4, 416, 320), w2 = 5
    rc1 = enc_select(SIZE, 13, h_major_out=False)          # h1 rows: (img, row)
    rc2 = enc_select(13, 5, h_major_out=True)              # h2 rows: (row, img)

    # decoder: 6 -> 14 -> 28 (crop folded into the last deconv)
    md1, wd1w = deconv_M(p["dec_w1"], 6, crop=False)       # (4, 384, 448), 14
    md2, wd2w = deconv_M(p["dec_w2"], wd1w, crop=True)     # (4, 448, 28), 28
    md2c = np.concatenate([md2[kh] for kh in range(4)], axis=1)   # (448, 112) lane-cat
    sd1 = dec_scatter(6, 14, crop=False, h_major_in=True)  # a1 rows are (row, img)
    sd2 = dec_scatter(14, 28, crop=True, h_major_in=False)

    # Encoder Linear(64*5*5 -> 4): flat index is c*25 + h*5 + w (NCHW flatten).
    # Pack densely as (320, 5*4) with column h*4 + j (avoids padding 4 -> 128 lanes).
    enc_lin_w = np.asarray(p["enc_lin_w"], f32)            # (1600, 4) = W.T
    wle5 = enc_lin_w.reshape(64, 5, 5, NLAT).transpose(1, 2, 0, 3).reshape(5, 320, NLAT)
    wpack = wle5.transpose(1, 0, 2).reshape(320, 5 * NLAT)

    # Decoder Linear(latent -> 64*6*6): produced directly in (h, w*64+c) conv layout.
    dec_lin_w = np.asarray(p["dec_lin_w"], f32)            # (2, 2304) = W.T
    wd3 = dec_lin_w.reshape(LATENT_DIM, 64, 6, 6).transpose(0, 2, 3, 1).reshape(
        LATENT_DIM * 6, 6 * 64)                            # row l*6 + h
    bd3 = np.asarray(p["dec_lin_b"], f32).reshape(64, 6, 6).transpose(1, 2, 0).reshape(
        6, 6 * 64)

    bf = lambda a: jnp.asarray(a, CDTYPE)       # 0/1 and conv weights: exact / ~1e-3
    fj = lambda a: jnp.asarray(a, jnp.float32)  # latent-path math stays f32
    tile = lambda b, n: np.tile(np.asarray(b, f32), n)[None, :]
    return dict(
        rc1=bf(rc1), mc1=bf(mc1), bc1=fj(tile(p["enc_b1"], w1)),
        rc2=bf(rc2), mc2=bf(mc2), bc2=fj(tile(p["enc_b2"], w2)),
        wle=fj(wpack), ble=fj(np.asarray(p["enc_lin_b"], f32)[None, :]),
        wd3=fj(wd3), bd3=fj(bd3),
        sd1=bf(sd1), md1=bf(md1), bd1=fj(tile(p["dec_b1"], wd1w)),
        sd2=bf(sd2), md2=bf(md2c), bd2=fj(tile(p["dec_b2"], wd2w)),
    )


_CONST_KEYS = ("rc1", "mc1", "bc1", "rc2", "mc2", "bc2", "wle", "ble",
               "wd3", "bd3", "sd1", "md1", "bd1", "sd2", "md2", "bd2")


def _const_index_map(ndim):
    return lambda b: (0,) * ndim


# ----------------------------------------------------------------------------
# Fused ConvVAE forward (IMGS images per grid step, stacked on sublanes)
# ----------------------------------------------------------------------------
def conv_vae_forward(prep, x, eps):
    """x: (B, 1, 28, 28) f32, eps: (B, latent) f32 -> (recon, mu, logvar)."""
    B = x.shape[0]
    imgs = prep["sd2"].shape[1] // SIZE            # images packed per grid step
    assert B % imgs == 0
    G = B // imgs
    n28 = imgs * SIZE

    xg = x.reshape(G, n28, SIZE)                   # images stacked on the row axis
    epsg = eps.reshape(G, imgs, LATENT_DIM)
    consts = [prep[k] for k in _CONST_KEYS]

    def kernel(x_ref, eps_ref, rc1, mc1, bc1, rc2, mc2, bc2, wle, ble,
               wd3, bd3, sd1, md1, bd1, sd2, md2c, bd2, out_ref, mulv_ref):
        f32 = jnp.float32

        def conv_like(act_bf, r_ref, m_ref, b_ref, rows, cols):
            # sum_kh (R[kh] @ act) @ M[kh] + b  -- R/S are exact 0/1 bf16, so every
            # MXU op is single-pass bf16; the kh accumulation stays in f32.
            acc = jnp.zeros((rows, cols), f32)
            for kh in range(4):
                g = jnp.dot(r_ref[kh], act_bf,
                            preferred_element_type=f32).astype(CDTYPE)
                acc = acc + jnp.dot(g, m_ref[kh], preferred_element_type=f32)
            return acc + b_ref[...]

        # ------------------------------ encoder ------------------------------
        xact = x_ref[0].astype(CDTYPE)                                   # (imgs*28, 28)
        h1 = jnp.maximum(conv_like(xact, rc1, mc1, bc1, imgs * 13, 13 * 32), 0.0)
        h2 = jnp.maximum(conv_like(h1.astype(CDTYPE), rc2, mc2, bc2,
                                   imgs * 5, 5 * 64), 0.0)               # rows = (h, img)

        # Flatten + Linear(1600 -> 4): one dot against the packed (320, 20) weight,
        # then pick the 5 diagonal (imgs, 4) blocks (one per conv row h) and sum.
        t = jnp.dot(h2, wle[...], preferred_element_type=f32)            # (imgs*5, 20)
        zacc = jnp.zeros((imgs, NLAT), f32)
        for h in range(5):
            zacc = zacc + t[h * imgs:(h + 1) * imgs, h * NLAT:(h + 1) * NLAT]
        z = zacc + ble[...]
        mu = z[:, :LATENT_DIM]
        lv = jnp.clip(z[:, LATENT_DIM:], -15.0, 15.0)                    # torch.clamp
        mulv_ref[0] = jnp.concatenate([mu, lv], axis=1)                  # fused mu|logvar
        zl = mu + eps_ref[0] * jnp.exp(0.5 * lv)                         # reparameterize

        # ------------------------------ decoder ------------------------------
        # Linear(latent -> 64*6*6) + ReLU, produced in (h, img) x (w*64+c) layout
        # with 12 tiny VPU broadcast-multiplies (no MXU, no reshape).
        wd3_v, bd3_v = wd3[...], bd3[...]
        a1_rows = []
        for h in range(6):
            a1_rows.append(zl[:, 0:1] * wd3_v[h:h + 1, :]
                           + zl[:, 1:2] * wd3_v[6 + h:7 + h, :]
                           + bd3_v[h:h + 1, :])
        a1 = jnp.maximum(jnp.concatenate(a1_rows, axis=0), 0.0)          # (imgs*6, 384)

        d1 = jnp.maximum(conv_like(a1.astype(CDTYPE), sd1, md1, bd1,
                                   imgs * 14, 14 * 32), 0.0)             # (imgs*14, 448)

        # Final ConvTranspose (Cout=1, crop fused): ONE matmul against the
        # lane-concatenated taps, then 4 tiny bf16 row-scatter dots.
        tcat = jnp.dot(d1.astype(CDTYPE), md2c[...],
                       preferred_element_type=f32)                       # (imgs*14, 112)
        acc = jnp.zeros((n28, SIZE), f32)
        for kh in range(4):
            tk = tcat[:, kh * SIZE:(kh + 1) * SIZE].astype(CDTYPE)
            acc = acc + jnp.dot(sd2[kh], tk, preferred_element_type=f32)
        d2 = acc + bd2[...]
        # sigmoid: exp + approx reciprocal both run on the (idle) EUP slot;
        # min() keeps the exact <=1 guarantee despite the approximate recip.
        out_ref[0] = jnp.minimum(
            pl.reciprocal(1.0 + jnp.exp(-d2), approx=True), 1.0)

    recon, mulv = pl.pallas_call(
        kernel,
        out_shape=(
            jax.ShapeDtypeStruct((G, n28, SIZE), jnp.float32),
            jax.ShapeDtypeStruct((G, imgs, NLAT), jnp.float32),
        ),
        grid_spec=pltpu.PrefetchScalarGridSpec(
            num_scalar_prefetch=0,
            grid=(G,),
            in_specs=[
                pl.BlockSpec((1, n28, SIZE), lambda b: (b, 0, 0)),
                pl.BlockSpec((1, imgs, LATENT_DIM), lambda b: (b, 0, 0)),
                # constants: constant index map -> fetched once per call; default
                # buffering kept (≈3.4 MB of constants, ample VMEM headroom).
            ] + [pl.BlockSpec(a.shape, _const_index_map(a.ndim)) for a in consts],
            out_specs=[
                pl.BlockSpec((1, n28, SIZE), lambda b: (b, 0, 0)),
                pl.BlockSpec((1, imgs, NLAT), lambda b: (b, 0, 0)),
            ],
        ),
        compiler_params=pltpu.CompilerParams(
            dimension_semantics=("parallel",),
            vmem_limit_bytes=32 * 1024 * 1024),
    )(xg, epsg, *consts)

    mulv = mulv.reshape(B, NLAT)
    return recon.reshape(B, 1, SIZE, SIZE), mulv[:, :LATENT_DIM], mulv[:, LATENT_DIM:]


# ----------------------------------------------------------------------------
# Pure-JAX (XLA) reference of the PyTorch module, for numerical validation
# ----------------------------------------------------------------------------
def vae_reference(p, x, eps):
    dn = ("NCHW", "OIHW", "NCHW")
    relu = lambda v: jnp.maximum(v, 0.0)
    h = jax.lax.conv_general_dilated(x, p["enc_w1"], (2, 2), "VALID",
                                     dimension_numbers=dn)
    h = relu(h + p["enc_b1"][None, :, None, None])
    h = jax.lax.conv_general_dilated(h, p["enc_w2"], (2, 2), "VALID",
                                     dimension_numbers=dn)
    h = relu(h + p["enc_b2"][None, :, None, None])
    B = x.shape[0]
    z = h.reshape(B, -1) @ p["enc_lin_w"] + p["enc_lin_b"]
    mu = z[:, :LATENT_DIM]
    lv = jnp.clip(z[:, LATENT_DIM:], -15.0, 15.0)
    zl = mu + eps * jnp.exp(0.5 * lv)
    a = relu(zl @ p["dec_lin_w"] + p["dec_lin_b"]).reshape(B, 64, 6, 6)

    def deconv(v, w, b):   # ConvTranspose2d(k, s=2, p=0) via input dilation
        k = w.shape[-1]
        wt = jnp.flip(w, (-2, -1)).transpose(1, 0, 2, 3)
        y = jax.lax.conv_general_dilated(
            v, wt, (1, 1), [(k - 1, k - 1), (k - 1, k - 1)],
            lhs_dilation=(2, 2), dimension_numbers=dn)
        return y + b[None, :, None, None]

    d = relu(deconv(a, p["dec_w1"], p["dec_b1"]))
    d = jax.nn.sigmoid(deconv(d, p["dec_w2"], p["dec_b2"]))
    return d[:, :, 1:-1, 1:-1], mu, lv


# ----------------------------------------------------------------------------
# Deterministic parameter init (PyTorch-style uniform 1/sqrt(fan_in) scaling)
# ----------------------------------------------------------------------------
def init_params(key):
    ks = jax.random.split(key, 12)

    def u(k, shape, fan_in):
        bound = 1.0 / float(fan_in) ** 0.5
        return jax.random.uniform(k, shape, jnp.float32, -bound, bound)

    p = {}
    p["enc_w1"] = u(ks[0], (32, 1, 4, 4), 1 * 16)
    p["enc_b1"] = u(ks[1], (32,), 1 * 16)
    p["enc_w2"] = u(ks[2], (64, 32, 4, 4), 32 * 16)
    p["enc_b2"] = u(ks[3], (64,), 32 * 16)
    p["enc_lin_w"] = u(ks[4], (64 * 5 * 5, NLAT), 64 * 5 * 5)        # (in, out) = W.T
    p["enc_lin_b"] = u(ks[5], (NLAT,), 64 * 5 * 5)
    p["dec_lin_w"] = u(ks[6], (LATENT_DIM, 64 * 6 * 6), LATENT_DIM)  # (in, out) = W.T
    p["dec_lin_b"] = u(ks[7], (64 * 6 * 6,), LATENT_DIM)
    p["dec_w1"] = u(ks[8], (64, 32, 4, 4), 64 * 16)  # ConvTranspose2d: (Cin, Cout, k, k)
    p["dec_b1"] = u(ks[9], (32,), 64 * 16)
    p["dec_w2"] = u(ks[10], (32, 1, 4, 4), 32 * 16)
    p["dec_b2"] = u(ks[11], (1,), 32 * 16)
    return p


if __name__ == "__main__":
    key = jax.random.PRNGKey(0)
    pkey, xkey, ekey = jax.random.split(key, 3)
    params = init_params(pkey)

    B = 2
    # Pack as many images per grid step as possible (largest divisor of B <= 8);
    # for large B on v7x this still yields >= 2 grid steps so both TCs are busy.
    imgs = max(d for d in range(1, min(B, MAX_IMGS_PER_STEP) + 1) if B % d == 0)
    prep = prepare_params(params, imgs)            # one-time, outside the per-step jit

    x = jax.random.normal(xkey, (B, 1, SIZE, SIZE), jnp.float32)
    # TODO(synk): torch.randn_like noise is drawn with the host RNG and passed in.
    eps = jax.random.normal(ekey, (B, LATENT_DIM), jnp.float32)

    fwd = jax.jit(conv_vae_forward)
    recon, mu, logvar = fwd(prep, x, eps)
    jax.block_until_ready((recon, mu, logvar))

    assert recon.shape == (B, 1, SIZE, SIZE)
    assert mu.shape == (B, LATENT_DIM) and logvar.shape == (B, LATENT_DIM)
    assert bool(jnp.all(jnp.isfinite(recon)))
    assert bool(jnp.all((recon >= 0.0) & (recon <= 1.0)))   # sigmoid output

    # Numerical check vs the pure-JAX reference (bf16 constant path => loose atol).
    r_ref, mu_ref, lv_ref = jax.jit(vae_reference)(params, x, eps)
    print("max|recon - ref| =", float(jnp.max(jnp.abs(recon - r_ref))))
    print("max|mu - ref|    =", float(jnp.max(jnp.abs(mu - mu_ref))))
    print("max|lv - ref|    =", float(jnp.max(jnp.abs(logvar - lv_ref))))
    np.testing.assert_allclose(np.asarray(mu), np.asarray(mu_ref), rtol=0, atol=5e-2)
    np.testing.assert_allclose(np.asarray(logvar), np.asarray(lv_ref), rtol=0, atol=5e-2)
    np.testing.assert_allclose(np.asarray(recon), np.asarray(r_ref), rtol=0, atol=5e-2)
    print("KERNEL_OK")
</pallas_src>

<mosaic_0001>
module attributes {stable_mosaic.version = 11 : i64} {
  func.func @kernel(%arg0: i32, %arg1: memref<1x56x28xf32, #tpu.memory_space<vmem>>, %arg2: memref<1x2x2xf32, #tpu.memory_space<vmem>>, %arg3: memref<4x26x56xbf16, #tpu.memory_space<vmem>>, %arg4: memref<4x28x416xbf16, #tpu.memory_space<vmem>>, %arg5: memref<1x416xf32, #tpu.memory_space<vmem>>, %arg6: memref<4x10x26xbf16, #tpu.memory_space<vmem>>, %arg7: memref<4x416x320xbf16, #tpu.memory_space<vmem>>, %arg8: memref<1x320xf32, #tpu.memory_space<vmem>>, %arg9: memref<320x20xf32, #tpu.memory_space<vmem>>, %arg10: memref<1x4xf32, #tpu.memory_space<vmem>>, %arg11: memref<12x384xf32, #tpu.memory_space<vmem>>, %arg12: memref<6x384xf32, #tpu.memory_space<vmem>>, %arg13: memref<4x28x12xbf16, #tpu.memory_space<vmem>>, %arg14: memref<4x384x448xbf16, #tpu.memory_space<vmem>>, %arg15: memref<1x448xf32, #tpu.memory_space<vmem>>, %arg16: memref<4x56x28xbf16, #tpu.memory_space<vmem>>, %arg17: memref<448x112xbf16, #tpu.memory_space<vmem>>, %arg18: memref<1x28xf32, #tpu.memory_space<vmem>>, %arg19: memref<1x56x28xf32, #tpu.memory_space<vmem>>, %arg20: memref<1x2x4xf32, #tpu.memory_space<vmem>>) attributes {dimension_semantics = [#tpu.dimension_semantics<parallel>], iteration_bounds = array<i64: 1>, scalar_prefetch = 0 : i64, scratch_operands = 0 : i64, tpu.core_type = #tpu.core_type<tc>, window_params = [{transform_indices = @transform_0, window_bounds = array<i64: 1, 56, 28>}, {transform_indices = @transform_1, window_bounds = array<i64: 1, 2, 2>}, {pipeline_mode = #tpu.pipeline_mode<synchronous>, transform_indices = @transform_2, window_bounds = array<i64: 4, 26, 56>}, {pipeline_mode = #tpu.pipeline_mode<synchronous>, transform_indices = @transform_3, window_bounds = array<i64: 4, 28, 416>}, {pipeline_mode = #tpu.pipeline_mode<synchronous>, transform_indices = @transform_4, window_bounds = array<i64: 1, 416>}, {pipeline_mode = #tpu.pipeline_mode<synchronous>, transform_indices = @transform_5, window_bounds = array<i64: 4, 10, 26>}, {pipeline_mode = #tpu.pipeline_mode<synchronous>, transform_indices = @transform_6, window_bounds = array<i64: 4, 416, 320>}, {pipeline_mode = #tpu.pipeline_mode<synchronous>, transform_indices = @transform_7, window_bounds = array<i64: 1, 320>}, {pipeline_mode = #tpu.pipeline_mode<synchronous>, transform_indices = @transform_8, window_bounds = array<i64: 320, 20>}, {pipeline_mode = #tpu.pipeline_mode<synchronous>, transform_indices = @transform_9, window_bounds = array<i64: 1, 4>}, {pipeline_mode = #tpu.pipeline_mode<synchronous>, transform_indices = @transform_10, window_bounds = array<i64: 12, 384>}, {pipeline_mode = #tpu.pipeline_mode<synchronous>, transform_indices = @transform_11, window_bounds = array<i64: 6, 384>}, {pipeline_mode = #tpu.pipeline_mode<synchronous>, transform_indices = @transform_12, window_bounds = array<i64: 4, 28, 12>}, {pipeline_mode = #tpu.pipeline_mode<synchronous>, transform_indices = @transform_13, window_bounds = array<i64: 4, 384, 448>}, {pipeline_mode = #tpu.pipeline_mode<synchronous>, transform_indices = @transform_14, window_bounds = array<i64: 1, 448>}, {pipeline_mode = #tpu.pipeline_mode<synchronous>, transform_indices = @transform_15, window_bounds = array<i64: 4, 56, 28>}, {pipeline_mode = #tpu.pipeline_mode<synchronous>, transform_indices = @transform_16, window_bounds = array<i64: 448, 112>}, {pipeline_mode = #tpu.pipeline_mode<synchronous>, transform_indices = @transform_17, window_bounds = array<i64: 1, 28>}, {transform_indices = @transform_18, window_bounds = array<i64: 1, 56, 28>}, {transform_indices = @transform_19, window_bounds = array<i64: 1, 2, 4>}]} {
    %c0 = arith.constant 0 : index
    %c0_0 = arith.constant 0 : index
    %c0_1 = arith.constant 0 : index
    %0 = vector.load %arg1[%c0, %c0_0, %c0_1] : memref<1x56x28xf32, #tpu.memory_space<vmem>>, vector<1x56x28xf32>
    %1 = vector.shape_cast %0 : vector<1x56x28xf32> to vector<56x28xf32>
    %2 = arith.truncf %1 : vector<56x28xf32> to vector<56x28xbf16>
    %cst = arith.constant 0.000000e+00 : f32
    %3 = vector.broadcast %cst : f32 to vector<26x416xf32>
    %c0_2 = arith.constant 0 : index
    %c0_3 = arith.constant 0 : index
    %c0_4 = arith.constant 0 : index
    %4 = vector.load %arg3[%c0_2, %c0_3, %c0_4] : memref<4x26x56xbf16, #tpu.memory_space<vmem>>, vector<1x26x56xbf16>
    %5 = vector.shape_cast %4 : vector<1x26x56xbf16> to vector<26x56xbf16>
    %cst_5 = arith.constant dense<0.000000e+00> : vector<26x28xf32>
    %6 = tpu.matmul %5, %2, %cst_5 {dimension_numbers = #tpu.dot_dimension_numbers<[1], [0], [0], [1], [0, 0, 1, 1], [], []>} : vector<26x56xbf16>, vector<56x28xbf16>, vector<26x28xf32> -> vector<26x28xf32>
    %7 = arith.truncf %6 : vector<26x28xf32> to vector<26x28xbf16>
    %c0_6 = arith.constant 0 : index
    %c0_7 = arith.constant 0 : index
    %c0_8 = arith.constant 0 : index
    %8 = vector.load %arg4[%c0_6, %c0_7, %c0_8] : memref<4x28x416xbf16, #tpu.memory_space<vmem>>, vector<1x28x416xbf16>
    %9 = vector.shape_cast %8 : vector<1x28x416xbf16> to vector<28x416xbf16>
    %cst_9 = arith.constant dense<0.000000e+00> : vector<26x416xf32>
    %10 = tpu.matmul %7, %9, %cst_9 {dimension_numbers = #tpu.dot_dimension_numbers<[1], [0], [0], [1], [0, 0, 1, 1], [], []>} : vector<26x28xbf16>, vector<28x416xbf16>, vector<26x416xf32> -> vector<26x416xf32>
    %11 = arith.addf %3, %10 : vector<26x416xf32>
    %c1 = arith.constant 1 : index
    %c0_10 = arith.constant 0 : index
    %c0_11 = arith.constant 0 : index
    %12 = vector.load %arg3[%c1, %c0_10, %c0_11] : memref<4x26x56xbf16, #tpu.memory_space<vmem>>, vector<1x26x56xbf16>
    %13 = vector.shape_cast %12 : vector<1x26x56xbf16> to vector<26x56xbf16>
    %cst_12 = arith.constant dense<0.000000e+00> : vector<26x28xf32>
    %14 = tpu.matmul %13, %2, %cst_12 {dimension_numbers = #tpu.dot_dimension_numbers<[1], [0], [0], [1], [0, 0, 1, 1], [], []>} : vector<26x56xbf16>, vector<56x28xbf16>, vector<26x28xf32> -> vector<26x28xf32>
    %15 = arith.truncf %14 : vector<26x28xf32> to vector<26x28xbf16>
    %c1_13 = arith.constant 1 : index
    %c0_14 = arith.constant 0 : index
    %c0_15 = arith.constant 0 : index
    %16 = vector.load %arg4[%c1_13, %c0_14, %c0_15] : memref<4x28x416xbf16, #tpu.memory_space<vmem>>, vector<1x28x416xbf16>
    %17 = vector.shape_cast %16 : vector<1x28x416xbf16> to vector<28x416xbf16>
    %cst_16 = arith.constant dense<0.000000e+00> : vector<26x416xf32>
    %18 = tpu.matmul %15, %17, %cst_16 {dimension_numbers = #tpu.dot_dimension_numbers<[1], [0], [0], [1], [0, 0, 1, 1], [], []>} : vector<26x28xbf16>, vector<28x416xbf16>, vector<26x416xf32> -> vector<26x416xf32>
    %19 = arith.addf %11, %18 : vector<26x416xf32>
    %c2 = arith.constant 2 : index
    %c0_17 = arith.constant 0 : index
    %c0_18 = arith.constant 0 : index
    %20 = vector.load %arg3[%c2, %c0_17, %c0_18] : memref<4x26x56xbf16, #tpu.memory_space<vmem>>, vector<1x26x56xbf16>
    %21 = vector.shape_cast %20 : vector<1x26x56xbf16> to vector<26x56xbf16>
    %cst_19 = arith.constant dense<0.000000e+00> : vector<26x28xf32>
    %22 = tpu.matmul %21, %2, %cst_19 {dimension_numbers = #tpu.dot_dimension_numbers<[1], [0], [0], [1], [0, 0, 1, 1], [], []>} : vector<26x56xbf16>, vector<56x28xbf16>, vector<26x28xf32> -> vector<26x28xf32>
    %23 = arith.truncf %22 : vector<26x28xf32> to vector<26x28xbf16>
    %c2_20 = arith.constant 2 : index
    %c0_21 = arith.constant 0 : index
    %c0_22 = arith.constant 0 : index
    %24 = vector.load %arg4[%c2_20, %c0_21, %c0_22] : memref<4x28x416xbf16, #tpu.memory_space<vmem>>, vector<1x28x416xbf16>
    %25 = vector.shape_cast %24 : vector<1x28x416xbf16> to vector<28x416xbf16>
    %cst_23 = arith.constant dense<0.000000e+00> : vector<26x416xf32>
    %26 = tpu.matmul %23, %25, %cst_23 {dimension_numbers = #tpu.dot_dimension_numbers<[1], [0], [0], [1], [0, 0, 1, 1], [], []>} : vector<26x28xbf16>, vector<28x416xbf16>, vector<26x416xf32> -> vector<26x416xf32>
    %27 = arith.addf %19, %26 : vector<26x416xf32>
    %c3 = arith.constant 3 : index
    %c0_24 = arith.constant 0 : index
    %c0_25 = arith.constant 0 : index
    %28 = vector.load %arg3[%c3, %c0_24, %c0_25] : memref<4x26x56xbf16, #tpu.memory_space<vmem>>, vector<1x26x56xbf16>
    %29 = vector.shape_cast %28 : vector<1x26x56xbf16> to vector<26x56xbf16>
    %cst_26 = arith.constant dense<0.000000e+00> : vector<26x28xf32>
    %30 = tpu.matmul %29, %2, %cst_26 {dimension_numbers = #tpu.dot_dimension_numbers<[1], [0], [0], [1], [0, 0, 1, 1], [], []>} : vector<26x56xbf16>, vector<56x28xbf16>, vector<26x28xf32> -> vector<26x28xf32>
    %31 = arith.truncf %30 : vector<26x28xf32> to vector<26x28xbf16>
    %c3_27 = arith.constant 3 : index
    %c0_28 = arith.constant 0 : index
    %c0_29 = arith.constant 0 : index
    %32 = vector.load %arg4[%c3_27, %c0_28, %c0_29] : memref<4x28x416xbf16, #tpu.memory_space<vmem>>, vector<1x28x416xbf16>
    %33 = vector.shape_cast %32 : vector<1x28x416xbf16> to vector<28x416xbf16>
    %cst_30 = arith.constant dense<0.000000e+00> : vector<26x416xf32>
    %34 = tpu.matmul %31, %33, %cst_30 {dimension_numbers = #tpu.dot_dimension_numbers<[1], [0], [0], [1], [0, 0, 1, 1], [], []>} : vector<26x28xbf16>, vector<28x416xbf16>, vector<26x416xf32> -> vector<26x416xf32>
    %35 = arith.addf %27, %34 : vector<26x416xf32>
    %c0_31 = arith.constant 0 : index
    %c0_32 = arith.constant 0 : index
    %36 = vector.load %arg5[%c0_31, %c0_32] : memref<1x416xf32, #tpu.memory_space<vmem>>, vector<1x416xf32>
    %37 = vector.broadcast %36 : vector<1x416xf32> to vector<26x416xf32>
    %38 = arith.addf %35, %37 : vector<26x416xf32>
    %cst_33 = arith.constant 0.000000e+00 : f32
    %39 = vector.broadcast %cst_33 : f32 to vector<26x416xf32>
    %40 = arith.maximumf %38, %39 : vector<26x416xf32>
    %41 = arith.truncf %40 : vector<26x416xf32> to vector<26x416xbf16>
    %cst_34 = arith.constant 0.000000e+00 : f32
    %42 = vector.broadcast %cst_34 : f32 to vector<10x320xf32>
    %c0_35 = arith.constant 0 : index
    %c0_36 = arith.constant 0 : index
    %c0_37 = arith.constant 0 : index
    %43 = vector.load %arg6[%c0_35, %c0_36, %c0_37] : memref<4x10x26xbf16, #tpu.memory_space<vmem>>, vector<1x10x26xbf16>
    %44 = vector.shape_cast %43 : vector<1x10x26xbf16> to vector<10x26xbf16>
    %cst_38 = arith.constant dense<0.000000e+00> : vector<10x416xf32>
    %45 = tpu.matmul %44, %41, %cst_38 {dimension_numbers = #tpu.dot_dimension_numbers<[1], [0], [0], [1], [0, 0, 1, 1], [], []>} : vector<10x26xbf16>, vector<26x416xbf16>, vector<10x416xf32> -> vector<10x416xf32>
    %46 = arith.truncf %45 : vector<10x416xf32> to vector<10x416xbf16>
    %c0_39 = arith.constant 0 : index
    %c0_40 = arith.constant 0 : index
    %c0_41 = arith.constant 0 : index
    %47 = vector.load %arg7[%c0_39, %c0_40, %c0_41] : memref<4x416x320xbf16, #tpu.memory_space<vmem>>, vector<1x416x320xbf16>
    %48 = vector.shape_cast %47 : vector<1x416x320xbf16> to vector<416x320xbf16>
    %cst_42 = arith.constant dense<0.000000e+00> : vector<10x320xf32>
    %49 = tpu.matmul %46, %48, %cst_42 {dimension_numbers = #tpu.dot_dimension_numbers<[1], [0], [0], [1], [0, 0, 1, 1], [], []>} : vector<10x416xbf16>, vector<416x320xbf16>, vector<10x320xf32> -> vector<10x320xf32>
    %50 = arith.addf %42, %49 : vector<10x320xf32>
    %c1_43 = arith.constant 1 : index
    %c0_44 = arith.constant 0 : index
    %c0_45 = arith.constant 0 : index
    %51 = vector.load %arg6[%c1_43, %c0_44, %c0_45] : memref<4x10x26xbf16, #tpu.memory_space<vmem>>, vector<1x10x26xbf16>
    %52 = vector.shape_cast %51 : vector<1x10x26xbf16> to vector<10x26xbf16>
    %cst_46 = arith.constant dense<0.000000e+00> : vector<10x416xf32>
    %53 = tpu.matmul %52, %41, %cst_46 {dimension_numbers = #tpu.dot_dimension_numbers<[1], [0], [0], [1], [0, 0, 1, 1], [], []>} : vector<10x26xbf16>, vector<26x416xbf16>, vector<10x416xf32> -> vector<10x416xf32>
    %54 = arith.truncf %53 : vector<10x416xf32> to vector<10x416xbf16>
    %c1_47 = arith.constant 1 : index
    %c0_48 = arith.constant 0 : index
    %c0_49 = arith.constant 0 : index
    %55 = vector.load %arg7[%c1_47, %c0_48, %c0_49] : memref<4x416x320xbf16, #tpu.memory_space<vmem>>, vector<1x416x320xbf16>
    %56 = vector.shape_cast %55 : vector<1x416x320xbf16> to vector<416x320xbf16>
    %cst_50 = arith.constant dense<0.000000e+00> : vector<10x320xf32>
    %57 = tpu.matmul %54, %56, %cst_50 {dimension_numbers = #tpu.dot_dimension_numbers<[1], [0], [0], [1], [0, 0, 1, 1], [], []>} : vector<10x416xbf16>, vector<416x320xbf16>, vector<10x320xf32> -> vector<10x320xf32>
    %58 = arith.addf %50, %57 : vector<10x320xf32>
    %c2_51 = arith.constant 2 : index
    %c0_52 = arith.constant 0 : index
    %c0_53 = arith.constant 0 : index
    %59 = vector.load %arg6[%c2_51, %c0_52, %c0_53] : memref<4x10x26xbf16, #tpu.memory_space<vmem>>, vector<1x10x26xbf16>
    %60 = vector.shape_cast %59 : vector<1x10x26xbf16> to vector<10x26xbf16>
    %cst_54 = arith.constant dense<0.000000e+00> : vector<10x416xf32>
    %61 = tpu.matmul %60, %41, %cst_54 {dimension_numbers = #tpu.dot_dimension_numbers<[1], [0], [0], [1], [0, 0, 1, 1], [], []>} : vector<10x26xbf16>, vector<26x416xbf16>, vector<10x416xf32> -> vector<10x416xf32>
    %62 = arith.truncf %61 : vector<10x416xf32> to vector<10x416xbf16>
    %c2_55 = arith.constant 2 : index
    %c0_56 = arith.constant 0 : index
    %c0_57 = arith.constant 0 : index
    %63 = vector.load %arg7[%c2_55, %c0_56, %c0_57] : memref<4x416x320xbf16, #tpu.memory_space<vmem>>, vector<1x416x320xbf16>
    %64 = vector.shape_cast %63 : vector<1x416x320xbf16> to vector<416x320xbf16>
    %cst_58 = arith.constant dense<0.000000e+00> : vector<10x320xf32>
    %65 = tpu.matmul %62, %64, %cst_58 {dimension_numbers = #tpu.dot_dimension_numbers<[1], [0], [0], [1], [0, 0, 1, 1], [], []>} : vector<10x416xbf16>, vector<416x320xbf16>, vector<10x320xf32> -> vector<10x320xf32>
    %66 = arith.addf %58, %65 : vector<10x320xf32>
    %c3_59 = arith.constant 3 : index
    %c0_60 = arith.constant 0 : index
    %c0_61 = arith.constant 0 : index
    %67 = vector.load %arg6[%c3_59, %c0_60, %c0_61] : memref<4x10x26xbf16, #tpu.memory_space<vmem>>, vector<1x10x26xbf16>
    %68 = vector.shape_cast %67 : vector<1x10x26xbf16> to vector<10x26xbf16>
    %cst_62 = arith.constant dense<0.000000e+00> : vector<10x416xf32>
    %69 = tpu.matmul %68, %41, %cst_62 {dimension_numbers = #tpu.dot_dimension_numbers<[1], [0], [0], [1], [0, 0, 1, 1], [], []>} : vector<10x26xbf16>, vector<26x416xbf16>, vector<10x416xf32> -> vector<10x416xf32>
    %70 = arith.truncf %69 : vector<10x416xf32> to vector<10x416xbf16>
    %c3_63 = arith.constant 3 : index
    %c0_64 = arith.constant 0 : index
    %c0_65 = arith.constant 0 : index
    %71 = vector.load %arg7[%c3_63, %c0_64, %c0_65] : memref<4x416x320xbf16, #tpu.memory_space<vmem>>, vector<1x416x320xbf16>
    %72 = vector.shape_cast %71 : vector<1x416x320xbf16> to vector<416x320xbf16>
    %cst_66 = arith.constant dense<0.000000e+00> : vector<10x320xf32>
    %73 = tpu.matmul %70, %72, %cst_66 {dimension_numbers = #tpu.dot_dimension_numbers<[1], [0], [0], [1], [0, 0, 1, 1], [], []>} : vector<10x416xbf16>, vector<416x320xbf16>, vector<10x320xf32> -> vector<10x320xf32>
    %74 = arith.addf %66, %73 : vector<10x320xf32>
    %c0_67 = arith.constant 0 : index
    %c0_68 = arith.constant 0 : index
    %75 = vector.load %arg8[%c0_67, %c0_68] : memref<1x320xf32, #tpu.memory_space<vmem>>, vector<1x320xf32>
    %76 = vector.broadcast %75 : vector<1x320xf32> to vector<10x320xf32>
    %77 = arith.addf %74, %76 : vector<10x320xf32>
    %cst_69 = arith.constant 0.000000e+00 : f32
    %78 = vector.broadcast %cst_69 : f32 to vector<10x320xf32>
    %79 = arith.maximumf %77, %78 : vector<10x320xf32>
    %c0_70 = arith.constant 0 : index
    %c0_71 = arith.constant 0 : index
    %80 = vector.load %arg9[%c0_70, %c0_71] : memref<320x20xf32, #tpu.memory_space<vmem>>, vector<320x20xf32>
    %cst_72 = arith.constant dense<0.000000e+00> : vector<10x20xf32>
    %81 = tpu.matmul %79, %80, %cst_72 {dimension_numbers = #tpu.dot_dimension_numbers<[1], [0], [0], [1], [0, 0, 1, 1], [], []>} : vector<10x320xf32>, vector<320x20xf32>, vector<10x20xf32> -> vector<10x20xf32>
    %cst_73 = arith.constant 0.000000e+00 : f32
    %82 = vector.broadcast %cst_73 : f32 to vector<2x4xf32>
    %83 = vector.extract_strided_slice %81 {offsets = [0, 0], sizes = [2, 4], strides = [1, 1]} : vector<10x20xf32> to vector<2x4xf32>
    %84 = arith.addf %82, %83 : vector<2x4xf32>
    %85 = vector.extract_strided_slice %81 {offsets = [2, 4], sizes = [2, 4], strides = [1, 1]} : vector<10x20xf32> to vector<2x4xf32>
    %86 = arith.addf %84, %85 : vector<2x4xf32>
    %87 = vector.extract_strided_slice %81 {offsets = [4, 8], sizes = [2, 4], strides = [1, 1]} : vector<10x20xf32> to vector<2x4xf32>
    %88 = arith.addf %86, %87 : vector<2x4xf32>
    %89 = vector.extract_strided_slice %81 {offsets = [6, 12], sizes = [2, 4], strides = [1, 1]} : vector<10x20xf32> to vector<2x4xf32>
    %90 = arith.addf %88, %89 : vector<2x4xf32>
    %91 = vector.extract_strided_slice %81 {offsets = [8, 16], sizes = [2, 4], strides = [1, 1]} : vector<10x20xf32> to vector<2x4xf32>
    %92 = arith.addf %90, %91 : vector<2x4xf32>
    %c0_74 = arith.constant 0 : index
    %c0_75 = arith.constant 0 : index
    %93 = vector.load %arg10[%c0_74, %c0_75] : memref<1x4xf32, #tpu.memory_space<vmem>>, vector<1x4xf32>
    %94 = vector.broadcast %93 : vector<1x4xf32> to vector<2x4xf32>
    %95 = arith.addf %92, %94 : vector<2x4xf32>
    %96 = vector.extract_strided_slice %95 {offsets = [0, 0], sizes = [2, 2], strides = [1, 1]} : vector<2x4xf32> to vector<2x2xf32>
    %97 = vector.extract_strided_slice %95 {offsets = [0, 2], sizes = [2, 2], strides = [1, 1]} : vector<2x4xf32> to vector<2x2xf32>
    %cst_76 = arith.constant -1.500000e+01 : f32
    %cst_77 = arith.constant 1.500000e+01 : f32
    %98 = vector.broadcast %cst_76 : f32 to vector<2x2xf32>
    %99 = arith.maximumf %98, %97 : vector<2x2xf32>
    %100 = vector.broadcast %cst_77 : f32 to vector<2x2xf32>
    %101 = arith.minimumf %100, %99 : vector<2x2xf32>
    %102 = tpu.concatenate %96, %101 in 1 : vector<2x2xf32>, vector<2x2xf32> -> vector<2x4xf32>
    %c0_78 = arith.constant 0 : index
    %c0_79 = arith.constant 0 : index
    %c0_80 = arith.constant 0 : index
    %103 = vector.load %arg20[%c0_78, %c0_79, %c0_80] : memref<1x2x4xf32, #tpu.memory_space<vmem>>, vector<1x2x4xf32>
    %104 = vector.shape_cast %103 : vector<1x2x4xf32> to vector<2x4xf32>
    %105 = vector.shape_cast %102 : vector<2x4xf32> to vector<1x2x4xf32>
    tpu.vector_store %arg20[%c0_78, %c0_79, %c0_80], %105 {strides = array<i32>} : memref<1x2x4xf32, #tpu.memory_space<vmem>>, vector<1x2x4xf32>,
    %c0_81 = arith.constant 0 : index
    %c0_82 = arith.constant 0 : index
    %c0_83 = arith.constant 0 : index
    %106 = vector.load %arg2[%c0_81, %c0_82, %c0_83] : memref<1x2x2xf32, #tpu.memory_space<vmem>>, vector<1x2x2xf32>
    %107 = vector.shape_cast %106 : vector<1x2x2xf32> to vector<2x2xf32>
    %cst_84 = arith.constant 5.000000e-01 : f32
    %108 = vector.broadcast %cst_84 : f32 to vector<2x2xf32>
    %109 = arith.mulf %108, %101 : vector<2x2xf32>
    %110 = math.exp %109 : vector<2x2xf32>
    %111 = arith.mulf %107, %110 : vector<2x2xf32>
    %112 = arith.addf %96, %111 : vector<2x2xf32>
    %c0_85 = arith.constant 0 : index
    %c0_86 = arith.constant 0 : index
    %113 = vector.load %arg11[%c0_85, %c0_86] : memref<12x384xf32, #tpu.memory_space<vmem>>, vector<12x384xf32>
    %c0_87 = arith.constant 0 : index
    %c0_88 = arith.constant 0 : index
    %114 = vector.load %arg12[%c0_87, %c0_88] : memref<6x384xf32, #tpu.memory_space<vmem>>, vector<6x384xf32>
    %115 = vector.extract_strided_slice %112 {offsets = [0, 0], sizes = [2, 1], strides = [1, 1]} : vector<2x2xf32> to vector<2x1xf32>
    %116 = vector.extract_strided_slice %113 {offsets = [0, 0], sizes = [1, 384], strides = [1, 1]} : vector<12x384xf32> to vector<1x384xf32>
    %117 = vector.broadcast %115 : vector<2x1xf32> to vector<2x384xf32>
    %118 = vector.broadcast %116 : vector<1x384xf32> to vector<2x384xf32>
    %119 = arith.mulf %117, %118 : vector<2x384xf32>
    %120 = vector.extract_strided_slice %112 {offsets = [0, 1], sizes = [2, 1], strides = [1, 1]} : vector<2x2xf32> to vector<2x1xf32>
    %121 = vector.extract_strided_slice %113 {offsets = [6, 0], sizes = [1, 384], strides = [1, 1]} : vector<12x384xf32> to vector<1x384xf32>
    %122 = vector.broadcast %120 : vector<2x1xf32> to vector<2x384xf32>
    %123 = vector.broadcast %121 : vector<1x384xf32> to vector<2x384xf32>
    %124 = arith.mulf %122, %123 : vector<2x384xf32>
    %125 = arith.addf %119, %124 : vector<2x384xf32>
    %126 = vector.extract_strided_slice %114 {offsets = [0, 0], sizes = [1, 384], strides = [1, 1]} : vector<6x384xf32> to vector<1x384xf32>
    %127 = vector.broadcast %126 : vector<1x384xf32> to vector<2x384xf32>
    %128 = arith.addf %125, %127 : vector<2x384xf32>
    %129 = vector.extract_strided_slice %112 {offsets = [0, 0], sizes = [2, 1], strides = [1, 1]} : vector<2x2xf32> to vector<2x1xf32>
    %130 = vector.extract_strided_slice %113 {offsets = [1, 0], sizes = [1, 384], strides = [1, 1]} : vector<12x384xf32> to vector<1x384xf32>
    %131 = vector.broadcast %129 : vector<2x1xf32> to vector<2x384xf32>
    %132 = vector.broadcast %130 : vector<1x384xf32> to vector<2x384xf32>
    %133 = arith.mulf %131, %132 : vector<2x384xf32>
    %134 = vector.extract_strided_slice %112 {offsets = [0, 1], sizes = [2, 1], strides = [1, 1]} : vector<2x2xf32> to vector<2x1xf32>
    %135 = vector.extract_strided_slice %113 {offsets = [7, 0], sizes = [1, 384], strides = [1, 1]} : vector<12x384xf32> to vector<1x384xf32>
    %136 = vector.broadcast %134 : vector<2x1xf32> to vector<2x384xf32>
    %137 = vector.broadcast %135 : vector<1x384xf32> to vector<2x384xf32>
    %138 = arith.mulf %136, %137 : vector<2x384xf32>
    %139 = arith.addf %133, %138 : vector<2x384xf32>
    %140 = vector.extract_strided_slice %114 {offsets = [1, 0], sizes = [1, 384], strides = [1, 1]} : vector<6x384xf32> to vector<1x384xf32>
    %141 = vector.broadcast %140 : vector<1x384xf32> to vector<2x384xf32>
    %142 = arith.addf %139, %141 : vector<2x384xf32>
    %143 = vector.extract_strided_slice %112 {offsets = [0, 0], sizes = [2, 1], strides = [1, 1]} : vector<2x2xf32> to vector<2x1xf32>
    %144 = vector.extract_strided_slice %113 {offsets = [2, 0], sizes = [1, 384], strides = [1, 1]} : vector<12x384xf32> to vector<1x384xf32>
    %145 = vector.broadcast %143 : vector<2x1xf32> to vector<2x384xf32>
    %146 = vector.broadcast %144 : vector<1x384xf32> to vector<2x384xf32>
    %147 = arith.mulf %145, %146 : vector<2x384xf32>
    %148 = vector.extract_strided_slice %112 {offsets = [0, 1], sizes = [2, 1], strides = [1, 1]} : vector<2x2xf32> to vector<2x1xf32>
    %149 = vector.extract_strided_slice %113 {offsets = [8, 0], sizes = [1, 384], strides = [1, 1]} : vector<12x384xf32> to vector<1x384xf32>
    %150 = vector.broadcast %148 : vector<2x1xf32> to vector<2x384xf32>
    %151 = vector.broadcast %149 : vector<1x384xf32> to vector<2x384xf32>
    %152 = arith.mulf %150, %151 : vector<2x384xf32>
    %153 = arith.addf %147, %152 : vector<2x384xf32>
    %154 = vector.extract_strided_slice %114 {offsets = [2, 0], sizes = [1, 384], strides = [1, 1]} : vector<6x384xf32> to vector<1x384xf32>
    %155 = vector.broadcast %154 : vector<1x384xf32> to vector<2x384xf32>
    %156 = arith.addf %153, %155 : vector<2x384xf32>
    %157 = vector.extract_strided_slice %112 {offsets = [0, 0], sizes = [2, 1], strides = [1, 1]} : vector<2x2xf32> to vector<2x1xf32>
    %158 = vector.extract_strided_slice %113 {offsets = [3, 0], sizes = [1, 384], strides = [1, 1]} : vector<12x384xf32> to vector<1x384xf32>
    %159 = vector.broadcast %157 : vector<2x1xf32> to vector<2x384xf32>
    %160 = vector.broadcast %158 : vector<1x384xf32> to vector<2x384xf32>
    %161 = arith.mulf %159, %160 : vector<2x384xf32>
    %162 = vector.extract_strided_slice %112 {offsets = [0, 1], sizes = [2, 1], strides = [1, 1]} : vector<2x2xf32> to vector<2x1xf32>
    %163 = vector.extract_strided_slice %113 {offsets = [9, 0], sizes = [1, 384], strides = [1, 1]} : vector<12x384xf32> to vector<1x384xf32>
    %164 = vector.broadcast %162 : vector<2x1xf32> to vector<2x384xf32>
    %165 = vector.broadcast %163 : vector<1x384xf32> to vector<2x384xf32>
    %166 = arith.mulf %164, %165 : vector<2x384xf32>
    %167 = arith.addf %161, %166 : vector<2x384xf32>
    %168 = vector.extract_strided_slice %114 {offsets = [3, 0], sizes = [1, 384], strides = [1, 1]} : vector<6x384xf32> to vector<1x384xf32>
    %169 = vector.broadcast %168 : vector<1x384xf32> to vector<2x384xf32>
    %170 = arith.addf %167, %169 : vector<2x384xf32>
    %171 = vector.extract_strided_slice %112 {offsets = [0, 0], sizes = [2, 1], strides = [1, 1]} : vector<2x2xf32> to vector<2x1xf32>
    %172 = vector.extract_strided_slice %113 {offsets = [4, 0], sizes = [1, 384], strides = [1, 1]} : vector<12x384xf32> to vector<1x384xf32>
    %173 = vector.broadcast %171 : vector<2x1xf32> to vector<2x384xf32>
    %174 = vector.broadcast %172 : vector<1x384xf32> to vector<2x384xf32>
    %175 = arith.mulf %173, %174 : vector<2x384xf32>
    %176 = vector.extract_strided_slice %112 {offsets = [0, 1], sizes = [2, 1], strides = [1, 1]} : vector<2x2xf32> to vector<2x1xf32>
    %177 = vector.extract_strided_slice %113 {offsets = [10, 0], sizes = [1, 384], strides = [1, 1]} : vector<12x384xf32> to vector<1x384xf32>
    %178 = vector.broadcast %176 : vector<2x1xf32> to vector<2x384xf32>
    %179 = vector.broadcast %177 : vector<1x384xf32> to vector<2x384xf32>
    %180 = arith.mulf %178, %179 : vector<2x384xf32>
    %181 = arith.addf %175, %180 : vector<2x384xf32>
    %182 = vector.extract_strided_slice %114 {offsets = [4, 0], sizes = [1, 384], strides = [1, 1]} : vector<6x384xf32> to vector<1x384xf32>
    %183 = vector.broadcast %182 : vector<1x384xf32> to vector<2x384xf32>
    %184 = arith.addf %181, %183 : vector<2x384xf32>
    %185 = vector.extract_strided_slice %112 {offsets = [0, 0], sizes = [2, 1], strides = [1, 1]} : vector<2x2xf32> to vector<2x1xf32>
    %186 = vector.extract_strided_slice %113 {offsets = [5, 0], sizes = [1, 384], strides = [1, 1]} : vector<12x384xf32> to vector<1x384xf32>
    %187 = vector.broadcast %185 : vector<2x1xf32> to vector<2x384xf32>
    %188 = vector.broadcast %186 : vector<1x384xf32> to vector<2x384xf32>
    %189 = arith.mulf %187, %188 : vector<2x384xf32>
    %190 = vector.extract_strided_slice %112 {offsets = [0, 1], sizes = [2, 1], strides = [1, 1]} : vector<2x2xf32> to vector<2x1xf32>
    %191 = vector.extract_strided_slice %113 {offsets = [11, 0], sizes = [1, 384], strides = [1, 1]} : vector<12x384xf32> to vector<1x384xf32>
    %192 = vector.broadcast %190 : vector<2x1xf32> to vector<2x384xf32>
    %193 = vector.broadcast %191 : vector<1x384xf32> to vector<2x384xf32>
    %194 = arith.mulf %192, %193 : vector<2x384xf32>
    %195 = arith.addf %189, %194 : vector<2x384xf32>
    %196 = vector.extract_strided_slice %114 {offsets = [5, 0], sizes = [1, 384], strides = [1, 1]} : vector<6x384xf32> to vector<1x384xf32>
    %197 = vector.broadcast %196 : vector<1x384xf32> to vector<2x384xf32>
    %198 = arith.addf %195, %197 : vector<2x384xf32>
    %199 = tpu.concatenate %128, %142, %156, %170, %184, %198 in 0 : vector<2x384xf32>, vector<2x384xf32>, vector<2x384xf32>, vector<2x384xf32>, vector<2x384xf32>, vector<2x384xf32> -> vector<12x384xf32>
    %cst_89 = arith.constant 0.000000e+00 : f32
    %200 = vector.broadcast %cst_89 : f32 to vector<12x384xf32>
    %201 = arith.maximumf %199, %200 : vector<12x384xf32>
    %202 = arith.truncf %201 : vector<12x384xf32> to vector<12x384xbf16>
    %cst_90 = arith.constant 0.000000e+00 : f32
    %203 = vector.broadcast %cst_90 : f32 to vector<28x448xf32>
    %c0_91 = arith.constant 0 : index
    %c0_92 = arith.constant 0 : index
    %c0_93 = arith.constant 0 : index
    %204 = vector.load %arg13[%c0_91, %c0_92, %c0_93] : memref<4x28x12xbf16, #tpu.memory_space<vmem>>, vector<1x28x12xbf16>
    %205 = vector.shape_cast %204 : vector<1x28x12xbf16> to vector<28x12xbf16>
    %cst_94 = arith.constant dense<0.000000e+00> : vector<28x384xf32>
    %206 = tpu.matmul %205, %202, %cst_94 {dimension_numbers = #tpu.dot_dimension_numbers<[1], [0], [0], [1], [0, 0, 1, 1], [], []>} : vector<28x12xbf16>, vector<12x384xbf16>, vector<28x384xf32> -> vector<28x384xf32>
    %207 = arith.truncf %206 : vector<28x384xf32> to vector<28x384xbf16>
    %c0_95 = arith.constant 0 : index
    %c0_96 = arith.constant 0 : index
    %c0_97 = arith.constant 0 : index
    %208 = vector.load %arg14[%c0_95, %c0_96, %c0_97] : memref<4x384x448xbf16, #tpu.memory_space<vmem>>, vector<1x384x448xbf16>
    %209 = vector.shape_cast %208 : vector<1x384x448xbf16> to vector<384x448xbf16>
    %cst_98 = arith.constant dense<0.000000e+00> : vector<28x448xf32>
    %210 = tpu.matmul %207, %209, %cst_98 {dimension_numbers = #tpu.dot_dimension_numbers<[1], [0], [0], [1], [0, 0, 1, 1], [], []>} : vector<28x384xbf16>, vector<384x448xbf16>, vector<28x448xf32> -> vector<28x448xf32>
    %211 = arith.addf %203, %210 : vector<28x448xf32>
    %c1_99 = arith.constant 1 : index
    %c0_100 = arith.constant 0 : index
    %c0_101 = arith.constant 0 : index
    %212 = vector.load %arg13[%c1_99, %c0_100, %c0_101] : memref<4x28x12xbf16, #tpu.memory_space<vmem>>, vector<1x28x12xbf16>
    %213 = vector.shape_cast %212 : vector<1x28x12xbf16> to vector<28x12xbf16>
    %cst_102 = arith.constant dense<0.000000e+00> : vector<28x384xf32>
    %214 = tpu.matmul %213, %202, %cst_102 {dimension_numbers = #tpu.dot_dimension_numbers<[1], [0], [0], [1], [0, 0, 1, 1], [], []>} : vector<28x12xbf16>, vector<12x384xbf16>, vector<28x384xf32> -> vector<28x384xf32>
    %215 = arith.truncf %214 : vector<28x384xf32> to vector<28x384xbf16>
    %c1_103 = arith.constant 1 : index
    %c0_104 = arith.constant 0 : index
    %c0_105 = arith.constant 0 : index
    %216 = vector.load %arg14[%c1_103, %c0_104, %c0_105] : memref<4x384x448xbf16, #tpu.memory_space<vmem>>, vector<1x384x448xbf16>
    %217 = vector.shape_cast %216 : vector<1x384x448xbf16> to vector<384x448xbf16>
    %cst_106 = arith.constant dense<0.000000e+00> : vector<28x448xf32>
    %218 = tpu.matmul %215, %217, %cst_106 {dimension_numbers = #tpu.dot_dimension_numbers<[1], [0], [0], [1], [0, 0, 1, 1], [], []>} : vector<28x384xbf16>, vector<384x448xbf16>, vector<28x448xf32> -> vector<28x448xf32>
    %219 = arith.addf %211, %218 : vector<28x448xf32>
    %c2_107 = arith.constant 2 : index
    %c0_108 = arith.constant 0 : index
    %c0_109 = arith.constant 0 : index
    %220 = vector.load %arg13[%c2_107, %c0_108, %c0_109] : memref<4x28x12xbf16, #tpu.memory_space<vmem>>, vector<1x28x12xbf16>
    %221 = vector.shape_cast %220 : vector<1x28x12xbf16> to vector<28x12xbf16>
    %cst_110 = arith.constant dense<0.000000e+00> : vector<28x384xf32>
    %222 = tpu.matmul %221, %202, %cst_110 {dimension_numbers = #tpu.dot_dimension_numbers<[1], [0], [0], [1], [0, 0, 1, 1], [], []>} : vector<28x12xbf16>, vector<12x384xbf16>, vector<28x384xf32> -> vector<28x384xf32>
    %223 = arith.truncf %222 : vector<28x384xf32> to vector<28x384xbf16>
    %c2_111 = arith.constant 2 : index
    %c0_112 = arith.constant 0 : index
    %c0_113 = arith.constant 0 : index
    %224 = vector.load %arg14[%c2_111, %c0_112, %c0_113] : memref<4x384x448xbf16, #tpu.memory_space<vmem>>, vector<1x384x448xbf16>
    %225 = vector.shape_cast %224 : vector<1x384x448xbf16> to vector<384x448xbf16>
    %cst_114 = arith.constant dense<0.000000e+00> : vector<28x448xf32>
    %226 = tpu.matmul %223, %225, %cst_114 {dimension_numbers = #tpu.dot_dimension_numbers<[1], [0], [0], [1], [0, 0, 1, 1], [], []>} : vector<28x384xbf16>, vector<384x448xbf16>, vector<28x448xf32> -> vector<28x448xf32>
    %227 = arith.addf %219, %226 : vector<28x448xf32>
    %c3_115 = arith.constant 3 : index
    %c0_116 = arith.constant 0 : index
    %c0_117 = arith.constant 0 : index
    %228 = vector.load %arg13[%c3_115, %c0_116, %c0_117] : memref<4x28x12xbf16, #tpu.memory_space<vmem>>, vector<1x28x12xbf16>
    %229 = vector.shape_cast %228 : vector<1x28x12xbf16> to vector<28x12xbf16>
    %cst_118 = arith.constant dense<0.000000e+00> : vector<28x384xf32>
    %230 = tpu.matmul %229, %202, %cst_118 {dimension_numbers = #tpu.dot_dimension_numbers<[1], [0], [0], [1], [0, 0, 1, 1], [], []>} : vector<28x12xbf16>, vector<12x384xbf16>, vector<28x384xf32> -> vector<28x384xf32>
    %231 = arith.truncf %230 : vector<28x384xf32> to vector<28x384xbf16>
    %c3_119 = arith.constant 3 : index
    %c0_120 = arith.constant 0 : index
    %c0_121 = arith.constant 0 : index
    %232 = vector.load %arg14[%c3_119, %c0_120, %c0_121] : memref<4x384x448xbf16, #tpu.memory_space<vmem>>, vector<1x384x448xbf16>
    %233 = vector.shape_cast %232 : vector<1x384x448xbf16> to vector<384x448xbf16>
    %cst_122 = arith.constant dense<0.000000e+00> : vector<28x448xf32>
    %234 = tpu.matmul %231, %233, %cst_122 {dimension_numbers = #tpu.dot_dimension_numbers<[1], [0], [0], [1], [0, 0, 1, 1], [], []>} : vector<28x384xbf16>, vector<384x448xbf16>, vector<28x448xf32> -> vector<28x448xf32>
    %235 = arith.addf %227, %234 : vector<28x448xf32>
    %c0_123 = arith.constant 0 : index
    %c0_124 = arith.constant 0 : index
    %236 = vector.load %arg15[%c0_123, %c0_124] : memref<1x448xf32, #tpu.memory_space<vmem>>, vector<1x448xf32>
    %237 = vector.broadcast %236 : vector<1x448xf32> to vector<28x448xf32>
    %238 = arith.addf %235, %237 : vector<28x448xf32>
    %cst_125 = arith.constant 0.000000e+00 : f32
    %239 = vector.broadcast %cst_125 : f32 to vector<28x448xf32>
    %240 = arith.maximumf %238, %239 : vector<28x448xf32>
    %241 = arith.truncf %240 : vector<28x448xf32> to vector<28x448xbf16>
    %c0_126 = arith.constant 0 : index
    %c0_127 = arith.constant 0 : index
    %242 = vector.load %arg17[%c0_126, %c0_127] : memref<448x112xbf16, #tpu.memory_space<vmem>>, vector<448x112xbf16>
    %cst_128 = arith.constant dense<0.000000e+00> : vector<28x112xf32>
    %243 = tpu.matmul %241, %242, %cst_128 {dimension_numbers = #tpu.dot_dimension_numbers<[1], [0], [0], [1], [0, 0, 1, 1], [], []>} : vector<28x448xbf16>, vector<448x112xbf16>, vector<28x112xf32> -> vector<28x112xf32>
    %cst_129 = arith.constant 0.000000e+00 : f32
    %244 = vector.broadcast %cst_129 : f32 to vector<56x28xf32>
    %245 = vector.extract_strided_slice %243 {offsets = [0, 0], sizes = [28, 28], strides = [1, 1]} : vector<28x112xf32> to vector<28x28xf32>
    %246 = arith.truncf %245 : vector<28x28xf32> to vector<28x28xbf16>
    %c0_130 = arith.constant 0 : index
    %c0_131 = arith.constant 0 : index
    %c0_132 = arith.constant 0 : index
    %247 = vector.load %arg16[%c0_130, %c0_131, %c0_132] : memref<4x56x28xbf16, #tpu.memory_space<vmem>>, vector<1x56x28xbf16>
    %248 = vector.shape_cast %247 : vector<1x56x28xbf16> to vector<56x28xbf16>
    %cst_133 = arith.constant dense<0.000000e+00> : vector<56x28xf32>
    %249 = tpu.matmul %248, %246, %cst_133 {dimension_numbers = #tpu.dot_dimension_numbers<[1], [0], [0], [1], [0, 0, 1, 1], [], []>} : vector<56x28xbf16>, vector<28x28xbf16>, vector<56x28xf32> -> vector<56x28xf32>
    %250 = arith.addf %244, %249 : vector<56x28xf32>
    %251 = vector.extract_strided_slice %243 {offsets = [0, 28], sizes = [28, 28], strides = [1, 1]} : vector<28x112xf32> to vector<28x28xf32>
    %252 = arith.truncf %251 : vector<28x28xf32> to vector<28x28xbf16>
    %c1_134 = arith.constant 1 : index
    %c0_135 = arith.constant 0 : index
    %c0_136 = arith.constant 0 : index
    %253 = vector.load %arg16[%c1_134, %c0_135, %c0_136] : memref<4x56x28xbf16, #tpu.memory_space<vmem>>, vector<1x56x28xbf16>
    %254 = vector.shape_cast %253 : vector<1x56x28xbf16> to vector<56x28xbf16>
    %cst_137 = arith.constant dense<0.000000e+00> : vector<56x28xf32>
    %255 = tpu.matmul %254, %252, %cst_137 {dimension_numbers = #tpu.dot_dimension_numbers<[1], [0], [0], [1], [0, 0, 1, 1], [], []>} : vector<56x28xbf16>, vector<28x28xbf16>, vector<56x28xf32> -> vector<56x28xf32>
    %256 = arith.addf %250, %255 : vector<56x28xf32>
    %257 = vector.extract_strided_slice %243 {offsets = [0, 56], sizes = [28, 28], strides = [1, 1]} : vector<28x112xf32> to vector<28x28xf32>
    %258 = arith.truncf %257 : vector<28x28xf32> to vector<28x28xbf16>
    %c2_138 = arith.constant 2 : index
    %c0_139 = arith.constant 0 : index
    %c0_140 = arith.constant 0 : index
    %259 = vector.load %arg16[%c2_138, %c0_139, %c0_140] : memref<4x56x28xbf16, #tpu.memory_space<vmem>>, vector<1x56x28xbf16>
    %260 = vector.shape_cast %259 : vector<1x56x28xbf16> to vector<56x28xbf16>
    %cst_141 = arith.constant dense<0.000000e+00> : vector<56x28xf32>
    %261 = tpu.matmul %260, %258, %cst_141 {dimension_numbers = #tpu.dot_dimension_numbers<[1], [0], [0], [1], [0, 0, 1, 1], [], []>} : vector<56x28xbf16>, vector<28x28xbf16>, vector<56x28xf32> -> vector<56x28xf32>
    %262 = arith.addf %256, %261 : vector<56x28xf32>
    %263 = vector.extract_strided_slice %243 {offsets = [0, 84], sizes = [28, 28], strides = [1, 1]} : vector<28x112xf32> to vector<28x28xf32>
    %264 = arith.truncf %263 : vector<28x28xf32> to vector<28x28xbf16>
    %c3_142 = arith.constant 3 : index
    %c0_143 = arith.constant 0 : index
    %c0_144 = arith.constant 0 : index
    %265 = vector.load %arg16[%c3_142, %c0_143, %c0_144] : memref<4x56x28xbf16, #tpu.memory_space<vmem>>, vector<1x56x28xbf16>
    %266 = vector.shape_cast %265 : vector<1x56x28xbf16> to vector<56x28xbf16>
    %cst_145 = arith.constant dense<0.000000e+00> : vector<56x28xf32>
    %267 = tpu.matmul %266, %264, %cst_145 {dimension_numbers = #tpu.dot_dimension_numbers<[1], [0], [0], [1], [0, 0, 1, 1], [], []>} : vector<56x28xbf16>, vector<28x28xbf16>, vector<56x28xf32> -> vector<56x28xf32>
    %268 = arith.addf %262, %267 : vector<56x28xf32>
    %c0_146 = arith.constant 0 : index
    %c0_147 = arith.constant 0 : index
    %269 = vector.load %arg18[%c0_146, %c0_147] : memref<1x28xf32, #tpu.memory_space<vmem>>, vector<1x28xf32>
    %270 = vector.broadcast %269 : vector<1x28xf32> to vector<56x28xf32>
    %271 = arith.addf %268, %270 : vector<56x28xf32>
    %cst_148 = arith.constant 0.000000e+00 : f32
    %272 = vector.broadcast %cst_148 : f32 to vector<56x28xf32>
    %273 = arith.subf %272, %271 : vector<56x28xf32>
    %274 = math.exp %273 : vector<56x28xf32>
    %cst_149 = arith.constant 1.000000e+00 : f32
    %275 = vector.broadcast %cst_149 : f32 to vector<56x28xf32>
    %276 = arith.addf %275, %274 : vector<56x28xf32>
    %277 = tpu.reciprocal %276 {approx = true} : vector<56x28xf32> -> vector<56x28xf32>
    %cst_150 = arith.constant 1.000000e+00 : f32
    %278 = vector.broadcast %cst_150 : f32 to vector<56x28xf32>
    %279 = arith.minimumf %277, %278 : vector<56x28xf32>
    %c0_151 = arith.constant 0 : index
    %c0_152 = arith.constant 0 : index
    %c0_153 = arith.constant 0 : index
    %280 = vector.load %arg19[%c0_151, %c0_152, %c0_153] : memref<1x56x28xf32, #tpu.memory_space<vmem>>, vector<1x56x28xf32>
    %281 = vector.shape_cast %280 : vector<1x56x28xf32> to vector<56x28xf32>
    %282 = vector.shape_cast %279 : vector<56x28xf32> to vector<1x56x28xf32>
    tpu.vector_store %arg19[%c0_151, %c0_152, %c0_153], %282 {strides = array<i32>} : memref<1x56x28xf32, #tpu.memory_space<vmem>>, vector<1x56x28xf32>,
    return
  }
  func.func @transform_0(%arg0: i32) -> (i32, i32, i32) {
    %c0_i32 = arith.constant 0 : i32
    %c0_i32_0 = arith.constant 0 : i32
    %c0_i32_1 = arith.constant 0 : i32
    return %arg0, %c0_i32, %c0_i32_0 : i32, i32, i32
  }
  func.func @transform_1(%arg0: i32) -> (i32, i32, i32) {
    %c0_i32 = arith.constant 0 : i32
    %c0_i32_0 = arith.constant 0 : i32
    %c0_i32_1 = arith.constant 0 : i32
    return %arg0, %c0_i32, %c0_i32_0 : i32, i32, i32
  }
  func.func @transform_2(%arg0: i32) -> (i32, i32, i32) {
    %c0_i32 = arith.constant 0 : i32
    %c0_i32_0 = arith.constant 0 : i32
    %c0_i32_1 = arith.constant 0 : i32
    %c0_i32_2 = arith.constant 0 : i32
    return %c0_i32, %c0_i32_0, %c0_i32_1 : i32, i32, i32
  }
  func.func @transform_3(%arg0: i32) -> (i32, i32, i32) {
    %c0_i32 = arith.constant 0 : i32
    %c0_i32_0 = arith.constant 0 : i32
    %c0_i32_1 = arith.constant 0 : i32
    %c0_i32_2 = arith.constant 0 : i32
    return %c0_i32, %c0_i32_0, %c0_i32_1 : i32, i32, i32
  }
  func.func @transform_4(%arg0: i32) -> (i32, i32) {
    %c0_i32 = arith.constant 0 : i32
    %c0_i32_0 = arith.constant 0 : i32
    %c0_i32_1 = arith.constant 0 : i32
    return %c0_i32, %c0_i32_0 : i32, i32
  }
  func.func @transform_5(%arg0: i32) -> (i32, i32, i32) {
    %c0_i32 = arith.constant 0 : i32
    %c0_i32_0 = arith.constant 0 : i32
    %c0_i32_1 = arith.constant 0 : i32
    %c0_i32_2 = arith.constant 0 : i32
    return %c0_i32, %c0_i32_0, %c0_i32_1 : i32, i32, i32
  }
  func.func @transform_6(%arg0: i32) -> (i32, i32, i32) {
    %c0_i32 = arith.constant 0 : i32
    %c0_i32_0 = arith.constant 0 : i32
    %c0_i32_1 = arith.constant 0 : i32
    %c0_i32_2 = arith.constant 0 : i32
    return %c0_i32, %c0_i32_0, %c0_i32_1 : i32, i32, i32
  }
  func.func @transform_7(%arg0: i32) -> (i32, i32) {
    %c0_i32 = arith.constant 0 : i32
    %c0_i32_0 = arith.constant 0 : i32
    %c0_i32_1 = arith.constant 0 : i32
    return %c0_i32, %c0_i32_0 : i32, i32
  }
  func.func @transform_8(%arg0: i32) -> (i32, i32) {
    %c0_i32 = arith.constant 0 : i32
    %c0_i32_0 = arith.constant 0 : i32
    %c0_i32_1 = arith.constant 0 : i32
    return %c0_i32, %c0_i32_0 : i32, i32
  }
  func.func @transform_9(%arg0: i32) -> (i32, i32) {
    %c0_i32 = arith.constant 0 : i32
    %c0_i32_0 = arith.constant 0 : i32
    %c0_i32_1 = arith.constant 0 : i32
    return %c0_i32, %c0_i32_0 : i32, i32
  }
  func.func @transform_10(%arg0: i32) -> (i32, i32) {
    %c0_i32 = arith.constant 0 : i32
    %c0_i32_0 = arith.constant 0 : i32
    %c0_i32_1 = arith.constant 0 : i32
    return %c0_i32, %c0_i32_0 : i32, i32
  }
  func.func @transform_11(%arg0: i32) -> (i32, i32) {
    %c0_i32 = arith.constant 0 : i32
    %c0_i32_0 = arith.constant 0 : i32
    %c0_i32_1 = arith.constant 0 : i32
    return %c0_i32, %c0_i32_0 : i32, i32
  }
  func.func @transform_12(%arg0: i32) -> (i32, i32, i32) {
    %c0_i32 = arith.constant 0 : i32
    %c0_i32_0 = arith.constant 0 : i32
    %c0_i32_1 = arith.constant 0 : i32
    %c0_i32_2 = arith.constant 0 : i32
    return %c0_i32, %c0_i32_0, %c0_i32_1 : i32, i32, i32
  }
  func.func @transform_13(%arg0: i32) -> (i32, i32, i32) {
    %c0_i32 = arith.constant 0 : i32
    %c0_i32_0 = arith.constant 0 : i32
    %c0_i32_1 = arith.constant 0 : i32
    %c0_i32_2 = arith.constant 0 : i32
    return %c0_i32, %c0_i32_0, %c0_i32_1 : i32, i32, i32
  }
  func.func @transform_14(%arg0: i32) -> (i32, i32) {
    %c0_i32 = arith.constant 0 : i32
    %c0_i32_0 = arith.constant 0 : i32
    %c0_i32_1 = arith.constant 0 : i32
    return %c0_i32, %c0_i32_0 : i32, i32
  }
  func.func @transform_15(%arg0: i32) -> (i32, i32, i32) {
    %c0_i32 = arith.constant 0 : i32
    %c0_i32_0 = arith.constant 0 : i32
    %c0_i32_1 = arith.constant 0 : i32
    %c0_i32_2 = arith.constant 0 : i32
    return %c0_i32, %c0_i32_0, %c0_i32_1 : i32, i32, i32
  }
  func.func @transform_16(%arg0: i32) -> (i32, i32) {
    %c0_i32 = arith.constant 0 : i32
    %c0_i32_0 = arith.constant 0 : i32
    %c0_i32_1 = arith.constant 0 : i32
    return %c0_i32, %c0_i32_0 : i32, i32
  }
  func.func @transform_17(%arg0: i32) -> (i32, i32) {
    %c0_i32 = arith.constant 0 : i32
    %c0_i32_0 = arith.constant 0 : i32
    %c0_i32_1 = arith.constant 0 : i32
    return %c0_i32, %c0_i32_0 : i32, i32
  }
  func.func @transform_18(%arg0: i32) -> (i32, i32, i32) {
    %c0_i32 = arith.constant 0 : i32
    %c0_i32_0 = arith.constant 0 : i32
    %c0_i32_1 = arith.constant 0 : i32
    return %arg0, %c0_i32, %c0_i32_0 : i32, i32, i32
  }
  func.func @transform_19(%arg0: i32) -> (i32, i32, i32) {
    %c0_i32 = arith.constant 0 : i32
    %c0_i32_0 = arith.constant 0 : i32
    %c0_i32_1 = arith.constant 0 : i32
    return %arg0, %c0_i32, %c0_i32_0 : i32, i32, i32
  }
}

</mosaic_0001>

<llo_original>
// kernel: conv_vae_forward.1
$region0: #{conv_vae_forward.1}
  #allocation0 [shape = 'u32[]', space=smem, size = 0x4, offset = 0x4, fixed_abs, tag = 'smem constant byte address 0x4 - core index']
  #allocation1 [shape = 'u32[72,128]{1,0:T(1,128)}', space=vmem, size = 0x9000, scoped, tag = 'internal scratch']
  %s0 = inlined_call_operand.vmem [shape: f32[1,56,28], index: 0, kind: input, shape index: {}]
  %s1 = inlined_call_operand.vmem [shape: f32[1,2,2], index: 1, kind: input, shape index: {}]
  %s2 = inlined_call_operand.vmem [shape: bf16[4,26,56], index: 2, kind: input, shape index: {}]
  %s3 = inlined_call_operand.vmem [shape: bf16[4,28,416], index: 3, kind: input, shape index: {}]
  %s4 = inlined_call_operand.vmem [shape: f32[1,416], index: 4, kind: input, shape index: {}]
  %s5 = inlined_call_operand.vmem [shape: bf16[4,10,26], index: 5, kind: input, shape index: {}]
  %s6 = inlined_call_operand.vmem [shape: bf16[4,416,320], index: 6, kind: input, shape index: {}]
  %s7 = inlined_call_operand.vmem [shape: f32[1,320], index: 7, kind: input, shape index: {}]
  %s8 = inlined_call_operand.vmem [shape: f32[320,20], index: 8, kind: input, shape index: {}]
  %s9 = inlined_call_operand.vmem [shape: f32[1,4], index: 9, kind: input, shape index: {}]
  %s10 = inlined_call_operand.vmem [shape: f32[12,384], index: 10, kind: input, shape index: {}]
  %s11 = inlined_call_operand.vmem [shape: f32[6,384], index: 11, kind: input, shape index: {}]
  %s12 = inlined_call_operand.vmem [shape: bf16[4,28,12], index: 12, kind: input, shape index: {}]
  %s13 = inlined_call_operand.vmem [shape: bf16[4,384,448], index: 13, kind: input, shape index: {}]
  %s14 = inlined_call_operand.vmem [shape: f32[1,448], index: 14, kind: input, shape index: {}]
  %s15 = inlined_call_operand.vmem [shape: bf16[4,56,28], index: 15, kind: input, shape index: {}]
  %s16 = inlined_call_operand.vmem [shape: bf16[448,112], index: 16, kind: input, shape index: {}]
  %s17 = inlined_call_operand.vmem [shape: f32[1,28], index: 17, kind: input, shape index: {}]
  %s18 = inlined_call_operand.hbm [shape: f32[1,56,28], index: 18, kind: output, shape index: {0}]
  %s19 = inlined_call_operand.vmem [shape: f32[1,2,4], index: 19, kind: output, shape index: {1}]
  %20 = xla_tuple %s18, %s19
  %s21 = sld [smem:[#allocation0]]
  $region90: #{conv_vae_forward.1} parent=0
    _
  %s23 = ssub.s32 1, %s21
  %s24 = scalar_select 0, %s23, %s21
  $region1: #{conv_vae_forward.1} parent=0
    #allocation2 [shape = 'u8[28672]{0}', space=vmem, size = 0x7000, scoped, tag = 'output window, operand 0, single buffered']
    #allocation3 [shape = 's32[1]{0}', space=sflag, size = 0x4, scoped, tag = 'scoped memory for conv_vae_forward.1']
    %25 = vsyncpa [#allocation3], 0
    // Predicated region
    $region2: #{conv_vae_forward.1} parent=1 // pred_check
      _
    $region3: #{conv_vae_forward.1} parent=1 // pred_check_branch
      %27 = sbr.rel (0) target = $region5
    $region4: #{conv_vae_forward.1} parent=1 // pred_region
      _
    $region5: #{conv_vae_forward.1} parent=1 // pred_fallthru
      _
    // Predicated region
    $region6: #{conv_vae_forward.1} parent=1 // pred_check
      _
    $region7: #{conv_vae_forward.1} parent=1 // pred_check_branch
      %29 = sbr.rel (0) target = $region9
    $region8: #{conv_vae_forward.1} parent=1 // pred_region
      _
    $region9: #{conv_vae_forward.1} parent=1 // pred_fallthru
      _
    // Predicated region
    $region10: #{conv_vae_forward.1} parent=1 // pred_check
      _
    $region11: #{conv_vae_forward.1} parent=1 // pred_check_branch
      %31 = sbr.rel (0) target = $region13
    $region12: #{conv_vae_forward.1} parent=1 // pred_region
      _
    $region13: #{conv_vae_forward.1} parent=1 // pred_fallthru
      _
    // Predicated region
    $region14: #{conv_vae_forward.1} parent=1 // pred_check
      _
    $region15: #{conv_vae_forward.1} parent=1 // pred_check_branch
      %33 = sbr.rel (0) target = $region17
    $region16: #{conv_vae_forward.1} parent=1 // pred_region
      _
    $region17: #{conv_vae_forward.1} parent=1 // pred_fallthru
      _
    // Predicated region
    $region18: #{conv_vae_forward.1} parent=1 // pred_check
      _
    $region19: #{conv_vae_forward.1} parent=1 // pred_check_branch
      %35 = sbr.rel (0) target = $region21
    $region20: #{conv_vae_forward.1} parent=1 // pred_region
      _
    $region21: #{conv_vae_forward.1} parent=1 // pred_fallthru
      _
    // Predicated region
    $region22: #{conv_vae_forward.1} parent=1 // pred_check
      _
    $region23: #{conv_vae_forward.1} parent=1 // pred_check_branch
      %37 = sbr.rel (0) target = $region25
    $region24: #{conv_vae_forward.1} parent=1 // pred_region
      _
    $region25: #{conv_vae_forward.1} parent=1 // pred_fallthru
      _
    // Predicated region
    $region26: #{conv_vae_forward.1} parent=1 // pred_check
      _
    $region27: #{conv_vae_forward.1} parent=1 // pred_check_branch
      %39 = sbr.rel (0) target = $region29
    $region28: #{conv_vae_forward.1} parent=1 // pred_region
      _
    $region29: #{conv_vae_forward.1} parent=1 // pred_fallthru
      _
    // Predicated region
    $region30: #{conv_vae_forward.1} parent=1 // pred_check
      _
    $region31: #{conv_vae_forward.1} parent=1 // pred_check_branch
      %41 = sbr.rel (0) target = $region33
    $region32: #{conv_vae_forward.1} parent=1 // pred_region
      _
    $region33: #{conv_vae_forward.1} parent=1 // pred_fallthru
      _
    // Predicated region
    $region34: #{conv_vae_forward.1} parent=1 // pred_check
      _
    $region35: #{conv_vae_forward.1} parent=1 // pred_check_branch
      %43 = sbr.rel (0) target = $region37
    $region36: #{conv_vae_forward.1} parent=1 // pred_region
      _
    $region37: #{conv_vae_forward.1} parent=1 // pred_fallthru
      _
    // Predicated region
    $region38: #{conv_vae_forward.1} parent=1 // pred_check
      _
    $region39: #{conv_vae_forward.1} parent=1 // pred_check_branch
      %45 = sbr.rel (0) target = $region41
    $region40: #{conv_vae_forward.1} parent=1 // pred_region
      _
    $region41: #{conv_vae_forward.1} parent=1 // pred_fallthru
      _
    // Predicated region
    $region42: #{conv_vae_forward.1} parent=1 // pred_check
      _
    $region43: #{conv_vae_forward.1} parent=1 // pred_check_branch
      %47 = sbr.rel (0) target = $region45
    $region44: #{conv_vae_forward.1} parent=1 // pred_region
      _
    $region45: #{conv_vae_forward.1} parent=1 // pred_fallthru
      _
    // Predicated region
    $region46: #{conv_vae_forward.1} parent=1 // pred_check
      _
    $region47: #{conv_vae_forward.1} parent=1 // pred_check_branch
      %49 = sbr.rel (0) target = $region49
    $region48: #{conv_vae_forward.1} parent=1 // pred_region
      _
    $region49: #{conv_vae_forward.1} parent=1 // pred_fallthru
      _
    // Predicated region
    $region50: #{conv_vae_forward.1} parent=1 // pred_check
      _
    $region51: #{conv_vae_forward.1} parent=1 // pred_check_branch
      %51 = sbr.rel (0) target = $region53
    $region52: #{conv_vae_forward.1} parent=1 // pred_region
      _
    $region53: #{conv_vae_forward.1} parent=1 // pred_fallthru
      _
    // Predicated region
    $region54: #{conv_vae_forward.1} parent=1 // pred_check
      _
    $region55: #{conv_vae_forward.1} parent=1 // pred_check_branch
      %53 = sbr.rel (0) target = $region57
    $region56: #{conv_vae_forward.1} parent=1 // pred_region
      _
    $region57: #{conv_vae_forward.1} parent=1 // pred_fallthru
      _
    // Predicated region
    $region58: #{conv_vae_forward.1} parent=1 // pred_check
      _
    $region59: #{conv_vae_forward.1} parent=1 // pred_check_branch
      %55 = sbr.rel (0) target = $region61
    $region60: #{conv_vae_forward.1} parent=1 // pred_region
      _
    $region61: #{conv_vae_forward.1} parent=1 // pred_fallthru
      _
    // Predicated region
    $region62: #{conv_vae_forward.1} parent=1 // pred_check
      _
    $region63: #{conv_vae_forward.1} parent=1 // pred_check_branch
      %57 = sbr.rel (0) target = $region65
    $region64: #{conv_vae_forward.1} parent=1 // pred_region
      _
    $region65: #{conv_vae_forward.1} parent=1 // pred_fallthru
      _
    // Predicated region
    $region66: #{conv_vae_forward.1} parent=1 // pred_check
      _
    $region67: #{conv_vae_forward.1} parent=1 // pred_check_branch
      %59 = sbr.rel (0) target = $region69
    $region68: #{conv_vae_forward.1} parent=1 // pred_region
      _
    $region69: #{conv_vae_forward.1} parent=1 // pred_fallthru
      _
    // Predicated region
    $region70: #{conv_vae_forward.1} parent=1 // pred_check
      _
    $region71: #{conv_vae_forward.1} parent=1 // pred_check_branch
      %61 = sbr.rel (0) target = $region73
    $region72: #{conv_vae_forward.1} parent=1 // pred_region
      _
    $region73: #{conv_vae_forward.1} parent=1 // pred_fallthru
      _
    %v63 = vld [vmem:[%s0] sm:$0xff]
    %v64 = vld [vmem:[%s0 + $0x8] sm:$0xff]
    %v65 = vld [vmem:[%s0 + $0x10] sm:$0xff]
    %v66 = vld [vmem:[%s0 + $0x18] sm:$0xff]
    %v67 = vld [vmem:[%s0 + $0x20] sm:$0xff]
    %v68 = vld [vmem:[%s0 + $0x28] sm:$0xff]
    %v69 = vld [vmem:[%s0 + $0x30] sm:$0xff]
    %v70 = vpack.c.bf16 %v64, %v63
    %v71 = vpack.c.bf16 %v66, %v65
    %v72 = vpack.c.bf16 %v68, %v67
    %v73 = vpack.c.bf16 %v69, %v69
    %v74 = vld [vmem:[%s2] sm:$0xf]
    %v75 = vld [vmem:[%s2 + $0x4] sm:$0xf]
    %v76 = vld [vmem:[%s2 + $0x8] sm:$0xf]
    %v77 = vld [vmem:[%s2 + $0xc] sm:$0x1]
    %v82 = vunpack.c.l.b16 %v74
    %v83 = vunpack.c.l.b16 %v75
    %v84 = vunpack.c.l.b16 %v76
    %v85 = vunpack.c.l.b16 %v77
    %v86 = vpack.c.b16 %v83, %v82
    %v87 = vpack.c.b16 %v85, %v84
    %vm88 = vcmask 457728
    %v90 = vsel %vm88, %v86, 0
    %v93 = vsel %vm88, %v87, 0
    %vm95 = vcmask 1043456
    %v97 = vsel %vm95, %v73, 0
    %99 = vmatpush.bf16.msra.mxu0 0
    %100 = vmatpush.bf16.msra.mxu0 0
    %101 = vmatpush.bf16.msra.mxu0 0
    %102 = vmatpush.bf16.msra.mxu0 0
    %103 = vmatpush.bf16.msra.mxu0 %v97
    %104 = vmatpush.bf16.msra.mxu0 %v72
    %105 = vmatpush.bf16.msra.mxu0 %v71
    %106 = vmatpush.bf16.msra.mxu0 %v70
    %107 = vmatmul.bf16.gmra.mxu0 %v90
    %v108 = vpop.f32.mrf.mxu0
    %v109 = vadd.f32 0.0, %v108
    %v110 = vpop.f32.mrf.mxu0
    %v111 = vadd.f32 0.0, %v110
    %112 = vmatmul.bf16.gmra.mxu0 %v93
    %v113 = vpop.f32.mrf.mxu0
    %v114 = vadd.f32 0.0, %v113
    %v115 = vpop.f32.mrf.mxu0
    %v116 = vadd.f32 0.0, %v115
    %117 = vdwg.mxu0
    %v118 = vpack.c.bf16 %v111, %v109
    %v119 = vpack.c.bf16 %v116, %v114
    %v120 = vld [vmem:[%s3] sm:$0xff]
    %v121 = vld [vmem:[%s3 + $0x8] sm:$0xff]
    %v122 = vld [vmem:[%s3 + $0x10] sm:$0xff]
    %v123 = vld [vmem:[%s3 + $0x18] sm:$0xff]
    %v124 = vld [vmem:[%s3 + $0x20] sm:$0xff]
    %v125 = vld [vmem:[%s3 + $0x28] sm:$0xff]
    %v126 = vld [vmem:[%s3 + $0x30] sm:$0x33]
    %v127 = vld [vmem:[%s3 + $0x38] sm:$0x33]
    %s128 = scalar_lea.vmem %s2, 16
    %v129 = vld [vmem:[%s128] sm:$0xf]
    %v130 = vld [vmem:[%s128 + $0x4] sm:$0xf]
    %v131 = vld [vmem:[%s128 + $0x8] sm:$0xf]
    %v132 = vld [vmem:[%s128 + $0xc] sm:$0x1]
    %v137 = vunpack.c.l.b16 %v129
    %v138 = vunpack.c.l.b16 %v130
    %v139 = vunpack.c.l.b16 %v131
    %v140 = vunpack.c.l.b16 %v132
    %v141 = vpack.c.b16 %v138, %v137
    %v142 = vpack.c.b16 %v140, %v139
    %v144 = vsel %vm88, %v141, 0
    %v147 = vsel %vm88, %v142, 0
    %149 = vmatpush.bf16.msra.mxu0 0
    %150 = vmatpush.bf16.msra.mxu0 0
    %151 = vmatpush.bf16.msra.mxu0 0
    %152 = vmatpush.bf16.msra.mxu0 0
    %153 = vmatpush.bf16.msra.mxu0 %v97
    %154 = vmatpush.bf16.msra.mxu0 %v72
    %155 = vmatpush.bf16.msra.mxu0 %v71
    %156 = vmatpush.bf16.msra.mxu0 %v70
    %157 = vmatmul.bf16.gmra.mxu0 %v144
    %v158 = vpop.f32.mrf.mxu0
    %v159 = vadd.f32 0.0, %v158
    %v160 = vpop.f32.mrf.mxu0
    %v161 = vadd.f32 0.0, %v160
    %162 = vmatmul.bf16.gmra.mxu0 %v147
    %v163 = vpop.f32.mrf.mxu0
    %v164 = vadd.f32 0.0, %v163
    %v165 = vpop.f32.mrf.mxu0
    %v166 = vadd.f32 0.0, %v165
    %167 = vdwg.mxu0
    %v168 = vpack.c.bf16 %v161, %v159
    %v169 = vpack.c.bf16 %v166, %v164
    %s170 = scalar_lea.vmem %s3, 64
    %v171 = vld [vmem:[%s170] sm:$0xff]
    %v172 = vld [vmem:[%s170 + $0x8] sm:$0xff]
    %v173 = vld [vmem:[%s170 + $0x10] sm:$0xff]
    %v174 = vld [vmem:[%s170 + $0x18] sm:$0xff]
    %v175 = vld [vmem:[%s170 + $0x20] sm:$0xff]
    %v176 = vld [vmem:[%s170 + $0x28] sm:$0xff]
    %v177 = vld [vmem:[%s170 + $0x30] sm:$0x33]
    %v178 = vld [vmem:[%s170 + $0x38] sm:$0x33]
    %v187 = vunpack.c.l.b16 %v171
    %v188 = vunpack.c.h.b16 %v171
    %v189 = vunpack.c.l.b16 %v172
    %v190 = vunpack.c.h.b16 %v172
    %v191 = vunpack.c.l.b16 %v173
    %v192 = vunpack.c.h.b16 %v173
    %v193 = vunpack.c.l.b16 %v174
    %v194 = vunpack.c.h.b16 %v174
    %v195 = vunpack.c.l.b16 %v175
    %v196 = vunpack.c.h.b16 %v175
    %v197 = vunpack.c.l.b16 %v176
    %v198 = vunpack.c.h.b16 %v176
    %v199 = vunpack.c.l.b16 %v177
    %v200 = vunpack.c.h.b16 %v177
    %v201 = vunpack.c.l.b16 %v178
    %v202 = vunpack.c.h.b16 %v178
    %v203 = vpack.c.b16 %v191, %v187
    %v204 = vpack.c.b16 %v192, %v188
    %v205 = vpack.c.b16 %v193, %v189
    %v206 = vpack.c.b16 %v194, %v190
    %v207 = vpack.c.b16 %v199, %v195
    %v208 = vpack.c.b16 %v200, %v196
    %v209 = vpack.c.b16 %v201, %v197
    %v210 = vpack.c.b16 %v202, %v198
    %vm215 = vcmask 228352
    %v217 = vsel %vm215, %v168, 0
    %v220 = vsel %vm215, %v169, 0
    %vm222 = vcmask 1045504
    %v224 = vsel %vm222, %v207, 0
    %v227 = vsel %vm222, %v208, 0
    %v230 = vsel %vm222, %v209, 0
    %v233 = vsel %vm222, %v210, 0
    %235 = vmatpush.bf16.msra.mxu0 0
    %236 = vmatpush.bf16.msra.mxu0 0
    %237 = vmatpush.bf16.msra.mxu0 0
    %238 = vmatpush.bf16.msra.mxu0 0
    %239 = vmatpush.bf16.msra.mxu0 0
    %240 = vmatpush.bf16.msra.mxu0 0
    %241 = vmatpush.bf16.msra.mxu0 %v224
    %242 = vmatpush.bf16.msra.mxu0 %v203
    %243 = vmatmul.bf16.gmra.mxu0 %v217
    %v244 = vpop.f32.mrf.mxu0
    %v245 = vadd.f32 0.0, %v244
    %v246 = vpop.f32.mrf.mxu0
    %v247 = vadd.f32 0.0, %v246
    %248 = vmatmul.bf16.gmra.mxu0 %v220
    %v249 = vpop.f32.mrf.mxu0
    %v250 = vadd.f32 0.0, %v249
    %v251 = vpop.f32.mrf.mxu0
    %v252 = vadd.f32 0.0, %v251
    %253 = vdwg.mxu0
    %254 = vmatpush.bf16.msra.mxu0 0
    %255 = vmatpush.bf16.msra.mxu0 0
    %256 = vmatpush.bf16.msra.mxu0 0
    %257 = vmatpush.bf16.msra.mxu0 0
    %258 = vmatpush.bf16.msra.mxu0 0
    %259 = vmatpush.bf16.msra.mxu0 0
    %260 = vmatpush.bf16.msra.mxu0 %v227
    %261 = vmatpush.bf16.msra.mxu0 %v204
    %262 = vmatmul.bf16.gmra.mxu0 %v217
    %v263 = vpop.f32.mrf.mxu0
    %v264 = vadd.f32 0.0, %v263
    %v265 = vpop.f32.mrf.mxu0
    %v266 = vadd.f32 0.0, %v265
    %267 = vmatmul.bf16.gmra.mxu0 %v220
    %v268 = vpop.f32.mrf.mxu0
    %v269 = vadd.f32 0.0, %v268
    %v270 = vpop.f32.mrf.mxu0
    %v271 = vadd.f32 0.0, %v270
    %272 = vdwg.mxu0
    %273 = vmatpush.bf16.msra.mxu0 0
    %274 = vmatpush.bf16.msra.mxu0 0
    %275 = vmatpush.bf16.msra.mxu0 0
    %276 = vmatpush.bf16.msra.mxu0 0
    %277 = vmatpush.bf16.msra.mxu0 0
    %278 = vmatpush.bf16.msra.mxu0 0
    %279 = vmatpush.bf16.msra.mxu0 %v230
    %280 = vmatpush.bf16.msra.mxu0 %v205
    %281 = vmatmul.bf16.gmra.mxu0 %v217
    %v282 = vpop.f32.mrf.mxu0
    %v283 = vadd.f32 0.0, %v282
    %v284 = vpop.f32.mrf.mxu0
    %v285 = vadd.f32 0.0, %v284
    %286 = vmatmul.bf16.gmra.mxu0 %v220
    %v287 = vpop.f32.mrf.mxu0
    %v288 = vadd.f32 0.0, %v287
    %v289 = vpop.f32.mrf.mxu0
    %v290 = vadd.f32 0.0, %v289
    %291 = vdwg.mxu0
    %292 = vmatpush.bf16.msra.mxu0 0
    %293 = vmatpush.bf16.msra.mxu0 0
    %294 = vmatpush.bf16.msra.mxu0 0
    %295 = vmatpush.bf16.msra.mxu0 0
    %296 = vmatpush.bf16.msra.mxu0 0
    %297 = vmatpush.bf16.msra.mxu0 0
    %298 = vmatpush.bf16.msra.mxu0 %v233
    %299 = vmatpush.bf16.msra.mxu0 %v206
    %300 = vmatmul.bf16.gmra.mxu0 %v217
    %v301 = vpop.f32.mrf.mxu0
    %v302 = vadd.f32 0.0, %v301
    %v303 = vpop.f32.mrf.mxu0
    %v304 = vadd.f32 0.0, %v303
    %305 = vmatmul.bf16.gmra.mxu0 %v220
    %v306 = vpop.f32.mrf.mxu0
    %v307 = vadd.f32 0.0, %v306
    %v308 = vpop.f32.mrf.mxu0
    %v309 = vadd.f32 0.0, %v308
    %310 = vdwg.mxu0
    %v319 = vunpack.c.l.b16 %v120
    %v320 = vunpack.c.h.b16 %v120
    %v321 = vunpack.c.l.b16 %v121
    %v322 = vunpack.c.h.b16 %v121
    %v323 = vunpack.c.l.b16 %v122
    %v324 = vunpack.c.h.b16 %v122
    %v325 = vunpack.c.l.b16 %v123
    %v326 = vunpack.c.h.b16 %v123
    %v327 = vunpack.c.l.b16 %v124
    %v328 = vunpack.c.h.b16 %v124
    %v329 = vunpack.c.l.b16 %v125
    %v330 = vunpack.c.h.b16 %v125
    %v331 = vunpack.c.l.b16 %v126
    %v332 = vunpack.c.h.b16 %v126
    %v333 = vunpack.c.l.b16 %v127
    %v334 = vunpack.c.h.b16 %v127
    %v335 = vpack.c.b16 %v323, %v319
    %v336 = vpack.c.b16 %v324, %v320
    %v337 = vpack.c.b16 %v325, %v321
    %v338 = vpack.c.b16 %v326, %v322
    %v339 = vpack.c.b16 %v331, %v327
    %v340 = vpack.c.b16 %v332, %v328
    %v341 = vpack.c.b16 %v333, %v329
    %v342 = vpack.c.b16 %v334, %v330
    %v348 = vsel %vm215, %v118, 0
    %v351 = vsel %vm215, %v119, 0
    %v354 = vsel %vm222, %v339, 0
    %v357 = vsel %vm222, %v340, 0
    %v360 = vsel %vm222, %v341, 0
    %v363 = vsel %vm222, %v342, 0
    %365 = vmatpush.bf16.msra.mxu0 0
    %366 = vmatpush.bf16.msra.mxu0 0
    %367 = vmatpush.bf16.msra.mxu0 0
    %368 = vmatpush.bf16.msra.mxu0 0
    %369 = vmatpush.bf16.msra.mxu0 0
    %370 = vmatpush.bf16.msra.mxu0 0
    %371 = vmatpush.bf16.msra.mxu0 %v354
    %372 = vmatpush.bf16.msra.mxu0 %v335
    %373 = vmatmul.bf16.gmra.mxu0 %v348
    %v374 = vpop.f32.mrf.mxu0
    %v375 = vadd.f32 %v245, %v374
    %v376 = vpop.f32.mrf.mxu0
    %v377 = vadd.f32 %v247, %v376
    %378 = vmatmul.bf16.gmra.mxu0 %v351
    %v379 = vpop.f32.mrf.mxu0
    %v380 = vadd.f32 %v250, %v379
    %v381 = vpop.f32.mrf.mxu0
    %v382 = vadd.f32 %v252, %v381
    %383 = vdwg.mxu0
    %384 = vmatpush.bf16.msra.mxu0 0
    %385 = vmatpush.bf16.msra.mxu0 0
    %386 = vmatpush.bf16.msra.mxu0 0
    %387 = vmatpush.bf16.msra.mxu0 0
    %388 = vmatpush.bf16.msra.mxu0 0
    %389 = vmatpush.bf16.msra.mxu0 0
    %390 = vmatpush.bf16.msra.mxu0 %v357
    %391 = vmatpush.bf16.msra.mxu0 %v336
    %392 = vmatmul.bf16.gmra.mxu0 %v348
    %v393 = vpop.f32.mrf.mxu0
    %v394 = vadd.f32 %v264, %v393
    %v395 = vpop.f32.mrf.mxu0
    %v396 = vadd.f32 %v266, %v395
    %397 = vmatmul.bf16.gmra.mxu0 %v351
    %v398 = vpop.f32.mrf.mxu0
    %v399 = vadd.f32 %v269, %v398
    %v400 = vpop.f32.mrf.mxu0
    %v401 = vadd.f32 %v271, %v400
    %402 = vdwg.mxu0
    %403 = vmatpush.bf16.msra.mxu0 0
    %404 = vmatpush.bf16.msra.mxu0 0
    %405 = vmatpush.bf16.msra.mxu0 0
    %406 = vmatpush.bf16.msra.mxu0 0
    %407 = vmatpush.bf16.msra.mxu0 0
    %408 = vmatpush.bf16.msra.mxu0 0
    %409 = vmatpush.bf16.msra.mxu0 %v360
    %410 = vmatpush.bf16.msra.mxu0 %v337
    %411 = vmatmul.bf16.gmra.mxu0 %v348
    %v412 = vpop.f32.mrf.mxu0
    %v413 = vadd.f32 %v283, %v412
    %v414 = vpop.f32.mrf.mxu0
    %v415 = vadd.f32 %v285, %v414
    %416 = vmatmul.bf16.gmra.mxu0 %v351
    %v417 = vpop.f32.mrf.mxu0
    %v418 = vadd.f32 %v288, %v417
    %v419 = vpop.f32.mrf.mxu0
    %v420 = vadd.f32 %v290, %v419
    %421 = vdwg.mxu0
    %422 = vmatpush.bf16.msra.mxu0 0
    %423 = vmatpush.bf16.msra.mxu0 0
    %424 = vmatpush.bf16.msra.mxu0 0
    %425 = vmatpush.bf16.msra.mxu0 0
    %426 = vmatpush.bf16.msra.mxu0 0
    %427 = vmatpush.bf16.msra.mxu0 0
    %428 = vmatpush.bf16.msra.mxu0 %v363
    %429 = vmatpush.bf16.msra.mxu0 %v338
    %430 = vmatmul.bf16.gmra.mxu0 %v348
    %v431 = vpop.f32.mrf.mxu0
    %v432 = vadd.f32 %v302, %v431
    %v433 = vpop.f32.mrf.mxu0
    %v434 = vadd.f32 %v304, %v433
    %435 = vmatmul.bf16.gmra.mxu0 %v351
    %v436 = vpop.f32.mrf.mxu0
    %v437 = vadd.f32 %v307, %v436
    %v438 = vpop.f32.mrf.mxu0
    %v439 = vadd.f32 %v309, %v438
    %440 = vdwg.mxu0
    %s441 = scalar_lea.vmem %s2, 32
    %v442 = vld [vmem:[%s441] sm:$0xf]
    %v443 = vld [vmem:[%s441 + $0x4] sm:$0xf]
    %v444 = vld [vmem:[%s441 + $0x8] sm:$0xf]
    %v445 = vld [vmem:[%s441 + $0xc] sm:$0x1]
    %v450 = vunpack.c.l.b16 %v442
    %v451 = vunpack.c.l.b16 %v443
    %v452 = vunpack.c.l.b16 %v444
    %v453 = vunpack.c.l.b16 %v445
    %v454 = vpack.c.b16 %v451, %v450
    %v455 = vpack.c.b16 %v453, %v452
    %v457 = vsel %vm88, %v454, 0
    %v460 = vsel %vm88, %v455, 0
    %462 = vmatpush.bf16.msra.mxu0 0
    %463 = vmatpush.bf16.msra.mxu0 0
    %464 = vmatpush.bf16.msra.mxu0 0
    %465 = vmatpush.bf16.msra.mxu0 0
    %466 = vmatpush.bf16.msra.mxu0 %v97
    %467 = vmatpush.bf16.msra.mxu0 %v72
    %468 = vmatpush.bf16.msra.mxu0 %v71
    %469 = vmatpush.bf16.msra.mxu0 %v70
    %470 = vmatmul.bf16.gmra.mxu0 %v457
    %v471 = vpop.f32.mrf.mxu0
    %v472 = vadd.f32 0.0, %v471
    %v473 = vpop.f32.mrf.mxu0
    %v474 = vadd.f32 0.0, %v473
    %475 = vmatmul.bf16.gmra.mxu0 %v460
    %v476 = vpop.f32.mrf.mxu0
    %v477 = vadd.f32 0.0, %v476
    %v478 = vpop.f32.mrf.mxu0
    %v479 = vadd.f32 0.0, %v478
    %480 = vdwg.mxu0
    %v481 = vpack.c.bf16 %v474, %v472
    %v482 = vpack.c.bf16 %v479, %v477
    %s483 = scalar_lea.vmem %s3, 128
    %v484 = vld [vmem:[%s483] sm:$0xff]
    %v485 = vld [vmem:[%s483 + $0x8] sm:$0xff]
    %v486 = vld [vmem:[%s483 + $0x10] sm:$0xff]
    %v487 = vld [vmem:[%s483 + $0x18] sm:$0xff]
    %v488 = vld [vmem:[%s483 + $0x20] sm:$0xff]
    %v489 = vld [vmem:[%s483 + $0x28] sm:$0xff]
    %v490 = vld [vmem:[%s483 + $0x30] sm:$0x33]
    %v491 = vld [vmem:[%s483 + $0x38] sm:$0x33]
    %v500 = vunpack.c.l.b16 %v484
    %v501 = vunpack.c.h.b16 %v484
    %v502 = vunpack.c.l.b16 %v485
    %v503 = vunpack.c.h.b16 %v485
    %v504 = vunpack.c.l.b16 %v486
    %v505 = vunpack.c.h.b16 %v486
    %v506 = vunpack.c.l.b16 %v487
    %v507 = vunpack.c.h.b16 %v487
    %v508 = vunpack.c.l.b16 %v488
    %v509 = vunpack.c.h.b16 %v488
    %v510 = vunpack.c.l.b16 %v489
    %v511 = vunpack.c.h.b16 %v489
    %v512 = vunpack.c.l.b16 %v490
    %v513 = vunpack.c.h.b16 %v490
    %v514 = vunpack.c.l.b16 %v491
    %v515 = vunpack.c.h.b16 %v491
    %v516 = vpack.c.b16 %v504, %v500
    %v517 = vpack.c.b16 %v505, %v501
    %v518 = vpack.c.b16 %v506, %v502
    %v519 = vpack.c.b16 %v507, %v503
    %v520 = vpack.c.b16 %v512, %v508
    %v521 = vpack.c.b16 %v513, %v509
    %v522 = vpack.c.b16 %v514, %v510
    %v523 = vpack.c.b16 %v515, %v511
    %v529 = vsel %vm215, %v481, 0
    %v532 = vsel %vm215, %v482, 0
    %v535 = vsel %vm222, %v520, 0
    %v538 = vsel %vm222, %v521, 0
    %v541 = vsel %vm222, %v522, 0
    %v544 = vsel %vm222, %v523, 0
    %546 = vmatpush.bf16.msra.mxu0 0
    %547 = vmatpush.bf16.msra.mxu0 0
    %548 = vmatpush.bf16.msra.mxu0 0
    %549 = vmatpush.bf16.msra.mxu0 0
    %550 = vmatpush.bf16.msra.mxu0 0
    %551 = vmatpush.bf16.msra.mxu0 0
    %552 = vmatpush.bf16.msra.mxu0 %v535
    %553 = vmatpush.bf16.msra.mxu0 %v516
    %554 = vmatmul.bf16.gmra.mxu0 %v529
    %v555 = vpop.f32.mrf.mxu0
    %v556 = vadd.f32 0.0, %v555
    %v557 = vpop.f32.mrf.mxu0
    %v558 = vadd.f32 0.0, %v557
    %559 = vmatmul.bf16.gmra.mxu0 %v532
    %v560 = vpop.f32.mrf.mxu0
    %v561 = vadd.f32 0.0, %v560
    %v562 = vpop.f32.mrf.mxu0
    %v563 = vadd.f32 0.0, %v562
    %564 = vdwg.mxu0
    %565 = vmatpush.bf16.msra.mxu0 0
    %566 = vmatpush.bf16.msra.mxu0 0
    %567 = vmatpush.bf16.msra.mxu0 0
    %568 = vmatpush.bf16.msra.mxu0 0
    %569 = vmatpush.bf16.msra.mxu0 0
    %570 = vmatpush.bf16.msra.mxu0 0
    %571 = vmatpush.bf16.msra.mxu0 %v538
    %572 = vmatpush.bf16.msra.mxu0 %v517
    %573 = vmatmul.bf16.gmra.mxu0 %v529
    %v574 = vpop.f32.mrf.mxu0
    %v575 = vadd.f32 0.0, %v574
    %v576 = vpop.f32.mrf.mxu0
    %v577 = vadd.f32 0.0, %v576
    %578 = vmatmul.bf16.gmra.mxu0 %v532
    %v579 = vpop.f32.mrf.mxu0
    %v580 = vadd.f32 0.0, %v579
    %v581 = vpop.f32.mrf.mxu0
    %v582 = vadd.f32 0.0, %v581
    %583 = vdwg.mxu0
    %584 = vmatpush.bf16.msra.mxu0 0
    %585 = vmatpush.bf16.msra.mxu0 0
    %586 = vmatpush.bf16.msra.mxu0 0
    %587 = vmatpush.bf16.msra.mxu0 0
    %588 = vmatpush.bf16.msra.mxu0 0
    %589 = vmatpush.bf16.msra.mxu0 0
    %590 = vmatpush.bf16.msra.mxu0 %v541
    %591 = vmatpush.bf16.msra.mxu0 %v518
    %592 = vmatmul.bf16.gmra.mxu0 %v529
    %v593 = vpop.f32.mrf.mxu0
    %v594 = vadd.f32 0.0, %v593
    %v595 = vpop.f32.mrf.mxu0
    %v596 = vadd.f32 0.0, %v595
    %597 = vmatmul.bf16.gmra.mxu0 %v532
    %v598 = vpop.f32.mrf.mxu0
    %v599 = vadd.f32 0.0, %v598
    %v600 = vpop.f32.mrf.mxu0
    %v601 = vadd.f32 0.0, %v600
    %602 = vdwg.mxu0
    %603 = vmatpush.bf16.msra.mxu0 0
    %604 = vmatpush.bf16.msra.mxu0 0
    %605 = vmatpush.bf16.msra.mxu0 0
    %606 = vmatpush.bf16.msra.mxu0 0
    %607 = vmatpush.bf16.msra.mxu0 0
    %608 = vmatpush.bf16.msra.mxu0 0
    %609 = vmatpush.bf16.msra.mxu0 %v544
    %610 = vmatpush.bf16.msra.mxu0 %v519
    %611 = vmatmul.bf16.gmra.mxu0 %v529
    %v612 = vpop.f32.mrf.mxu0
    %v613 = vadd.f32 0.0, %v612
    %v614 = vpop.f32.mrf.mxu0
    %v615 = vadd.f32 0.0, %v614
    %616 = vmatmul.bf16.gmra.mxu0 %v532
    %v617 = vpop.f32.mrf.mxu0
    %v618 = vadd.f32 0.0, %v617
    %v619 = vpop.f32.mrf.mxu0
    %v620 = vadd.f32 0.0, %v619
    %621 = vdwg.mxu0
    %v622 = vadd.f32 %v375, %v556
    %v623 = vadd.f32 %v394, %v575
    %v624 = vadd.f32 %v413, %v594
    %v625 = vadd.f32 %v432, %v613
    %v626 = vadd.f32 %v377, %v558
    %v627 = vadd.f32 %v396, %v577
    %v628 = vadd.f32 %v415, %v596
    %v629 = vadd.f32 %v434, %v615
    %v630 = vadd.f32 %v380, %v561
    %v631 = vadd.f32 %v399, %v580
    %v632 = vadd.f32 %v418, %v599
    %v633 = vadd.f32 %v437, %v618
    %v634 = vadd.f32 %v382, %v563
    %v635 = vadd.f32 %v401, %v582
    %v636 = vadd.f32 %v420, %v601
    %v637 = vadd.f32 %v439, %v620
    %s638 = scalar_lea.vmem %s2, 48
    %v639 = vld [vmem:[%s638] sm:$0xf]
    %v640 = vld [vmem:[%s638 + $0x4] sm:$0xf]
    %v641 = vld [vmem:[%s638 + $0x8] sm:$0xf]
    %v642 = vld [vmem:[%s638 + $0xc] sm:$0x1]
    %v647 = vunpack.c.l.b16 %v639
    %v648 = vunpack.c.l.b16 %v640
    %v649 = vunpack.c.l.b16 %v641
    %v650 = vunpack.c.l.b16 %v642
    %v651 = vpack.c.b16 %v648, %v647
    %v652 = vpack.c.b16 %v650, %v649
    %v654 = vsel %vm88, %v651, 0
    %v657 = vsel %vm88, %v652, 0
    %659 = vmatpush.bf16.msra.mxu0 0
    %660 = vmatpush.bf16.msra.mxu0 0
    %661 = vmatpush.bf16.msra.mxu0 0
    %662 = vmatpush.bf16.msra.mxu0 0
    %663 = vmatpush.bf16.msra.mxu0 %v97
    %664 = vmatpush.bf16.msra.mxu0 %v72
    %665 = vmatpush.bf16.msra.mxu0 %v71
    %666 = vmatpush.bf16.msra.mxu0 %v70
    %667 = vmatmul.bf16.gmra.mxu0 %v654
    %v668 = vpop.f32.mrf.mxu0
    %v669 = vadd.f32 0.0, %v668
    %v670 = vpop.f32.mrf.mxu0
    %v671 = vadd.f32 0.0, %v670
    %672 = vmatmul.bf16.gmra.mxu0 %v657
    %v673 = vpop.f32.mrf.mxu0
    %v674 = vadd.f32 0.0, %v673
    %v675 = vpop.f32.mrf.mxu0
    %v676 = vadd.f32 0.0, %v675
    %677 = vdwg.mxu0
    %v678 = vpack.c.bf16 %v671, %v669
    %v679 = vpack.c.bf16 %v676, %v674
    %s680 = scalar_lea.vmem %s3, 192
    %v681 = vld [vmem:[%s680] sm:$0xff]
    %v682 = vld [vmem:[%s680 + $0x8] sm:$0xff]
    %v683 = vld [vmem:[%s680 + $0x10] sm:$0xff]
    %v684 = vld [vmem:[%s680 + $0x18] sm:$0xff]
    %v685 = vld [vmem:[%s680 + $0x20] sm:$0xff]
    %v686 = vld [vmem:[%s680 + $0x28] sm:$0xff]
    %v687 = vld [vmem:[%s680 + $0x30] sm:$0x33]
    %v688 = vld [vmem:[%s680 + $0x38] sm:$0x33]
    %v697 = vunpack.c.l.b16 %v681
    %v698 = vunpack.c.h.b16 %v681
    %v699 = vunpack.c.l.b16 %v682
    %v700 = vunpack.c.h.b16 %v682
    %v701 = vunpack.c.l.b16 %v683
    %v702 = vunpack.c.h.b16 %v683
    %v703 = vunpack.c.l.b16 %v684
    %v704 = vunpack.c.h.b16 %v684
    %v705 = vunpack.c.l.b16 %v685
    %v706 = vunpack.c.h.b16 %v685
    %v707 = vunpack.c.l.b16 %v686
    %v708 = vunpack.c.h.b16 %v686
    %v709 = vunpack.c.l.b16 %v687
    %v710 = vunpack.c.h.b16 %v687
    %v711 = vunpack.c.l.b16 %v688
    %v712 = vunpack.c.h.b16 %v688
    %v713 = vpack.c.b16 %v701, %v697
    %v714 = vpack.c.b16 %v702, %v698
    %v715 = vpack.c.b16 %v703, %v699
    %v716 = vpack.c.b16 %v704, %v700
    %v717 = vpack.c.b16 %v709, %v705
    %v718 = vpack.c.b16 %v710, %v706
    %v719 = vpack.c.b16 %v711, %v707
    %v720 = vpack.c.b16 %v712, %v708
    %v726 = vsel %vm215, %v678, 0
    %v729 = vsel %vm215, %v679, 0
    %v732 = vsel %vm222, %v717, 0
    %v735 = vsel %vm222, %v718, 0
    %v738 = vsel %vm222, %v719, 0
    %v741 = vsel %vm222, %v720, 0
    %743 = vmatpush.bf16.msra.mxu0 0
    %744 = vmatpush.bf16.msra.mxu0 0
    %745 = vmatpush.bf16.msra.mxu0 0
    %746 = vmatpush.bf16.msra.mxu0 0
    %747 = vmatpush.bf16.msra.mxu0 0
    %748 = vmatpush.bf16.msra.mxu0 0
    %749 = vmatpush.bf16.msra.mxu0 %v732
    %750 = vmatpush.bf16.msra.mxu0 %v713
    %751 = vmatmul.bf16.gmra.mxu0 %v726
    %v752 = vpop.f32.mrf.mxu0
    %v753 = vadd.f32 0.0, %v752
    %v754 = vpop.f32.mrf.mxu0
    %v755 = vadd.f32 0.0, %v754
    %756 = vmatmul.bf16.gmra.mxu0 %v729
    %v757 = vpop.f32.mrf.mxu0
    %v758 = vadd.f32 0.0, %v757
    %v759 = vpop.f32.mrf.mxu0
    %v760 = vadd.f32 0.0, %v759
    %761 = vdwg.mxu0
    %762 = vmatpush.bf16.msra.mxu0 0
    %763 = vmatpush.bf16.msra.mxu0 0
    %764 = vmatpush.bf16.msra.mxu0 0
    %765 = vmatpush.bf16.msra.mxu0 0
    %766 = vmatpush.bf16.msra.mxu0 0
    %767 = vmatpush.bf16.msra.mxu0 0
    %768 = vmatpush.bf16.msra.mxu0 %v735
    %769 = vmatpush.bf16.msra.mxu0 %v714
    %770 = vmatmul.bf16.gmra.mxu0 %v726
    %v771 = vpop.f32.mrf.mxu0
    %v772 = vadd.f32 0.0, %v771
    %v773 = vpop.f32.mrf.mxu0
    %v774 = vadd.f32 0.0, %v773
    %775 = vmatmul.bf16.gmra.mxu0 %v729
    %v776 = vpop.f32.mrf.mxu0
    %v777 = vadd.f32 0.0, %v776
    %v778 = vpop.f32.mrf.mxu0
    %v779 = vadd.f32 0.0, %v778
    %780 = vdwg.mxu0
    %781 = vmatpush.bf16.msra.mxu0 0
    %782 = vmatpush.bf16.msra.mxu0 0
    %783 = vmatpush.bf16.msra.mxu0 0
    %784 = vmatpush.bf16.msra.mxu0 0
    %785 = vmatpush.bf16.msra.mxu0 0
    %786 = vmatpush.bf16.msra.mxu0 0
    %787 = vmatpush.bf16.msra.mxu0 %v738
    %788 = vmatpush.bf16.msra.mxu0 %v715
    %789 = vmatmul.bf16.gmra.mxu0 %v726
    %v790 = vpop.f32.mrf.mxu0
    %v791 = vadd.f32 0.0, %v790
    %v792 = vpop.f32.mrf.mxu0
    %v793 = vadd.f32 0.0, %v792
    %794 = vmatmul.bf16.gmra.mxu0 %v729
    %v795 = vpop.f32.mrf.mxu0
    %v796 = vadd.f32 0.0, %v795
    %v797 = vpop.f32.mrf.mxu0
    %v798 = vadd.f32 0.0, %v797
    %799 = vdwg.mxu0
    %800 = vmatpush.bf16.msra.mxu0 0
    %801 = vmatpush.bf16.msra.mxu0 0
    %802 = vmatpush.bf16.msra.mxu0 0
    %803 = vmatpush.bf16.msra.mxu0 0
    %804 = vmatpush.bf16.msra.mxu0 0
    %805 = vmatpush.bf16.msra.mxu0 0
    %806 = vmatpush.bf16.msra.mxu0 %v741
    %807 = vmatpush.bf16.msra.mxu0 %v716
    %808 = vmatmul.bf16.gmra.mxu0 %v726
    %v809 = vpop.f32.mrf.mxu0
    %v810 = vadd.f32 0.0, %v809
    %v811 = vpop.f32.mrf.mxu0
    %v812 = vadd.f32 0.0, %v811
    %813 = vmatmul.bf16.gmra.mxu0 %v729
    %v814 = vpop.f32.mrf.mxu0
    %v815 = vadd.f32 0.0, %v814
    %v816 = vpop.f32.mrf.mxu0
    %v817 = vadd.f32 0.0, %v816
    %818 = vdwg.mxu0
    %v819 = vadd.f32 %v622, %v753
    %v820 = vadd.f32 %v623, %v772
    %v821 = vadd.f32 %v624, %v791
    %v822 = vadd.f32 %v625, %v810
    %v823 = vadd.f32 %v626, %v755
    %v824 = vadd.f32 %v627, %v774
    %v825 = vadd.f32 %v628, %v793
    %v826 = vadd.f32 %v629, %v812
    %v827 = vadd.f32 %v630, %v758
    %v828 = vadd.f32 %v631, %v777
    %v829 = vadd.f32 %v632, %v796
    %v830 = vadd.f32 %v633, %v815
    %v831 = vadd.f32 %v634, %v760
    %v832 = vadd.f32 %v635, %v779
    %v833 = vadd.f32 %v636, %v798
    %v834 = vadd.f32 %v637, %v817
    %v835 = vld [vmem:[%s4] sm:$0xf]
    %v837 = vperm.slane %v835, 0
    %v838 = vperm.slane %v835, 1
    %v839 = vperm.slane %v835, 2
    %v840 = vperm.slane %v835, 3
    %v845 = vadd.f32 %v819, %v837
    %v846 = vadd.f32 %v820, %v838
    %v847 = vadd.f32 %v821, %v839
    %v848 = vadd.f32 %v822, %v840
    %v849 = vadd.f32 %v823, %v837
    %v850 = vadd.f32 %v824, %v838
    %v851 = vadd.f32 %v825, %v839
    %v852 = vadd.f32 %v826, %v840
    %v853 = vadd.f32 %v827, %v837
    %v854 = vadd.f32 %v828, %v838
    %v855 = vadd.f32 %v829, %v839
    %v856 = vadd.f32 %v830, %v840
    %v857 = vadd.f32 %v831, %v837
    %v858 = vadd.f32 %v832, %v838
    %v859 = vadd.f32 %v833, %v839
    %v860 = vadd.f32 %v834, %v840
    %v861 = vmax.f32 %v845, 0.0
    %v862 = vmax.f32 %v846, 0.0
    %v863 = vmax.f32 %v847, 0.0
    %v864 = vmax.f32 %v848, 0.0
    %v865 = vmax.f32 %v849, 0.0
    %v866 = vmax.f32 %v850, 0.0
    %v867 = vmax.f32 %v851, 0.0
    %v868 = vmax.f32 %v852, 0.0
    %v869 = vmax.f32 %v853, 0.0
    %v870 = vmax.f32 %v854, 0.0
    %v871 = vmax.f32 %v855, 0.0
    %v872 = vmax.f32 %v856, 0.0
    %v873 = vmax.f32 %v857, 0.0
    %v874 = vmax.f32 %v858, 0.0
    %v875 = vmax.f32 %v859, 0.0
    %v876 = vmax.f32 %v860, 0.0
    %v877 = vpack.c.bf16 %v865, %v861
    %v878 = vpack.c.bf16 %v866, %v862
    %v879 = vpack.c.bf16 %v867, %v863
    %v880 = vpack.c.bf16 %v868, %v864
    %v881 = vpack.c.bf16 %v873, %v869
    %v882 = vpack.c.bf16 %v874, %v870
    %v883 = vpack.c.bf16 %v875, %v871
    %v884 = vpack.c.bf16 %v876, %v872
    %v885 = vld [vmem:[%s5] sm:$0xf]
    %v886 = vld [vmem:[%s5 + $0x4] sm:$0x1]
    %v889 = vunpack.c.l.b16 %v885
    %v890 = vunpack.c.l.b16 %v886
    %v891 = vpack.c.b16 %v890, %v889
    %vm892 = vcmask 211968
    %v894 = vsel %vm892, %v891, 0
    %vm896 = vcmask 1044480
    %v898 = vsel %vm896, %v881, 0
    %v901 = vsel %vm896, %v882, 0
    %v904 = vsel %vm896, %v883, 0
    %v907 = vsel %vm896, %v884, 0
    %909 = vmatpush.bf16.msra.mxu0 0
    %910 = vmatpush.bf16.msra.mxu0 0
    %911 = vmatpush.bf16.msra.mxu0 0
    %912 = vmatpush.bf16.msra.mxu0 0
    %913 = vmatpush.bf16.msra.mxu0 0
    %914 = vmatpush.bf16.msra.mxu0 0
    %915 = vmatpush.bf16.msra.mxu0 %v898
    %916 = vmatpush.bf16.msra.mxu0 %v877
    %917 = vmatmul.bf16.gmra.mxu0 %v894
    %v918 = vpop.f32.mrf.mxu0
    %v919 = vadd.f32 0.0, %v918
    %v920 = vpop.f32.mrf.mxu0
    %v921 = vadd.f32 0.0, %v920
    %922 = vdwg.mxu0
    %923 = vmatpush.bf16.msra.mxu0 0
    %924 = vmatpush.bf16.msra.mxu0 0
    %925 = vmatpush.bf16.msra.mxu0 0
    %926 = vmatpush.bf16.msra.mxu0 0
    %927 = vmatpush.bf16.msra.mxu0 0
    %928 = vmatpush.bf16.msra.mxu0 0
    %929 = vmatpush.bf16.msra.mxu0 %v901
    %930 = vmatpush.bf16.msra.mxu0 %v878
    %931 = vmatmul.bf16.gmra.mxu0 %v894
    %v932 = vpop.f32.mrf.mxu0
    %v933 = vadd.f32 0.0, %v932
    %v934 = vpop.f32.mrf.mxu0
    %v935 = vadd.f32 0.0, %v934
    %936 = vdwg.mxu0
    %937 = vmatpush.bf16.msra.mxu0 0
    %938 = vmatpush.bf16.msra.mxu0 0
    %939 = vmatpush.bf16.msra.mxu0 0
    %940 = vmatpush.bf16.msra.mxu0 0
    %941 = vmatpush.bf16.msra.mxu0 0
    %942 = vmatpush.bf16.msra.mxu0 0
    %943 = vmatpush.bf16.msra.mxu0 %v904
    %944 = vmatpush.bf16.msra.mxu0 %v879
    %945 = vmatmul.bf16.gmra.mxu0 %v894
    %v946 = vpop.f32.mrf.mxu0
    %v947 = vadd.f32 0.0, %v946
    %v948 = vpop.f32.mrf.mxu0
    %v949 = vadd.f32 0.0, %v948
    %950 = vdwg.mxu0
    %951 = vmatpush.bf16.msra.mxu0 0
    %952 = vmatpush.bf16.msra.mxu0 0
    %953 = vmatpush.bf16.msra.mxu0 0
    %954 = vmatpush.bf16.msra.mxu0 0
    %955 = vmatpush.bf16.msra.mxu0 0
    %956 = vmatpush.bf16.msra.mxu0 0
    %957 = vmatpush.bf16.msra.mxu0 %v907
    %958 = vmatpush.bf16.msra.mxu0 %v880
    %959 = vmatmul.bf16.gmra.mxu0 %v894
    %v960 = vpop.f32.mrf.mxu0
    %v961 = vadd.f32 0.0, %v960
    %v962 = vpop.f32.mrf.mxu0
    %v963 = vadd.f32 0.0, %v962
    %964 = vdwg.mxu0
    %v965 = vpack.c.bf16 %v921, %v919
    %v966 = vpack.c.bf16 %v935, %v933
    %v967 = vpack.c.bf16 %v949, %v947
    %v968 = vpack.c.bf16 %v963, %v961
    %v969 = vld [vmem:[%s6] sm:$0xff]
    %v970 = vld [vmem:[%s6 + $0x8] sm:$0xf]
    %v971 = vld [vmem:[%s6 + $0xc] sm:$0xff]
    %v972 = vld [vmem:[%s6 + $0x14] sm:$0xf]
    %v973 = vld [vmem:[%s6 + $0x18] sm:$0xff]
    %v974 = vld [vmem:[%s6 + $0x20] sm:$0xf]
    %v975 = vld [vmem:[%s6 + $0x24] sm:$0xff]
    %v976 = vld [vmem:[%s6 + $0x2c] sm:$0xf]
    %v977 = vld [vmem:[%s6 + $0x30] sm:$0xff]
    %v978 = vld [vmem:[%s6 + $0x38] sm:$0xf]
    %v979 = vld [vmem:[%s6 + $0x3c] sm:$0xff]
    %v980 = vld [vmem:[%s6 + $0x44] sm:$0xf]
    %v981 = vld [vmem:[%s6 + $0x48] sm:$0xff]
    %v982 = vld [vmem:[%s6 + $0x50] sm:$0xf]
    %v983 = vld [vmem:[%s6 + $0x54] sm:$0xff]
    %v984 = vld [vmem:[%s6 + $0x5c] sm:$0xf]
    %v985 = vld [vmem:[%s6 + $0x60] sm:$0xff]
    %v986 = vld [vmem:[%s6 + $0x68] sm:$0xf]
    %v987 = vld [vmem:[%s6 + $0x6c] sm:$0xff]
    %v988 = vld [vmem:[%s6 + $0x74] sm:$0xf]
    %v989 = vld [vmem:[%s6 + $0x78] sm:$0xff]
    %v990 = vld [vmem:[%s6 + $0x80] sm:$0xf]
    %v991 = vld [vmem:[%s6 + $0x84] sm:$0xff]
    %v992 = vld [vmem:[%s6 + $0x8c] sm:$0xf]
    %v993 = vld [vmem:[%s6 + $0x90] sm:$0xff]
    %v994 = vld [vmem:[%s6 + $0x98] sm:$0xf]
    %v995 = vld [vmem:[%s6 + $0x9c] sm:$0xff]
    %v996 = vld [vmem:[%s6 + $0xa4] sm:$0xf]
    %v997 = vld [vmem:[%s6 + $0xa8] sm:$0xff]
    %v998 = vld [vmem:[%s6 + $0xb0] sm:$0xf]
    %v999 = vld [vmem:[%s6 + $0xb4] sm:$0xff]
    %v1000 = vld [vmem:[%s6 + $0xbc] sm:$0xf]
    %v1001 = vld [vmem:[%s6 + $0xc0] sm:$0xff]
    %v1002 = vld [vmem:[%s6 + $0xc8] sm:$0xf]
    %v1003 = vld [vmem:[%s6 + $0xcc] sm:$0xff]
    %v1004 = vld [vmem:[%s6 + $0xd4] sm:$0xf]
    %v1005 = vld [vmem:[%s6 + $0xd8] sm:$0xff]
    %v1006 = vld [vmem:[%s6 + $0xe0] sm:$0xf]
    %v1007 = vld [vmem:[%s6 + $0xe4] sm:$0xff]
    %v1008 = vld [vmem:[%s6 + $0xec] sm:$0xf]
    %v1009 = vld [vmem:[%s6 + $0xf0] sm:$0xff]
    %v1010 = vld [vmem:[%s6 + $0xf8] sm:$0xf]
    %v1011 = vld [vmem:[%s6 + $0xfc] sm:$0xff]
    %v1012 = vld [vmem:[%s6 + $0x104] sm:$0xf]
    %v1013 = vld [vmem:[%s6 + $0x108] sm:$0xff]
    %v1014 = vld [vmem:[%s6 + $0x110] sm:$0xf]
    %v1015 = vld [vmem:[%s6 + $0x114] sm:$0xff]
    %v1016 = vld [vmem:[%s6 + $0x11c] sm:$0xf]
    %v1017 = vld [vmem:[%s6 + $0x120] sm:$0xff]
    %v1018 = vld [vmem:[%s6 + $0x128] sm:$0xf]
    %v1019 = vld [vmem:[%s6 + $0x12c] sm:$0xff]
    %v1020 = vld [vmem:[%s6 + $0x134] sm:$0xf]
    %v1021 = vld [vmem:[%s6 + $0x138] sm:$0xff]
    %v1022 = vld [vmem:[%s6 + $0x140] sm:$0xf]
    %v1023 = vld [vmem:[%s6 + $0x144] sm:$0xff]
    %v1024 = vld [vmem:[%s6 + $0x14c] sm:$0xf]
    %v1025 = vld [vmem:[%s6 + $0x150] sm:$0xff]
    %v1026 = vld [vmem:[%s6 + $0x158] sm:$0xf]
    %v1027 = vld [vmem:[%s6 + $0x15c] sm:$0xff]
    %v1028 = vld [vmem:[%s6 + $0x164] sm:$0xf]
    %v1029 = vld [vmem:[%s6 + $0x168] sm:$0xff]
    %v1030 = vld [vmem:[%s6 + $0x170] sm:$0xf]
    %v1031 = vld [vmem:[%s6 + $0x174] sm:$0xff]
    %v1032 = vld [vmem:[%s6 + $0x17c] sm:$0xf]
    %v1033 = vld [vmem:[%s6 + $0x180] sm:$0xff]
    %v1034 = vld [vmem:[%s6 + $0x188] sm:$0xf]
    %v1035 = vld [vmem:[%s6 + $0x18c] sm:$0xff]
    %v1036 = vld [vmem:[%s6 + $0x194] sm:$0xf]
    %v1037 = vld [vmem:[%s6 + $0x198] sm:$0xff]
    %v1038 = vld [vmem:[%s6 + $0x1a0] sm:$0xf]
    %v1039 = vld [vmem:[%s6 + $0x1a4] sm:$0xff]
    %v1040 = vld [vmem:[%s6 + $0x1ac] sm:$0xf]
    %v1041 = vld [vmem:[%s6 + $0x1b0] sm:$0xff]
    %v1042 = vld [vmem:[%s6 + $0x1b8] sm:$0xf]
    %v1043 = vld [vmem:[%s6 + $0x1bc] sm:$0xff]
    %v1044 = vld [vmem:[%s6 + $0x1c4] sm:$0xf]
    %v1045 = vld [vmem:[%s6 + $0x1c8] sm:$0xff]
    %v1046 = vld [vmem:[%s6 + $0x1d0] sm:$0xf]
    %v1047 = vld [vmem:[%s6 + $0x1d4] sm:$0xff]
    %v1048 = vld [vmem:[%s6 + $0x1dc] sm:$0xf]
    %v1049 = vld [vmem:[%s6 + $0x1e0] sm:$0xff]
    %v1050 = vld [vmem:[%s6 + $0x1e8] sm:$0xf]
    %v1051 = vld [vmem:[%s6 + $0x1ec] sm:$0xff]
    %v1052 = vld [vmem:[%s6 + $0x1f4] sm:$0xf]
    %v1053 = vld [vmem:[%s6 + $0x1f8] sm:$0xff]
    %v1054 = vld [vmem:[%s6 + $0x200] sm:$0xf]
    %v1055 = vld [vmem:[%s6 + $0x204] sm:$0xff]
    %v1056 = vld [vmem:[%s6 + $0x20c] sm:$0xf]
    %v1057 = vld [vmem:[%s6 + $0x210] sm:$0xff]
    %v1058 = vld [vmem:[%s6 + $0x218] sm:$0xf]
    %v1059 = vld [vmem:[%s6 + $0x21c] sm:$0xff]
    %v1060 = vld [vmem:[%s6 + $0x224] sm:$0xf]
    %v1061 = vld [vmem:[%s6 + $0x228] sm:$0xff]
    %v1062 = vld [vmem:[%s6 + $0x230] sm:$0xf]
    %v1063 = vld [vmem:[%s6 + $0x234] sm:$0xff]
    %v1064 = vld [vmem:[%s6 + $0x23c] sm:$0xf]
    %v1065 = vld [vmem:[%s6 + $0x240] sm:$0xff]
    %v1066 = vld [vmem:[%s6 + $0x248] sm:$0xf]
    %v1067 = vld [vmem:[%s6 + $0x24c] sm:$0xff]
    %v1068 = vld [vmem:[%s6 + $0x254] sm:$0xf]
    %v1069 = vld [vmem:[%s6 + $0x258] sm:$0xff]
    %v1070 = vld [vmem:[%s6 + $0x260] sm:$0xf]
    %v1071 = vld [vmem:[%s6 + $0x264] sm:$0xff]
    %v1072 = vld [vmem:[%s6 + $0x26c] sm:$0xf]
    %s1073 = scalar_lea.vmem %s5, 8
    %v1074 = vld [vmem:[%s1073] sm:$0xf]
    %v1075 = vld [vmem:[%s1073 + $0x4] sm:$0x1]
    %v1078 = vunpack.c.l.b16 %v1074
    %v1079 = vunpack.c.l.b16 %v1075
    %v1080 = vpack.c.b16 %v1079, %v1078
    %v1082 = vsel %vm892, %v1080, 0
    %1084 = vmatpush.bf16.msra.mxu0 0
    %1085 = vmatpush.bf16.msra.mxu0 0
    %1086 = vmatpush.bf16.msra.mxu0 0
    %1087 = vmatpush.bf16.msra.mxu0 0
    %1088 = vmatpush.bf16.msra.mxu0 0
    %1089 = vmatpush.bf16.msra.mxu0 0
    %1090 = vmatpush.bf16.msra.mxu0 %v898
    %1091 = vmatpush.bf16.msra.mxu0 %v877
    %1092 = vmatmul.bf16.gmra.mxu0 %v1082
    %v1093 = vpop.f32.mrf.mxu0
    %v1094 = vadd.f32 0.0, %v1093
    %v1095 = vpop.f32.mrf.mxu0
    %v1096 = vadd.f32 0.0, %v1095
    %1097 = vdwg.mxu0
    %1098 = vmatpush.bf16.msra.mxu0 0
    %1099 = vmatpush.bf16.msra.mxu0 0
    %1100 = vmatpush.bf16.msra.mxu0 0
    %1101 = vmatpush.bf16.msra.mxu0 0
    %1102 = vmatpush.bf16.msra.mxu0 0
    %1103 = vmatpush.bf16.msra.mxu0 0
    %1104 = vmatpush.bf16.msra.mxu0 %v901
    %1105 = vmatpush.bf16.msra.mxu0 %v878
    %1106 = vmatmul.bf16.gmra.mxu0 %v1082
    %v1107 = vpop.f32.mrf.mxu0
    %v1108 = vadd.f32 0.0, %v1107
    %v1109 = vpop.f32.mrf.mxu0
    %v1110 = vadd.f32 0.0, %v1109
    %1111 = vdwg.mxu0
    %1112 = vmatpush.bf16.msra.mxu0 0
    %1113 = vmatpush.bf16.msra.mxu0 0
    %1114 = vmatpush.bf16.msra.mxu0 0
    %1115 = vmatpush.bf16.msra.mxu0 0
    %1116 = vmatpush.bf16.msra.mxu0 0
    %1117 = vmatpush.bf16.msra.mxu0 0
    %1118 = vmatpush.bf16.msra.mxu0 %v904
    %1119 = vmatpush.bf16.msra.mxu0 %v879
    %1120 = vmatmul.bf16.gmra.mxu0 %v1082
    %v1121 = vpop.f32.mrf.mxu0
    %v1122 = vadd.f32 0.0, %v1121
    %v1123 = vpop.f32.mrf.mxu0
    %v1124 = vadd.f32 0.0, %v1123
    %1125 = vdwg.mxu0
    %1126 = vmatpush.bf16.msra.mxu0 0
    %1127 = vmatpush.bf16.msra.mxu0 0
    %1128 = vmatpush.bf16.msra.mxu0 0
    %1129 = vmatpush.bf16.msra.mxu0 0
    %1130 = vmatpush.bf16.msra.mxu0 0
    %1131 = vmatpush.bf16.msra.mxu0 0
    %1132 = vmatpush.bf16.msra.mxu0 %v907
    %1133 = vmatpush.bf16.msra.mxu0 %v880
    %1134 = vmatmul.bf16.gmra.mxu0 %v1082
    %v1135 = vpop.f32.mrf.mxu0
    %v1136 = vadd.f32 0.0, %v1135
    %v1137 = vpop.f32.mrf.mxu0
    %v1138 = vadd.f32 0.0, %v1137
    %1139 = vdwg.mxu0
    %v1140 = vpack.c.bf16 %v1096, %v1094
    %v1141 = vpack.c.bf16 %v1110, %v1108
    %v1142 = vpack.c.bf16 %v1124, %v1122
    %v1143 = vpack.c.bf16 %v1138, %v1136
    %s1144 = scalar_lea.vmem %s6, 624
    %v1145 = vld [vmem:[%s1144] sm:$0xff]
    %v1146 = vld [vmem:[%s1144 + $0x8] sm:$0xf]
    %v1147 = vld [vmem:[%s1144 + $0xc] sm:$0xff]
    %v1148 = vld [vmem:[%s1144 + $0x14] sm:$0xf]
    %v1149 = vld [vmem:[%s1144 + $0x18] sm:$0xff]
    %v1150 = vld [vmem:[%s1144 + $0x20] sm:$0xf]
    %v1151 = vld [vmem:[%s1144 + $0x24] sm:$0xff]
    %v1152 = vld [vmem:[%s1144 + $0x2c] sm:$0xf]
    %v1153 = vld [vmem:[%s1144 + $0x30] sm:$0xff]
    %v1154 = vld [vmem:[%s1144 + $0x38] sm:$0xf]
    %v1155 = vld [vmem:[%s1144 + $0x3c] sm:$0xff]
    %v1156 = vld [vmem:[%s1144 + $0x44] sm:$0xf]
    %v1157 = vld [vmem:[%s1144 + $0x48] sm:$0xff]
    %v1158 = vld [vmem:[%s1144 + $0x50] sm:$0xf]
    %v1159 = vld [vmem:[%s1144 + $0x54] sm:$0xff]
    %v1160 = vld [vmem:[%s1144 + $0x5c] sm:$0xf]
    %v1161 = vld [vmem:[%s1144 + $0x60] sm:$0xff]
    %v1162 = vld [vmem:[%s1144 + $0x68] sm:$0xf]
    %v1163 = vld [vmem:[%s1144 + $0x6c] sm:$0xff]
    %v1164 = vld [vmem:[%s1144 + $0x74] sm:$0xf]
    %v1165 = vld [vmem:[%s1144 + $0x78] sm:$0xff]
    %v1166 = vld [vmem:[%s1144 + $0x80] sm:$0xf]
    %v1167 = vld [vmem:[%s1144 + $0x84] sm:$0xff]
    %v1168 = vld [vmem:[%s1144 + $0x8c] sm:$0xf]
    %v1169 = vld [vmem:[%s1144 + $0x90] sm:$0xff]
    %v1170 = vld [vmem:[%s1144 + $0x98] sm:$0xf]
    %v1171 = vld [vmem:[%s1144 + $0x9c] sm:$0xff]
    %v1172 = vld [vmem:[%s1144 + $0xa4] sm:$0xf]
    %v1173 = vld [vmem:[%s1144 + $0xa8] sm:$0xff]
    %v1174 = vld [vmem:[%s1144 + $0xb0] sm:$0xf]
    %v1175 = vld [vmem:[%s1144 + $0xb4] sm:$0xff]
    %v1176 = vld [vmem:[%s1144 + $0xbc] sm:$0xf]
    %v1177 = vld [vmem:[%s1144 + $0xc0] sm:$0xff]
    %v1178 = vld [vmem:[%s1144 + $0xc8] sm:$0xf]
    %v1179 = vld [vmem:[%s1144 + $0xcc] sm:$0xff]
    %v1180 = vld [vmem:[%s1144 + $0xd4] sm:$0xf]
    %v1181 = vld [vmem:[%s1144 + $0xd8] sm:$0xff]
    %v1182 = vld [vmem:[%s1144 + $0xe0] sm:$0xf]
    %v1183 = vld [vmem:[%s1144 + $0xe4] sm:$0xff]
    %v1184 = vld [vmem:[%s1144 + $0xec] sm:$0xf]
    %v1185 = vld [vmem:[%s1144 + $0xf0] sm:$0xff]
    %v1186 = vld [vmem:[%s1144 + $0xf8] sm:$0xf]
    %v1187 = vld [vmem:[%s1144 + $0xfc] sm:$0xff]
    %v1188 = vld [vmem:[%s1144 + $0x104] sm:$0xf]
    %v1189 = vld [vmem:[%s1144 + $0x108] sm:$0xff]
    %v1190 = vld [vmem:[%s1144 + $0x110] sm:$0xf]
    %v1191 = vld [vmem:[%s1144 + $0x114] sm:$0xff]
    %v1192 = vld [vmem:[%s1144 + $0x11c] sm:$0xf]
    %v1193 = vld [vmem:[%s1144 + $0x120] sm:$0xff]
    %v1194 = vld [vmem:[%s1144 + $0x128] sm:$0xf]
    %v1195 = vld [vmem:[%s1144 + $0x12c] sm:$0xff]
    %v1196 = vld [vmem:[%s1144 + $0x134] sm:$0xf]
    %v1197 = vld [vmem:[%s1144 + $0x138] sm:$0xff]
    %v1198 = vld [vmem:[%s1144 + $0x140] sm:$0xf]
    %v1199 = vld [vmem:[%s1144 + $0x144] sm:$0xff]
    %v1200 = vld [vmem:[%s1144 + $0x14c] sm:$0xf]
    %v1201 = vld [vmem:[%s1144 + $0x150] sm:$0xff]
    %v1202 = vld [vmem:[%s1144 + $0x158] sm:$0xf]
    %v1203 = vld [vmem:[%s1144 + $0x15c] sm:$0xff]
    %v1204 = vld [vmem:[%s1144 + $0x164] sm:$0xf]
    %v1205 = vld [vmem:[%s1144 + $0x168] sm:$0xff]
    %v1206 = vld [vmem:[%s1144 + $0x170] sm:$0xf]
    %v1207 = vld [vmem:[%s1144 + $0x174] sm:$0xff]
    %v1208 = vld [vmem:[%s1144 + $0x17c] sm:$0xf]
    %v1209 = vld [vmem:[%s1144 + $0x180] sm:$0xff]
    %v1210 = vld [vmem:[%s1144 + $0x188] sm:$0xf]
    %v1211 = vld [vmem:[%s1144 + $0x18c] sm:$0xff]
    %v1212 = vld [vmem:[%s1144 + $0x194] sm:$0xf]
    %v1213 = vld [vmem:[%s1144 + $0x198] sm:$0xff]
    %v1214 = vld [vmem:[%s1144 + $0x1a0] sm:$0xf]
    %v1215 = vld [vmem:[%s1144 + $0x1a4] sm:$0xff]
    %v1216 = vld [vmem:[%s1144 + $0x1ac] sm:$0xf]
    %v1217 = vld [vmem:[%s1144 + $0x1b0] sm:$0xff]
    %v1218 = vld [vmem:[%s1144 + $0x1b8] sm:$0xf]
    %v1219 = vld [vmem:[%s1144 + $0x1bc] sm:$0xff]
    %v1220 = vld [vmem:[%s1144 + $0x1c4] sm:$0xf]
    %v1221 = vld [vmem:[%s1144 + $0x1c8] sm:$0xff]
    %v1222 = vld [vmem:[%s1144 + $0x1d0] sm:$0xf]
    %v1223 = vld [vmem:[%s1144 + $0x1d4] sm:$0xff]
    %v1224 = vld [vmem:[%s1144 + $0x1dc] sm:$0xf]
    %v1225 = vld [vmem:[%s1144 + $0x1e0] sm:$0xff]
    %v1226 = vld [vmem:[%s1144 + $0x1e8] sm:$0xf]
    %v1227 = vld [vmem:[%s1144 + $0x1ec] sm:$0xff]
    %v1228 = vld [vmem:[%s1144 + $0x1f4] sm:$0xf]
    %v1229 = vld [vmem:[%s1144 + $0x1f8] sm:$0xff]
    %v1230 = vld [vmem:[%s1144 + $0x200] sm:$0xf]
    %v1231 = vld [vmem:[%s1144 + $0x204] sm:$0xff]
    %v1232 = vld [vmem:[%s1144 + $0x20c] sm:$0xf]
    %v1233 = vld [vmem:[%s1144 + $0x210] sm:$0xff]
    %v1234 = vld [vmem:[%s1144 + $0x218] sm:$0xf]
    %v1235 = vld [vmem:[%s1144 + $0x21c] sm:$0xff]
    %v1236 = vld [vmem:[%s1144 + $0x224] sm:$0xf]
    %v1237 = vld [vmem:[%s1144 + $0x228] sm:$0xff]
    %v1238 = vld [vmem:[%s1144 + $0x230] sm:$0xf]
    %v1239 = vld [vmem:[%s1144 + $0x234] sm:$0xff]
    %v1240 = vld [vmem:[%s1144 + $0x23c] sm:$0xf]
    %v1241 = vld [vmem:[%s1144 + $0x240] sm:$0xff]
    %v1242 = vld [vmem:[%s1144 + $0x248] sm:$0xf]
    %v1243 = vld [vmem:[%s1144 + $0x24c] sm:$0xff]
    %v1244 = vld [vmem:[%s1144 + $0x254] sm:$0xf]
    %v1245 = vld [vmem:[%s1144 + $0x258] sm:$0xff]
    %v1246 = vld [vmem:[%s1144 + $0x260] sm:$0xf]
    %v1247 = vld [vmem:[%s1144 + $0x264] sm:$0xff]
    %v1248 = vld [vmem:[%s1144 + $0x26c] sm:$0xf]
    %v1353 = vunpack.c.l.b16 %v1145
    %v1354 = vunpack.c.h.b16 %v1145
    %v1355 = vunpack.c.l.b16 %v1146
    %v1356 = vunpack.c.l.b16 %v1147
    %v1357 = vunpack.c.h.b16 %v1147
    %v1358 = vunpack.c.l.b16 %v1148
    %v1359 = vunpack.c.l.b16 %v1149
    %v1360 = vunpack.c.h.b16 %v1149
    %v1361 = vunpack.c.l.b16 %v1150
    %v1362 = vunpack.c.l.b16 %v1151
    %v1363 = vunpack.c.h.b16 %v1151
    %v1364 = vunpack.c.l.b16 %v1152
    %v1365 = vunpack.c.l.b16 %v1153
    %v1366 = vunpack.c.h.b16 %v1153
    %v1367 = vunpack.c.l.b16 %v1154
    %v1368 = vunpack.c.l.b16 %v1155
    %v1369 = vunpack.c.h.b16 %v1155
    %v1370 = vunpack.c.l.b16 %v1156
    %v1371 = vunpack.c.l.b16 %v1157
    %v1372 = vunpack.c.h.b16 %v1157
    %v1373 = vunpack.c.l.b16 %v1158
    %v1374 = vunpack.c.l.b16 %v1159
    %v1375 = vunpack.c.h.b16 %v1159
    %v1376 = vunpack.c.l.b16 %v1160
    %v1377 = vunpack.c.l.b16 %v1161
    %v1378 = vunpack.c.h.b16 %v1161
    %v1379 = vunpack.c.l.b16 %v1162
    %v1380 = vunpack.c.l.b16 %v1163
    %v1381 = vunpack.c.h.b16 %v1163
    %v1382 = vunpack.c.l.b16 %v1164
    %v1383 = vunpack.c.l.b16 %v1165
    %v1384 = vunpack.c.h.b16 %v1165
    %v1385 = vunpack.c.l.b16 %v1166
    %v1386 = vunpack.c.l.b16 %v1167
    %v1387 = vunpack.c.h.b16 %v1167
    %v1388 = vunpack.c.l.b16 %v1168
    %v1389 = vunpack.c.l.b16 %v1169
    %v1390 = vunpack.c.h.b16 %v1169
    %v1391 = vunpack.c.l.b16 %v1170
    %v1392 = vunpack.c.l.b16 %v1171
    %v1393 = vunpack.c.h.b16 %v1171
    %v1394 = vunpack.c.l.b16 %v1172
    %v1395 = vunpack.c.l.b16 %v1173
    %v1396 = vunpack.c.h.b16 %v1173
    %v1397 = vunpack.c.l.b16 %v1174
    %v1398 = vunpack.c.l.b16 %v1175
    %v1399 = vunpack.c.h.b16 %v1175
    %v1400 = vunpack.c.l.b16 %v1176
    %v1401 = vunpack.c.l.b16 %v1177
    %v1402 = vunpack.c.h.b16 %v1177
    %v1403 = vunpack.c.l.b16 %v1178
    %v1404 = vunpack.c.l.b16 %v1179
    %v1405 = vunpack.c.h.b16 %v1179
    %v1406 = vunpack.c.l.b16 %v1180
    %v1407 = vunpack.c.l.b16 %v1181
    %v1408 = vunpack.c.h.b16 %v1181
    %v1409 = vunpack.c.l.b16 %v1182
    %v1410 = vunpack.c.l.b16 %v1183
    %v1411 = vunpack.c.h.b16 %v1183
    %v1412 = vunpack.c.l.b16 %v1184
    %v1413 = vunpack.c.l.b16 %v1185
    %v1414 = vunpack.c.h.b16 %v1185
    %v1415 = vunpack.c.l.b16 %v1186
    %v1416 = vunpack.c.l.b16 %v1187
    %v1417 = vunpack.c.h.b16 %v1187
    %v1418 = vunpack.c.l.b16 %v1188
    %v1419 = vunpack.c.l.b16 %v1189
    %v1420 = vunpack.c.h.b16 %v1189
    %v1421 = vunpack.c.l.b16 %v1190
    %v1422 = vunpack.c.l.b16 %v1191
    %v1423 = vunpack.c.h.b16 %v1191
    %v1424 = vunpack.c.l.b16 %v1192
    %v1425 = vunpack.c.l.b16 %v1193
    %v1426 = vunpack.c.h.b16 %v1193
    %v1427 = vunpack.c.l.b16 %v1194
    %v1428 = vunpack.c.l.b16 %v1195
    %v1429 = vunpack.c.h.b16 %v1195
    %v1430 = vunpack.c.l.b16 %v1196
    %v1431 = vunpack.c.l.b16 %v1197
    %v1432 = vunpack.c.h.b16 %v1197
    %v1433 = vunpack.c.l.b16 %v1198
    %v1434 = vunpack.c.l.b16 %v1199
    %v1435 = vunpack.c.h.b16 %v1199
    %v1436 = vunpack.c.l.b16 %v1200
    %v1437 = vunpack.c.l.b16 %v1201
    %v1438 = vunpack.c.h.b16 %v1201
    %v1439 = vunpack.c.l.b16 %v1202
    %v1440 = vunpack.c.l.b16 %v1203
    %v1441 = vunpack.c.h.b16 %v1203
    %v1442 = vunpack.c.l.b16 %v1204
    %v1443 = vunpack.c.l.b16 %v1205
    %v1444 = vunpack.c.h.b16 %v1205
    %v1445 = vunpack.c.l.b16 %v1206
    %v1446 = vunpack.c.l.b16 %v1207
    %v1447 = vunpack.c.h.b16 %v1207
    %v1448 = vunpack.c.l.b16 %v1208
    %v1449 = vunpack.c.l.b16 %v1209
    %v1450 = vunpack.c.h.b16 %v1209
    %v1451 = vunpack.c.l.b16 %v1210
    %v1452 = vunpack.c.l.b16 %v1211
    %v1453 = vunpack.c.h.b16 %v1211
    %v1454 = vunpack.c.l.b16 %v1212
    %v1455 = vunpack.c.l.b16 %v1213
    %v1456 = vunpack.c.h.b16 %v1213
    %v1457 = vunpack.c.l.b16 %v1214
    %v1458 = vunpack.c.l.b16 %v1215
    %v1459 = vunpack.c.h.b16 %v1215
    %v1460 = vunpack.c.l.b16 %v1216
    %v1461 = vunpack.c.l.b16 %v1217
    %v1462 = vunpack.c.h.b16 %v1217
    %v1463 = vunpack.c.l.b16 %v1218
    %v1464 = vunpack.c.l.b16 %v1219
    %v1465 = vunpack.c.h.b16 %v1219
    %v1466 = vunpack.c.l.b16 %v1220
    %v1467 = vunpack.c.l.b16 %v1221
    %v1468 = vunpack.c.h.b16 %v1221
    %v1469 = vunpack.c.l.b16 %v1222
    %v1470 = vunpack.c.l.b16 %v1223
    %v1471 = vunpack.c.h.b16 %v1223
    %v1472 = vunpack.c.l.b16 %v1224
    %v1473 = vunpack.c.l.b16 %v1225
    %v1474 = vunpack.c.h.b16 %v1225
    %v1475 = vunpack.c.l.b16 %v1226
    %v1476 = vunpack.c.l.b16 %v1227
    %v1477 = vunpack.c.h.b16 %v1227
    %v1478 = vunpack.c.l.b16 %v1228
    %v1479 = vunpack.c.l.b16 %v1229
    %v1480 = vunpack.c.h.b16 %v1229
    %v1481 = vunpack.c.l.b16 %v1230
    %v1482 = vunpack.c.l.b16 %v1231
    %v1483 = vunpack.c.h.b16 %v1231
    %v1484 = vunpack.c.l.b16 %v1232
    %v1485 = vunpack.c.l.b16 %v1233
    %v1486 = vunpack.c.h.b16 %v1233
    %v1487 = vunpack.c.l.b16 %v1234
    %v1488 = vunpack.c.l.b16 %v1235
    %v1489 = vunpack.c.h.b16 %v1235
    %v1490 = vunpack.c.l.b16 %v1236
    %v1491 = vunpack.c.l.b16 %v1237
    %v1492 = vunpack.c.h.b16 %v1237
    %v1493 = vunpack.c.l.b16 %v1238
    %v1494 = vunpack.c.l.b16 %v1239
    %v1495 = vunpack.c.h.b16 %v1239
    %v1496 = vunpack.c.l.b16 %v1240
    %v1497 = vunpack.c.l.b16 %v1241
    %v1498 = vunpack.c.h.b16 %v1241
    %v1499 = vunpack.c.l.b16 %v1242
    %v1500 = vunpack.c.l.b16 %v1243
    %v1501 = vunpack.c.h.b16 %v1243
    %v1502 = vunpack.c.l.b16 %v1244
    %v1503 = vunpack.c.l.b16 %v1245
    %v1504 = vunpack.c.h.b16 %v1245
    %v1505 = vunpack.c.l.b16 %v1246
    %v1506 = vunpack.c.l.b16 %v1247
    %v1507 = vunpack.c.h.b16 %v1247
    %v1508 = vunpack.c.l.b16 %v1248
    %v1509 = vpack.c.b16 %v1356, %v1353
    %v1510 = vpack.c.b16 %v1357, %v1354
    %v1511 = vpack.c.b16 %v1358, %v1355
    %v1512 = vpack.c.b16 %v1362, %v1359
    %v1513 = vpack.c.b16 %v1363, %v1360
    %v1514 = vpack.c.b16 %v1364, %v1361
    %v1515 = vpack.c.b16 %v1368, %v1365
    %v1516 = vpack.c.b16 %v1369, %v1366
    %v1517 = vpack.c.b16 %v1370, %v1367
    %v1518 = vpack.c.b16 %v1374, %v1371
    %v1519 = vpack.c.b16 %v1375, %v1372
    %v1520 = vpack.c.b16 %v1376, %v1373
    %v1521 = vpack.c.b16 %v1380, %v1377
    %v1522 = vpack.c.b16 %v1381, %v1378
    %v1523 = vpack.c.b16 %v1382, %v1379
    %v1524 = vpack.c.b16 %v1386, %v1383
    %v1525 = vpack.c.b16 %v1387, %v1384
    %v1526 = vpack.c.b16 %v1388, %v1385
    %v1527 = vpack.c.b16 %v1392, %v1389
    %v1528 = vpack.c.b16 %v1393, %v1390
    %v1529 = vpack.c.b16 %v1394, %v1391
    %v1530 = vpack.c.b16 %v1398, %v1395
    %v1531 = vpack.c.b16 %v1399, %v1396
    %v1532 = vpack.c.b16 %v1400, %v1397
    %v1533 = vpack.c.b16 %v1404, %v1401
    %v1534 = vpack.c.b16 %v1405, %v1402
    %v1535 = vpack.c.b16 %v1406, %v1403
    %v1536 = vpack.c.b16 %v1410, %v1407
    %v1537 = vpack.c.b16 %v1411, %v1408
    %v1538 = vpack.c.b16 %v1412, %v1409
    %v1539 = vpack.c.b16 %v1416, %v1413
    %v1540 = vpack.c.b16 %v1417, %v1414
    %v1541 = vpack.c.b16 %v1418, %v1415
    %v1542 = vpack.c.b16 %v1422, %v1419
    %v1543 = vpack.c.b16 %v1423, %v1420
    %v1544 = vpack.c.b16 %v1424, %v1421
    %v1545 = vpack.c.b16 %v1428, %v1425
    %v1546 = vpack.c.b16 %v1429, %v1426
    %v1547 = vpack.c.b16 %v1430, %v1427
    %v1548 = vpack.c.b16 %v1434, %v1431
    %v1549 = vpack.c.b16 %v1435, %v1432
    %v1550 = vpack.c.b16 %v1436, %v1433
    %v1551 = vpack.c.b16 %v1440, %v1437
    %v1552 = vpack.c.b16 %v1441, %v1438
    %v1553 = vpack.c.b16 %v1442, %v1439
    %v1554 = vpack.c.b16 %v1446, %v1443
    %v1555 = vpack.c.b16 %v1447, %v1444
    %v1556 = vpack.c.b16 %v1448, %v1445
    %v1557 = vpack.c.b16 %v1452, %v1449
    %v1558 = vpack.c.b16 %v1453, %v1450
    %v1559 = vpack.c.b16 %v1454, %v1451
    %v1560 = vpack.c.b16 %v1458, %v1455
    %v1561 = vpack.c.b16 %v1459, %v1456
    %v1562 = vpack.c.b16 %v1460, %v1457
    %v1563 = vpack.c.b16 %v1464, %v1461
    %v1564 = vpack.c.b16 %v1465, %v1462
    %v1565 = vpack.c.b16 %v1466, %v1463
    %v1566 = vpack.c.b16 %v1470, %v1467
    %v1567 = vpack.c.b16 %v1471, %v1468
    %v1568 = vpack.c.b16 %v1472, %v1469
    %v1569 = vpack.c.b16 %v1476, %v1473
    %v1570 = vpack.c.b16 %v1477, %v1474
    %v1571 = vpack.c.b16 %v1478, %v1475
    %v1572 = vpack.c.b16 %v1482, %v1479
    %v1573 = vpack.c.b16 %v1483, %v1480
    %v1574 = vpack.c.b16 %v1484, %v1481
    %v1575 = vpack.c.b16 %v1488, %v1485
    %v1576 = vpack.c.b16 %v1489, %v1486
    %v1577 = vpack.c.b16 %v1490, %v1487
    %v1578 = vpack.c.b16 %v1494, %v1491
    %v1579 = vpack.c.b16 %v1495, %v1492
    %v1580 = vpack.c.b16 %v1496, %v1493
    %v1581 = vpack.c.b16 %v1500, %v1497
    %v1582 = vpack.c.b16 %v1501, %v1498
    %v1583 = vpack.c.b16 %v1502, %v1499
    %v1584 = vpack.c.b16 %v1506, %v1503
    %v1585 = vpack.c.b16 %v1507, %v1504
    %v1586 = vpack.c.b16 %v1508, %v1505
    %vm1665 = vcmask 261120
    %v1667 = vsel %vm1665, %v1143, 0
    %1669 = vmatpush.bf16.msra.mxu0 %v1530
    %1670 = vmatpush.bf16.msra.mxu0 %v1527
    %1671 = vmatpush.bf16.msra.mxu0 %v1524
    %1672 = vmatpush.bf16.msra.mxu0 %v1521
    %1673 = vmatpush.bf16.msra.mxu0 %v1518
    %1674 = vmatpush.bf16.msra.mxu0 %v1515
    %1675 = vmatpush.bf16.msra.mxu0 %v1512
    %1676 = vmatpush.bf16.msra.mxu0 %v1509
    %1677 = vmatmul.bf16.gmra.mxu0 %v1140
    %v1678 = vpop.f32.mrf.mxu0
    %v1679 = vadd.f32 0.0, %v1678
    %v1680 = vpop.f32.mrf.mxu0
    %v1681 = vadd.f32 0.0, %v1680
    %1682 = vdwg.mxu0
    %1683 = vmatpush.bf16.msra.mxu0 %v1554
    %1684 = vmatpush.bf16.msra.mxu0 %v1551
    %1685 = vmatpush.bf16.msra.mxu0 %v1548
    %1686 = vmatpush.bf16.msra.mxu0 %v1545
    %1687 = vmatpush.bf16.msra.mxu0 %v1542
    %1688 = vmatpush.bf16.msra.mxu0 %v1539
    %1689 = vmatpush.bf16.msra.mxu0 %v1536
    %1690 = vmatpush.bf16.msra.mxu0 %v1533
    %1691 = vmatmul.bf16.gmra.mxu0 %v1141
    %v1692 = vpop.f32.mrf.mxu0
    %v1693 = vadd.f32 %v1679, %v1692
    %v1694 = vpop.f32.mrf.mxu0
    %v1695 = vadd.f32 %v1681, %v1694
    %1696 = vdwg.mxu0
    %1697 = vmatpush.bf16.msra.mxu0 %v1578
    %1698 = vmatpush.bf16.msra.mxu0 %v1575
    %1699 = vmatpush.bf16.msra.mxu0 %v1572
    %1700 = vmatpush.bf16.msra.mxu0 %v1569
    %1701 = vmatpush.bf16.msra.mxu0 %v1566
    %1702 = vmatpush.bf16.msra.mxu0 %v1563
    %1703 = vmatpush.bf16.msra.mxu0 %v1560
    %1704 = vmatpush.bf16.msra.mxu0 %v1557
    %1705 = vmatmul.bf16.gmra.mxu0 %v1142
    %v1706 = vpop.f32.mrf.mxu0
    %v1707 = vadd.f32 %v1693, %v1706
    %v1708 = vpop.f32.mrf.mxu0
    %v1709 = vadd.f32 %v1695, %v1708
    %1710 = vdwg.mxu0
    %1711 = vmatpush.bf16.msra.mxu0 0
    %1712 = vmatpush.bf16.msra.mxu0 0
    %1713 = vmatpush.bf16.msra.mxu0 0
    %1714 = vmatpush.bf16.msra.mxu0 0
    %1715 = vmatpush.bf16.msra.mxu0 0
    %1716 = vmatpush.bf16.msra.mxu0 0
    %1717 = vmatpush.bf16.msra.mxu0 %v1584
    %1718 = vmatpush.bf16.msra.mxu0 %v1581
    %1719 = vmatmul.bf16.gmra.mxu0 %v1667
    %v1720 = vpop.f32.mrf.mxu0
    %v1721 = vadd.f32 %v1707, %v1720
    %v1722 = vpop.f32.mrf.mxu0
    %v1723 = vadd.f32 %v1709, %v1722
    %1724 = vdwg.mxu0
    %1725 = vmatpush.bf16.msra.mxu0 %v1531
    %1726 = vmatpush.bf16.msra.mxu0 %v1528
    %1727 = vmatpush.bf16.msra.mxu0 %v1525
    %1728 = vmatpush.bf16.msra.mxu0 %v1522
    %1729 = vmatpush.bf16.msra.mxu0 %v1519
    %1730 = vmatpush.bf16.msra.mxu0 %v1516
    %1731 = vmatpush.bf16.msra.mxu0 %v1513
    %1732 = vmatpush.bf16.msra.mxu0 %v1510
    %1733 = vmatmul.bf16.gmra.mxu0 %v1140
    %v1734 = vpop.f32.mrf.mxu0
    %v1735 = vadd.f32 0.0, %v1734
    %v1736 = vpop.f32.mrf.mxu0
    %v1737 = vadd.f32 0.0, %v1736
    %1738 = vdwg.mxu0
    %1739 = vmatpush.bf16.msra.mxu0 %v1555
    %1740 = vmatpush.bf16.msra.mxu0 %v1552
    %1741 = vmatpush.bf16.msra.mxu0 %v1549
    %1742 = vmatpush.bf16.msra.mxu0 %v1546
    %1743 = vmatpush.bf16.msra.mxu0 %v1543
    %1744 = vmatpush.bf16.msra.mxu0 %v1540
    %1745 = vmatpush.bf16.msra.mxu0 %v1537
    %1746 = vmatpush.bf16.msra.mxu0 %v1534
    %1747 = vmatmul.bf16.gmra.mxu0 %v1141
    %v1748 = vpop.f32.mrf.mxu0
    %v1749 = vadd.f32 %v1735, %v1748
    %v1750 = vpop.f32.mrf.mxu0
    %v1751 = vadd.f32 %v1737, %v1750
    %1752 = vdwg.mxu0
    %1753 = vmatpush.bf16.msra.mxu0 %v1579
    %1754 = vmatpush.bf16.msra.mxu0 %v1576
    %1755 = vmatpush.bf16.msra.mxu0 %v1573
    %1756 = vmatpush.bf16.msra.mxu0 %v1570
    %1757 = vmatpush.bf16.msra.mxu0 %v1567
    %1758 = vmatpush.bf16.msra.mxu0 %v1564
    %1759 = vmatpush.bf16.msra.mxu0 %v1561
    %1760 = vmatpush.bf16.msra.mxu0 %v1558
    %1761 = vmatmul.bf16.gmra.mxu0 %v1142
    %v1762 = vpop.f32.mrf.mxu0
    %v1763 = vadd.f32 %v1749, %v1762
    %v1764 = vpop.f32.mrf.mxu0
    %v1765 = vadd.f32 %v1751, %v1764
    %1766 = vdwg.mxu0
    %1767 = vmatpush.bf16.msra.mxu0 0
    %1768 = vmatpush.bf16.msra.mxu0 0
    %1769 = vmatpush.bf16.msra.mxu0 0
    %1770 = vmatpush.bf16.msra.mxu0 0
    %1771 = vmatpush.bf16.msra.mxu0 0
    %1772 = vmatpush.bf16.msra.mxu0 0
    %1773 = vmatpush.bf16.msra.mxu0 %v1585
    %1774 = vmatpush.bf16.msra.mxu0 %v1582
    %1775 = vmatmul.bf16.gmra.mxu0 %v1667
    %v1776 = vpop.f32.mrf.mxu0
    %v1777 = vadd.f32 %v1763, %v1776
    %v1778 = vpop.f32.mrf.mxu0
    %v1779 = vadd.f32 %v1765, %v1778
    %1780 = vdwg.mxu0
    %1781 = vmatpush.bf16.msra.mxu0 %v1532
    %1782 = vmatpush.bf16.msra.mxu0 %v1529
    %1783 = vmatpush.bf16.msra.mxu0 %v1526
    %1784 = vmatpush.bf16.msra.mxu0 %v1523
    %1785 = vmatpush.bf16.msra.mxu0 %v1520
    %1786 = vmatpush.bf16.msra.mxu0 %v1517
    %1787 = vmatpush.bf16.msra.mxu0 %v1514
    %1788 = vmatpush.bf16.msra.mxu0 %v1511
    %1789 = vmatmul.bf16.gmra.mxu0 %v1140
    %v1790 = vpop.f32.mrf.mxu0
    %v1791 = vadd.f32 0.0, %v1790
    %v1792 = vpop.f32.mrf.mxu0
    %v1793 = vadd.f32 0.0, %v1792
    %1794 = vdwg.mxu0
    %1795 = vmatpush.bf16.msra.mxu0 %v1556
    %1796 = vmatpush.bf16.msra.mxu0 %v1553
    %1797 = vmatpush.bf16.msra.mxu0 %v1550
    %1798 = vmatpush.bf16.msra.mxu0 %v1547
    %1799 = vmatpush.bf16.msra.mxu0 %v1544
    %1800 = vmatpush.bf16.msra.mxu0 %v1541
    %1801 = vmatpush.bf16.msra.mxu0 %v1538
    %1802 = vmatpush.bf16.msra.mxu0 %v1535
    %1803 = vmatmul.bf16.gmra.mxu0 %v1141
    %v1804 = vpop.f32.mrf.mxu0
    %v1805 = vadd.f32 %v1791, %v1804
    %v1806 = vpop.f32.mrf.mxu0
    %v1807 = vadd.f32 %v1793, %v1806
    %1808 = vdwg.mxu0
    %1809 = vmatpush.bf16.msra.mxu0 %v1580
    %1810 = vmatpush.bf16.msra.mxu0 %v1577
    %1811 = vmatpush.bf16.msra.mxu0 %v1574
    %1812 = vmatpush.bf16.msra.mxu0 %v1571
    %1813 = vmatpush.bf16.msra.mxu0 %v1568
    %1814 = vmatpush.bf16.msra.mxu0 %v1565
    %1815 = vmatpush.bf16.msra.mxu0 %v1562
    %1816 = vmatpush.bf16.msra.mxu0 %v1559
    %1817 = vmatmul.bf16.gmra.mxu0 %v1142
    %v1818 = vpop.f32.mrf.mxu0
    %v1819 = vadd.f32 %v1805, %v1818
    %v1820 = vpop.f32.mrf.mxu0
    %v1821 = vadd.f32 %v1807, %v1820
    %1822 = vdwg.mxu0
    %1823 = vmatpush.bf16.msra.mxu0 0
    %1824 = vmatpush.bf16.msra.mxu0 0
    %1825 = vmatpush.bf16.msra.mxu0 0
    %1826 = vmatpush.bf16.msra.mxu0 0
    %1827 = vmatpush.bf16.msra.mxu0 0
    %1828 = vmatpush.bf16.msra.mxu0 0
    %1829 = vmatpush.bf16.msra.mxu0 %v1586
    %1830 = vmatpush.bf16.msra.mxu0 %v1583
    %1831 = vmatmul.bf16.gmra.mxu0 %v1667
    %v1832 = vpop.f32.mrf.mxu0
    %v1833 = vadd.f32 %v1819, %v1832
    %v1834 = vpop.f32.mrf.mxu0
    %v1835 = vadd.f32 %v1821, %v1834
    %1836 = vdwg.mxu0
    %v1941 = vunpack.c.l.b16 %v969
    %v1942 = vunpack.c.h.b16 %v969
    %v1943 = vunpack.c.l.b16 %v970
    %v1944 = vunpack.c.l.b16 %v971
    %v1945 = vunpack.c.h.b16 %v971
    %v1946 = vunpack.c.l.b16 %v972
    %v1947 = vunpack.c.l.b16 %v973
    %v1948 = vunpack.c.h.b16 %v973
    %v1949 = vunpack.c.l.b16 %v974
    %v1950 = vunpack.c.l.b16 %v975
    %v1951 = vunpack.c.h.b16 %v975
    %v1952 = vunpack.c.l.b16 %v976
    %v1953 = vunpack.c.l.b16 %v977
    %v1954 = vunpack.c.h.b16 %v977
    %v1955 = vunpack.c.l.b16 %v978
    %v1956 = vunpack.c.l.b16 %v979
    %v1957 = vunpack.c.h.b16 %v979
    %v1958 = vunpack.c.l.b16 %v980
    %v1959 = vunpack.c.l.b16 %v981
    %v1960 = vunpack.c.h.b16 %v981
    %v1961 = vunpack.c.l.b16 %v982
    %v1962 = vunpack.c.l.b16 %v983
    %v1963 = vunpack.c.h.b16 %v983
    %v1964 = vunpack.c.l.b16 %v984
    %v1965 = vunpack.c.l.b16 %v985
    %v1966 = vunpack.c.h.b16 %v985
    %v1967 = vunpack.c.l.b16 %v986
    %v1968 = vunpack.c.l.b16 %v987
    %v1969 = vunpack.c.h.b16 %v987
    %v1970 = vunpack.c.l.b16 %v988
    %v1971 = vunpack.c.l.b16 %v989
    %v1972 = vunpack.c.h.b16 %v989
    %v1973 = vunpack.c.l.b16 %v990
    %v1974 = vunpack.c.l.b16 %v991
    %v1975 = vunpack.c.h.b16 %v991
    %v1976 = vunpack.c.l.b16 %v992
    %v1977 = vunpack.c.l.b16 %v993
    %v1978 = vunpack.c.h.b16 %v993
    %v1979 = vunpack.c.l.b16 %v994
    %v1980 = vunpack.c.l.b16 %v995
    %v1981 = vunpack.c.h.b16 %v995
    %v1982 = vunpack.c.l.b16 %v996
    %v1983 = vunpack.c.l.b16 %v997
    %v1984 = vunpack.c.h.b16 %v997
    %v1985 = vunpack.c.l.b16 %v998
    %v1986 = vunpack.c.l.b16 %v999
    %v1987 = vunpack.c.h.b16 %v999
    %v1988 = vunpack.c.l.b16 %v1000
    %v1989 = vunpack.c.l.b16 %v1001
    %v1990 = vunpack.c.h.b16 %v1001
    %v1991 = vunpack.c.l.b16 %v1002
    %v1992 = vunpack.c.l.b16 %v1003
    %v1993 = vunpack.c.h.b16 %v1003
    %v1994 = vunpack.c.l.b16 %v1004
    %v1995 = vunpack.c.l.b16 %v1005
    %v1996 = vunpack.c.h.b16 %v1005
    %v1997 = vunpack.c.l.b16 %v1006
    %v1998 = vunpack.c.l.b16 %v1007
    %v1999 = vunpack.c.h.b16 %v1007
    %v2000 = vunpack.c.l.b16 %v1008
    %v2001 = vunpack.c.l.b16 %v1009
    %v2002 = vunpack.c.h.b16 %v1009
    %v2003 = vunpack.c.l.b16 %v1010
    %v2004 = vunpack.c.l.b16 %v1011
    %v2005 = vunpack.c.h.b16 %v1011
    %v2006 = vunpack.c.l.b16 %v1012
    %v2007 = vunpack.c.l.b16 %v1013
    %v2008 = vunpack.c.h.b16 %v1013
    %v2009 = vunpack.c.l.b16 %v1014
    %v2010 = vunpack.c.l.b16 %v1015
    %v2011 = vunpack.c.h.b16 %v1015
    %v2012 = vunpack.c.l.b16 %v1016
    %v2013 = vunpack.c.l.b16 %v1017
    %v2014 = vunpack.c.h.b16 %v1017
    %v2015 = vunpack.c.l.b16 %v1018
    %v2016 = vunpack.c.l.b16 %v1019
    %v2017 = vunpack.c.h.b16 %v1019
    %v2018 = vunpack.c.l.b16 %v1020
    %v2019 = vunpack.c.l.b16 %v1021
    %v2020 = vunpack.c.h.b16 %v1021
    %v2021 = vunpack.c.l.b16 %v1022
    %v2022 = vunpack.c.l.b16 %v1023
    %v2023 = vunpack.c.h.b16 %v1023
    %v2024 = vunpack.c.l.b16 %v1024
    %v2025 = vunpack.c.l.b16 %v1025
    %v2026 = vunpack.c.h.b16 %v1025
    %v2027 = vunpack.c.l.b16 %v1026
    %v2028 = vunpack.c.l.b16 %v1027
    %v2029 = vunpack.c.h.b16 %v1027
    %v2030 = vunpack.c.l.b16 %v1028
    %v2031 = vunpack.c.l.b16 %v1029
    %v2032 = vunpack.c.h.b16 %v1029
    %v2033 = vunpack.c.l.b16 %v1030
    %v2034 = vunpack.c.l.b16 %v1031
    %v2035 = vunpack.c.h.b16 %v1031
    %v2036 = vunpack.c.l.b16 %v1032
    %v2037 = vunpack.c.l.b16 %v1033
    %v2038 = vunpack.c.h.b16 %v1033
    %v2039 = vunpack.c.l.b16 %v1034
    %v2040 = vunpack.c.l.b16 %v1035
    %v2041 = vunpack.c.h.b16 %v1035
    %v2042 = vunpack.c.l.b16 %v1036
    %v2043 = vunpack.c.l.b16 %v1037
    %v2044 = vunpack.c.h.b16 %v1037
    %v2045 = vunpack.c.l.b16 %v1038
    %v2046 = vunpack.c.l.b16 %v1039
    %v2047 = vunpack.c.h.b16 %v1039
    %v2048 = vunpack.c.l.b16 %v1040
    %v2049 = vunpack.c.l.b16 %v1041
    %v2050 = vunpack.c.h.b16 %v1041
    %v2051 = vunpack.c.l.b16 %v1042
    %v2052 = vunpack.c.l.b16 %v1043
    %v2053 = vunpack.c.h.b16 %v1043
    %v2054 = vunpack.c.l.b16 %v1044
    %v2055 = vunpack.c.l.b16 %v1045
    %v2056 = vunpack.c.h.b16 %v1045
    %v2057 = vunpack.c.l.b16 %v1046
    %v2058 = vunpack.c.l.b16 %v1047
    %v2059 = vunpack.c.h.b16 %v1047
    %v2060 = vunpack.c.l.b16 %v1048
    %v2061 = vunpack.c.l.b16 %v1049
    %v2062 = vunpack.c.h.b16 %v1049
    %v2063 = vunpack.c.l.b16 %v1050
    %v2064 = vunpack.c.l.b16 %v1051
    %v2065 = vunpack.c.h.b16 %v1051
    %v2066 = vunpack.c.l.b16 %v1052
    %v2067 = vunpack.c.l.b16 %v1053
    %v2068 = vunpack.c.h.b16 %v1053
    %v2069 = vunpack.c.l.b16 %v1054
    %v2070 = vunpack.c.l.b16 %v1055
    %v2071 = vunpack.c.h.b16 %v1055
    %v2072 = vunpack.c.l.b16 %v1056
    %v2073 = vunpack.c.l.b16 %v1057
    %v2074 = vunpack.c.h.b16 %v1057
    %v2075 = vunpack.c.l.b16 %v1058
    %v2076 = vunpack.c.l.b16 %v1059
    %v2077 = vunpack.c.h.b16 %v1059
    %v2078 = vunpack.c.l.b16 %v1060
    %v2079 = vunpack.c.l.b16 %v1061
    %v2080 = vunpack.c.h.b16 %v1061
    %v2081 = vunpack.c.l.b16 %v1062
    %v2082 = vunpack.c.l.b16 %v1063
    %v2083 = vunpack.c.h.b16 %v1063
    %v2084 = vunpack.c.l.b16 %v1064
    %v2085 = vunpack.c.l.b16 %v1065
    %v2086 = vunpack.c.h.b16 %v1065
    %v2087 = vunpack.c.l.b16 %v1066
    %v2088 = vunpack.c.l.b16 %v1067
    %v2089 = vunpack.c.h.b16 %v1067
    %v2090 = vunpack.c.l.b16 %v1068
    %v2091 = vunpack.c.l.b16 %v1069
    %v2092 = vunpack.c.h.b16 %v1069
    %v2093 = vunpack.c.l.b16 %v1070
    %v2094 = vunpack.c.l.b16 %v1071
    %v2095 = vunpack.c.h.b16 %v1071
    %v2096 = vunpack.c.l.b16 %v1072
    %v2097 = vpack.c.b16 %v1944, %v1941
    %v2098 = vpack.c.b16 %v1945, %v1942
    %v2099 = vpack.c.b16 %v1946, %v1943
    %v2100 = vpack.c.b16 %v1950, %v1947
    %v2101 = vpack.c.b16 %v1951, %v1948
    %v2102 = vpack.c.b16 %v1952, %v1949
    %v2103 = vpack.c.b16 %v1956, %v1953
    %v2104 = vpack.c.b16 %v1957, %v1954
    %v2105 = vpack.c.b16 %v1958, %v1955
    %v2106 = vpack.c.b16 %v1962, %v1959
    %v2107 = vpack.c.b16 %v1963, %v1960
    %v2108 = vpack.c.b16 %v1964, %v1961
    %v2109 = vpack.c.b16 %v1968, %v1965
    %v2110 = vpack.c.b16 %v1969, %v1966
    %v2111 = vpack.c.b16 %v1970, %v1967
    %v2112 = vpack.c.b16 %v1974, %v1971
    %v2113 = vpack.c.b16 %v1975, %v1972
    %v2114 = vpack.c.b16 %v1976, %v1973
    %v2115 = vpack.c.b16 %v1980, %v1977
    %v2116 = vpack.c.b16 %v1981, %v1978
    %v2117 = vpack.c.b16 %v1982, %v1979
    %v2118 = vpack.c.b16 %v1986, %v1983
    %v2119 = vpack.c.b16 %v1987, %v1984
    %v2120 = vpack.c.b16 %v1988, %v1985
    %v2121 = vpack.c.b16 %v1992, %v1989
    %v2122 = vpack.c.b16 %v1993, %v1990
    %v2123 = vpack.c.b16 %v1994, %v1991
    %v2124 = vpack.c.b16 %v1998, %v1995
    %v2125 = vpack.c.b16 %v1999, %v1996
    %v2126 = vpack.c.b16 %v2000, %v1997
    %v2127 = vpack.c.b16 %v2004, %v2001
    %v2128 = vpack.c.b16 %v2005, %v2002
    %v2129 = vpack.c.b16 %v2006, %v2003
    %v2130 = vpack.c.b16 %v2010, %v2007
    %v2131 = vpack.c.b16 %v2011, %v2008
    %v2132 = vpack.c.b16 %v2012, %v2009
    %v2133 = vpack.c.b16 %v2016, %v2013
    %v2134 = vpack.c.b16 %v2017, %v2014
    %v2135 = vpack.c.b16 %v2018, %v2015
    %v2136 = vpack.c.b16 %v2022, %v2019
    %v2137 = vpack.c.b16 %v2023, %v2020
    %v2138 = vpack.c.b16 %v2024, %v2021
    %v2139 = vpack.c.b16 %v2028, %v2025
    %v2140 = vpack.c.b16 %v2029, %v2026
    %v2141 = vpack.c.b16 %v2030, %v2027
    %v2142 = vpack.c.b16 %v2034, %v2031
    %v2143 = vpack.c.b16 %v2035, %v2032
    %v2144 = vpack.c.b16 %v2036, %v2033
    %v2145 = vpack.c.b16 %v2040, %v2037
    %v2146 = vpack.c.b16 %v2041, %v2038
    %v2147 = vpack.c.b16 %v2042, %v2039
    %v2148 = vpack.c.b16 %v2046, %v2043
    %v2149 = vpack.c.b16 %v2047, %v2044
    %v2150 = vpack.c.b16 %v2048, %v2045
    %v2151 = vpack.c.b16 %v2052, %v2049
    %v2152 = vpack.c.b16 %v2053, %v2050
    %v2153 = vpack.c.b16 %v2054, %v2051
    %v2154 = vpack.c.b16 %v2058, %v2055
    %v2155 = vpack.c.b16 %v2059, %v2056
    %v2156 = vpack.c.b16 %v2060, %v2057
    %v2157 = vpack.c.b16 %v2064, %v2061
    %v2158 = vpack.c.b16 %v2065, %v2062
    %v2159 = vpack.c.b16 %v2066, %v2063
    %v2160 = vpack.c.b16 %v2070, %v2067
    %v2161 = vpack.c.b16 %v2071, %v2068
    %v2162 = vpack.c.b16 %v2072, %v2069
    %v2163 = vpack.c.b16 %v2076, %v2073
    %v2164 = vpack.c.b16 %v2077, %v2074
    %v2165 = vpack.c.b16 %v2078, %v2075
    %v2166 = vpack.c.b16 %v2082, %v2079
    %v2167 = vpack.c.b16 %v2083, %v2080
    %v2168 = vpack.c.b16 %v2084, %v2081
    %v2169 = vpack.c.b16 %v2088, %v2085
    %v2170 = vpack.c.b16 %v2089, %v2086
    %v2171 = vpack.c.b16 %v2090, %v2087
    %v2172 = vpack.c.b16 %v2094, %v2091
    %v2173 = vpack.c.b16 %v2095, %v2092
    %v2174 = vpack.c.b16 %v2096, %v2093
    %v2254 = vsel %vm1665, %v968, 0
    %2256 = vmatpush.bf16.msra.mxu0 %v2118
    %2257 = vmatpush.bf16.msra.mxu0 %v2115
    %2258 = vmatpush.bf16.msra.mxu0 %v2112
    %2259 = vmatpush.bf16.msra.mxu0 %v2109
    %2260 = vmatpush.bf16.msra.mxu0 %v2106
    %2261 = vmatpush.bf16.msra.mxu0 %v2103
    %2262 = vmatpush.bf16.msra.mxu0 %v2100
    %2263 = vmatpush.bf16.msra.mxu0 %v2097
    %2264 = vmatmul.bf16.gmra.mxu0 %v965
    %v2265 = vpop.f32.mrf.mxu0
    %v2266 = vadd.f32 %v1721, %v2265
    %v2267 = vpop.f32.mrf.mxu0
    %v2268 = vadd.f32 %v1723, %v2267
    %2269 = vdwg.mxu0
    %2270 = vmatpush.bf16.msra.mxu0 %v2142
    %2271 = vmatpush.bf16.msra.mxu0 %v2139
    %2272 = vmatpush.bf16.msra.mxu0 %v2136
    %2273 = vmatpush.bf16.msra.mxu0 %v2133
    %2274 = vmatpush.bf16.msra.mxu0 %v2130
    %2275 = vmatpush.bf16.msra.mxu0 %v2127
    %2276 = vmatpush.bf16.msra.mxu0 %v2124
    %2277 = vmatpush.bf16.msra.mxu0 %v2121
    %2278 = vmatmul.bf16.gmra.mxu0 %v966
    %v2279 = vpop.f32.mrf.mxu0
    %v2280 = vadd.f32 %v2266, %v2279
    %v2281 = vpop.f32.mrf.mxu0
    %v2282 = vadd.f32 %v2268, %v2281
    %2283 = vdwg.mxu0
    %2284 = vmatpush.bf16.msra.mxu0 %v2166
    %2285 = vmatpush.bf16.msra.mxu0 %v2163
    %2286 = vmatpush.bf16.msra.mxu0 %v2160
    %2287 = vmatpush.bf16.msra.mxu0 %v2157
    %2288 = vmatpush.bf16.msra.mxu0 %v2154
    %2289 = vmatpush.bf16.msra.mxu0 %v2151
    %2290 = vmatpush.bf16.msra.mxu0 %v2148
    %2291 = vmatpush.bf16.msra.mxu0 %v2145
    %2292 = vmatmul.bf16.gmra.mxu0 %v967
    %v2293 = vpop.f32.mrf.mxu0
    %v2294 = vadd.f32 %v2280, %v2293
    %v2295 = vpop.f32.mrf.mxu0
    %v2296 = vadd.f32 %v2282, %v2295
    %2297 = vdwg.mxu0
    %2298 = vmatpush.bf16.msra.mxu0 0
    %2299 = vmatpush.bf16.msra.mxu0 0
    %2300 = vmatpush.bf16.msra.mxu0 0
    %2301 = vmatpush.bf16.msra.mxu0 0
    %2302 = vmatpush.bf16.msra.mxu0 0
    %2303 = vmatpush.bf16.msra.mxu0 0
    %2304 = vmatpush.bf16.msra.mxu0 %v2172
    %2305 = vmatpush.bf16.msra.mxu0 %v2169
    %2306 = vmatmul.bf16.gmra.mxu0 %v2254
    %v2307 = vpop.f32.mrf.mxu0
    %v2308 = vadd.f32 %v2294, %v2307
    %v2309 = vpop.f32.mrf.mxu0
    %v2310 = vadd.f32 %v2296, %v2309
    %2311 = vdwg.mxu0
    %2312 = vmatpush.bf16.msra.mxu0 %v2119
    %2313 = vmatpush.bf16.msra.mxu0 %v2116
    %2314 = vmatpush.bf16.msra.mxu0 %v2113
    %2315 = vmatpush.bf16.msra.mxu0 %v2110
    %2316 = vmatpush.bf16.msra.mxu0 %v2107
    %2317 = vmatpush.bf16.msra.mxu0 %v2104
    %2318 = vmatpush.bf16.msra.mxu0 %v2101
    %2319 = vmatpush.bf16.msra.mxu0 %v2098
    %2320 = vmatmul.bf16.gmra.mxu0 %v965
    %v2321 = vpop.f32.mrf.mxu0
    %v2322 = vadd.f32 %v1777, %v2321
    %v2323 = vpop.f32.mrf.mxu0
    %v2324 = vadd.f32 %v1779, %v2323
    %2325 = vdwg.mxu0
    %2326 = vmatpush.bf16.msra.mxu0 %v2143
    %2327 = vmatpush.bf16.msra.mxu0 %v2140
    %2328 = vmatpush.bf16.msra.mxu0 %v2137
    %2329 = vmatpush.bf16.msra.mxu0 %v2134
    %2330 = vmatpush.bf16.msra.mxu0 %v2131
    %2331 = vmatpush.bf16.msra.mxu0 %v2128
    %2332 = vmatpush.bf16.msra.mxu0 %v2125
    %2333 = vmatpush.bf16.msra.mxu0 %v2122
    %2334 = vmatmul.bf16.gmra.mxu0 %v966
    %v2335 = vpop.f32.mrf.mxu0
    %v2336 = vadd.f32 %v2322, %v2335
    %v2337 = vpop.f32.mrf.mxu0
    %v2338 = vadd.f32 %v2324, %v2337
    %2339 = vdwg.mxu0
    %2340 = vmatpush.bf16.msra.mxu0 %v2167
    %2341 = vmatpush.bf16.msra.mxu0 %v2164
    %2342 = vmatpush.bf16.msra.mxu0 %v2161
    %2343 = vmatpush.bf16.msra.mxu0 %v2158
    %2344 = vmatpush.bf16.msra.mxu0 %v2155
    %2345 = vmatpush.bf16.msra.mxu0 %v2152
    %2346 = vmatpush.bf16.msra.mxu0 %v2149
    %2347 = vmatpush.bf16.msra.mxu0 %v2146
    %2348 = vmatmul.bf16.gmra.mxu0 %v967
    %v2349 = vpop.f32.mrf.mxu0
    %v2350 = vadd.f32 %v2336, %v2349
    %v2351 = vpop.f32.mrf.mxu0
    %v2352 = vadd.f32 %v2338, %v2351
    %2353 = vdwg.mxu0
    %2354 = vmatpush.bf16.msra.mxu0 0
    %2355 = vmatpush.bf16.msra.mxu0 0
    %2356 = vmatpush.bf16.msra.mxu0 0
    %2357 = vmatpush.bf16.msra.mxu0 0
    %2358 = vmatpush.bf16.msra.mxu0 0
    %2359 = vmatpush.bf16.msra.mxu0 0
    %2360 = vmatpush.bf16.msra.mxu0 %v2173
    %2361 = vmatpush.bf16.msra.mxu0 %v2170
    %2362 = vmatmul.bf16.gmra.mxu0 %v2254
    %v2363 = vpop.f32.mrf.mxu0
    %v2364 = vadd.f32 %v2350, %v2363
    %v2365 = vpop.f32.mrf.mxu0
    %v2366 = vadd.f32 %v2352, %v2365
    %2367 = vdwg.mxu0
    %2368 = vmatpush.bf16.msra.mxu0 %v2120
    %2369 = vmatpush.bf16.msra.mxu0 %v2117
    %2370 = vmatpush.bf16.msra.mxu0 %v2114
    %2371 = vmatpush.bf16.msra.mxu0 %v2111
    %2372 = vmatpush.bf16.msra.mxu0 %v2108
    %2373 = vmatpush.bf16.msra.mxu0 %v2105
    %2374 = vmatpush.bf16.msra.mxu0 %v2102
    %2375 = vmatpush.bf16.msra.mxu0 %v2099
    %2376 = vmatmul.bf16.gmra.mxu0 %v965
    %v2377 = vpop.f32.mrf.mxu0
    %v2378 = vadd.f32 %v1833, %v2377
    %v2379 = vpop.f32.mrf.mxu0
    %v2380 = vadd.f32 %v1835, %v2379
    %2381 = vdwg.mxu0
    %2382 = vmatpush.bf16.msra.mxu0 %v2144
    %2383 = vmatpush.bf16.msra.mxu0 %v2141
    %2384 = vmatpush.bf16.msra.mxu0 %v2138
    %2385 = vmatpush.bf16.msra.mxu0 %v2135
    %2386 = vmatpush.bf16.msra.mxu0 %v2132
    %2387 = vmatpush.bf16.msra.mxu0 %v2129
    %2388 = vmatpush.bf16.msra.mxu0 %v2126
    %2389 = vmatpush.bf16.msra.mxu0 %v2123
    %2390 = vmatmul.bf16.gmra.mxu0 %v966
    %v2391 = vpop.f32.mrf.mxu0
    %v2392 = vadd.f32 %v2378, %v2391
    %v2393 = vpop.f32.mrf.mxu0
    %v2394 = vadd.f32 %v2380, %v2393
    %2395 = vdwg.mxu0
    %2396 = vmatpush.bf16.msra.mxu0 %v2168
    %2397 = vmatpush.bf16.msra.mxu0 %v2165
    %2398 = vmatpush.bf16.msra.mxu0 %v2162
    %2399 = vmatpush.bf16.msra.mxu0 %v2159
    %2400 = vmatpush.bf16.msra.mxu0 %v2156
    %2401 = vmatpush.bf16.msra.mxu0 %v2153
    %2402 = vmatpush.bf16.msra.mxu0 %v2150
    %2403 = vmatpush.bf16.msra.mxu0 %v2147
    %2404 = vmatmul.bf16.gmra.mxu0 %v967
    %v2405 = vpop.f32.mrf.mxu0
    %v2406 = vadd.f32 %v2392, %v2405
    %v2407 = vpop.f32.mrf.mxu0
    %v2408 = vadd.f32 %v2394, %v2407
    %2409 = vdwg.mxu0
    %2410 = vmatpush.bf16.msra.mxu0 0
    %2411 = vmatpush.bf16.msra.mxu0 0
    %2412 = vmatpush.bf16.msra.mxu0 0
    %2413 = vmatpush.bf16.msra.mxu0 0
    %2414 = vmatpush.bf16.msra.mxu0 0
    %2415 = vmatpush.bf16.msra.mxu0 0
    %2416 = vmatpush.bf16.msra.mxu0 %v2174
    %2417 = vmatpush.bf16.msra.mxu0 %v2171
    %2418 = vmatmul.bf16.gmra.mxu0 %v2254
    %v2419 = vpop.f32.mrf.mxu0
    %v2420 = vadd.f32 %v2406, %v2419
    %v2421 = vpop.f32.mrf.mxu0
    %v2422 = vadd.f32 %v2408, %v2421
    %2423 = vdwg.mxu0
    %s2424 = scalar_lea.vmem %s5, 16
    %v2425 = vld [vmem:[%s2424] sm:$0xf]
    %v2426 = vld [vmem:[%s2424 + $0x4] sm:$0x1]
    %v2429 = vunpack.c.l.b16 %v2425
    %v2430 = vunpack.c.l.b16 %v2426
    %v2431 = vpack.c.b16 %v2430, %v2429
    %v2433 = vsel %vm892, %v2431, 0
    %2435 = vmatpush.bf16.msra.mxu0 0
    %2436 = vmatpush.bf16.msra.mxu0 0
    %2437 = vmatpush.bf16.msra.mxu0 0
    %2438 = vmatpush.bf16.msra.mxu0 0
    %2439 = vmatpush.bf16.msra.mxu0 0
    %2440 = vmatpush.bf16.msra.mxu0 0
    %2441 = vmatpush.bf16.msra.mxu0 %v898
    %2442 = vmatpush.bf16.msra.mxu0 %v877
    %2443 = vmatmul.bf16.gmra.mxu0 %v2433
    %v2444 = vpop.f32.mrf.mxu0
    %v2445 = vadd.f32 0.0, %v2444
    %v2446 = vpop.f32.mrf.mxu0
    %v2447 = vadd.f32 0.0, %v2446
    %2448 = vdwg.mxu0
    %2449 = vmatpush.bf16.msra.mxu0 0
    %2450 = vmatpush.bf16.msra.mxu0 0
    %2451 = vmatpush.bf16.msra.mxu0 0
    %2452 = vmatpush.bf16.msra.mxu0 0
    %2453 = vmatpush.bf16.msra.mxu0 0
    %2454 = vmatpush.bf16.msra.mxu0 0
    %2455 = vmatpush.bf16.msra.mxu0 %v901
    %2456 = vmatpush.bf16.msra.mxu0 %v878
    %2457 = vmatmul.bf16.gmra.mxu0 %v2433
    %v2458 = vpop.f32.mrf.mxu0
    %v2459 = vadd.f32 0.0, %v2458
    %v2460 = vpop.f32.mrf.mxu0
    %v2461 = vadd.f32 0.0, %v2460
    %2462 = vdwg.mxu0
    %2463 = vmatpush.bf16.msra.mxu0 0
    %2464 = vmatpush.bf16.msra.mxu0 0
    %2465 = vmatpush.bf16.msra.mxu0 0
    %2466 = vmatpush.bf16.msra.mxu0 0
    %2467 = vmatpush.bf16.msra.mxu0 0
    %2468 = vmatpush.bf16.msra.mxu0 0
    %2469 = vmatpush.bf16.msra.mxu0 %v904
    %2470 = vmatpush.bf16.msra.mxu0 %v879
    %2471 = vmatmul.bf16.gmra.mxu0 %v2433
    %v2472 = vpop.f32.mrf.mxu0
    %v2473 = vadd.f32 0.0, %v2472
    %v2474 = vpop.f32.mrf.mxu0
    %v2475 = vadd.f32 0.0, %v2474
    %2476 = vdwg.mxu0
    %2477 = vmatpush.bf16.msra.mxu0 0
    %2478 = vmatpush.bf16.msra.mxu0 0
    %2479 = vmatpush.bf16.msra.mxu0 0
    %2480 = vmatpush.bf16.msra.mxu0 0
    %2481 = vmatpush.bf16.msra.mxu0 0
    %2482 = vmatpush.bf16.msra.mxu0 0
    %2483 = vmatpush.bf16.msra.mxu0 %v907
    %2484 = vmatpush.bf16.msra.mxu0 %v880
    %2485 = vmatmul.bf16.gmra.mxu0 %v2433
    %v2486 = vpop.f32.mrf.mxu0
    %v2487 = vadd.f32 0.0, %v2486
    %v2488 = vpop.f32.mrf.mxu0
    %v2489 = vadd.f32 0.0, %v2488
    %2490 = vdwg.mxu0
    %v2491 = vpack.c.bf16 %v2447, %v2445
    %v2492 = vpack.c.bf16 %v2461, %v2459
    %v2493 = vpack.c.bf16 %v2475, %v2473
    %v2494 = vpack.c.bf16 %v2489, %v2487
    %s2495 = scalar_lea.vmem %s6, 1248
    %v2496 = vld [vmem:[%s2495] sm:$0xff]
    %v2497 = vld [vmem:[%s2495 + $0x8] sm:$0xf]
    %v2498 = vld [vmem:[%s2495 + $0xc] sm:$0xff]
    %v2499 = vld [vmem:[%s2495 + $0x14] sm:$0xf]
    %v2500 = vld [vmem:[%s2495 + $0x18] sm:$0xff]
    %v2501 = vld [vmem:[%s2495 + $0x20] sm:$0xf]
    %v2502 = vld [vmem:[%s2495 + $0x24] sm:$0xff]
    %v2503 = vld [vmem:[%s2495 + $0x2c] sm:$0xf]
    %v2504 = vld [vmem:[%s2495 + $0x30] sm:$0xff]
    %v2505 = vld [vmem:[%s2495 + $0x38] sm:$0xf]
    %v2506 = vld [vmem:[%s2495 + $0x3c] sm:$0xff]
    %v2507 = vld [vmem:[%s2495 + $0x44] sm:$0xf]
    %v2508 = vld [vmem:[%s2495 + $0x48] sm:$0xff]
    %v2509 = vld [vmem:[%s2495 + $0x50] sm:$0xf]
    %v2510 = vld [vmem:[%s2495 + $0x54] sm:$0xff]
    %v2511 = vld [vmem:[%s2495 + $0x5c] sm:$0xf]
    %v2512 = vld [vmem:[%s2495 + $0x60] sm:$0xff]
    %v2513 = vld [vmem:[%s2495 + $0x68] sm:$0xf]
    %v2514 = vld [vmem:[%s2495 + $0x6c] sm:$0xff]
    %v2515 = vld [vmem:[%s2495 + $0x74] sm:$0xf]
    %v2516 = vld [vmem:[%s2495 + $0x78] sm:$0xff]
    %v2517 = vld [vmem:[%s2495 + $0x80] sm:$0xf]
    %v2518 = vld [vmem:[%s2495 + $0x84] sm:$0xff]
    %v2519 = vld [vmem:[%s2495 + $0x8c] sm:$0xf]
    %v2520 = vld [vmem:[%s2495 + $0x90] sm:$0xff]
    %v2521 = vld [vmem:[%s2495 + $0x98] sm:$0xf]
    %v2522 = vld [vmem:[%s2495 + $0x9c] sm:$0xff]
    %v2523 = vld [vmem:[%s2495 + $0xa4] sm:$0xf]
    %v2524 = vld [vmem:[%s2495 + $0xa8] sm:$0xff]
    %v2525 = vld [vmem:[%s2495 + $0xb0] sm:$0xf]
    %v2526 = vld [vmem:[%s2495 + $0xb4] sm:$0xff]
    %v2527 = vld [vmem:[%s2495 + $0xbc] sm:$0xf]
    %v2528 = vld [vmem:[%s2495 + $0xc0] sm:$0xff]
    %v2529 = vld [vmem:[%s2495 + $0xc8] sm:$0xf]
    %v2530 = vld [vmem:[%s2495 + $0xcc] sm:$0xff]
    %v2531 = vld [vmem:[%s2495 + $0xd4] sm:$0xf]
    %v2532 = vld [vmem:[%s2495 + $0xd8] sm:$0xff]
    %v2533 = vld [vmem:[%s2495 + $0xe0] sm:$0xf]
    %v2534 = vld [vmem:[%s2495 + $0xe4] sm:$0xff]
    %v2535 = vld [vmem:[%s2495 + $0xec] sm:$0xf]
    %v2536 = vld [vmem:[%s2495 + $0xf0] sm:$0xff]
    %v2537 = vld [vmem:[%s2495 + $0xf8] sm:$0xf]
    %v2538 = vld [vmem:[%s2495 + $0xfc] sm:$0xff]
    %v2539 = vld [vmem:[%s2495 + $0x104] sm:$0xf]
    %v2540 = vld [vmem:[%s2495 + $0x108] sm:$0xff]
    %v2541 = vld [vmem:[%s2495 + $0x110] sm:$0xf]
    %v2542 = vld [vmem:[%s2495 + $0x114] sm:$0xff]
    %v2543 = vld [vmem:[%s2495 + $0x11c] sm:$0xf]
    %v2544 = vld [vmem:[%s2495 + $0x120] sm:$0xff]
    %v2545 = vld [vmem:[%s2495 + $0x128] sm:$0xf]
    %v2546 = vld [vmem:[%s2495 + $0x12c] sm:$0xff]
    %v2547 = vld [vmem:[%s2495 + $0x134] sm:$0xf]
    %v2548 = vld [vmem:[%s2495 + $0x138] sm:$0xff]
    %v2549 = vld [vmem:[%s2495 + $0x140] sm:$0xf]
    %v2550 = vld [vmem:[%s2495 + $0x144] sm:$0xff]
    %v2551 = vld [vmem:[%s2495 + $0x14c] sm:$0xf]
    %v2552 = vld [vmem:[%s2495 + $0x150] sm:$0xff]
    %v2553 = vld [vmem:[%s2495 + $0x158] sm:$0xf]
    %v2554 = vld [vmem:[%s2495 + $0x15c] sm:$0xff]
    %v2555 = vld [vmem:[%s2495 + $0x164] sm:$0xf]
    %v2556 = vld [vmem:[%s2495 + $0x168] sm:$0xff]
    %v2557 = vld [vmem:[%s2495 + $0x170] sm:$0xf]
    %v2558 = vld [vmem:[%s2495 + $0x174] sm:$0xff]
    %v2559 = vld [vmem:[%s2495 + $0x17c] sm:$0xf]
    %v2560 = vld [vmem:[%s2495 + $0x180] sm:$0xff]
    %v2561 = vld [vmem:[%s2495 + $0x188] sm:$0xf]
    %v2562 = vld [vmem:[%s2495 + $0x18c] sm:$0xff]
    %v2563 = vld [vmem:[%s2495 + $0x194] sm:$0xf]
    %v2564 = vld [vmem:[%s2495 + $0x198] sm:$0xff]
    %v2565 = vld [vmem:[%s2495 + $0x1a0] sm:$0xf]
    %v2566 = vld [vmem:[%s2495 + $0x1a4] sm:$0xff]
    %v2567 = vld [vmem:[%s2495 + $0x1ac] sm:$0xf]
    %v2568 = vld [vmem:[%s2495 + $0x1b0] sm:$0xff]
    %v2569 = vld [vmem:[%s2495 + $0x1b8] sm:$0xf]
    %v2570 = vld [vmem:[%s2495 + $0x1bc] sm:$0xff]
    %v2571 = vld [vmem:[%s2495 + $0x1c4] sm:$0xf]
    %v2572 = vld [vmem:[%s2495 + $0x1c8] sm:$0xff]
    %v2573 = vld [vmem:[%s2495 + $0x1d0] sm:$0xf]
    %v2574 = vld [vmem:[%s2495 + $0x1d4] sm:$0xff]
    %v2575 = vld [vmem:[%s2495 + $0x1dc] sm:$0xf]
    %v2576 = vld [vmem:[%s2495 + $0x1e0] sm:$0xff]
    %v2577 = vld [vmem:[%s2495 + $0x1e8] sm:$0xf]
    %v2578 = vld [vmem:[%s2495 + $0x1ec] sm:$0xff]
    %v2579 = vld [vmem:[%s2495 + $0x1f4] sm:$0xf]
    %v2580 = vld [vmem:[%s2495 + $0x1f8] sm:$0xff]
    %v2581 = vld [vmem:[%s2495 + $0x200] sm:$0xf]
    %v2582 = vld [vmem:[%s2495 + $0x204] sm:$0xff]
    %v2583 = vld [vmem:[%s2495 + $0x20c] sm:$0xf]
    %v2584 = vld [vmem:[%s2495 + $0x210] sm:$0xff]
    %v2585 = vld [vmem:[%s2495 + $0x218] sm:$0xf]
    %v2586 = vld [vmem:[%s2495 + $0x21c] sm:$0xff]
    %v2587 = vld [vmem:[%s2495 + $0x224] sm:$0xf]
    %v2588 = vld [vmem:[%s2495 + $0x228] sm:$0xff]
    %v2589 = vld [vmem:[%s2495 + $0x230] sm:$0xf]
    %v2590 = vld [vmem:[%s2495 + $0x234] sm:$0xff]
    %v2591 = vld [vmem:[%s2495 + $0x23c] sm:$0xf]
    %v2592 = vld [vmem:[%s2495 + $0x240] sm:$0xff]
    %v2593 = vld [vmem:[%s2495 + $0x248] sm:$0xf]
    %v2594 = vld [vmem:[%s2495 + $0x24c] sm:$0xff]
    %v2595 = vld [vmem:[%s2495 + $0x254] sm:$0xf]
    %v2596 = vld [vmem:[%s2495 + $0x258] sm:$0xff]
    %v2597 = vld [vmem:[%s2495 + $0x260] sm:$0xf]
    %v2598 = vld [vmem:[%s2495 + $0x264] sm:$0xff]
    %v2599 = vld [vmem:[%s2495 + $0x26c] sm:$0xf]
    %v2704 = vunpack.c.l.b16 %v2496
    %v2705 = vunpack.c.h.b16 %v2496
    %v2706 = vunpack.c.l.b16 %v2497
    %v2707 = vunpack.c.l.b16 %v2498
    %v2708 = vunpack.c.h.b16 %v2498
    %v2709 = vunpack.c.l.b16 %v2499
    %v2710 = vunpack.c.l.b16 %v2500
    %v2711 = vunpack.c.h.b16 %v2500
    %v2712 = vunpack.c.l.b16 %v2501
    %v2713 = vunpack.c.l.b16 %v2502
    %v2714 = vunpack.c.h.b16 %v2502
    %v2715 = vunpack.c.l.b16 %v2503
    %v2716 = vunpack.c.l.b16 %v2504
    %v2717 = vunpack.c.h.b16 %v2504
    %v2718 = vunpack.c.l.b16 %v2505
    %v2719 = vunpack.c.l.b16 %v2506
    %v2720 = vunpack.c.h.b16 %v2506
    %v2721 = vunpack.c.l.b16 %v2507
    %v2722 = vunpack.c.l.b16 %v2508
    %v2723 = vunpack.c.h.b16 %v2508
    %v2724 = vunpack.c.l.b16 %v2509
    %v2725 = vunpack.c.l.b16 %v2510
    %v2726 = vunpack.c.h.b16 %v2510
    %v2727 = vunpack.c.l.b16 %v2511
    %v2728 = vunpack.c.l.b16 %v2512
    %v2729 = vunpack.c.h.b16 %v2512
    %v2730 = vunpack.c.l.b16 %v2513
    %v2731 = vunpack.c.l.b16 %v2514
    %v2732 = vunpack.c.h.b16 %v2514
    %v2733 = vunpack.c.l.b16 %v2515
    %v2734 = vunpack.c.l.b16 %v2516
    %v2735 = vunpack.c.h.b16 %v2516
    %v2736 = vunpack.c.l.b16 %v2517
    %v2737 = vunpack.c.l.b16 %v2518
    %v2738 = vunpack.c.h.b16 %v2518
    %v2739 = vunpack.c.l.b16 %v2519
    %v2740 = vunpack.c.l.b16 %v2520
    %v2741 = vunpack.c.h.b16 %v2520
    %v2742 = vunpack.c.l.b16 %v2521
    %v2743 = vunpack.c.l.b16 %v2522
    %v2744 = vunpack.c.h.b16 %v2522
    %v2745 = vunpack.c.l.b16 %v2523
    %v2746 = vunpack.c.l.b16 %v2524
    %v2747 = vunpack.c.h.b16 %v2524
    %v2748 = vunpack.c.l.b16 %v2525
    %v2749 = vunpack.c.l.b16 %v2526
    %v2750 = vunpack.c.h.b16 %v2526
    %v2751 = vunpack.c.l.b16 %v2527
    %v2752 = vunpack.c.l.b16 %v2528
    %v2753 = vunpack.c.h.b16 %v2528
    %v2754 = vunpack.c.l.b16 %v2529
    %v2755 = vunpack.c.l.b16 %v2530
    %v2756 = vunpack.c.h.b16 %v2530
    %v2757 = vunpack.c.l.b16 %v2531
    %v2758 = vunpack.c.l.b16 %v2532
    %v2759 = vunpack.c.h.b16 %v2532
    %v2760 = vunpack.c.l.b16 %v2533
    %v2761 = vunpack.c.l.b16 %v2534
    %v2762 = vunpack.c.h.b16 %v2534
    %v2763 = vunpack.c.l.b16 %v2535
    %v2764 = vunpack.c.l.b16 %v2536
    %v2765 = vunpack.c.h.b16 %v2536
    %v2766 = vunpack.c.l.b16 %v2537
    %v2767 = vunpack.c.l.b16 %v2538
    %v2768 = vunpack.c.h.b16 %v2538
    %v2769 = vunpack.c.l.b16 %v2539
    %v2770 = vunpack.c.l.b16 %v2540
    %v2771 = vunpack.c.h.b16 %v2540
    %v2772 = vunpack.c.l.b16 %v2541
    %v2773 = vunpack.c.l.b16 %v2542
    %v2774 = vunpack.c.h.b16 %v2542
    %v2775 = vunpack.c.l.b16 %v2543
    %v2776 = vunpack.c.l.b16 %v2544
    %v2777 = vunpack.c.h.b16 %v2544
    %v2778 = vunpack.c.l.b16 %v2545
    %v2779 = vunpack.c.l.b16 %v2546
    %v2780 = vunpack.c.h.b16 %v2546
    %v2781 = vunpack.c.l.b16 %v2547
    %v2782 = vunpack.c.l.b16 %v2548
    %v2783 = vunpack.c.h.b16 %v2548
    %v2784 = vunpack.c.l.b16 %v2549
    %v2785 = vunpack.c.l.b16 %v2550
    %v2786 = vunpack.c.h.b16 %v2550
    %v2787 = vunpack.c.l.b16 %v2551
    %v2788 = vunpack.c.l.b16 %v2552
    %v2789 = vunpack.c.h.b16 %v2552
    %v2790 = vunpack.c.l.b16 %v2553
    %v2791 = vunpack.c.l.b16 %v2554
    %v2792 = vunpack.c.h.b16 %v2554
    %v2793 = vunpack.c.l.b16 %v2555
    %v2794 = vunpack.c.l.b16 %v2556
    %v2795 = vunpack.c.h.b16 %v2556
    %v2796 = vunpack.c.l.b16 %v2557
    %v2797 = vunpack.c.l.b16 %v2558
    %v2798 = vunpack.c.h.b16 %v2558
    %v2799 = vunpack.c.l.b16 %v2559
    %v2800 = vunpack.c.l.b16 %v2560
    %v2801 = vunpack.c.h.b16 %v2560
    %v2802 = vunpack.c.l.b16 %v2561
    %v2803 = vunpack.c.l.b16 %v2562
    %v2804 = vunpack.c.h.b16 %v2562
    %v2805 = vunpack.c.l.b16 %v2563
    %v2806 = vunpack.c.l.b16 %v2564
    %v2807 = vunpack.c.h.b16 %v2564
    %v2808 = vunpack.c.l.b16 %v2565
    %v2809 = vunpack.c.l.b16 %v2566
    %v2810 = vunpack.c.h.b16 %v2566
    %v2811 = vunpack.c.l.b16 %v2567
    %v2812 = vunpack.c.l.b16 %v2568
    %v2813 = vunpack.c.h.b16 %v2568
    %v2814 = vunpack.c.l.b16 %v2569
    %v2815 = vunpack.c.l.b16 %v2570
    %v2816 = vunpack.c.h.b16 %v2570
    %v2817 = vunpack.c.l.b16 %v2571
    %v2818 = vunpack.c.l.b16 %v2572
    %v2819 = vunpack.c.h.b16 %v2572
    %v2820 = vunpack.c.l.b16 %v2573
    %v2821 = vunpack.c.l.b16 %v2574
    %v2822 = vunpack.c.h.b16 %v2574
    %v2823 = vunpack.c.l.b16 %v2575
    %v2824 = vunpack.c.l.b16 %v2576
    %v2825 = vunpack.c.h.b16 %v2576
    %v2826 = vunpack.c.l.b16 %v2577
    %v2827 = vunpack.c.l.b16 %v2578
    %v2828 = vunpack.c.h.b16 %v2578
    %v2829 = vunpack.c.l.b16 %v2579
    %v2830 = vunpack.c.l.b16 %v2580
    %v2831 = vunpack.c.h.b16 %v2580
    %v2832 = vunpack.c.l.b16 %v2581
    %v2833 = vunpack.c.l.b16 %v2582
    %v2834 = vunpack.c.h.b16 %v2582
    %v2835 = vunpack.c.l.b16 %v2583
    %v2836 = vunpack.c.l.b16 %v2584
    %v2837 = vunpack.c.h.b16 %v2584
    %v2838 = vunpack.c.l.b16 %v2585
    %v2839 = vunpack.c.l.b16 %v2586
    %v2840 = vunpack.c.h.b16 %v2586
    %v2841 = vunpack.c.l.b16 %v2587
    %v2842 = vunpack.c.l.b16 %v2588
    %v2843 = vunpack.c.h.b16 %v2588
    %v2844 = vunpack.c.l.b16 %v2589
    %v2845 = vunpack.c.l.b16 %v2590
    %v2846 = vunpack.c.h.b16 %v2590
    %v2847 = vunpack.c.l.b16 %v2591
    %v2848 = vunpack.c.l.b16 %v2592
    %v2849 = vunpack.c.h.b16 %v2592
    %v2850 = vunpack.c.l.b16 %v2593
    %v2851 = vunpack.c.l.b16 %v2594
    %v2852 = vunpack.c.h.b16 %v2594
    %v2853 = vunpack.c.l.b16 %v2595
    %v2854 = vunpack.c.l.b16 %v2596
    %v2855 = vunpack.c.h.b16 %v2596
    %v2856 = vunpack.c.l.b16 %v2597
    %v2857 = vunpack.c.l.b16 %v2598
    %v2858 = vunpack.c.h.b16 %v2598
    %v2859 = vunpack.c.l.b16 %v2599
    %v2860 = vpack.c.b16 %v2707, %v2704
    %v2861 = vpack.c.b16 %v2708, %v2705
    %v2862 = vpack.c.b16 %v2709, %v2706
    %v2863 = vpack.c.b16 %v2713, %v2710
    %v2864 = vpack.c.b16 %v2714, %v2711
    %v2865 = vpack.c.b16 %v2715, %v2712
    %v2866 = vpack.c.b16 %v2719, %v2716
    %v2867 = vpack.c.b16 %v2720, %v2717
    %v2868 = vpack.c.b16 %v2721, %v2718
    %v2869 = vpack.c.b16 %v2725, %v2722
    %v2870 = vpack.c.b16 %v2726, %v2723
    %v2871 = vpack.c.b16 %v2727, %v2724
    %v2872 = vpack.c.b16 %v2731, %v2728
    %v2873 = vpack.c.b16 %v2732, %v2729
    %v2874 = vpack.c.b16 %v2733, %v2730
    %v2875 = vpack.c.b16 %v2737, %v2734
    %v2876 = vpack.c.b16 %v2738, %v2735
    %v2877 = vpack.c.b16 %v2739, %v2736
    %v2878 = vpack.c.b16 %v2743, %v2740
    %v2879 = vpack.c.b16 %v2744, %v2741
    %v2880 = vpack.c.b16 %v2745, %v2742
    %v2881 = vpack.c.b16 %v2749, %v2746
    %v2882 = vpack.c.b16 %v2750, %v2747
    %v2883 = vpack.c.b16 %v2751, %v2748
    %v2884 = vpack.c.b16 %v2755, %v2752
    %v2885 = vpack.c.b16 %v2756, %v2753
    %v2886 = vpack.c.b16 %v2757, %v2754
    %v2887 = vpack.c.b16 %v2761, %v2758
    %v2888 = vpack.c.b16 %v2762, %v2759
    %v2889 = vpack.c.b16 %v2763, %v2760
    %v2890 = vpack.c.b16 %v2767, %v2764
    %v2891 = vpack.c.b16 %v2768, %v2765
    %v2892 = vpack.c.b16 %v2769, %v2766
    %v2893 = vpack.c.b16 %v2773, %v2770
    %v2894 = vpack.c.b16 %v2774, %v2771
    %v2895 = vpack.c.b16 %v2775, %v2772
    %v2896 = vpack.c.b16 %v2779, %v2776
    %v2897 = vpack.c.b16 %v2780, %v2777
    %v2898 = vpack.c.b16 %v2781, %v2778
    %v2899 = vpack.c.b16 %v2785, %v2782
    %v2900 = vpack.c.b16 %v2786, %v2783
    %v2901 = vpack.c.b16 %v2787, %v2784
    %v2902 = vpack.c.b16 %v2791, %v2788
    %v2903 = vpack.c.b16 %v2792, %v2789
    %v2904 = vpack.c.b16 %v2793, %v2790
    %v2905 = vpack.c.b16 %v2797, %v2794
    %v2906 = vpack.c.b16 %v2798, %v2795
    %v2907 = vpack.c.b16 %v2799, %v2796
    %v2908 = vpack.c.b16 %v2803, %v2800
    %v2909 = vpack.c.b16 %v2804, %v2801
    %v2910 = vpack.c.b16 %v2805, %v2802
    %v2911 = vpack.c.b16 %v2809, %v2806
    %v2912 = vpack.c.b16 %v2810, %v2807
    %v2913 = vpack.c.b16 %v2811, %v2808
    %v2914 = vpack.c.b16 %v2815, %v2812
    %v2915 = vpack.c.b16 %v2816, %v2813
    %v2916 = vpack.c.b16 %v2817, %v2814
    %v2917 = vpack.c.b16 %v2821, %v2818
    %v2918 = vpack.c.b16 %v2822, %v2819
    %v2919 = vpack.c.b16 %v2823, %v2820
    %v2920 = vpack.c.b16 %v2827, %v2824
    %v2921 = vpack.c.b16 %v2828, %v2825
    %v2922 = vpack.c.b16 %v2829, %v2826
    %v2923 = vpack.c.b16 %v2833, %v2830
    %v2924 = vpack.c.b16 %v2834, %v2831
    %v2925 = vpack.c.b16 %v2835, %v2832
    %v2926 = vpack.c.b16 %v2839, %v2836
    %v2927 = vpack.c.b16 %v2840, %v2837
    %v2928 = vpack.c.b16 %v2841, %v2838
    %v2929 = vpack.c.b16 %v2845, %v2842
    %v2930 = vpack.c.b16 %v2846, %v2843
    %v2931 = vpack.c.b16 %v2847, %v2844
    %v2932 = vpack.c.b16 %v2851, %v2848
    %v2933 = vpack.c.b16 %v2852, %v2849
    %v2934 = vpack.c.b16 %v2853, %v2850
    %v2935 = vpack.c.b16 %v2857, %v2854
    %v2936 = vpack.c.b16 %v2858, %v2855
    %v2937 = vpack.c.b16 %v2859, %v2856
    %v3017 = vsel %vm1665, %v2494, 0
    %3019 = vmatpush.bf16.msra.mxu0 %v2881
    %3020 = vmatpush.bf16.msra.mxu0 %v2878
    %3021 = vmatpush.bf16.msra.mxu0 %v2875
    %3022 = vmatpush.bf16.msra.mxu0 %v2872
    %3023 = vmatpush.bf16.msra.mxu0 %v2869
    %3024 = vmatpush.bf16.msra.mxu0 %v2866
    %3025 = vmatpush.bf16.msra.mxu0 %v2863
    %3026 = vmatpush.bf16.msra.mxu0 %v2860
    %3027 = vmatmul.bf16.gmra.mxu0 %v2491
    %v3028 = vpop.f32.mrf.mxu0
    %v3029 = vadd.f32 0.0, %v3028
    %v3030 = vpop.f32.mrf.mxu0
    %v3031 = vadd.f32 0.0, %v3030
    %3032 = vdwg.mxu0
    %3033 = vmatpush.bf16.msra.mxu0 %v2905
    %3034 = vmatpush.bf16.msra.mxu0 %v2902
    %3035 = vmatpush.bf16.msra.mxu0 %v2899
    %3036 = vmatpush.bf16.msra.mxu0 %v2896
    %3037 = vmatpush.bf16.msra.mxu0 %v2893
    %3038 = vmatpush.bf16.msra.mxu0 %v2890
    %3039 = vmatpush.bf16.msra.mxu0 %v2887
    %3040 = vmatpush.bf16.msra.mxu0 %v2884
    %3041 = vmatmul.bf16.gmra.mxu0 %v2492
    %v3042 = vpop.f32.mrf.mxu0
    %v3043 = vadd.f32 %v3029, %v3042
    %v3044 = vpop.f32.mrf.mxu0
    %v3045 = vadd.f32 %v3031, %v3044
    %3046 = vdwg.mxu0
    %3047 = vmatpush.bf16.msra.mxu0 %v2929
    %3048 = vmatpush.bf16.msra.mxu0 %v2926
    %3049 = vmatpush.bf16.msra.mxu0 %v2923
    %3050 = vmatpush.bf16.msra.mxu0 %v2920
    %3051 = vmatpush.bf16.msra.mxu0 %v2917
    %3052 = vmatpush.bf16.msra.mxu0 %v2914
    %3053 = vmatpush.bf16.msra.mxu0 %v2911
    %3054 = vmatpush.bf16.msra.mxu0 %v2908
    %3055 = vmatmul.bf16.gmra.mxu0 %v2493
    %v3056 = vpop.f32.mrf.mxu0
    %v3057 = vadd.f32 %v3043, %v3056
    %v3058 = vpop.f32.mrf.mxu0
    %v3059 = vadd.f32 %v3045, %v3058
    %3060 = vdwg.mxu0
    %3061 = vmatpush.bf16.msra.mxu0 0
    %3062 = vmatpush.bf16.msra.mxu0 0
    %3063 = vmatpush.bf16.msra.mxu0 0
    %3064 = vmatpush.bf16.msra.mxu0 0
    %3065 = vmatpush.bf16.msra.mxu0 0
    %3066 = vmatpush.bf16.msra.mxu0 0
    %3067 = vmatpush.bf16.msra.mxu0 %v2935
    %3068 = vmatpush.bf16.msra.mxu0 %v2932
    %3069 = vmatmul.bf16.gmra.mxu0 %v3017
    %v3070 = vpop.f32.mrf.mxu0
    %v3071 = vadd.f32 %v3057, %v3070
    %v3072 = vpop.f32.mrf.mxu0
    %v3073 = vadd.f32 %v3059, %v3072
    %3074 = vdwg.mxu0
    %3075 = vmatpush.bf16.msra.mxu0 %v2882
    %3076 = vmatpush.bf16.msra.mxu0 %v2879
    %3077 = vmatpush.bf16.msra.mxu0 %v2876
    %3078 = vmatpush.bf16.msra.mxu0 %v2873
    %3079 = vmatpush.bf16.msra.mxu0 %v2870
    %3080 = vmatpush.bf16.msra.mxu0 %v2867
    %3081 = vmatpush.bf16.msra.mxu0 %v2864
    %3082 = vmatpush.bf16.msra.mxu0 %v2861
    %3083 = vmatmul.bf16.gmra.mxu0 %v2491
    %v3084 = vpop.f32.mrf.mxu0
    %v3085 = vadd.f32 0.0, %v3084
    %v3086 = vpop.f32.mrf.mxu0
    %v3087 = vadd.f32 0.0, %v3086
    %3088 = vdwg.mxu0
    %3089 = vmatpush.bf16.msra.mxu0 %v2906
    %3090 = vmatpush.bf16.msra.mxu0 %v2903
    %3091 = vmatpush.bf16.msra.mxu0 %v2900
    %3092 = vmatpush.bf16.msra.mxu0 %v2897
    %3093 = vmatpush.bf16.msra.mxu0 %v2894
    %3094 = vmatpush.bf16.msra.mxu0 %v2891
    %3095 = vmatpush.bf16.msra.mxu0 %v2888
    %3096 = vmatpush.bf16.msra.mxu0 %v2885
    %3097 = vmatmul.bf16.gmra.mxu0 %v2492
    %v3098 = vpop.f32.mrf.mxu0
    %v3099 = vadd.f32 %v3085, %v3098
    %v3100 = vpop.f32.mrf.mxu0
    %v3101 = vadd.f32 %v3087, %v3100
    %3102 = vdwg.mxu0
    %3103 = vmatpush.bf16.msra.mxu0 %v2930
    %3104 = vmatpush.bf16.msra.mxu0 %v2927
    %3105 = vmatpush.bf16.msra.mxu0 %v2924
    %3106 = vmatpush.bf16.msra.mxu0 %v2921
    %3107 = vmatpush.bf16.msra.mxu0 %v2918
    %3108 = vmatpush.bf16.msra.mxu0 %v2915
    %3109 = vmatpush.bf16.msra.mxu0 %v2912
    %3110 = vmatpush.bf16.msra.mxu0 %v2909
    %3111 = vmatmul.bf16.gmra.mxu0 %v2493
    %v3112 = vpop.f32.mrf.mxu0
    %v3113 = vadd.f32 %v3099, %v3112
    %v3114 = vpop.f32.mrf.mxu0
    %v3115 = vadd.f32 %v3101, %v3114
    %3116 = vdwg.mxu0
    %3117 = vmatpush.bf16.msra.mxu0 0
    %3118 = vmatpush.bf16.msra.mxu0 0
    %3119 = vmatpush.bf16.msra.mxu0 0
    %3120 = vmatpush.bf16.msra.mxu0 0
    %3121 = vmatpush.bf16.msra.mxu0 0
    %3122 = vmatpush.bf16.msra.mxu0 0
    %3123 = vmatpush.bf16.msra.mxu0 %v2936
    %3124 = vmatpush.bf16.msra.mxu0 %v2933
    %3125 = vmatmul.bf16.gmra.mxu0 %v3017
    %v3126 = vpop.f32.mrf.mxu0
    %v3127 = vadd.f32 %v3113, %v3126
    %v3128 = vpop.f32.mrf.mxu0
    %v3129 = vadd.f32 %v3115, %v3128
    %3130 = vdwg.mxu0
    %3131 = vmatpush.bf16.msra.mxu0 %v2883
    %3132 = vmatpush.bf16.msra.mxu0 %v2880
    %3133 = vmatpush.bf16.msra.mxu0 %v2877
    %3134 = vmatpush.bf16.msra.mxu0 %v2874
    %3135 = vmatpush.bf16.msra.mxu0 %v2871
    %3136 = vmatpush.bf16.msra.mxu0 %v2868
    %3137 = vmatpush.bf16.msra.mxu0 %v2865
    %3138 = vmatpush.bf16.msra.mxu0 %v2862
    %3139 = vmatmul.bf16.gmra.mxu0 %v2491
    %v3140 = vpop.f32.mrf.mxu0
    %v3141 = vadd.f32 0.0, %v3140
    %v3142 = vpop.f32.mrf.mxu0
    %v3143 = vadd.f32 0.0, %v3142
    %3144 = vdwg.mxu0
    %3145 = vmatpush.bf16.msra.mxu0 %v2907
    %3146 = vmatpush.bf16.msra.mxu0 %v2904
    %3147 = vmatpush.bf16.msra.mxu0 %v2901
    %3148 = vmatpush.bf16.msra.mxu0 %v2898
    %3149 = vmatpush.bf16.msra.mxu0 %v2895
    %3150 = vmatpush.bf16.msra.mxu0 %v2892
    %3151 = vmatpush.bf16.msra.mxu0 %v2889
    %3152 = vmatpush.bf16.msra.mxu0 %v2886
    %3153 = vmatmul.bf16.gmra.mxu0 %v2492
    %v3154 = vpop.f32.mrf.mxu0
    %v3155 = vadd.f32 %v3141, %v3154
    %v3156 = vpop.f32.mrf.mxu0
    %v3157 = vadd.f32 %v3143, %v3156
    %3158 = vdwg.mxu0
    %3159 = vmatpush.bf16.msra.mxu0 %v2931
    %3160 = vmatpush.bf16.msra.mxu0 %v2928
    %3161 = vmatpush.bf16.msra.mxu0 %v2925
    %3162 = vmatpush.bf16.msra.mxu0 %v2922
    %3163 = vmatpush.bf16.msra.mxu0 %v2919
    %3164 = vmatpush.bf16.msra.mxu0 %v2916
    %3165 = vmatpush.bf16.msra.mxu0 %v2913
    %3166 = vmatpush.bf16.msra.mxu0 %v2910
    %3167 = vmatmul.bf16.gmra.mxu0 %v2493
    %v3168 = vpop.f32.mrf.mxu0
    %v3169 = vadd.f32 %v3155, %v3168
    %v3170 = vpop.f32.mrf.mxu0
    %v3171 = vadd.f32 %v3157, %v3170
    %3172 = vdwg.mxu0
    %3173 = vmatpush.bf16.msra.mxu0 0
    %3174 = vmatpush.bf16.msra.mxu0 0
    %3175 = vmatpush.bf16.msra.mxu0 0
    %3176 = vmatpush.bf16.msra.mxu0 0
    %3177 = vmatpush.bf16.msra.mxu0 0
    %3178 = vmatpush.bf16.msra.mxu0 0
    %3179 = vmatpush.bf16.msra.mxu0 %v2937
    %3180 = vmatpush.bf16.msra.mxu0 %v2934
    %3181 = vmatmul.bf16.gmra.mxu0 %v3017
    %v3182 = vpop.f32.mrf.mxu0
    %v3183 = vadd.f32 %v3169, %v3182
    %v3184 = vpop.f32.mrf.mxu0
    %v3185 = vadd.f32 %v3171, %v3184
    %3186 = vdwg.mxu0
    %v3187 = vadd.f32 %v2308, %v3071
    %v3188 = vadd.f32 %v2364, %v3127
    %v3189 = vadd.f32 %v2420, %v3183
    %v3190 = vadd.f32 %v2310, %v3073
    %v3191 = vadd.f32 %v2366, %v3129
    %v3192 = vadd.f32 %v2422, %v3185
    %s3193 = scalar_lea.vmem %s5, 24
    %v3194 = vld [vmem:[%s3193] sm:$0xf]
    %v3195 = vld [vmem:[%s3193 + $0x4] sm:$0x1]
    %v3198 = vunpack.c.l.b16 %v3194
    %v3199 = vunpack.c.l.b16 %v3195
    %v3200 = vpack.c.b16 %v3199, %v3198
    %v3202 = vsel %vm892, %v3200, 0
    %3204 = vmatpush.bf16.msra.mxu0 0
    %3205 = vmatpush.bf16.msra.mxu0 0
    %3206 = vmatpush.bf16.msra.mxu0 0
    %3207 = vmatpush.bf16.msra.mxu0 0
    %3208 = vmatpush.bf16.msra.mxu0 0
    %3209 = vmatpush.bf16.msra.mxu0 0
    %3210 = vmatpush.bf16.msra.mxu0 %v898
    %3211 = vmatpush.bf16.msra.mxu0 %v877
    %3212 = vmatmul.bf16.gmra.mxu0 %v3202
    %v3213 = vpop.f32.mrf.mxu0
    %v3214 = vadd.f32 0.0, %v3213
    %v3215 = vpop.f32.mrf.mxu0
    %v3216 = vadd.f32 0.0, %v3215
    %3217 = vdwg.mxu0
    %3218 = vmatpush.bf16.msra.mxu0 0
    %3219 = vmatpush.bf16.msra.mxu0 0
    %3220 = vmatpush.bf16.msra.mxu0 0
    %3221 = vmatpush.bf16.msra.mxu0 0
    %3222 = vmatpush.bf16.msra.mxu0 0
    %3223 = vmatpush.bf16.msra.mxu0 0
    %3224 = vmatpush.bf16.msra.mxu0 %v901
    %3225 = vmatpush.bf16.msra.mxu0 %v878
    %3226 = vmatmul.bf16.gmra.mxu0 %v3202
    %v3227 = vpop.f32.mrf.mxu0
    %v3228 = vadd.f32 0.0, %v3227
    %v3229 = vpop.f32.mrf.mxu0
    %v3230 = vadd.f32 0.0, %v3229
    %3231 = vdwg.mxu0
    %3232 = vmatpush.bf16.msra.mxu0 0
    %3233 = vmatpush.bf16.msra.mxu0 0
    %3234 = vmatpush.bf16.msra.mxu0 0
    %3235 = vmatpush.bf16.msra.mxu0 0
    %3236 = vmatpush.bf16.msra.mxu0 0
    %3237 = vmatpush.bf16.msra.mxu0 0
    %3238 = vmatpush.bf16.msra.mxu0 %v904
    %3239 = vmatpush.bf16.msra.mxu0 %v879
    %3240 = vmatmul.bf16.gmra.mxu0 %v3202
    %v3241 = vpop.f32.mrf.mxu0
    %v3242 = vadd.f32 0.0, %v3241
    %v3243 = vpop.f32.mrf.mxu0
    %v3244 = vadd.f32 0.0, %v3243
    %3245 = vdwg.mxu0
    %3246 = vmatpush.bf16.msra.mxu0 0
    %3247 = vmatpush.bf16.msra.mxu0 0
    %3248 = vmatpush.bf16.msra.mxu0 0
    %3249 = vmatpush.bf16.msra.mxu0 0
    %3250 = vmatpush.bf16.msra.mxu0 0
    %3251 = vmatpush.bf16.msra.mxu0 0
    %3252 = vmatpush.bf16.msra.mxu0 %v907
    %3253 = vmatpush.bf16.msra.mxu0 %v880
    %3254 = vmatmul.bf16.gmra.mxu0 %v3202
    %v3255 = vpop.f32.mrf.mxu0
    %v3256 = vadd.f32 0.0, %v3255
    %v3257 = vpop.f32.mrf.mxu0
    %v3258 = vadd.f32 0.0, %v3257
    %3259 = vdwg.mxu0
    %v3260 = vpack.c.bf16 %v3216, %v3214
    %v3261 = vpack.c.bf16 %v3230, %v3228
    %v3262 = vpack.c.bf16 %v3244, %v3242
    %v3263 = vpack.c.bf16 %v3258, %v3256
    %s3264 = scalar_lea.vmem %s6, 1872
    %v3265 = vld [vmem:[%s3264] sm:$0xff]
    %v3266 = vld [vmem:[%s3264 + $0x8] sm:$0xf]
    %v3267 = vld [vmem:[%s3264 + $0xc] sm:$0xff]
    %v3268 = vld [vmem:[%s3264 + $0x14] sm:$0xf]
    %v3269 = vld [vmem:[%s3264 + $0x18] sm:$0xff]
    %v3270 = vld [vmem:[%s3264 + $0x20] sm:$0xf]
    %v3271 = vld [vmem:[%s3264 + $0x24] sm:$0xff]
    %v3272 = vld [vmem:[%s3264 + $0x2c] sm:$0xf]
    %v3273 = vld [vmem:[%s3264 + $0x30] sm:$0xff]
    %v3274 = vld [vmem:[%s3264 + $0x38] sm:$0xf]
    %v3275 = vld [vmem:[%s3264 + $0x3c] sm:$0xff]
    %v3276 = vld [vmem:[%s3264 + $0x44] sm:$0xf]
    %v3277 = vld [vmem:[%s3264 + $0x48] sm:$0xff]
    %v3278 = vld [vmem:[%s3264 + $0x50] sm:$0xf]
    %v3279 = vld [vmem:[%s3264 + $0x54] sm:$0xff]
    %v3280 = vld [vmem:[%s3264 + $0x5c] sm:$0xf]
    %v3281 = vld [vmem:[%s3264 + $0x60] sm:$0xff]
    %v3282 = vld [vmem:[%s3264 + $0x68] sm:$0xf]
    %v3283 = vld [vmem:[%s3264 + $0x6c] sm:$0xff]
    %v3284 = vld [vmem:[%s3264 + $0x74] sm:$0xf]
    %v3285 = vld [vmem:[%s3264 + $0x78] sm:$0xff]
    %v3286 = vld [vmem:[%s3264 + $0x80] sm:$0xf]
    %v3287 = vld [vmem:[%s3264 + $0x84] sm:$0xff]
    %v3288 = vld [vmem:[%s3264 + $0x8c] sm:$0xf]
    %v3289 = vld [vmem:[%s3264 + $0x90] sm:$0xff]
    %v3290 = vld [vmem:[%s3264 + $0x98] sm:$0xf]
    %v3291 = vld [vmem:[%s3264 + $0x9c] sm:$0xff]
    %v3292 = vld [vmem:[%s3264 + $0xa4] sm:$0xf]
    %v3293 = vld [vmem:[%s3264 + $0xa8] sm:$0xff]
    %v3294 = vld [vmem:[%s3264 + $0xb0] sm:$0xf]
    %v3295 = vld [vmem:[%s3264 + $0xb4] sm:$0xff]
    %v3296 = vld [vmem:[%s3264 + $0xbc] sm:$0xf]
    %v3297 = vld [vmem:[%s3264 + $0xc0] sm:$0xff]
    %v3298 = vld [vmem:[%s3264 + $0xc8] sm:$0xf]
    %v3299 = vld [vmem:[%s3264 + $0xcc] sm:$0xff]
    %v3300 = vld [vmem:[%s3264 + $0xd4] sm:$0xf]
    %v3301 = vld [vmem:[%s3264 + $0xd8] sm:$0xff]
    %v3302 = vld [vmem:[%s3264 + $0xe0] sm:$0xf]
    %v3303 = vld [vmem:[%s3264 + $0xe4] sm:$0xff]
    %v3304 = vld [vmem:[%s3264 + $0xec] sm:$0xf]
    %v3305 = vld [vmem:[%s3264 + $0xf0] sm:$0xff]
    %v3306 = vld [vmem:[%s3264 + $0xf8] sm:$0xf]
    %v3307 = vld [vmem:[%s3264 + $0xfc] sm:$0xff]
    %v3308 = vld [vmem:[%s3264 + $0x104] sm:$0xf]
    %v3309 = vld [vmem:[%s3264 + $0x108] sm:$0xff]
    %v3310 = vld [vmem:[%s3264 + $0x110] sm:$0xf]
    %v3311 = vld [vmem:[%s3264 + $0x114] sm:$0xff]
    %v3312 = vld [vmem:[%s3264 + $0x11c] sm:$0xf]
    %v3313 = vld [vmem:[%s3264 + $0x120] sm:$0xff]
    %v3314 = vld [vmem:[%s3264 + $0x128] sm:$0xf]
    %v3315 = vld [vmem:[%s3264 + $0x12c] sm:$0xff]
    %v3316 = vld [vmem:[%s3264 + $0x134] sm:$0xf]
    %v3317 = vld [vmem:[%s3264 + $0x138] sm:$0xff]
    %v3318 = vld [vmem:[%s3264 + $0x140] sm:$0xf]
    %v3319 = vld [vmem:[%s3264 + $0x144] sm:$0xff]
    %v3320 = vld [vmem:[%s3264 + $0x14c] sm:$0xf]
    %v3321 = vld [vmem:[%s3264 + $0x150] sm:$0xff]
    %v3322 = vld [vmem:[%s3264 + $0x158] sm:$0xf]
    %v3323 = vld [vmem:[%s3264 + $0x15c] sm:$0xff]
    %v3324 = vld [vmem:[%s3264 + $0x164] sm:$0xf]
    %v3325 = vld [vmem:[%s3264 + $0x168] sm:$0xff]
    %v3326 = vld [vmem:[%s3264 + $0x170] sm:$0xf]
    %v3327 = vld [vmem:[%s3264 + $0x174] sm:$0xff]
    %v3328 = vld [vmem:[%s3264 + $0x17c] sm:$0xf]
    %v3329 = vld [vmem:[%s3264 + $0x180] sm:$0xff]
    %v3330 = vld [vmem:[%s3264 + $0x188] sm:$0xf]
    %v3331 = vld [vmem:[%s3264 + $0x18c] sm:$0xff]
    %v3332 = vld [vmem:[%s3264 + $0x194] sm:$0xf]
    %v3333 = vld [vmem:[%s3264 + $0x198] sm:$0xff]
    %v3334 = vld [vmem:[%s3264 + $0x1a0] sm:$0xf]
    %v3335 = vld [vmem:[%s3264 + $0x1a4] sm:$0xff]
    %v3336 = vld [vmem:[%s3264 + $0x1ac] sm:$0xf]
    %v3337 = vld [vmem:[%s3264 + $0x1b0] sm:$0xff]
    %v3338 = vld [vmem:[%s3264 + $0x1b8] sm:$0xf]
    %v3339 = vld [vmem:[%s3264 + $0x1bc] sm:$0xff]
    %v3340 = vld [vmem:[%s3264 + $0x1c4] sm:$0xf]
    %v3341 = vld [vmem:[%s3264 + $0x1c8] sm:$0xff]
    %v3342 = vld [vmem:[%s3264 + $0x1d0] sm:$0xf]
    %v3343 = vld [vmem:[%s3264 + $0x1d4] sm:$0xff]
    %v3344 = vld [vmem:[%s3264 + $0x1dc] sm:$0xf]
    %v3345 = vld [vmem:[%s3264 + $0x1e0] sm:$0xff]
    %v3346 = vld [vmem:[%s3264 + $0x1e8] sm:$0xf]
    %v3347 = vld [vmem:[%s3264 + $0x1ec] sm:$0xff]
    %v3348 = vld [vmem:[%s3264 + $0x1f4] sm:$0xf]
    %v3349 = vld [vmem:[%s3264 + $0x1f8] sm:$0xff]
    %v3350 = vld [vmem:[%s3264 + $0x200] sm:$0xf]
    %v3351 = vld [vmem:[%s3264 + $0x204] sm:$0xff]
    %v3352 = vld [vmem:[%s3264 + $0x20c] sm:$0xf]
    %v3353 = vld [vmem:[%s3264 + $0x210] sm:$0xff]
    %v3354 = vld [vmem:[%s3264 + $0x218] sm:$0xf]
    %v3355 = vld [vmem:[%s3264 + $0x21c] sm:$0xff]
    %v3356 = vld [vmem:[%s3264 + $0x224] sm:$0xf]
    %v3357 = vld [vmem:[%s3264 + $0x228] sm:$0xff]
    %v3358 = vld [vmem:[%s3264 + $0x230] sm:$0xf]
    %v3359 = vld [vmem:[%s3264 + $0x234] sm:$0xff]
    %v3360 = vld [vmem:[%s3264 + $0x23c] sm:$0xf]
    %v3361 = vld [vmem:[%s3264 + $0x240] sm:$0xff]
    %v3362 = vld [vmem:[%s3264 + $0x248] sm:$0xf]
    %v3363 = vld [vmem:[%s3264 + $0x24c] sm:$0xff]
    %v3364 = vld [vmem:[%s3264 + $0x254] sm:$0xf]
    %v3365 = vld [vmem:[%s3264 + $0x258] sm:$0xff]
    %v3366 = vld [vmem:[%s3264 + $0x260] sm:$0xf]
    %v3367 = vld [vmem:[%s3264 + $0x264] sm:$0xff]
    %v3368 = vld [vmem:[%s3264 + $0x26c] sm:$0xf]
    %v3473 = vunpack.c.l.b16 %v3265
    %v3474 = vunpack.c.h.b16 %v3265
    %v3475 = vunpack.c.l.b16 %v3266
    %v3476 = vunpack.c.l.b16 %v3267
    %v3477 = vunpack.c.h.b16 %v3267
    %v3478 = vunpack.c.l.b16 %v3268
    %v3479 = vunpack.c.l.b16 %v3269
    %v3480 = vunpack.c.h.b16 %v3269
    %v3481 = vunpack.c.l.b16 %v3270
    %v3482 = vunpack.c.l.b16 %v3271
    %v3483 = vunpack.c.h.b16 %v3271
    %v3484 = vunpack.c.l.b16 %v3272
    %v3485 = vunpack.c.l.b16 %v3273
    %v3486 = vunpack.c.h.b16 %v3273
    %v3487 = vunpack.c.l.b16 %v3274
    %v3488 = vunpack.c.l.b16 %v3275
    %v3489 = vunpack.c.h.b16 %v3275
    %v3490 = vunpack.c.l.b16 %v3276
    %v3491 = vunpack.c.l.b16 %v3277
    %v3492 = vunpack.c.h.b16 %v3277
    %v3493 = vunpack.c.l.b16 %v3278
    %v3494 = vunpack.c.l.b16 %v3279
    %v3495 = vunpack.c.h.b16 %v3279
    %v3496 = vunpack.c.l.b16 %v3280
    %v3497 = vunpack.c.l.b16 %v3281
    %v3498 = vunpack.c.h.b16 %v3281
    %v3499 = vunpack.c.l.b16 %v3282
    %v3500 = vunpack.c.l.b16 %v3283
    %v3501 = vunpack.c.h.b16 %v3283
    %v3502 = vunpack.c.l.b16 %v3284
    %v3503 = vunpack.c.l.b16 %v3285
    %v3504 = vunpack.c.h.b16 %v3285
    %v3505 = vunpack.c.l.b16 %v3286
    %v3506 = vunpack.c.l.b16 %v3287
    %v3507 = vunpack.c.h.b16 %v3287
    %v3508 = vunpack.c.l.b16 %v3288
    %v3509 = vunpack.c.l.b16 %v3289
    %v3510 = vunpack.c.h.b16 %v3289
    %v3511 = vunpack.c.l.b16 %v3290
    %v3512 = vunpack.c.l.b16 %v3291
    %v3513 = vunpack.c.h.b16 %v3291
    %v3514 = vunpack.c.l.b16 %v3292
    %v3515 = vunpack.c.l.b16 %v3293
    %v3516 = vunpack.c.h.b16 %v3293
    %v3517 = vunpack.c.l.b16 %v3294
    %v3518 = vunpack.c.l.b16 %v3295
    %v3519 = vunpack.c.h.b16 %v3295
    %v3520 = vunpack.c.l.b16 %v3296
    %v3521 = vunpack.c.l.b16 %v3297
    %v3522 = vunpack.c.h.b16 %v3297
    %v3523 = vunpack.c.l.b16 %v3298
    %v3524 = vunpack.c.l.b16 %v3299
    %v3525 = vunpack.c.h.b16 %v3299
    %v3526 = vunpack.c.l.b16 %v3300
    %v3527 = vunpack.c.l.b16 %v3301
    %v3528 = vunpack.c.h.b16 %v3301
    %v3529 = vunpack.c.l.b16 %v3302
    %v3530 = vunpack.c.l.b16 %v3303
    %v3531 = vunpack.c.h.b16 %v3303
    %v3532 = vunpack.c.l.b16 %v3304
    %v3533 = vunpack.c.l.b16 %v3305
    %v3534 = vunpack.c.h.b16 %v3305
    %v3535 = vunpack.c.l.b16 %v3306
    %v3536 = vunpack.c.l.b16 %v3307
    %v3537 = vunpack.c.h.b16 %v3307
    %v3538 = vunpack.c.l.b16 %v3308
    %v3539 = vunpack.c.l.b16 %v3309
    %v3540 = vunpack.c.h.b16 %v3309
    %v3541 = vunpack.c.l.b16 %v3310
    %v3542 = vunpack.c.l.b16 %v3311
    %v3543 = vunpack.c.h.b16 %v3311
    %v3544 = vunpack.c.l.b16 %v3312
    %v3545 = vunpack.c.l.b16 %v3313
    %v3546 = vunpack.c.h.b16 %v3313
    %v3547 = vunpack.c.l.b16 %v3314
    %v3548 = vunpack.c.l.b16 %v3315
    %v3549 = vunpack.c.h.b16 %v3315
    %v3550 = vunpack.c.l.b16 %v3316
    %v3551 = vunpack.c.l.b16 %v3317
    %v3552 = vunpack.c.h.b16 %v3317
    %v3553 = vunpack.c.l.b16 %v3318
    %v3554 = vunpack.c.l.b16 %v3319
    %v3555 = vunpack.c.h.b16 %v3319
    %v3556 = vunpack.c.l.b16 %v3320
    %v3557 = vunpack.c.l.b16 %v3321
    %v3558 = vunpack.c.h.b16 %v3321
    %v3559 = vunpack.c.l.b16 %v3322
    %v3560 = vunpack.c.l.b16 %v3323
    %v3561 = vunpack.c.h.b16 %v3323
    %v3562 = vunpack.c.l.b16 %v3324
    %v3563 = vunpack.c.l.b16 %v3325
    %v3564 = vunpack.c.h.b16 %v3325
    %v3565 = vunpack.c.l.b16 %v3326
    %v3566 = vunpack.c.l.b16 %v3327
    %v3567 = vunpack.c.h.b16 %v3327
    %v3568 = vunpack.c.l.b16 %v3328
    %v3569 = vunpack.c.l.b16 %v3329
    %v3570 = vunpack.c.h.b16 %v3329
    %v3571 = vunpack.c.l.b16 %v3330
    %v3572 = vunpack.c.l.b16 %v3331
    %v3573 = vunpack.c.h.b16 %v3331
    %v3574 = vunpack.c.l.b16 %v3332
    %v3575 = vunpack.c.l.b16 %v3333
    %v3576 = vunpack.c.h.b16 %v3333
    %v3577 = vunpack.c.l.b16 %v3334
    %v3578 = vunpack.c.l.b16 %v3335
    %v3579 = vunpack.c.h.b16 %v3335
    %v3580 = vunpack.c.l.b16 %v3336
    %v3581 = vunpack.c.l.b16 %v3337
    %v3582 = vunpack.c.h.b16 %v3337
    %v3583 = vunpack.c.l.b16 %v3338
    %v3584 = vunpack.c.l.b16 %v3339
    %v3585 = vunpack.c.h.b16 %v3339
    %v3586 = vunpack.c.l.b16 %v3340
    %v3587 = vunpack.c.l.b16 %v3341
    %v3588 = vunpack.c.h.b16 %v3341
    %v3589 = vunpack.c.l.b16 %v3342
    %v3590 = vunpack.c.l.b16 %v3343
    %v3591 = vunpack.c.h.b16 %v3343
    %v3592 = vunpack.c.l.b16 %v3344
    %v3593 = vunpack.c.l.b16 %v3345
    %v3594 = vunpack.c.h.b16 %v3345
    %v3595 = vunpack.c.l.b16 %v3346
    %v3596 = vunpack.c.l.b16 %v3347
    %v3597 = vunpack.c.h.b16 %v3347
    %v3598 = vunpack.c.l.b16 %v3348
    %v3599 = vunpack.c.l.b16 %v3349
    %v3600 = vunpack.c.h.b16 %v3349
    %v3601 = vunpack.c.l.b16 %v3350
    %v3602 = vunpack.c.l.b16 %v3351
    %v3603 = vunpack.c.h.b16 %v3351
    %v3604 = vunpack.c.l.b16 %v3352
    %v3605 = vunpack.c.l.b16 %v3353
    %v3606 = vunpack.c.h.b16 %v3353
    %v3607 = vunpack.c.l.b16 %v3354
    %v3608 = vunpack.c.l.b16 %v3355
    %v3609 = vunpack.c.h.b16 %v3355
    %v3610 = vunpack.c.l.b16 %v3356
    %v3611 = vunpack.c.l.b16 %v3357
    %v3612 = vunpack.c.h.b16 %v3357
    %v3613 = vunpack.c.l.b16 %v3358
    %v3614 = vunpack.c.l.b16 %v3359
    %v3615 = vunpack.c.h.b16 %v3359
    %v3616 = vunpack.c.l.b16 %v3360
    %v3617 = vunpack.c.l.b16 %v3361
    %v3618 = vunpack.c.h.b16 %v3361
    %v3619 = vunpack.c.l.b16 %v3362
    %v3620 = vunpack.c.l.b16 %v3363
    %v3621 = vunpack.c.h.b16 %v3363
    %v3622 = vunpack.c.l.b16 %v3364
    %v3623 = vunpack.c.l.b16 %v3365
    %v3624 = vunpack.c.h.b16 %v3365
    %v3625 = vunpack.c.l.b16 %v3366
    %v3626 = vunpack.c.l.b16 %v3367
    %v3627 = vunpack.c.h.b16 %v3367
    %v3628 = vunpack.c.l.b16 %v3368
    %v3629 = vpack.c.b16 %v3476, %v3473
    %v3630 = vpack.c.b16 %v3477, %v3474
    %v3631 = vpack.c.b16 %v3478, %v3475
    %v3632 = vpack.c.b16 %v3482, %v3479
    %v3633 = vpack.c.b16 %v3483, %v3480
    %v3634 = vpack.c.b16 %v3484, %v3481
    %v3635 = vpack.c.b16 %v3488, %v3485
    %v3636 = vpack.c.b16 %v3489, %v3486
    %v3637 = vpack.c.b16 %v3490, %v3487
    %v3638 = vpack.c.b16 %v3494, %v3491
    %v3639 = vpack.c.b16 %v3495, %v3492
    %v3640 = vpack.c.b16 %v3496, %v3493
    %v3641 = vpack.c.b16 %v3500, %v3497
    %v3642 = vpack.c.b16 %v3501, %v3498
    %v3643 = vpack.c.b16 %v3502, %v3499
    %v3644 = vpack.c.b16 %v3506, %v3503
    %v3645 = vpack.c.b16 %v3507, %v3504
    %v3646 = vpack.c.b16 %v3508, %v3505
    %v3647 = vpack.c.b16 %v3512, %v3509
    %v3648 = vpack.c.b16 %v3513, %v3510
    %v3649 = vpack.c.b16 %v3514, %v3511
    %v3650 = vpack.c.b16 %v3518, %v3515
    %v3651 = vpack.c.b16 %v3519, %v3516
    %v3652 = vpack.c.b16 %v3520, %v3517
    %v3653 = vpack.c.b16 %v3524, %v3521
    %v3654 = vpack.c.b16 %v3525, %v3522
    %v3655 = vpack.c.b16 %v3526, %v3523
    %v3656 = vpack.c.b16 %v3530, %v3527
    %v3657 = vpack.c.b16 %v3531, %v3528
    %v3658 = vpack.c.b16 %v3532, %v3529
    %v3659 = vpack.c.b16 %v3536, %v3533
    %v3660 = vpack.c.b16 %v3537, %v3534
    %v3661 = vpack.c.b16 %v3538, %v3535
    %v3662 = vpack.c.b16 %v3542, %v3539
    %v3663 = vpack.c.b16 %v3543, %v3540
    %v3664 = vpack.c.b16 %v3544, %v3541
    %v3665 = vpack.c.b16 %v3548, %v3545
    %v3666 = vpack.c.b16 %v3549, %v3546
    %v3667 = vpack.c.b16 %v3550, %v3547
    %v3668 = vpack.c.b16 %v3554, %v3551
    %v3669 = vpack.c.b16 %v3555, %v3552
    %v3670 = vpack.c.b16 %v3556, %v3553
    %v3671 = vpack.c.b16 %v3560, %v3557
    %v3672 = vpack.c.b16 %v3561, %v3558
    %v3673 = vpack.c.b16 %v3562, %v3559
    %v3674 = vpack.c.b16 %v3566, %v3563
    %v3675 = vpack.c.b16 %v3567, %v3564
    %v3676 = vpack.c.b16 %v3568, %v3565
    %v3677 = vpack.c.b16 %v3572, %v3569
    %v3678 = vpack.c.b16 %v3573, %v3570
    %v3679 = vpack.c.b16 %v3574, %v3571
    %v3680 = vpack.c.b16 %v3578, %v3575
    %v3681 = vpack.c.b16 %v3579, %v3576
    %v3682 = vpack.c.b16 %v3580, %v3577
    %v3683 = vpack.c.b16 %v3584, %v3581
    %v3684 = vpack.c.b16 %v3585, %v3582
    %v3685 = vpack.c.b16 %v3586, %v3583
    %v3686 = vpack.c.b16 %v3590, %v3587
    %v3687 = vpack.c.b16 %v3591, %v3588
    %v3688 = vpack.c.b16 %v3592, %v3589
    %v3689 = vpack.c.b16 %v3596, %v3593
    %v3690 = vpack.c.b16 %v3597, %v3594
    %v3691 = vpack.c.b16 %v3598, %v3595
    %v3692 = vpack.c.b16 %v3602, %v3599
    %v3693 = vpack.c.b16 %v3603, %v3600
    %v3694 = vpack.c.b16 %v3604, %v3601
    %v3695 = vpack.c.b16 %v3608, %v3605
    %v3696 = vpack.c.b16 %v3609, %v3606
    %v3697 = vpack.c.b16 %v3610, %v3607
    %v3698 = vpack.c.b16 %v3614, %v3611
    %v3699 = vpack.c.b16 %v3615, %v3612
    %v3700 = vpack.c.b16 %v3616, %v3613
    %v3701 = vpack.c.b16 %v3620, %v3617
    %v3702 = vpack.c.b16 %v3621, %v3618
    %v3703 = vpack.c.b16 %v3622, %v3619
    %v3704 = vpack.c.b16 %v3626, %v3623
    %v3705 = vpack.c.b16 %v3627, %v3624
    %v3706 = vpack.c.b16 %v3628, %v3625
    %v3786 = vsel %vm1665, %v3263, 0
    %3788 = vmatpush.bf16.msra.mxu0 %v3650
    %3789 = vmatpush.bf16.msra.mxu0 %v3647
    %3790 = vmatpush.bf16.msra.mxu0 %v3644
    %3791 = vmatpush.bf16.msra.mxu0 %v3641
    %3792 = vmatpush.bf16.msra.mxu0 %v3638
    %3793 = vmatpush.bf16.msra.mxu0 %v3635
    %3794 = vmatpush.bf16.msra.mxu0 %v3632
    %3795 = vmatpush.bf16.msra.mxu0 %v3629
    %3796 = vmatmul.bf16.gmra.mxu0 %v3260
    %v3797 = vpop.f32.mrf.mxu0
    %v3798 = vadd.f32 0.0, %v3797
    %v3799 = vpop.f32.mrf.mxu0
    %v3800 = vadd.f32 0.0, %v3799
    %3801 = vdwg.mxu0
    %3802 = vmatpush.bf16.msra.mxu0 %v3674
    %3803 = vmatpush.bf16.msra.mxu0 %v3671
    %3804 = vmatpush.bf16.msra.mxu0 %v3668
    %3805 = vmatpush.bf16.msra.mxu0 %v3665
    %3806 = vmatpush.bf16.msra.mxu0 %v3662
    %3807 = vmatpush.bf16.msra.mxu0 %v3659
    %3808 = vmatpush.bf16.msra.mxu0 %v3656
    %3809 = vmatpush.bf16.msra.mxu0 %v3653
    %3810 = vmatmul.bf16.gmra.mxu0 %v3261
    %v3811 = vpop.f32.mrf.mxu0
    %v3812 = vadd.f32 %v3798, %v3811
    %v3813 = vpop.f32.mrf.mxu0
    %v3814 = vadd.f32 %v3800, %v3813
    %3815 = vdwg.mxu0
    %3816 = vmatpush.bf16.msra.mxu0 %v3698
    %3817 = vmatpush.bf16.msra.mxu0 %v3695
    %3818 = vmatpush.bf16.msra.mxu0 %v3692
    %3819 = vmatpush.bf16.msra.mxu0 %v3689
    %3820 = vmatpush.bf16.msra.mxu0 %v3686
    %3821 = vmatpush.bf16.msra.mxu0 %v3683
    %3822 = vmatpush.bf16.msra.mxu0 %v3680
    %3823 = vmatpush.bf16.msra.mxu0 %v3677
    %3824 = vmatmul.bf16.gmra.mxu0 %v3262
    %v3825 = vpop.f32.mrf.mxu0
    %v3826 = vadd.f32 %v3812, %v3825
    %v3827 = vpop.f32.mrf.mxu0
    %v3828 = vadd.f32 %v3814, %v3827
    %3829 = vdwg.mxu0
    %3830 = vmatpush.bf16.msra.mxu0 0
    %3831 = vmatpush.bf16.msra.mxu0 0
    %3832 = vmatpush.bf16.msra.mxu0 0
    %3833 = vmatpush.bf16.msra.mxu0 0
    %3834 = vmatpush.bf16.msra.mxu0 0
    %3835 = vmatpush.bf16.msra.mxu0 0
    %3836 = vmatpush.bf16.msra.mxu0 %v3704
    %3837 = vmatpush.bf16.msra.mxu0 %v3701
    %3838 = vmatmul.bf16.gmra.mxu0 %v3786
    %v3839 = vpop.f32.mrf.mxu0
    %v3840 = vadd.f32 %v3826, %v3839
    %v3841 = vpop.f32.mrf.mxu0
    %v3842 = vadd.f32 %v3828, %v3841
    %3843 = vdwg.mxu0
    %3844 = vmatpush.bf16.msra.mxu0 %v3651
    %3845 = vmatpush.bf16.msra.mxu0 %v3648
    %3846 = vmatpush.bf16.msra.mxu0 %v3645
    %3847 = vmatpush.bf16.msra.mxu0 %v3642
    %3848 = vmatpush.bf16.msra.mxu0 %v3639
    %3849 = vmatpush.bf16.msra.mxu0 %v3636
    %3850 = vmatpush.bf16.msra.mxu0 %v3633
    %3851 = vmatpush.bf16.msra.mxu0 %v3630
    %3852 = vmatmul.bf16.gmra.mxu0 %v3260
    %v3853 = vpop.f32.mrf.mxu0
    %v3854 = vadd.f32 0.0, %v3853
    %v3855 = vpop.f32.mrf.mxu0
    %v3856 = vadd.f32 0.0, %v3855
    %3857 = vdwg.mxu0
    %3858 = vmatpush.bf16.msra.mxu0 %v3675
    %3859 = vmatpush.bf16.msra.mxu0 %v3672
    %3860 = vmatpush.bf16.msra.mxu0 %v3669
    %3861 = vmatpush.bf16.msra.mxu0 %v3666
    %3862 = vmatpush.bf16.msra.mxu0 %v3663
    %3863 = vmatpush.bf16.msra.mxu0 %v3660
    %3864 = vmatpush.bf16.msra.mxu0 %v3657
    %3865 = vmatpush.bf16.msra.mxu0 %v3654
    %3866 = vmatmul.bf16.gmra.mxu0 %v3261
    %v3867 = vpop.f32.mrf.mxu0
    %v3868 = vadd.f32 %v3854, %v3867
    %v3869 = vpop.f32.mrf.mxu0
    %v3870 = vadd.f32 %v3856, %v3869
    %3871 = vdwg.mxu0
    %3872 = vmatpush.bf16.msra.mxu0 %v3699
    %3873 = vmatpush.bf16.msra.mxu0 %v3696
    %3874 = vmatpush.bf16.msra.mxu0 %v3693
    %3875 = vmatpush.bf16.msra.mxu0 %v3690
    %3876 = vmatpush.bf16.msra.mxu0 %v3687
    %3877 = vmatpush.bf16.msra.mxu0 %v3684
    %3878 = vmatpush.bf16.msra.mxu0 %v3681
    %3879 = vmatpush.bf16.msra.mxu0 %v3678
    %3880 = vmatmul.bf16.gmra.mxu0 %v3262
    %v3881 = vpop.f32.mrf.mxu0
    %v3882 = vadd.f32 %v3868, %v3881
    %v3883 = vpop.f32.mrf.mxu0
    %v3884 = vadd.f32 %v3870, %v3883
    %3885 = vdwg.mxu0
    %3886 = vmatpush.bf16.msra.mxu0 0
    %3887 = vmatpush.bf16.msra.mxu0 0
    %3888 = vmatpush.bf16.msra.mxu0 0
    %3889 = vmatpush.bf16.msra.mxu0 0
    %3890 = vmatpush.bf16.msra.mxu0 0
    %3891 = vmatpush.bf16.msra.mxu0 0
    %3892 = vmatpush.bf16.msra.mxu0 %v3705
    %3893 = vmatpush.bf16.msra.mxu0 %v3702
    %3894 = vmatmul.bf16.gmra.mxu0 %v3786
    %v3895 = vpop.f32.mrf.mxu0
    %v3896 = vadd.f32 %v3882, %v3895
    %v3897 = vpop.f32.mrf.mxu0
    %v3898 = vadd.f32 %v3884, %v3897
    %3899 = vdwg.mxu0
    %3900 = vmatpush.bf16.msra.mxu0 %v3652
    %3901 = vmatpush.bf16.msra.mxu0 %v3649
    %3902 = vmatpush.bf16.msra.mxu0 %v3646
    %3903 = vmatpush.bf16.msra.mxu0 %v3643
    %3904 = vmatpush.bf16.msra.mxu0 %v3640
    %3905 = vmatpush.bf16.msra.mxu0 %v3637
    %3906 = vmatpush.bf16.msra.mxu0 %v3634
    %3907 = vmatpush.bf16.msra.mxu0 %v3631
    %3908 = vmatmul.bf16.gmra.mxu0 %v3260
    %v3909 = vpop.f32.mrf.mxu0
    %v3910 = vadd.f32 0.0, %v3909
    %v3911 = vpop.f32.mrf.mxu0
    %v3912 = vadd.f32 0.0, %v3911
    %3913 = vdwg.mxu0
    %3914 = vmatpush.bf16.msra.mxu0 %v3676
    %3915 = vmatpush.bf16.msra.mxu0 %v3673
    %3916 = vmatpush.bf16.msra.mxu0 %v3670
    %3917 = vmatpush.bf16.msra.mxu0 %v3667
    %3918 = vmatpush.bf16.msra.mxu0 %v3664
    %3919 = vmatpush.bf16.msra.mxu0 %v3661
    %3920 = vmatpush.bf16.msra.mxu0 %v3658
    %3921 = vmatpush.bf16.msra.mxu0 %v3655
    %3922 = vmatmul.bf16.gmra.mxu0 %v3261
    %v3923 = vpop.f32.mrf.mxu0
    %v3924 = vadd.f32 %v3910, %v3923
    %v3925 = vpop.f32.mrf.mxu0
    %v3926 = vadd.f32 %v3912, %v3925
    %3927 = vdwg.mxu0
    %3928 = vmatpush.bf16.msra.mxu0 %v3700
    %3929 = vmatpush.bf16.msra.mxu0 %v3697
    %3930 = vmatpush.bf16.msra.mxu0 %v3694
    %3931 = vmatpush.bf16.msra.mxu0 %v3691
    %3932 = vmatpush.bf16.msra.mxu0 %v3688
    %3933 = vmatpush.bf16.msra.mxu0 %v3685
    %3934 = vmatpush.bf16.msra.mxu0 %v3682
    %3935 = vmatpush.bf16.msra.mxu0 %v3679
    %3936 = vmatmul.bf16.gmra.mxu0 %v3262
    %v3937 = vpop.f32.mrf.mxu0
    %v3938 = vadd.f32 %v3924, %v3937
    %v3939 = vpop.f32.mrf.mxu0
    %v3940 = vadd.f32 %v3926, %v3939
    %3941 = vdwg.mxu0
    %3942 = vmatpush.bf16.msra.mxu0 0
    %3943 = vmatpush.bf16.msra.mxu0 0
    %3944 = vmatpush.bf16.msra.mxu0 0
    %3945 = vmatpush.bf16.msra.mxu0 0
    %3946 = vmatpush.bf16.msra.mxu0 0
    %3947 = vmatpush.bf16.msra.mxu0 0
    %3948 = vmatpush.bf16.msra.mxu0 %v3706
    %3949 = vmatpush.bf16.msra.mxu0 %v3703
    %3950 = vmatmul.bf16.gmra.mxu0 %v3786
    %v3951 = vpop.f32.mrf.mxu0
    %v3952 = vadd.f32 %v3938, %v3951
    %v3953 = vpop.f32.mrf.mxu0
    %v3954 = vadd.f32 %v3940, %v3953
    %3955 = vdwg.mxu0
    %v3956 = vadd.f32 %v3187, %v3840
    %v3957 = vadd.f32 %v3188, %v3896
    %v3958 = vadd.f32 %v3189, %v3952
    %v3959 = vadd.f32 %v3190, %v3842
    %v3960 = vadd.f32 %v3191, %v3898
    %v3961 = vadd.f32 %v3192, %v3954
    %v3962 = vld [vmem:[%s7] sm:$0x7]
    %v3964 = vperm.slane %v3962, 0
    %v3965 = vperm.slane %v3962, 1
    %v3966 = vperm.slane %v3962, 2
    %v3970 = vadd.f32 %v3956, %v3964
    %v3971 = vadd.f32 %v3957, %v3965
    %v3972 = vadd.f32 %v3958, %v3966
    %v3973 = vadd.f32 %v3959, %v3964
    %v3974 = vadd.f32 %v3960, %v3965
    %v3975 = vadd.f32 %v3961, %v3966
    %v3976 = vmax.f32 %v3970, 0.0
    %v3977 = vmax.f32 %v3971, 0.0
    %v3978 = vmax.f32 %v3972, 0.0
    %v3979 = vmax.f32 %v3973, 0.0
    %v3980 = vmax.f32 %v3974, 0.0
    %v3981 = vmax.f32 %v3975, 0.0
    %v3982 = vld [vmem:[%s8] sm:$0xff]
    %v3983 = vld [vmem:[%s8 + $0x8] sm:$0xff]
    %v3984 = vld [vmem:[%s8 + $0x10] sm:$0xff]
    %v3985 = vld [vmem:[%s8 + $0x18] sm:$0xff]
    %v3986 = vld [vmem:[%s8 + $0x20] sm:$0xff]
    %v3987 = vld [vmem:[%s8 + $0x28] sm:$0xff]
    %v3988 = vld [vmem:[%s8 + $0x30] sm:$0xff]
    %v3989 = vld [vmem:[%s8 + $0x38] sm:$0xff]
    %v3990 = vld [vmem:[%s8 + $0x40] sm:$0xff]
    %v3991 = vld [vmem:[%s8 + $0x48] sm:$0xff]
    %v3992 = vld [vmem:[%s8 + $0x50] sm:$0xff]
    %v3993 = vld [vmem:[%s8 + $0x58] sm:$0xff]
    %v3994 = vld [vmem:[%s8 + $0x60] sm:$0xff]
    %v3995 = vld [vmem:[%s8 + $0x68] sm:$0xff]
    %v3996 = vld [vmem:[%s8 + $0x70] sm:$0xff]
    %v3997 = vld [vmem:[%s8 + $0x78] sm:$0xff]
    %v3998 = vld [vmem:[%s8 + $0x80] sm:$0xff]
    %v3999 = vld [vmem:[%s8 + $0x88] sm:$0xff]
    %v4000 = vld [vmem:[%s8 + $0x90] sm:$0xff]
    %v4001 = vld [vmem:[%s8 + $0x98] sm:$0xff]
    %v4002 = vld [vmem:[%s8 + $0xa0] sm:$0xff]
    %v4003 = vld [vmem:[%s8 + $0xa8] sm:$0xff]
    %v4004 = vld [vmem:[%s8 + $0xb0] sm:$0xff]
    %v4005 = vld [vmem:[%s8 + $0xb8] sm:$0xff]
    %v4006 = vld [vmem:[%s8 + $0xc0] sm:$0xff]
    %v4007 = vld [vmem:[%s8 + $0xc8] sm:$0xff]
    %v4008 = vld [vmem:[%s8 + $0xd0] sm:$0xff]
    %v4009 = vld [vmem:[%s8 + $0xd8] sm:$0xff]
    %v4010 = vld [vmem:[%s8 + $0xe0] sm:$0xff]
    %v4011 = vld [vmem:[%s8 + $0xe8] sm:$0xff]
    %v4012 = vld [vmem:[%s8 + $0xf0] sm:$0xff]
    %v4013 = vld [vmem:[%s8 + $0xf8] sm:$0xff]
    %v4014 = vld [vmem:[%s8 + $0x100] sm:$0xff]
    %v4015 = vld [vmem:[%s8 + $0x108] sm:$0xff]
    %v4016 = vld [vmem:[%s8 + $0x110] sm:$0xff]
    %v4017 = vld [vmem:[%s8 + $0x118] sm:$0xff]
    %v4018 = vld [vmem:[%s8 + $0x120] sm:$0xff]
    %v4019 = vld [vmem:[%s8 + $0x128] sm:$0xff]
    %v4020 = vld [vmem:[%s8 + $0x130] sm:$0xff]
    %v4021 = vld [vmem:[%s8 + $0x138] sm:$0xff]
    %vm4022 = vcmask 523264
    %v4024 = vsel %vm4022, %v3978, 0
    %v4027 = vsel %vm4022, %v3981, 0
    %4029 = vmatpush.msra.mxu0 %v3997
    %4030 = vmatpush.msra.mxu0 %v3996
    %4031 = vmatpush.msra.mxu0 %v3995
    %4032 = vmatpush.msra.mxu0 %v3994
    %4033 = vmatpush.msra.mxu0 %v3993
    %4034 = vmatpush.msra.mxu0 %v3992
    %4035 = vmatpush.msra.mxu0 %v3991
    %4036 = vmatpush.msra.mxu0 %v3990
    %4037 = vmatpush.msra.mxu0 %v3989
    %4038 = vmatpush.msra.mxu0 %v3988
    %4039 = vmatpush.msra.mxu0 %v3987
    %4040 = vmatpush.msra.mxu0 %v3986
    %4041 = vmatpush.msra.mxu0 %v3985
    %4042 = vmatpush.msra.mxu0 %v3984
    %4043 = vmatpush.msra.mxu0 %v3983
    %4044 = vmatpush.msra.mxu0 %v3982
    %4045 = vmatmul.f32.gmra.mxu0 %v3976
    %v4046 = vpop.f32.mrf.mxu0
    %v4047 = vadd.f32 0.0, %v4046
    %4048 = vmatmul.f32.gmra.mxu0 %v3979
    %v4049 = vpop.f32.mrf.mxu0
    %v4050 = vadd.f32 0.0, %v4049
    %4051 = vdwg.mxu0
    %4052 = vmatpush.msra.mxu0 %v4013
    %4053 = vmatpush.msra.mxu0 %v4012
    %4054 = vmatpush.msra.mxu0 %v4011
    %4055 = vmatpush.msra.mxu0 %v4010
    %4056 = vmatpush.msra.mxu0 %v4009
    %4057 = vmatpush.msra.mxu0 %v4008
    %4058 = vmatpush.msra.mxu0 %v4007
    %4059 = vmatpush.msra.mxu0 %v4006
    %4060 = vmatpush.msra.mxu0 %v4005
    %4061 = vmatpush.msra.mxu0 %v4004
    %4062 = vmatpush.msra.mxu0 %v4003
    %4063 = vmatpush.msra.mxu0 %v4002
    %4064 = vmatpush.msra.mxu0 %v4001
    %4065 = vmatpush.msra.mxu0 %v4000
    %4066 = vmatpush.msra.mxu0 %v3999
    %4067 = vmatpush.msra.mxu0 %v3998
    %4068 = vmatmul.f32.gmra.mxu0 %v3977
    %v4069 = vpop.f32.mrf.mxu0
    %v4070 = vadd.f32 %v4047, %v4069
    %4071 = vmatmul.f32.gmra.mxu0 %v3980
    %v4072 = vpop.f32.mrf.mxu0
    %v4073 = vadd.f32 %v4050, %v4072
    %4074 = vdwg.mxu0
    %4075 = vmatpush.msra.mxu0 0.0
    %4076 = vmatpush.msra.mxu0 0.0
    %4077 = vmatpush.msra.mxu0 0.0
    %4078 = vmatpush.msra.mxu0 0.0
    %4079 = vmatpush.msra.mxu0 0.0
    %4080 = vmatpush.msra.mxu0 0.0
    %4081 = vmatpush.msra.mxu0 0.0
    %4082 = vmatpush.msra.mxu0 0.0
    %4083 = vmatpush.msra.mxu0 %v4021
    %4084 = vmatpush.msra.mxu0 %v4020
    %4085 = vmatpush.msra.mxu0 %v4019
    %4086 = vmatpush.msra.mxu0 %v4018
    %4087 = vmatpush.msra.mxu0 %v4017
    %4088 = vmatpush.msra.mxu0 %v4016
    %4089 = vmatpush.msra.mxu0 %v4015
    %4090 = vmatpush.msra.mxu0 %v4014
    %4091 = vmatmul.f32.gmra.mxu0 %v4024
    %v4092 = vpop.f32.mrf.mxu0
    %v4093 = vadd.f32 %v4070, %v4092
    %4094 = vmatmul.f32.gmra.mxu0 %v4027
    %v4095 = vpop.f32.mrf.mxu0
    %v4096 = vadd.f32 %v4073, %v4095
    %4097 = vdwg.mxu0
    %v4098 = vadd.f32 %v4093, 0.0
    %v4100 = vrot.slane %v4093, 2
    %4101 = vrot.lane.b32.xlu0 %v4100, 124
    %v4102 = vpop.permute.xlu0 %4101
    %v4104 = vadd.f32 %v4098, %v4102
    %v4105 = vrot.slane %v4093, 4
    %4106 = vrot.lane.b32.xlu0 %v4105, 120
    %v4107 = vpop.permute.xlu0 %4106
    %v4109 = vadd.f32 %v4104, %v4107
    %v4110 = vrot.slane %v4093, 6
    %4111 = vrot.lane.b32.xlu0 %v4110, 116
    %v4112 = vpop.permute.xlu0 %4111
    %v4114 = vadd.f32 %v4109, %v4112
    %4116 = vrot.lane.b32.xlu0 %v4096, 112
    %v4117 = vpop.permute.xlu0 %4116
    %v4119 = vadd.f32 %v4114, %v4117
    %v4120 = vld [vmem:[%s9] sm:$0x1]
    %v4122 = vperm.slane %v4120, 0
    %v4124 = vadd.f32 %v4119, %v4122
    %v4125 = vmax.f32 %v4124, -15.0
    %v4126 = vmin.f32 %v4125, 15.0
    %vm4127 = vcmask 15360
    %v4128 = vsel %vm4127, %v4124, %v4126
    %vm4129 = vcmask 25600
    %4130 = vst.msk [vmem:[%s19] sm:$0x3] %vm4129, %v4128
    %v4131 = vld [vmem:[%s1] sm:$0x3]
    %v4132 = vmul.f32 %v4126, 0.5
    %v4133 = vmul.f32 %v4132, 1.442695
    %v4134 = vpow.pop %v4133
    %4136 = vrot.lane.b32.xlu0 %v4134, 126
    %v4137 = vpop.permute.xlu0 %4136
    %v4139 = vmul.f32 %v4131, %v4137
    %v4140 = vadd.f32 %v4124, %v4139
    %v4141 = vld [vmem:[%s10] sm:$0xff]
    %v4142 = vld [vmem:[%s10 + $0x8] sm:$0xff]
    %v4143 = vld [vmem:[%s10 + $0x10] sm:$0xff]
    %v4144 = vld [vmem:[%s10 + $0x18] sm:$0xf]
    %v4145 = vld [vmem:[%s10 + $0x20] sm:$0xf]
    %v4146 = vld [vmem:[%s10 + $0x28] sm:$0xf]
    %v4147 = vld [vmem:[%s11] sm:$0x3f]
    %v4148 = vld [vmem:[%s11 + $0x8] sm:$0x3f]
    %v4149 = vld [vmem:[%s11 + $0x10] sm:$0x3f]
    %4151 = vset.pattern.permute.xlu0 0
    %4152 = vperm.xlu0 %4151, %v4140
    %v4153 = vpop.permute.xlu0 %4152
    %v4155 = vperm.slane %v4141, 0
    %v4156 = vperm.slane %v4142, 0
    %v4157 = vperm.slane %v4143, 0
    %v4158 = vmul.f32 %v4153, %v4155
    %v4159 = vmul.f32 %v4153, %v4156
    %v4160 = vmul.f32 %v4153, %v4157
    %4161 = vset.pattern.permute.xlu0 1
    %4162 = vperm.xlu0 %4161, %v4140
    %v4163 = vpop.permute.xlu0 %4162
    %v4165 = vperm.slane %v4141, 6
    %v4166 = vperm.slane %v4142, 6
    %v4167 = vperm.slane %v4143, 6
    %v4168 = vmul.f32 %v4163, %v4165
    %v4169 = vmul.f32 %v4163, %v4166
    %v4170 = vmul.f32 %v4163, %v4167
    %v4171 = vadd.f32 %v4158, %v4168
    %v4172 = vadd.f32 %v4159, %v4169
    %v4173 = vadd.f32 %v4160, %v4170
    %v4174 = vperm.slane %v4147, 0
    %v4175 = vperm.slane %v4148, 0
    %v4176 = vperm.slane %v4149, 0
    %v4177 = vadd.f32 %v4171, %v4174
    %v4178 = vadd.f32 %v4172, %v4175
    %v4179 = vadd.f32 %v4173, %v4176
    %v4180 = vperm.slane %v4141, 1
    %v4181 = vperm.slane %v4142, 1
    %v4182 = vperm.slane %v4143, 1
    %v4183 = vmul.f32 %v4153, %v4180
    %v4184 = vmul.f32 %v4153, %v4181
    %v4185 = vmul.f32 %v4153, %v4182
    %v4186 = vperm.slane %v4141, 7
    %v4187 = vperm.slane %v4142, 7
    %v4188 = vperm.slane %v4143, 7
    %v4189 = vmul.f32 %v4163, %v4186
    %v4190 = vmul.f32 %v4163, %v4187
    %v4191 = vmul.f32 %v4163, %v4188
    %v4192 = vadd.f32 %v4183, %v4189
    %v4193 = vadd.f32 %v4184, %v4190
    %v4194 = vadd.f32 %v4185, %v4191
    %v4195 = vperm.slane %v4147, 1
    %v4196 = vperm.slane %v4148, 1
    %v4197 = vperm.slane %v4149, 1
    %v4198 = vadd.f32 %v4192, %v4195
    %v4199 = vadd.f32 %v4193, %v4196
    %v4200 = vadd.f32 %v4194, %v4197
    %v4201 = vperm.slane %v4141, 2
    %v4202 = vperm.slane %v4142, 2
    %v4203 = vperm.slane %v4143, 2
    %v4204 = vmul.f32 %v4153, %v4201
    %v4205 = vmul.f32 %v4153, %v4202
    %v4206 = vmul.f32 %v4153, %v4203
    %v4207 = vperm.slane %v4144, 0
    %v4208 = vperm.slane %v4145, 0
    %v4209 = vperm.slane %v4146, 0
    %v4210 = vmul.f32 %v4163, %v4207
    %v4211 = vmul.f32 %v4163, %v4208
    %v4212 = vmul.f32 %v4163, %v4209
    %v4213 = vadd.f32 %v4204, %v4210
    %v4214 = vadd.f32 %v4205, %v4211
    %v4215 = vadd.f32 %v4206, %v4212
    %v4216 = vperm.slane %v4147, 2
    %v4217 = vperm.slane %v4148, 2
    %v4218 = vperm.slane %v4149, 2
    %v4219 = vadd.f32 %v4213, %v4216
    %v4220 = vadd.f32 %v4214, %v4217
    %v4221 = vadd.f32 %v4215, %v4218
    %v4222 = vperm.slane %v4141, 3
    %v4223 = vperm.slane %v4142, 3
    %v4224 = vperm.slane %v4143, 3
    %v4225 = vmul.f32 %v4153, %v4222
    %v4226 = vmul.f32 %v4153, %v4223
    %v4227 = vmul.f32 %v4153, %v4224
    %v4228 = vperm.slane %v4144, 1
    %v4229 = vperm.slane %v4145, 1
    %v4230 = vperm.slane %v4146, 1
    %v4231 = vmul.f32 %v4163, %v4228
    %v4232 = vmul.f32 %v4163, %v4229
    %v4233 = vmul.f32 %v4163, %v4230
    %v4234 = vadd.f32 %v4225, %v4231
    %v4235 = vadd.f32 %v4226, %v4232
    %v4236 = vadd.f32 %v4227, %v4233
    %v4237 = vperm.slane %v4147, 3
    %v4238 = vperm.slane %v4148, 3
    %v4239 = vperm.slane %v4149, 3
    %v4240 = vadd.f32 %v4234, %v4237
    %v4241 = vadd.f32 %v4235, %v4238
    %v4242 = vadd.f32 %v4236, %v4239
    %v4243 = vperm.slane %v4141, 4
    %v4244 = vperm.slane %v4142, 4
    %v4245 = vperm.slane %v4143, 4
    %v4246 = vmul.f32 %v4153, %v4243
    %v4247 = vmul.f32 %v4153, %v4244
    %v4248 = vmul.f32 %v4153, %v4245
    %v4249 = vperm.slane %v4144, 2
    %v4250 = vperm.slane %v4145, 2
    %v4251 = vperm.slane %v4146, 2
    %v4252 = vmul.f32 %v4163, %v4249
    %v4253 = vmul.f32 %v4163, %v4250
    %v4254 = vmul.f32 %v4163, %v4251
    %v4255 = vadd.f32 %v4246, %v4252
    %v4256 = vadd.f32 %v4247, %v4253
    %v4257 = vadd.f32 %v4248, %v4254
    %v4258 = vperm.slane %v4147, 4
    %v4259 = vperm.slane %v4148, 4
    %v4260 = vperm.slane %v4149, 4
    %v4261 = vadd.f32 %v4255, %v4258
    %v4262 = vadd.f32 %v4256, %v4259
    %v4263 = vadd.f32 %v4257, %v4260
    %v4264 = vperm.slane %v4141, 5
    %v4265 = vperm.slane %v4142, 5
    %v4266 = vperm.slane %v4143, 5
    %v4267 = vmul.f32 %v4153, %v4264
    %v4268 = vmul.f32 %v4153, %v4265
    %v4269 = vmul.f32 %v4153, %v4266
    %v4270 = vperm.slane %v4144, 3
    %v4271 = vperm.slane %v4145, 3
    %v4272 = vperm.slane %v4146, 3
    %v4273 = vmul.f32 %v4163, %v4270
    %v4274 = vmul.f32 %v4163, %v4271
    %v4275 = vmul.f32 %v4163, %v4272
    %v4276 = vadd.f32 %v4267, %v4273
    %v4277 = vadd.f32 %v4268, %v4274
    %v4278 = vadd.f32 %v4269, %v4275
    %v4279 = vperm.slane %v4147, 5
    %v4280 = vperm.slane %v4148, 5
    %v4281 = vperm.slane %v4149, 5
    %v4282 = vadd.f32 %v4276, %v4279
    %v4283 = vadd.f32 %v4277, %v4280
    %v4284 = vadd.f32 %v4278, %v4281
    %v4288 = vrot.slane %v4198, 6
    %v4289 = vrot.slane %v4199, 6
    %v4290 = vrot.slane %v4200, 6
    %v4297 = vrot.slane %v4219, 4
    %v4298 = vrot.slane %v4220, 4
    %v4299 = vrot.slane %v4221, 4
    %v4306 = vrot.slane %v4240, 2
    %v4307 = vrot.slane %v4241, 2
    %v4308 = vrot.slane %v4242, 2
    %v4315 = vrot.slane %v4282, 6
    %v4316 = vrot.slane %v4283, 6
    %v4317 = vrot.slane %v4284, 6
    %vm4321 = vcmask 1041408
    %v4322 = vsel %vm4321, %v4177, %v4288
    %v4323 = vsel %vm4321, %v4178, %v4289
    %v4324 = vsel %vm4321, %v4179, %v4290
    %v4325 = vsel %vm95, %v4322, %v4297
    %v4326 = vsel %vm95, %v4323, %v4298
    %v4327 = vsel %vm95, %v4324, %v4299
    %v4328 = vsel %vm222, %v4325, %v4306
    %v4329 = vsel %vm222, %v4326, %v4307
    %v4330 = vsel %vm222, %v4327, %v4308
    %v4331 = vsel %vm4321, %v4261, %v4315
    %v4332 = vsel %vm4321, %v4262, %v4316
    %v4333 = vsel %vm4321, %v4263, %v4317
    %v4334 = vmax.f32 %v4328, 0.0
    %v4335 = vmax.f32 %v4329, 0.0
    %v4336 = vmax.f32 %v4330, 0.0
    %v4337 = vmax.f32 %v4331, 0.0
    %v4338 = vmax.f32 %v4332, 0.0
    %v4339 = vmax.f32 %v4333, 0.0
    %v4340 = vpack.c.bf16 %v4337, %v4334
    %v4341 = vpack.c.bf16 %v4338, %v4335
    %v4342 = vpack.c.bf16 %v4339, %v4336
    %v4343 = vld [vmem:[%s12] sm:$0xf]
    %v4344 = vld [vmem:[%s12 + $0x4] sm:$0xf]
    %v4345 = vld [vmem:[%s12 + $0x8] sm:$0xf]
    %v4346 = vld [vmem:[%s12 + $0xc] sm:$0x3]
    %v4351 = vunpack.c.l.b16 %v4343
    %v4352 = vunpack.c.l.b16 %v4344
    %v4353 = vunpack.c.l.b16 %v4345
    %v4354 = vunpack.c.l.b16 %v4346
    %v4355 = vpack.c.b16 %v4352, %v4351
    %v4356 = vpack.c.b16 %v4354, %v4353
    %vm4357 = vcmask 97280
    %v4359 = vsel %vm4357, %v4355, 0
    %v4362 = vsel %vm4357, %v4356, 0
    %v4365 = vsel %vm222, %v4340, 0
    %v4368 = vsel %vm222, %v4341, 0
    %v4371 = vsel %vm222, %v4342, 0
    %4373 = vmatpush.bf16.msra.mxu0 0
    %4374 = vmatpush.bf16.msra.mxu0 0
    %4375 = vmatpush.bf16.msra.mxu0 0
    %4376 = vmatpush.bf16.msra.mxu0 0
    %4377 = vmatpush.bf16.msra.mxu0 0
    %4378 = vmatpush.bf16.msra.mxu0 0
    %4379 = vmatpush.bf16.msra.mxu0 0
    %4380 = vmatpush.bf16.msra.mxu0 %v4365
    %4381 = vmatmul.bf16.gmra.mxu0 %v4359
    %v4382 = vpop.f32.mrf.mxu0
    %v4383 = vadd.f32 0.0, %v4382
    %v4384 = vpop.f32.mrf.mxu0
    %v4385 = vadd.f32 0.0, %v4384
    %4386 = vmatmul.bf16.gmra.mxu0 %v4362
    %v4387 = vpop.f32.mrf.mxu0
    %v4388 = vadd.f32 0.0, %v4387
    %v4389 = vpop.f32.mrf.mxu0
    %v4390 = vadd.f32 0.0, %v4389
    %4391 = vdwg.mxu0
    %4392 = vmatpush.bf16.msra.mxu0 0
    %4393 = vmatpush.bf16.msra.mxu0 0
    %4394 = vmatpush.bf16.msra.mxu0 0
    %4395 = vmatpush.bf16.msra.mxu0 0
    %4396 = vmatpush.bf16.msra.mxu0 0
    %4397 = vmatpush.bf16.msra.mxu0 0
    %4398 = vmatpush.bf16.msra.mxu0 0
    %4399 = vmatpush.bf16.msra.mxu0 %v4368
    %4400 = vmatmul.bf16.gmra.mxu0 %v4359
    %v4401 = vpop.f32.mrf.mxu0
    %v4402 = vadd.f32 0.0, %v4401
    %v4403 = vpop.f32.mrf.mxu0
    %v4404 = vadd.f32 0.0, %v4403
    %4405 = vmatmul.bf16.gmra.mxu0 %v4362
    %v4406 = vpop.f32.mrf.mxu0
    %v4407 = vadd.f32 0.0, %v4406
    %v4408 = vpop.f32.mrf.mxu0
    %v4409 = vadd.f32 0.0, %v4408
    %4410 = vdwg.mxu0
    %4411 = vmatpush.bf16.msra.mxu0 0
    %4412 = vmatpush.bf16.msra.mxu0 0
    %4413 = vmatpush.bf16.msra.mxu0 0
    %4414 = vmatpush.bf16.msra.mxu0 0
    %4415 = vmatpush.bf16.msra.mxu0 0
    %4416 = vmatpush.bf16.msra.mxu0 0
    %4417 = vmatpush.bf16.msra.mxu0 0
    %4418 = vmatpush.bf16.msra.mxu0 %v4371
    %4419 = vmatmul.bf16.gmra.mxu0 %v4359
    %v4420 = vpop.f32.mrf.mxu0
    %v4421 = vadd.f32 0.0, %v4420
    %v4422 = vpop.f32.mrf.mxu0
    %v4423 = vadd.f32 0.0, %v4422
    %4424 = vmatmul.bf16.gmra.mxu0 %v4362
    %v4425 = vpop.f32.mrf.mxu0
    %v4426 = vadd.f32 0.0, %v4425
    %v4427 = vpop.f32.mrf.mxu0
    %v4428 = vadd.f32 0.0, %v4427
    %4429 = vdwg.mxu0
    %v4430 = vpack.c.bf16 %v4385, %v4383
    %v4431 = vpack.c.bf16 %v4404, %v4402
    %v4432 = vpack.c.bf16 %v4423, %v4421
    %v4433 = vpack.c.bf16 %v4390, %v4388
    %v4434 = vpack.c.bf16 %v4409, %v4407
    %v4435 = vpack.c.bf16 %v4428, %v4426
    %v4436 = vld [vmem:[%s13] sm:$0xff]
    %v4437 = vld [vmem:[%s13 + $0x8] sm:$0xff]
    %v4438 = vld [vmem:[%s13 + $0x10] sm:$0xff]
    %v4439 = vld [vmem:[%s13 + $0x18] sm:$0xff]
    %v4440 = vld [vmem:[%s13 + $0x20] sm:$0xff]
    %v4441 = vld [vmem:[%s13 + $0x28] sm:$0xff]
    %v4442 = vld [vmem:[%s13 + $0x30] sm:$0xff]
    %v4443 = vld [vmem:[%s13 + $0x38] sm:$0xff]
    %v4444 = vld [vmem:[%s13 + $0x40] sm:$0xff]
    %v4445 = vld [vmem:[%s13 + $0x48] sm:$0xff]
    %v4446 = vld [vmem:[%s13 + $0x50] sm:$0xff]
    %v4447 = vld [vmem:[%s13 + $0x58] sm:$0xff]
    %v4448 = vld [vmem:[%s13 + $0x60] sm:$0xff]
    %v4449 = vld [vmem:[%s13 + $0x68] sm:$0xff]
    %v4450 = vld [vmem:[%s13 + $0x70] sm:$0xff]
    %v4451 = vld [vmem:[%s13 + $0x78] sm:$0xff]
    %v4452 = vld [vmem:[%s13 + $0x80] sm:$0xff]
    %v4453 = vld [vmem:[%s13 + $0x88] sm:$0xff]
    %v4454 = vld [vmem:[%s13 + $0x90] sm:$0xff]
    %v4455 = vld [vmem:[%s13 + $0x98] sm:$0xff]
    %v4456 = vld [vmem:[%s13 + $0xa0] sm:$0xff]
    %v4457 = vld [vmem:[%s13 + $0xa8] sm:$0xff]
    %v4458 = vld [vmem:[%s13 + $0xb0] sm:$0xff]
    %v4459 = vld [vmem:[%s13 + $0xb8] sm:$0xff]
    %v4460 = vld [vmem:[%s13 + $0xc0] sm:$0xff]
    %v4461 = vld [vmem:[%s13 + $0xc8] sm:$0xff]
    %v4462 = vld [vmem:[%s13 + $0xd0] sm:$0xff]
    %v4463 = vld [vmem:[%s13 + $0xd8] sm:$0xff]
    %v4464 = vld [vmem:[%s13 + $0xe0] sm:$0xff]
    %v4465 = vld [vmem:[%s13 + $0xe8] sm:$0xff]
    %v4466 = vld [vmem:[%s13 + $0xf0] sm:$0xff]
    %v4467 = vld [vmem:[%s13 + $0xf8] sm:$0xff]
    %v4468 = vld [vmem:[%s13 + $0x100] sm:$0xff]
    %v4469 = vld [vmem:[%s13 + $0x108] sm:$0xff]
    %v4470 = vld [vmem:[%s13 + $0x110] sm:$0xff]
    %v4471 = vld [vmem:[%s13 + $0x118] sm:$0xff]
    %v4472 = vld [vmem:[%s13 + $0x120] sm:$0xff]
    %v4473 = vld [vmem:[%s13 + $0x128] sm:$0xff]
    %v4474 = vld [vmem:[%s13 + $0x130] sm:$0xff]
    %v4475 = vld [vmem:[%s13 + $0x138] sm:$0xff]
    %v4476 = vld [vmem:[%s13 + $0x140] sm:$0xff]
    %v4477 = vld [vmem:[%s13 + $0x148] sm:$0xff]
    %v4478 = vld [vmem:[%s13 + $0x150] sm:$0xff]
    %v4479 = vld [vmem:[%s13 + $0x158] sm:$0xff]
    %v4480 = vld [vmem:[%s13 + $0x160] sm:$0xff]
    %v4481 = vld [vmem:[%s13 + $0x168] sm:$0xff]
    %v4482 = vld [vmem:[%s13 + $0x170] sm:$0xff]
    %v4483 = vld [vmem:[%s13 + $0x178] sm:$0xff]
    %v4484 = vld [vmem:[%s13 + $0x180] sm:$0xff]
    %v4485 = vld [vmem:[%s13 + $0x188] sm:$0xff]
    %v4486 = vld [vmem:[%s13 + $0x190] sm:$0xff]
    %v4487 = vld [vmem:[%s13 + $0x198] sm:$0xff]
    %v4488 = vld [vmem:[%s13 + $0x1a0] sm:$0xff]
    %v4489 = vld [vmem:[%s13 + $0x1a8] sm:$0xff]
    %v4490 = vld [vmem:[%s13 + $0x1b0] sm:$0xff]
    %v4491 = vld [vmem:[%s13 + $0x1b8] sm:$0xff]
    %v4492 = vld [vmem:[%s13 + $0x1c0] sm:$0xff]
    %v4493 = vld [vmem:[%s13 + $0x1c8] sm:$0xff]
    %v4494 = vld [vmem:[%s13 + $0x1d0] sm:$0xff]
    %v4495 = vld [vmem:[%s13 + $0x1d8] sm:$0xff]
    %v4496 = vld [vmem:[%s13 + $0x1e0] sm:$0xff]
    %v4497 = vld [vmem:[%s13 + $0x1e8] sm:$0xff]
    %v4498 = vld [vmem:[%s13 + $0x1f0] sm:$0xff]
    %v4499 = vld [vmem:[%s13 + $0x1f8] sm:$0xff]
    %v4500 = vld [vmem:[%s13 + $0x200] sm:$0xff]
    %v4501 = vld [vmem:[%s13 + $0x208] sm:$0xff]
    %v4502 = vld [vmem:[%s13 + $0x210] sm:$0xff]
    %v4503 = vld [vmem:[%s13 + $0x218] sm:$0xff]
    %v4504 = vld [vmem:[%s13 + $0x220] sm:$0xff]
    %v4505 = vld [vmem:[%s13 + $0x228] sm:$0xff]
    %v4506 = vld [vmem:[%s13 + $0x230] sm:$0xff]
    %v4507 = vld [vmem:[%s13 + $0x238] sm:$0xff]
    %v4508 = vld [vmem:[%s13 + $0x240] sm:$0xff]
    %v4509 = vld [vmem:[%s13 + $0x248] sm:$0xff]
    %v4510 = vld [vmem:[%s13 + $0x250] sm:$0xff]
    %v4511 = vld [vmem:[%s13 + $0x258] sm:$0xff]
    %v4512 = vld [vmem:[%s13 + $0x260] sm:$0xff]
    %v4513 = vld [vmem:[%s13 + $0x268] sm:$0xff]
    %v4514 = vld [vmem:[%s13 + $0x270] sm:$0xff]
    %v4515 = vld [vmem:[%s13 + $0x278] sm:$0xff]
    %v4516 = vld [vmem:[%s13 + $0x280] sm:$0xff]
    %v4517 = vld [vmem:[%s13 + $0x288] sm:$0xff]
    %v4518 = vld [vmem:[%s13 + $0x290] sm:$0xff]
    %v4519 = vld [vmem:[%s13 + $0x298] sm:$0xff]
    %v4520 = vld [vmem:[%s13 + $0x2a0] sm:$0xff]
    %v4521 = vld [vmem:[%s13 + $0x2a8] sm:$0xff]
    %v4522 = vld [vmem:[%s13 + $0x2b0] sm:$0xff]
    %v4523 = vld [vmem:[%s13 + $0x2b8] sm:$0xff]
    %v4524 = vld [vmem:[%s13 + $0x2c0] sm:$0xff]
    %v4525 = vld [vmem:[%s13 + $0x2c8] sm:$0xff]
    %v4526 = vld [vmem:[%s13 + $0x2d0] sm:$0xff]
    %v4527 = vld [vmem:[%s13 + $0x2d8] sm:$0xff]
    %v4528 = vld [vmem:[%s13 + $0x2e0] sm:$0xff]
    %v4529 = vld [vmem:[%s13 + $0x2e8] sm:$0xff]
    %v4530 = vld [vmem:[%s13 + $0x2f0] sm:$0xff]
    %v4531 = vld [vmem:[%s13 + $0x2f8] sm:$0xff]
    %s4532 = scalar_lea.vmem %s12, 16
    %v4533 = vld [vmem:[%s4532] sm:$0xf]
    %v4534 = vld [vmem:[%s4532 + $0x4] sm:$0xf]
    %v4535 = vld [vmem:[%s4532 + $0x8] sm:$0xf]
    %v4536 = vld [vmem:[%s4532 + $0xc] sm:$0x3]
    %v4541 = vunpack.c.l.b16 %v4533
    %v4542 = vunpack.c.l.b16 %v4534
    %v4543 = vunpack.c.l.b16 %v4535
    %v4544 = vunpack.c.l.b16 %v4536
    %v4545 = vpack.c.b16 %v4542, %v4541
    %v4546 = vpack.c.b16 %v4544, %v4543
    %v4548 = vsel %vm4357, %v4545, 0
    %v4551 = vsel %vm4357, %v4546, 0
    %4553 = vmatpush.bf16.msra.mxu0 0
    %4554 = vmatpush.bf16.msra.mxu0 0
    %4555 = vmatpush.bf16.msra.mxu0 0
    %4556 = vmatpush.bf16.msra.mxu0 0
    %4557 = vmatpush.bf16.msra.mxu0 0
    %4558 = vmatpush.bf16.msra.mxu0 0
    %4559 = vmatpush.bf16.msra.mxu0 0
    %4560 = vmatpush.bf16.msra.mxu0 %v4365
    %4561 = vmatmul.bf16.gmra.mxu0 %v4548
    %v4562 = vpop.f32.mrf.mxu0
    %v4563 = vadd.f32 0.0, %v4562
    %v4564 = vpop.f32.mrf.mxu0
    %v4565 = vadd.f32 0.0, %v4564
    %4566 = vmatmul.bf16.gmra.mxu0 %v4551
    %v4567 = vpop.f32.mrf.mxu0
    %v4568 = vadd.f32 0.0, %v4567
    %v4569 = vpop.f32.mrf.mxu0
    %v4570 = vadd.f32 0.0, %v4569
    %4571 = vdwg.mxu0
    %4572 = vmatpush.bf16.msra.mxu0 0
    %4573 = vmatpush.bf16.msra.mxu0 0
    %4574 = vmatpush.bf16.msra.mxu0 0
    %4575 = vmatpush.bf16.msra.mxu0 0
    %4576 = vmatpush.bf16.msra.mxu0 0
    %4577 = vmatpush.bf16.msra.mxu0 0
    %4578 = vmatpush.bf16.msra.mxu0 0
    %4579 = vmatpush.bf16.msra.mxu0 %v4368
    %4580 = vmatmul.bf16.gmra.mxu0 %v4548
    %v4581 = vpop.f32.mrf.mxu0
    %v4582 = vadd.f32 0.0, %v4581
    %v4583 = vpop.f32.mrf.mxu0
    %v4584 = vadd.f32 0.0, %v4583
    %4585 = vmatmul.bf16.gmra.mxu0 %v4551
    %v4586 = vpop.f32.mrf.mxu0
    %v4587 = vadd.f32 0.0, %v4586
    %v4588 = vpop.f32.mrf.mxu0
    %v4589 = vadd.f32 0.0, %v4588
    %4590 = vdwg.mxu0
    %4591 = vmatpush.bf16.msra.mxu0 0
    %4592 = vmatpush.bf16.msra.mxu0 0
    %4593 = vmatpush.bf16.msra.mxu0 0
    %4594 = vmatpush.bf16.msra.mxu0 0
    %4595 = vmatpush.bf16.msra.mxu0 0
    %4596 = vmatpush.bf16.msra.mxu0 0
    %4597 = vmatpush.bf16.msra.mxu0 0
    %4598 = vmatpush.bf16.msra.mxu0 %v4371
    %4599 = vmatmul.bf16.gmra.mxu0 %v4548
    %v4600 = vpop.f32.mrf.mxu0
    %v4601 = vadd.f32 0.0, %v4600
    %v4602 = vpop.f32.mrf.mxu0
    %v4603 = vadd.f32 0.0, %v4602
    %4604 = vmatmul.bf16.gmra.mxu0 %v4551
    %v4605 = vpop.f32.mrf.mxu0
    %v4606 = vadd.f32 0.0, %v4605
    %v4607 = vpop.f32.mrf.mxu0
    %v4608 = vadd.f32 0.0, %v4607
    %4609 = vdwg.mxu0
    %v4610 = vpack.c.bf16 %v4565, %v4563
    %v4611 = vpack.c.bf16 %v4584, %v4582
    %v4612 = vpack.c.bf16 %v4603, %v4601
    %v4613 = vpack.c.bf16 %v4570, %v4568
    %v4614 = vpack.c.bf16 %v4589, %v4587
    %v4615 = vpack.c.bf16 %v4608, %v4606
    %s4616 = scalar_lea.vmem %s13, 768
    %v4617 = vld [vmem:[%s4616] sm:$0xff]
    %v4618 = vld [vmem:[%s4616 + $0x8] sm:$0xff]
    %v4619 = vld [vmem:[%s4616 + $0x10] sm:$0xff]
    %v4620 = vld [vmem:[%s4616 + $0x18] sm:$0xff]
    %v4621 = vld [vmem:[%s4616 + $0x20] sm:$0xff]
    %v4622 = vld [vmem:[%s4616 + $0x28] sm:$0xff]
    %v4623 = vld [vmem:[%s4616 + $0x30] sm:$0xff]
    %v4624 = vld [vmem:[%s4616 + $0x38] sm:$0xff]
    %v4625 = vld [vmem:[%s4616 + $0x40] sm:$0xff]
    %v4626 = vld [vmem:[%s4616 + $0x48] sm:$0xff]
    %v4627 = vld [vmem:[%s4616 + $0x50] sm:$0xff]
    %v4628 = vld [vmem:[%s4616 + $0x58] sm:$0xff]
    %v4629 = vld [vmem:[%s4616 + $0x60] sm:$0xff]
    %v4630 = vld [vmem:[%s4616 + $0x68] sm:$0xff]
    %v4631 = vld [vmem:[%s4616 + $0x70] sm:$0xff]
    %v4632 = vld [vmem:[%s4616 + $0x78] sm:$0xff]
    %v4633 = vld [vmem:[%s4616 + $0x80] sm:$0xff]
    %v4634 = vld [vmem:[%s4616 + $0x88] sm:$0xff]
    %v4635 = vld [vmem:[%s4616 + $0x90] sm:$0xff]
    %v4636 = vld [vmem:[%s4616 + $0x98] sm:$0xff]
    %v4637 = vld [vmem:[%s4616 + $0xa0] sm:$0xff]
    %v4638 = vld [vmem:[%s4616 + $0xa8] sm:$0xff]
    %v4639 = vld [vmem:[%s4616 + $0xb0] sm:$0xff]
    %v4640 = vld [vmem:[%s4616 + $0xb8] sm:$0xff]
    %v4641 = vld [vmem:[%s4616 + $0xc0] sm:$0xff]
    %v4642 = vld [vmem:[%s4616 + $0xc8] sm:$0xff]
    %v4643 = vld [vmem:[%s4616 + $0xd0] sm:$0xff]
    %v4644 = vld [vmem:[%s4616 + $0xd8] sm:$0xff]
    %v4645 = vld [vmem:[%s4616 + $0xe0] sm:$0xff]
    %v4646 = vld [vmem:[%s4616 + $0xe8] sm:$0xff]
    %v4647 = vld [vmem:[%s4616 + $0xf0] sm:$0xff]
    %v4648 = vld [vmem:[%s4616 + $0xf8] sm:$0xff]
    %v4649 = vld [vmem:[%s4616 + $0x100] sm:$0xff]
    %v4650 = vld [vmem:[%s4616 + $0x108] sm:$0xff]
    %v4651 = vld [vmem:[%s4616 + $0x110] sm:$0xff]
    %v4652 = vld [vmem:[%s4616 + $0x118] sm:$0xff]
    %v4653 = vld [vmem:[%s4616 + $0x120] sm:$0xff]
    %v4654 = vld [vmem:[%s4616 + $0x128] sm:$0xff]
    %v4655 = vld [vmem:[%s4616 + $0x130] sm:$0xff]
    %v4656 = vld [vmem:[%s4616 + $0x138] sm:$0xff]
    %v4657 = vld [vmem:[%s4616 + $0x140] sm:$0xff]
    %v4658 = vld [vmem:[%s4616 + $0x148] sm:$0xff]
    %v4659 = vld [vmem:[%s4616 + $0x150] sm:$0xff]
    %v4660 = vld [vmem:[%s4616 + $0x158] sm:$0xff]
    %v4661 = vld [vmem:[%s4616 + $0x160] sm:$0xff]
    %v4662 = vld [vmem:[%s4616 + $0x168] sm:$0xff]
    %v4663 = vld [vmem:[%s4616 + $0x170] sm:$0xff]
    %v4664 = vld [vmem:[%s4616 + $0x178] sm:$0xff]
    %v4665 = vld [vmem:[%s4616 + $0x180] sm:$0xff]
    %v4666 = vld [vmem:[%s4616 + $0x188] sm:$0xff]
    %v4667 = vld [vmem:[%s4616 + $0x190] sm:$0xff]
    %v4668 = vld [vmem:[%s4616 + $0x198] sm:$0xff]
    %v4669 = vld [vmem:[%s4616 + $0x1a0] sm:$0xff]
    %v4670 = vld [vmem:[%s4616 + $0x1a8] sm:$0xff]
    %v4671 = vld [vmem:[%s4616 + $0x1b0] sm:$0xff]
    %v4672 = vld [vmem:[%s4616 + $0x1b8] sm:$0xff]
    %v4673 = vld [vmem:[%s4616 + $0x1c0] sm:$0xff]
    %v4674 = vld [vmem:[%s4616 + $0x1c8] sm:$0xff]
    %v4675 = vld [vmem:[%s4616 + $0x1d0] sm:$0xff]
    %v4676 = vld [vmem:[%s4616 + $0x1d8] sm:$0xff]
    %v4677 = vld [vmem:[%s4616 + $0x1e0] sm:$0xff]
    %v4678 = vld [vmem:[%s4616 + $0x1e8] sm:$0xff]
    %v4679 = vld [vmem:[%s4616 + $0x1f0] sm:$0xff]
    %v4680 = vld [vmem:[%s4616 + $0x1f8] sm:$0xff]
    %v4681 = vld [vmem:[%s4616 + $0x200] sm:$0xff]
    %v4682 = vld [vmem:[%s4616 + $0x208] sm:$0xff]
    %v4683 = vld [vmem:[%s4616 + $0x210] sm:$0xff]
    %v4684 = vld [vmem:[%s4616 + $0x218] sm:$0xff]
    %v4685 = vld [vmem:[%s4616 + $0x220] sm:$0xff]
    %v4686 = vld [vmem:[%s4616 + $0x228] sm:$0xff]
    %v4687 = vld [vmem:[%s4616 + $0x230] sm:$0xff]
    %v4688 = vld [vmem:[%s4616 + $0x238] sm:$0xff]
    %v4689 = vld [vmem:[%s4616 + $0x240] sm:$0xff]
    %v4690 = vld [vmem:[%s4616 + $0x248] sm:$0xff]
    %v4691 = vld [vmem:[%s4616 + $0x250] sm:$0xff]
    %v4692 = vld [vmem:[%s4616 + $0x258] sm:$0xff]
    %v4693 = vld [vmem:[%s4616 + $0x260] sm:$0xff]
    %v4694 = vld [vmem:[%s4616 + $0x268] sm:$0xff]
    %v4695 = vld [vmem:[%s4616 + $0x270] sm:$0xff]
    %v4696 = vld [vmem:[%s4616 + $0x278] sm:$0xff]
    %v4697 = vld [vmem:[%s4616 + $0x280] sm:$0xff]
    %v4698 = vld [vmem:[%s4616 + $0x288] sm:$0xff]
    %v4699 = vld [vmem:[%s4616 + $0x290] sm:$0xff]
    %v4700 = vld [vmem:[%s4616 + $0x298] sm:$0xff]
    %v4701 = vld [vmem:[%s4616 + $0x2a0] sm:$0xff]
    %v4702 = vld [vmem:[%s4616 + $0x2a8] sm:$0xff]
    %v4703 = vld [vmem:[%s4616 + $0x2b0] sm:$0xff]
    %v4704 = vld [vmem:[%s4616 + $0x2b8] sm:$0xff]
    %v4705 = vld [vmem:[%s4616 + $0x2c0] sm:$0xff]
    %v4706 = vld [vmem:[%s4616 + $0x2c8] sm:$0xff]
    %v4707 = vld [vmem:[%s4616 + $0x2d0] sm:$0xff]
    %v4708 = vld [vmem:[%s4616 + $0x2d8] sm:$0xff]
    %v4709 = vld [vmem:[%s4616 + $0x2e0] sm:$0xff]
    %v4710 = vld [vmem:[%s4616 + $0x2e8] sm:$0xff]
    %v4711 = vld [vmem:[%s4616 + $0x2f0] sm:$0xff]
    %v4712 = vld [vmem:[%s4616 + $0x2f8] sm:$0xff]
    %v4809 = vunpack.c.l.b16 %v4617
    %v4810 = vunpack.c.h.b16 %v4617
    %v4811 = vunpack.c.l.b16 %v4618
    %v4812 = vunpack.c.h.b16 %v4618
    %v4813 = vunpack.c.l.b16 %v4619
    %v4814 = vunpack.c.h.b16 %v4619
    %v4815 = vunpack.c.l.b16 %v4620
    %v4816 = vunpack.c.h.b16 %v4620
    %v4817 = vunpack.c.l.b16 %v4621
    %v4818 = vunpack.c.h.b16 %v4621
    %v4819 = vunpack.c.l.b16 %v4622
    %v4820 = vunpack.c.h.b16 %v4622
    %v4821 = vunpack.c.l.b16 %v4623
    %v4822 = vunpack.c.h.b16 %v4623
    %v4823 = vunpack.c.l.b16 %v4624
    %v4824 = vunpack.c.h.b16 %v4624
    %v4825 = vunpack.c.l.b16 %v4625
    %v4826 = vunpack.c.h.b16 %v4625
    %v4827 = vunpack.c.l.b16 %v4626
    %v4828 = vunpack.c.h.b16 %v4626
    %v4829 = vunpack.c.l.b16 %v4627
    %v4830 = vunpack.c.h.b16 %v4627
    %v4831 = vunpack.c.l.b16 %v4628
    %v4832 = vunpack.c.h.b16 %v4628
    %v4833 = vunpack.c.l.b16 %v4629
    %v4834 = vunpack.c.h.b16 %v4629
    %v4835 = vunpack.c.l.b16 %v4630
    %v4836 = vunpack.c.h.b16 %v4630
    %v4837 = vunpack.c.l.b16 %v4631
    %v4838 = vunpack.c.h.b16 %v4631
    %v4839 = vunpack.c.l.b16 %v4632
    %v4840 = vunpack.c.h.b16 %v4632
    %v4841 = vunpack.c.l.b16 %v4633
    %v4842 = vunpack.c.h.b16 %v4633
    %v4843 = vunpack.c.l.b16 %v4634
    %v4844 = vunpack.c.h.b16 %v4634
    %v4845 = vunpack.c.l.b16 %v4635
    %v4846 = vunpack.c.h.b16 %v4635
    %v4847 = vunpack.c.l.b16 %v4636
    %v4848 = vunpack.c.h.b16 %v4636
    %v4849 = vunpack.c.l.b16 %v4637
    %v4850 = vunpack.c.h.b16 %v4637
    %v4851 = vunpack.c.l.b16 %v4638
    %v4852 = vunpack.c.h.b16 %v4638
    %v4853 = vunpack.c.l.b16 %v4639
    %v4854 = vunpack.c.h.b16 %v4639
    %v4855 = vunpack.c.l.b16 %v4640
    %v4856 = vunpack.c.h.b16 %v4640
    %v4857 = vunpack.c.l.b16 %v4641
    %v4858 = vunpack.c.h.b16 %v4641
    %v4859 = vunpack.c.l.b16 %v4642
    %v4860 = vunpack.c.h.b16 %v4642
    %v4861 = vunpack.c.l.b16 %v4643
    %v4862 = vunpack.c.h.b16 %v4643
    %v4863 = vunpack.c.l.b16 %v4644
    %v4864 = vunpack.c.h.b16 %v4644
    %v4865 = vunpack.c.l.b16 %v4645
    %v4866 = vunpack.c.h.b16 %v4645
    %v4867 = vunpack.c.l.b16 %v4646
    %v4868 = vunpack.c.h.b16 %v4646
    %v4869 = vunpack.c.l.b16 %v4647
    %v4870 = vunpack.c.h.b16 %v4647
    %v4871 = vunpack.c.l.b16 %v4648
    %v4872 = vunpack.c.h.b16 %v4648
    %v4873 = vunpack.c.l.b16 %v4649
    %v4874 = vunpack.c.h.b16 %v4649
    %v4875 = vunpack.c.l.b16 %v4650
    %v4876 = vunpack.c.h.b16 %v4650
    %v4877 = vunpack.c.l.b16 %v4651
    %v4878 = vunpack.c.h.b16 %v4651
    %v4879 = vunpack.c.l.b16 %v4652
    %v4880 = vunpack.c.h.b16 %v4652
    %v4881 = vunpack.c.l.b16 %v4653
    %v4882 = vunpack.c.h.b16 %v4653
    %v4883 = vunpack.c.l.b16 %v4654
    %v4884 = vunpack.c.h.b16 %v4654
    %v4885 = vunpack.c.l.b16 %v4655
    %v4886 = vunpack.c.h.b16 %v4655
    %v4887 = vunpack.c.l.b16 %v4656
    %v4888 = vunpack.c.h.b16 %v4656
    %v4889 = vunpack.c.l.b16 %v4657
    %v4890 = vunpack.c.h.b16 %v4657
    %v4891 = vunpack.c.l.b16 %v4658
    %v4892 = vunpack.c.h.b16 %v4658
    %v4893 = vunpack.c.l.b16 %v4659
    %v4894 = vunpack.c.h.b16 %v4659
    %v4895 = vunpack.c.l.b16 %v4660
    %v4896 = vunpack.c.h.b16 %v4660
    %v4897 = vunpack.c.l.b16 %v4661
    %v4898 = vunpack.c.h.b16 %v4661
    %v4899 = vunpack.c.l.b16 %v4662
    %v4900 = vunpack.c.h.b16 %v4662
    %v4901 = vunpack.c.l.b16 %v4663
    %v4902 = vunpack.c.h.b16 %v4663
    %v4903 = vunpack.c.l.b16 %v4664
    %v4904 = vunpack.c.h.b16 %v4664
    %v4905 = vunpack.c.l.b16 %v4665
    %v4906 = vunpack.c.h.b16 %v4665
    %v4907 = vunpack.c.l.b16 %v4666
    %v4908 = vunpack.c.h.b16 %v4666
    %v4909 = vunpack.c.l.b16 %v4667
    %v4910 = vunpack.c.h.b16 %v4667
    %v4911 = vunpack.c.l.b16 %v4668
    %v4912 = vunpack.c.h.b16 %v4668
    %v4913 = vunpack.c.l.b16 %v4669
    %v4914 = vunpack.c.h.b16 %v4669
    %v4915 = vunpack.c.l.b16 %v4670
    %v4916 = vunpack.c.h.b16 %v4670
    %v4917 = vunpack.c.l.b16 %v4671
    %v4918 = vunpack.c.h.b16 %v4671
    %v4919 = vunpack.c.l.b16 %v4672
    %v4920 = vunpack.c.h.b16 %v4672
    %v4921 = vunpack.c.l.b16 %v4673
    %v4922 = vunpack.c.h.b16 %v4673
    %v4923 = vunpack.c.l.b16 %v4674
    %v4924 = vunpack.c.h.b16 %v4674
    %v4925 = vunpack.c.l.b16 %v4675
    %v4926 = vunpack.c.h.b16 %v4675
    %v4927 = vunpack.c.l.b16 %v4676
    %v4928 = vunpack.c.h.b16 %v4676
    %v4929 = vunpack.c.l.b16 %v4677
    %v4930 = vunpack.c.h.b16 %v4677
    %v4931 = vunpack.c.l.b16 %v4678
    %v4932 = vunpack.c.h.b16 %v4678
    %v4933 = vunpack.c.l.b16 %v4679
    %v4934 = vunpack.c.h.b16 %v4679
    %v4935 = vunpack.c.l.b16 %v4680
    %v4936 = vunpack.c.h.b16 %v4680
    %v4937 = vunpack.c.l.b16 %v4681
    %v4938 = vunpack.c.h.b16 %v4681
    %v4939 = vunpack.c.l.b16 %v4682
    %v4940 = vunpack.c.h.b16 %v4682
    %v4941 = vunpack.c.l.b16 %v4683
    %v4942 = vunpack.c.h.b16 %v4683
    %v4943 = vunpack.c.l.b16 %v4684
    %v4944 = vunpack.c.h.b16 %v4684
    %v4945 = vunpack.c.l.b16 %v4685
    %v4946 = vunpack.c.h.b16 %v4685
    %v4947 = vunpack.c.l.b16 %v4686
    %v4948 = vunpack.c.h.b16 %v4686
    %v4949 = vunpack.c.l.b16 %v4687
    %v4950 = vunpack.c.h.b16 %v4687
    %v4951 = vunpack.c.l.b16 %v4688
    %v4952 = vunpack.c.h.b16 %v4688
    %v4953 = vunpack.c.l.b16 %v4689
    %v4954 = vunpack.c.h.b16 %v4689
    %v4955 = vunpack.c.l.b16 %v4690
    %v4956 = vunpack.c.h.b16 %v4690
    %v4957 = vunpack.c.l.b16 %v4691
    %v4958 = vunpack.c.h.b16 %v4691
    %v4959 = vunpack.c.l.b16 %v4692
    %v4960 = vunpack.c.h.b16 %v4692
    %v4961 = vunpack.c.l.b16 %v4693
    %v4962 = vunpack.c.h.b16 %v4693
    %v4963 = vunpack.c.l.b16 %v4694
    %v4964 = vunpack.c.h.b16 %v4694
    %v4965 = vunpack.c.l.b16 %v4695
    %v4966 = vunpack.c.h.b16 %v4695
    %v4967 = vunpack.c.l.b16 %v4696
    %v4968 = vunpack.c.h.b16 %v4696
    %v4969 = vunpack.c.l.b16 %v4697
    %v4970 = vunpack.c.h.b16 %v4697
    %v4971 = vunpack.c.l.b16 %v4698
    %v4972 = vunpack.c.h.b16 %v4698
    %v4973 = vunpack.c.l.b16 %v4699
    %v4974 = vunpack.c.h.b16 %v4699
    %v4975 = vunpack.c.l.b16 %v4700
    %v4976 = vunpack.c.h.b16 %v4700
    %v4977 = vunpack.c.l.b16 %v4701
    %v4978 = vunpack.c.h.b16 %v4701
    %v4979 = vunpack.c.l.b16 %v4702
    %v4980 = vunpack.c.h.b16 %v4702
    %v4981 = vunpack.c.l.b16 %v4703
    %v4982 = vunpack.c.h.b16 %v4703
    %v4983 = vunpack.c.l.b16 %v4704
    %v4984 = vunpack.c.h.b16 %v4704
    %v4985 = vunpack.c.l.b16 %v4705
    %v4986 = vunpack.c.h.b16 %v4705
    %v4987 = vunpack.c.l.b16 %v4706
    %v4988 = vunpack.c.h.b16 %v4706
    %v4989 = vunpack.c.l.b16 %v4707
    %v4990 = vunpack.c.h.b16 %v4707
    %v4991 = vunpack.c.l.b16 %v4708
    %v4992 = vunpack.c.h.b16 %v4708
    %v4993 = vunpack.c.l.b16 %v4709
    %v4994 = vunpack.c.h.b16 %v4709
    %v4995 = vunpack.c.l.b16 %v4710
    %v4996 = vunpack.c.h.b16 %v4710
    %v4997 = vunpack.c.l.b16 %v4711
    %v4998 = vunpack.c.h.b16 %v4711
    %v4999 = vunpack.c.l.b16 %v4712
    %v5000 = vunpack.c.h.b16 %v4712
    %v5001 = vpack.c.b16 %v4813, %v4809
    %v5002 = vpack.c.b16 %v4814, %v4810
    %v5003 = vpack.c.b16 %v4815, %v4811
    %v5004 = vpack.c.b16 %v4816, %v4812
    %v5005 = vpack.c.b16 %v4821, %v4817
    %v5006 = vpack.c.b16 %v4822, %v4818
    %v5007 = vpack.c.b16 %v4823, %v4819
    %v5008 = vpack.c.b16 %v4824, %v4820
    %v5009 = vpack.c.b16 %v4829, %v4825
    %v5010 = vpack.c.b16 %v4830, %v4826
    %v5011 = vpack.c.b16 %v4831, %v4827
    %v5012 = vpack.c.b16 %v4832, %v4828
    %v5013 = vpack.c.b16 %v4837, %v4833
    %v5014 = vpack.c.b16 %v4838, %v4834
    %v5015 = vpack.c.b16 %v4839, %v4835
    %v5016 = vpack.c.b16 %v4840, %v4836
    %v5017 = vpack.c.b16 %v4845, %v4841
    %v5018 = vpack.c.b16 %v4846, %v4842
    %v5019 = vpack.c.b16 %v4847, %v4843
    %v5020 = vpack.c.b16 %v4848, %v4844
    %v5021 = vpack.c.b16 %v4853, %v4849
    %v5022 = vpack.c.b16 %v4854, %v4850
    %v5023 = vpack.c.b16 %v4855, %v4851
    %v5024 = vpack.c.b16 %v4856, %v4852
    %v5025 = vpack.c.b16 %v4861, %v4857
    %v5026 = vpack.c.b16 %v4862, %v4858
    %v5027 = vpack.c.b16 %v4863, %v4859
    %v5028 = vpack.c.b16 %v4864, %v4860
    %v5029 = vpack.c.b16 %v4869, %v4865
    %v5030 = vpack.c.b16 %v4870, %v4866
    %v5031 = vpack.c.b16 %v4871, %v4867
    %v5032 = vpack.c.b16 %v4872, %v4868
    %v5033 = vpack.c.b16 %v4877, %v4873
    %v5034 = vpack.c.b16 %v4878, %v4874
    %v5035 = vpack.c.b16 %v4879, %v4875
    %v5036 = vpack.c.b16 %v4880, %v4876
    %v5037 = vpack.c.b16 %v4885, %v4881
    %v5038 = vpack.c.b16 %v4886, %v4882
    %v5039 = vpack.c.b16 %v4887, %v4883
    %v5040 = vpack.c.b16 %v4888, %v4884
    %v5041 = vpack.c.b16 %v4893, %v4889
    %v5042 = vpack.c.b16 %v4894, %v4890
    %v5043 = vpack.c.b16 %v4895, %v4891
    %v5044 = vpack.c.b16 %v4896, %v4892
    %v5045 = vpack.c.b16 %v4901, %v4897
    %v5046 = vpack.c.b16 %v4902, %v4898
    %v5047 = vpack.c.b16 %v4903, %v4899
    %v5048 = vpack.c.b16 %v4904, %v4900
    %v5049 = vpack.c.b16 %v4909, %v4905
    %v5050 = vpack.c.b16 %v4910, %v4906
    %v5051 = vpack.c.b16 %v4911, %v4907
    %v5052 = vpack.c.b16 %v4912, %v4908
    %v5053 = vpack.c.b16 %v4917, %v4913
    %v5054 = vpack.c.b16 %v4918, %v4914
    %v5055 = vpack.c.b16 %v4919, %v4915
    %v5056 = vpack.c.b16 %v4920, %v4916
    %v5057 = vpack.c.b16 %v4925, %v4921
    %v5058 = vpack.c.b16 %v4926, %v4922
    %v5059 = vpack.c.b16 %v4927, %v4923
    %v5060 = vpack.c.b16 %v4928, %v4924
    %v5061 = vpack.c.b16 %v4933, %v4929
    %v5062 = vpack.c.b16 %v4934, %v4930
    %v5063 = vpack.c.b16 %v4935, %v4931
    %v5064 = vpack.c.b16 %v4936, %v4932
    %v5065 = vpack.c.b16 %v4941, %v4937
    %v5066 = vpack.c.b16 %v4942, %v4938
    %v5067 = vpack.c.b16 %v4943, %v4939
    %v5068 = vpack.c.b16 %v4944, %v4940
    %v5069 = vpack.c.b16 %v4949, %v4945
    %v5070 = vpack.c.b16 %v4950, %v4946
    %v5071 = vpack.c.b16 %v4951, %v4947
    %v5072 = vpack.c.b16 %v4952, %v4948
    %v5073 = vpack.c.b16 %v4957, %v4953
    %v5074 = vpack.c.b16 %v4958, %v4954
    %v5075 = vpack.c.b16 %v4959, %v4955
    %v5076 = vpack.c.b16 %v4960, %v4956
    %v5077 = vpack.c.b16 %v4965, %v4961
    %v5078 = vpack.c.b16 %v4966, %v4962
    %v5079 = vpack.c.b16 %v4967, %v4963
    %v5080 = vpack.c.b16 %v4968, %v4964
    %v5081 = vpack.c.b16 %v4973, %v4969
    %v5082 = vpack.c.b16 %v4974, %v4970
    %v5083 = vpack.c.b16 %v4975, %v4971
    %v5084 = vpack.c.b16 %v4976, %v4972
    %v5085 = vpack.c.b16 %v4981, %v4977
    %v5086 = vpack.c.b16 %v4982, %v4978
    %v5087 = vpack.c.b16 %v4983, %v4979
    %v5088 = vpack.c.b16 %v4984, %v4980
    %v5089 = vpack.c.b16 %v4989, %v4985
    %v5090 = vpack.c.b16 %v4990, %v4986
    %v5091 = vpack.c.b16 %v4991, %v4987
    %v5092 = vpack.c.b16 %v4992, %v4988
    %v5093 = vpack.c.b16 %v4997, %v4993
    %v5094 = vpack.c.b16 %v4998, %v4994
    %v5095 = vpack.c.b16 %v4999, %v4995
    %v5096 = vpack.c.b16 %v5000, %v4996
    %5193 = vmatpush.bf16.msra.mxu0 %v5029
    %5194 = vmatpush.bf16.msra.mxu0 %v5025
    %5195 = vmatpush.bf16.msra.mxu0 %v5021
    %5196 = vmatpush.bf16.msra.mxu0 %v5017
    %5197 = vmatpush.bf16.msra.mxu0 %v5013
    %5198 = vmatpush.bf16.msra.mxu0 %v5009
    %5199 = vmatpush.bf16.msra.mxu0 %v5005
    %5200 = vmatpush.bf16.msra.mxu0 %v5001
    %5201 = vmatmul.bf16.gmra.mxu0 %v4610
    %v5202 = vpop.f32.mrf.mxu0
    %v5203 = vadd.f32 0.0, %v5202
    %v5204 = vpop.f32.mrf.mxu0
    %v5205 = vadd.f32 0.0, %v5204
    %5206 = vmatmul.bf16.gmra.mxu0 %v4613
    %v5207 = vpop.f32.mrf.mxu0
    %v5208 = vadd.f32 0.0, %v5207
    %v5209 = vpop.f32.mrf.mxu0
    %v5210 = vadd.f32 0.0, %v5209
    %5211 = vdwg.mxu0
    %5212 = vmatpush.bf16.msra.mxu0 %v5061
    %5213 = vmatpush.bf16.msra.mxu0 %v5057
    %5214 = vmatpush.bf16.msra.mxu0 %v5053
    %5215 = vmatpush.bf16.msra.mxu0 %v5049
    %5216 = vmatpush.bf16.msra.mxu0 %v5045
    %5217 = vmatpush.bf16.msra.mxu0 %v5041
    %5218 = vmatpush.bf16.msra.mxu0 %v5037
    %5219 = vmatpush.bf16.msra.mxu0 %v5033
    %5220 = vmatmul.bf16.gmra.mxu0 %v4611
    %v5221 = vpop.f32.mrf.mxu0
    %v5222 = vadd.f32 %v5203, %v5221
    %v5223 = vpop.f32.mrf.mxu0
    %v5224 = vadd.f32 %v5205, %v5223
    %5225 = vmatmul.bf16.gmra.mxu0 %v4614
    %v5226 = vpop.f32.mrf.mxu0
    %v5227 = vadd.f32 %v5208, %v5226
    %v5228 = vpop.f32.mrf.mxu0
    %v5229 = vadd.f32 %v5210, %v5228
    %5230 = vdwg.mxu0
    %5231 = vmatpush.bf16.msra.mxu0 %v5093
    %5232 = vmatpush.bf16.msra.mxu0 %v5089
    %5233 = vmatpush.bf16.msra.mxu0 %v5085
    %5234 = vmatpush.bf16.msra.mxu0 %v5081
    %5235 = vmatpush.bf16.msra.mxu0 %v5077
    %5236 = vmatpush.bf16.msra.mxu0 %v5073
    %5237 = vmatpush.bf16.msra.mxu0 %v5069
    %5238 = vmatpush.bf16.msra.mxu0 %v5065
    %5239 = vmatmul.bf16.gmra.mxu0 %v4612
    %v5240 = vpop.f32.mrf.mxu0
    %v5241 = vadd.f32 %v5222, %v5240
    %v5242 = vpop.f32.mrf.mxu0
    %v5243 = vadd.f32 %v5224, %v5242
    %5244 = vmatmul.bf16.gmra.mxu0 %v4615
    %v5245 = vpop.f32.mrf.mxu0
    %v5246 = vadd.f32 %v5227, %v5245
    %v5247 = vpop.f32.mrf.mxu0
    %v5248 = vadd.f32 %v5229, %v5247
    %5249 = vdwg.mxu0
    %5250 = vmatpush.bf16.msra.mxu0 %v5030
    %5251 = vmatpush.bf16.msra.mxu0 %v5026
    %5252 = vmatpush.bf16.msra.mxu0 %v5022
    %5253 = vmatpush.bf16.msra.mxu0 %v5018
    %5254 = vmatpush.bf16.msra.mxu0 %v5014
    %5255 = vmatpush.bf16.msra.mxu0 %v5010
    %5256 = vmatpush.bf16.msra.mxu0 %v5006
    %5257 = vmatpush.bf16.msra.mxu0 %v5002
    %5258 = vmatmul.bf16.gmra.mxu0 %v4610
    %v5259 = vpop.f32.mrf.mxu0
    %v5260 = vadd.f32 0.0, %v5259
    %v5261 = vpop.f32.mrf.mxu0
    %v5262 = vadd.f32 0.0, %v5261
    %5263 = vmatmul.bf16.gmra.mxu0 %v4613
    %v5264 = vpop.f32.mrf.mxu0
    %v5265 = vadd.f32 0.0, %v5264
    %v5266 = vpop.f32.mrf.mxu0
    %v5267 = vadd.f32 0.0, %v5266
    %5268 = vdwg.mxu0
    %5269 = vmatpush.bf16.msra.mxu0 %v5062
    %5270 = vmatpush.bf16.msra.mxu0 %v5058
    %5271 = vmatpush.bf16.msra.mxu0 %v5054
    %5272 = vmatpush.bf16.msra.mxu0 %v5050
    %5273 = vmatpush.bf16.msra.mxu0 %v5046
    %5274 = vmatpush.bf16.msra.mxu0 %v5042
    %5275 = vmatpush.bf16.msra.mxu0 %v5038
    %5276 = vmatpush.bf16.msra.mxu0 %v5034
    %5277 = vmatmul.bf16.gmra.mxu0 %v4611
    %v5278 = vpop.f32.mrf.mxu0
    %v5279 = vadd.f32 %v5260, %v5278
    %v5280 = vpop.f32.mrf.mxu0
    %v5281 = vadd.f32 %v5262, %v5280
    %5282 = vmatmul.bf16.gmra.mxu0 %v4614
    %v5283 = vpop.f32.mrf.mxu0
    %v5284 = vadd.f32 %v5265, %v5283
    %v5285 = vpop.f32.mrf.mxu0
    %v5286 = vadd.f32 %v5267, %v5285
    %5287 = vdwg.mxu0
    %5288 = vmatpush.bf16.msra.mxu0 %v5094
    %5289 = vmatpush.bf16.msra.mxu0 %v5090
    %5290 = vmatpush.bf16.msra.mxu0 %v5086
    %5291 = vmatpush.bf16.msra.mxu0 %v5082
    %5292 = vmatpush.bf16.msra.mxu0 %v5078
    %5293 = vmatpush.bf16.msra.mxu0 %v5074
    %5294 = vmatpush.bf16.msra.mxu0 %v5070
    %5295 = vmatpush.bf16.msra.mxu0 %v5066
    %5296 = vmatmul.bf16.gmra.mxu0 %v4612
    %v5297 = vpop.f32.mrf.mxu0
    %v5298 = vadd.f32 %v5279, %v5297
    %v5299 = vpop.f32.mrf.mxu0
    %v5300 = vadd.f32 %v5281, %v5299
    %5301 = vmatmul.bf16.gmra.mxu0 %v4615
    %v5302 = vpop.f32.mrf.mxu0
    %v5303 = vadd.f32 %v5284, %v5302
    %v5304 = vpop.f32.mrf.mxu0
    %v5305 = vadd.f32 %v5286, %v5304
    %5306 = vdwg.mxu0
    %5307 = vmatpush.bf16.msra.mxu0 %v5031
    %5308 = vmatpush.bf16.msra.mxu0 %v5027
    %5309 = vmatpush.bf16.msra.mxu0 %v5023
    %5310 = vmatpush.bf16.msra.mxu0 %v5019
    %5311 = vmatpush.bf16.msra.mxu0 %v5015
    %5312 = vmatpush.bf16.msra.mxu0 %v5011
    %5313 = vmatpush.bf16.msra.mxu0 %v5007
    %5314 = vmatpush.bf16.msra.mxu0 %v5003
    %5315 = vmatmul.bf16.gmra.mxu0 %v4610
    %v5316 = vpop.f32.mrf.mxu0
    %v5317 = vadd.f32 0.0, %v5316
    %v5318 = vpop.f32.mrf.mxu0
    %v5319 = vadd.f32 0.0, %v5318
    %5320 = vmatmul.bf16.gmra.mxu0 %v4613
    %v5321 = vpop.f32.mrf.mxu0
    %v5322 = vadd.f32 0.0, %v5321
    %v5323 = vpop.f32.mrf.mxu0
    %v5324 = vadd.f32 0.0, %v5323
    %5325 = vdwg.mxu0
    %5326 = vmatpush.bf16.msra.mxu0 %v5063
    %5327 = vmatpush.bf16.msra.mxu0 %v5059
    %5328 = vmatpush.bf16.msra.mxu0 %v5055
    %5329 = vmatpush.bf16.msra.mxu0 %v5051
    %5330 = vmatpush.bf16.msra.mxu0 %v5047
    %5331 = vmatpush.bf16.msra.mxu0 %v5043
    %5332 = vmatpush.bf16.msra.mxu0 %v5039
    %5333 = vmatpush.bf16.msra.mxu0 %v5035
    %5334 = vmatmul.bf16.gmra.mxu0 %v4611
    %v5335 = vpop.f32.mrf.mxu0
    %v5336 = vadd.f32 %v5317, %v5335
    %v5337 = vpop.f32.mrf.mxu0
    %v5338 = vadd.f32 %v5319, %v5337
    %5339 = vmatmul.bf16.gmra.mxu0 %v4614
    %v5340 = vpop.f32.mrf.mxu0
    %v5341 = vadd.f32 %v5322, %v5340
    %v5342 = vpop.f32.mrf.mxu0
    %v5343 = vadd.f32 %v5324, %v5342
    %5344 = vdwg.mxu0
    %5345 = vmatpush.bf16.msra.mxu0 %v5095
    %5346 = vmatpush.bf16.msra.mxu0 %v5091
    %5347 = vmatpush.bf16.msra.mxu0 %v5087
    %5348 = vmatpush.bf16.msra.mxu0 %v5083
    %5349 = vmatpush.bf16.msra.mxu0 %v5079
    %5350 = vmatpush.bf16.msra.mxu0 %v5075
    %5351 = vmatpush.bf16.msra.mxu0 %v5071
    %5352 = vmatpush.bf16.msra.mxu0 %v5067
    %5353 = vmatmul.bf16.gmra.mxu0 %v4612
    %v5354 = vpop.f32.mrf.mxu0
    %v5355 = vadd.f32 %v5336, %v5354
    %v5356 = vpop.f32.mrf.mxu0
    %v5357 = vadd.f32 %v5338, %v5356
    %5358 = vmatmul.bf16.gmra.mxu0 %v4615
    %v5359 = vpop.f32.mrf.mxu0
    %v5360 = vadd.f32 %v5341, %v5359
    %v5361 = vpop.f32.mrf.mxu0
    %v5362 = vadd.f32 %v5343, %v5361
    %5363 = vdwg.mxu0
    %5364 = vmatpush.bf16.msra.mxu0 %v5032
    %5365 = vmatpush.bf16.msra.mxu0 %v5028
    %5366 = vmatpush.bf16.msra.mxu0 %v5024
    %5367 = vmatpush.bf16.msra.mxu0 %v5020
    %5368 = vmatpush.bf16.msra.mxu0 %v5016
    %5369 = vmatpush.bf16.msra.mxu0 %v5012
    %5370 = vmatpush.bf16.msra.mxu0 %v5008
    %5371 = vmatpush.bf16.msra.mxu0 %v5004
    %5372 = vmatmul.bf16.gmra.mxu0 %v4610
    %v5373 = vpop.f32.mrf.mxu0
    %v5374 = vadd.f32 0.0, %v5373
    %v5375 = vpop.f32.mrf.mxu0
    %v5376 = vadd.f32 0.0, %v5375
    %5377 = vmatmul.bf16.gmra.mxu0 %v4613
    %v5378 = vpop.f32.mrf.mxu0
    %v5379 = vadd.f32 0.0, %v5378
    %v5380 = vpop.f32.mrf.mxu0
    %v5381 = vadd.f32 0.0, %v5380
    %5382 = vdwg.mxu0
    %5383 = vmatpush.bf16.msra.mxu0 %v5064
    %5384 = vmatpush.bf16.msra.mxu0 %v5060
    %5385 = vmatpush.bf16.msra.mxu0 %v5056
    %5386 = vmatpush.bf16.msra.mxu0 %v5052
    %5387 = vmatpush.bf16.msra.mxu0 %v5048
    %5388 = vmatpush.bf16.msra.mxu0 %v5044
    %5389 = vmatpush.bf16.msra.mxu0 %v5040
    %5390 = vmatpush.bf16.msra.mxu0 %v5036
    %5391 = vmatmul.bf16.gmra.mxu0 %v4611
    %v5392 = vpop.f32.mrf.mxu0
    %v5393 = vadd.f32 %v5374, %v5392
    %v5394 = vpop.f32.mrf.mxu0
    %v5395 = vadd.f32 %v5376, %v5394
    %5396 = vmatmul.bf16.gmra.mxu0 %v4614
    %v5397 = vpop.f32.mrf.mxu0
    %v5398 = vadd.f32 %v5379, %v5397
    %v5399 = vpop.f32.mrf.mxu0
    %v5400 = vadd.f32 %v5381, %v5399
    %5401 = vdwg.mxu0
    %5402 = vmatpush.bf16.msra.mxu0 %v5096
    %5403 = vmatpush.bf16.msra.mxu0 %v5092
    %5404 = vmatpush.bf16.msra.mxu0 %v5088
    %5405 = vmatpush.bf16.msra.mxu0 %v5084
    %5406 = vmatpush.bf16.msra.mxu0 %v5080
    %5407 = vmatpush.bf16.msra.mxu0 %v5076
    %5408 = vmatpush.bf16.msra.mxu0 %v5072
    %5409 = vmatpush.bf16.msra.mxu0 %v5068
    %5410 = vmatmul.bf16.gmra.mxu0 %v4612
    %v5411 = vpop.f32.mrf.mxu0
    %v5412 = vadd.f32 %v5393, %v5411
    %v5413 = vpop.f32.mrf.mxu0
    %v5414 = vadd.f32 %v5395, %v5413
    %5415 = vmatmul.bf16.gmra.mxu0 %v4615
    %v5416 = vpop.f32.mrf.mxu0
    %v5417 = vadd.f32 %v5398, %v5416
    %v5418 = vpop.f32.mrf.mxu0
    %v5419 = vadd.f32 %v5400, %v5418
    %5420 = vdwg.mxu0
    %v5517 = vunpack.c.l.b16 %v4436
    %v5518 = vunpack.c.h.b16 %v4436
    %v5519 = vunpack.c.l.b16 %v4437
    %v5520 = vunpack.c.h.b16 %v4437
    %v5521 = vunpack.c.l.b16 %v4438
    %v5522 = vunpack.c.h.b16 %v4438
    %v5523 = vunpack.c.l.b16 %v4439
    %v5524 = vunpack.c.h.b16 %v4439
    %v5525 = vunpack.c.l.b16 %v4440
    %v5526 = vunpack.c.h.b16 %v4440
    %v5527 = vunpack.c.l.b16 %v4441
    %v5528 = vunpack.c.h.b16 %v4441
    %v5529 = vunpack.c.l.b16 %v4442
    %v5530 = vunpack.c.h.b16 %v4442
    %v5531 = vunpack.c.l.b16 %v4443
    %v5532 = vunpack.c.h.b16 %v4443
    %v5533 = vunpack.c.l.b16 %v4444
    %v5534 = vunpack.c.h.b16 %v4444
    %v5535 = vunpack.c.l.b16 %v4445
    %v5536 = vunpack.c.h.b16 %v4445
    %v5537 = vunpack.c.l.b16 %v4446
    %v5538 = vunpack.c.h.b16 %v4446
    %v5539 = vunpack.c.l.b16 %v4447
    %v5540 = vunpack.c.h.b16 %v4447
    %v5541 = vunpack.c.l.b16 %v4448
    %v5542 = vunpack.c.h.b16 %v4448
    %v5543 = vunpack.c.l.b16 %v4449
    %v5544 = vunpack.c.h.b16 %v4449
    %v5545 = vunpack.c.l.b16 %v4450
    %v5546 = vunpack.c.h.b16 %v4450
    %v5547 = vunpack.c.l.b16 %v4451
    %v5548 = vunpack.c.h.b16 %v4451
    %v5549 = vunpack.c.l.b16 %v4452
    %v5550 = vunpack.c.h.b16 %v4452
    %v5551 = vunpack.c.l.b16 %v4453
    %v5552 = vunpack.c.h.b16 %v4453
    %v5553 = vunpack.c.l.b16 %v4454
    %v5554 = vunpack.c.h.b16 %v4454
    %v5555 = vunpack.c.l.b16 %v4455
    %v5556 = vunpack.c.h.b16 %v4455
    %v5557 = vunpack.c.l.b16 %v4456
    %v5558 = vunpack.c.h.b16 %v4456
    %v5559 = vunpack.c.l.b16 %v4457
    %v5560 = vunpack.c.h.b16 %v4457
    %v5561 = vunpack.c.l.b16 %v4458
    %v5562 = vunpack.c.h.b16 %v4458
    %v5563 = vunpack.c.l.b16 %v4459
    %v5564 = vunpack.c.h.b16 %v4459
    %v5565 = vunpack.c.l.b16 %v4460
    %v5566 = vunpack.c.h.b16 %v4460
    %v5567 = vunpack.c.l.b16 %v4461
    %v5568 = vunpack.c.h.b16 %v4461
    %v5569 = vunpack.c.l.b16 %v4462
    %v5570 = vunpack.c.h.b16 %v4462
    %v5571 = vunpack.c.l.b16 %v4463
    %v5572 = vunpack.c.h.b16 %v4463
    %v5573 = vunpack.c.l.b16 %v4464
    %v5574 = vunpack.c.h.b16 %v4464
    %v5575 = vunpack.c.l.b16 %v4465
    %v5576 = vunpack.c.h.b16 %v4465
    %v5577 = vunpack.c.l.b16 %v4466
    %v5578 = vunpack.c.h.b16 %v4466
    %v5579 = vunpack.c.l.b16 %v4467
    %v5580 = vunpack.c.h.b16 %v4467
    %v5581 = vunpack.c.l.b16 %v4468
    %v5582 = vunpack.c.h.b16 %v4468
    %v5583 = vunpack.c.l.b16 %v4469
    %v5584 = vunpack.c.h.b16 %v4469
    %v5585 = vunpack.c.l.b16 %v4470
    %v5586 = vunpack.c.h.b16 %v4470
    %v5587 = vunpack.c.l.b16 %v4471
    %v5588 = vunpack.c.h.b16 %v4471
    %v5589 = vunpack.c.l.b16 %v4472
    %v5590 = vunpack.c.h.b16 %v4472
    %v5591 = vunpack.c.l.b16 %v4473
    %v5592 = vunpack.c.h.b16 %v4473
    %v5593 = vunpack.c.l.b16 %v4474
    %v5594 = vunpack.c.h.b16 %v4474
    %v5595 = vunpack.c.l.b16 %v4475
    %v5596 = vunpack.c.h.b16 %v4475
    %v5597 = vunpack.c.l.b16 %v4476
    %v5598 = vunpack.c.h.b16 %v4476
    %v5599 = vunpack.c.l.b16 %v4477
    %v5600 = vunpack.c.h.b16 %v4477
    %v5601 = vunpack.c.l.b16 %v4478
    %v5602 = vunpack.c.h.b16 %v4478
    %v5603 = vunpack.c.l.b16 %v4479
    %v5604 = vunpack.c.h.b16 %v4479
    %v5605 = vunpack.c.l.b16 %v4480
    %v5606 = vunpack.c.h.b16 %v4480
    %v5607 = vunpack.c.l.b16 %v4481
    %v5608 = vunpack.c.h.b16 %v4481
    %v5609 = vunpack.c.l.b16 %v4482
    %v5610 = vunpack.c.h.b16 %v4482
    %v5611 = vunpack.c.l.b16 %v4483
    %v5612 = vunpack.c.h.b16 %v4483
    %v5613 = vunpack.c.l.b16 %v4484
    %v5614 = vunpack.c.h.b16 %v4484
    %v5615 = vunpack.c.l.b16 %v4485
    %v5616 = vunpack.c.h.b16 %v4485
    %v5617 = vunpack.c.l.b16 %v4486
    %v5618 = vunpack.c.h.b16 %v4486
    %v5619 = vunpack.c.l.b16 %v4487
    %v5620 = vunpack.c.h.b16 %v4487
    %v5621 = vunpack.c.l.b16 %v4488
    %v5622 = vunpack.c.h.b16 %v4488
    %v5623 = vunpack.c.l.b16 %v4489
    %v5624 = vunpack.c.h.b16 %v4489
    %v5625 = vunpack.c.l.b16 %v4490
    %v5626 = vunpack.c.h.b16 %v4490
    %v5627 = vunpack.c.l.b16 %v4491
    %v5628 = vunpack.c.h.b16 %v4491
    %v5629 = vunpack.c.l.b16 %v4492
    %v5630 = vunpack.c.h.b16 %v4492
    %v5631 = vunpack.c.l.b16 %v4493
    %v5632 = vunpack.c.h.b16 %v4493
    %v5633 = vunpack.c.l.b16 %v4494
    %v5634 = vunpack.c.h.b16 %v4494
    %v5635 = vunpack.c.l.b16 %v4495
    %v5636 = vunpack.c.h.b16 %v4495
    %v5637 = vunpack.c.l.b16 %v4496
    %v5638 = vunpack.c.h.b16 %v4496
    %v5639 = vunpack.c.l.b16 %v4497
    %v5640 = vunpack.c.h.b16 %v4497
    %v5641 = vunpack.c.l.b16 %v4498
    %v5642 = vunpack.c.h.b16 %v4498
    %v5643 = vunpack.c.l.b16 %v4499
    %v5644 = vunpack.c.h.b16 %v4499
    %v5645 = vunpack.c.l.b16 %v4500
    %v5646 = vunpack.c.h.b16 %v4500
    %v5647 = vunpack.c.l.b16 %v4501
    %v5648 = vunpack.c.h.b16 %v4501
    %v5649 = vunpack.c.l.b16 %v4502
    %v5650 = vunpack.c.h.b16 %v4502
    %v5651 = vunpack.c.l.b16 %v4503
    %v5652 = vunpack.c.h.b16 %v4503
    %v5653 = vunpack.c.l.b16 %v4504
    %v5654 = vunpack.c.h.b16 %v4504
    %v5655 = vunpack.c.l.b16 %v4505
    %v5656 = vunpack.c.h.b16 %v4505
    %v5657 = vunpack.c.l.b16 %v4506
    %v5658 = vunpack.c.h.b16 %v4506
    %v5659 = vunpack.c.l.b16 %v4507
    %v5660 = vunpack.c.h.b16 %v4507
    %v5661 = vunpack.c.l.b16 %v4508
    %v5662 = vunpack.c.h.b16 %v4508
    %v5663 = vunpack.c.l.b16 %v4509
    %v5664 = vunpack.c.h.b16 %v4509
    %v5665 = vunpack.c.l.b16 %v4510
    %v5666 = vunpack.c.h.b16 %v4510
    %v5667 = vunpack.c.l.b16 %v4511
    %v5668 = vunpack.c.h.b16 %v4511
    %v5669 = vunpack.c.l.b16 %v4512
    %v5670 = vunpack.c.h.b16 %v4512
    %v5671 = vunpack.c.l.b16 %v4513
    %v5672 = vunpack.c.h.b16 %v4513
    %v5673 = vunpack.c.l.b16 %v4514
    %v5674 = vunpack.c.h.b16 %v4514
    %v5675 = vunpack.c.l.b16 %v4515
    %v5676 = vunpack.c.h.b16 %v4515
    %v5677 = vunpack.c.l.b16 %v4516
    %v5678 = vunpack.c.h.b16 %v4516
    %v5679 = vunpack.c.l.b16 %v4517
    %v5680 = vunpack.c.h.b16 %v4517
    %v5681 = vunpack.c.l.b16 %v4518
    %v5682 = vunpack.c.h.b16 %v4518
    %v5683 = vunpack.c.l.b16 %v4519
    %v5684 = vunpack.c.h.b16 %v4519
    %v5685 = vunpack.c.l.b16 %v4520
    %v5686 = vunpack.c.h.b16 %v4520
    %v5687 = vunpack.c.l.b16 %v4521
    %v5688 = vunpack.c.h.b16 %v4521
    %v5689 = vunpack.c.l.b16 %v4522
    %v5690 = vunpack.c.h.b16 %v4522
    %v5691 = vunpack.c.l.b16 %v4523
    %v5692 = vunpack.c.h.b16 %v4523
    %v5693 = vunpack.c.l.b16 %v4524
    %v5694 = vunpack.c.h.b16 %v4524
    %v5695 = vunpack.c.l.b16 %v4525
    %v5696 = vunpack.c.h.b16 %v4525
    %v5697 = vunpack.c.l.b16 %v4526
    %v5698 = vunpack.c.h.b16 %v4526
    %v5699 = vunpack.c.l.b16 %v4527
    %v5700 = vunpack.c.h.b16 %v4527
    %v5701 = vunpack.c.l.b16 %v4528
    %v5702 = vunpack.c.h.b16 %v4528
    %v5703 = vunpack.c.l.b16 %v4529
    %v5704 = vunpack.c.h.b16 %v4529
    %v5705 = vunpack.c.l.b16 %v4530
    %v5706 = vunpack.c.h.b16 %v4530
    %v5707 = vunpack.c.l.b16 %v4531
    %v5708 = vunpack.c.h.b16 %v4531
    %v5709 = vpack.c.b16 %v5521, %v5517
    %v5710 = vpack.c.b16 %v5522, %v5518
    %v5711 = vpack.c.b16 %v5523, %v5519
    %v5712 = vpack.c.b16 %v5524, %v5520
    %v5713 = vpack.c.b16 %v5529, %v5525
    %v5714 = vpack.c.b16 %v5530, %v5526
    %v5715 = vpack.c.b16 %v5531, %v5527
    %v5716 = vpack.c.b16 %v5532, %v5528
    %v5717 = vpack.c.b16 %v5537, %v5533
    %v5718 = vpack.c.b16 %v5538, %v5534
    %v5719 = vpack.c.b16 %v5539, %v5535
    %v5720 = vpack.c.b16 %v5540, %v5536
    %v5721 = vpack.c.b16 %v5545, %v5541
    %v5722 = vpack.c.b16 %v5546, %v5542
    %v5723 = vpack.c.b16 %v5547, %v5543
    %v5724 = vpack.c.b16 %v5548, %v5544
    %v5725 = vpack.c.b16 %v5553, %v5549
    %v5726 = vpack.c.b16 %v5554, %v5550
    %v5727 = vpack.c.b16 %v5555, %v5551
    %v5728 = vpack.c.b16 %v5556, %v5552
    %v5729 = vpack.c.b16 %v5561, %v5557
    %v5730 = vpack.c.b16 %v5562, %v5558
    %v5731 = vpack.c.b16 %v5563, %v5559
    %v5732 = vpack.c.b16 %v5564, %v5560
    %v5733 = vpack.c.b16 %v5569, %v5565
    %v5734 = vpack.c.b16 %v5570, %v5566
    %v5735 = vpack.c.b16 %v5571, %v5567
    %v5736 = vpack.c.b16 %v5572, %v5568
    %v5737 = vpack.c.b16 %v5577, %v5573
    %v5738 = vpack.c.b16 %v5578, %v5574
    %v5739 = vpack.c.b16 %v5579, %v5575
    %v5740 = vpack.c.b16 %v5580, %v5576
    %v5741 = vpack.c.b16 %v5585, %v5581
    %v5742 = vpack.c.b16 %v5586, %v5582
    %v5743 = vpack.c.b16 %v5587, %v5583
    %v5744 = vpack.c.b16 %v5588, %v5584
    %v5745 = vpack.c.b16 %v5593, %v5589
    %v5746 = vpack.c.b16 %v5594, %v5590
    %v5747 = vpack.c.b16 %v5595, %v5591
    %v5748 = vpack.c.b16 %v5596, %v5592
    %v5749 = vpack.c.b16 %v5601, %v5597
    %v5750 = vpack.c.b16 %v5602, %v5598
    %v5751 = vpack.c.b16 %v5603, %v5599
    %v5752 = vpack.c.b16 %v5604, %v5600
    %v5753 = vpack.c.b16 %v5609, %v5605
    %v5754 = vpack.c.b16 %v5610, %v5606
    %v5755 = vpack.c.b16 %v5611, %v5607
    %v5756 = vpack.c.b16 %v5612, %v5608
    %v5757 = vpack.c.b16 %v5617, %v5613
    %v5758 = vpack.c.b16 %v5618, %v5614
    %v5759 = vpack.c.b16 %v5619, %v5615
    %v5760 = vpack.c.b16 %v5620, %v5616
    %v5761 = vpack.c.b16 %v5625, %v5621
    %v5762 = vpack.c.b16 %v5626, %v5622
    %v5763 = vpack.c.b16 %v5627, %v5623
    %v5764 = vpack.c.b16 %v5628, %v5624
    %v5765 = vpack.c.b16 %v5633, %v5629
    %v5766 = vpack.c.b16 %v5634, %v5630
    %v5767 = vpack.c.b16 %v5635, %v5631
    %v5768 = vpack.c.b16 %v5636, %v5632
    %v5769 = vpack.c.b16 %v5641, %v5637
    %v5770 = vpack.c.b16 %v5642, %v5638
    %v5771 = vpack.c.b16 %v5643, %v5639
    %v5772 = vpack.c.b16 %v5644, %v5640
    %v5773 = vpack.c.b16 %v5649, %v5645
    %v5774 = vpack.c.b16 %v5650, %v5646
    %v5775 = vpack.c.b16 %v5651, %v5647
    %v5776 = vpack.c.b16 %v5652, %v5648
    %v5777 = vpack.c.b16 %v5657, %v5653
    %v5778 = vpack.c.b16 %v5658, %v5654
    %v5779 = vpack.c.b16 %v5659, %v5655
    %v5780 = vpack.c.b16 %v5660, %v5656
    %v5781 = vpack.c.b16 %v5665, %v5661
    %v5782 = vpack.c.b16 %v5666, %v5662
    %v5783 = vpack.c.b16 %v5667, %v5663
    %v5784 = vpack.c.b16 %v5668, %v5664
    %v5785 = vpack.c.b16 %v5673, %v5669
    %v5786 = vpack.c.b16 %v5674, %v5670
    %v5787 = vpack.c.b16 %v5675, %v5671
    %v5788 = vpack.c.b16 %v5676, %v5672
    %v5789 = vpack.c.b16 %v5681, %v5677
    %v5790 = vpack.c.b16 %v5682, %v5678
    %v5791 = vpack.c.b16 %v5683, %v5679
    %v5792 = vpack.c.b16 %v5684, %v5680
    %v5793 = vpack.c.b16 %v5689, %v5685
    %v5794 = vpack.c.b16 %v5690, %v5686
    %v5795 = vpack.c.b16 %v5691, %v5687
    %v5796 = vpack.c.b16 %v5692, %v5688
    %v5797 = vpack.c.b16 %v5697, %v5693
    %v5798 = vpack.c.b16 %v5698, %v5694
    %v5799 = vpack.c.b16 %v5699, %v5695
    %v5800 = vpack.c.b16 %v5700, %v5696
    %v5801 = vpack.c.b16 %v5705, %v5701
    %v5802 = vpack.c.b16 %v5706, %v5702
    %v5803 = vpack.c.b16 %v5707, %v5703
    %v5804 = vpack.c.b16 %v5708, %v5704
    %5901 = vmatpush.bf16.msra.mxu0 %v5737
    %5902 = vmatpush.bf16.msra.mxu0 %v5733
    %5903 = vmatpush.bf16.msra.mxu0 %v5729
    %5904 = vmatpush.bf16.msra.mxu0 %v5725
    %5905 = vmatpush.bf16.msra.mxu0 %v5721
    %5906 = vmatpush.bf16.msra.mxu0 %v5717
    %5907 = vmatpush.bf16.msra.mxu0 %v5713
    %5908 = vmatpush.bf16.msra.mxu0 %v5709
    %5909 = vmatmul.bf16.gmra.mxu0 %v4430
    %v5910 = vpop.f32.mrf.mxu0
    %v5911 = vadd.f32 %v5241, %v5910
    %v5912 = vpop.f32.mrf.mxu0
    %v5913 = vadd.f32 %v5243, %v5912
    %5914 = vmatmul.bf16.gmra.mxu0 %v4433
    %v5915 = vpop.f32.mrf.mxu0
    %v5916 = vadd.f32 %v5246, %v5915
    %v5917 = vpop.f32.mrf.mxu0
    %v5918 = vadd.f32 %v5248, %v5917
    %5919 = vdwg.mxu0
    %5920 = vmatpush.bf16.msra.mxu0 %v5769
    %5921 = vmatpush.bf16.msra.mxu0 %v5765
    %5922 = vmatpush.bf16.msra.mxu0 %v5761
    %5923 = vmatpush.bf16.msra.mxu0 %v5757
    %5924 = vmatpush.bf16.msra.mxu0 %v5753
    %5925 = vmatpush.bf16.msra.mxu0 %v5749
    %5926 = vmatpush.bf16.msra.mxu0 %v5745
    %5927 = vmatpush.bf16.msra.mxu0 %v5741
    %5928 = vmatmul.bf16.gmra.mxu0 %v4431
    %v5929 = vpop.f32.mrf.mxu0
    %v5930 = vadd.f32 %v5911, %v5929
    %v5931 = vpop.f32.mrf.mxu0
    %v5932 = vadd.f32 %v5913, %v5931
    %5933 = vmatmul.bf16.gmra.mxu0 %v4434
    %v5934 = vpop.f32.mrf.mxu0
    %v5935 = vadd.f32 %v5916, %v5934
    %v5936 = vpop.f32.mrf.mxu0
    %v5937 = vadd.f32 %v5918, %v5936
    %5938 = vdwg.mxu0
    %5939 = vmatpush.bf16.msra.mxu0 %v5801
    %5940 = vmatpush.bf16.msra.mxu0 %v5797
    %5941 = vmatpush.bf16.msra.mxu0 %v5793
    %5942 = vmatpush.bf16.msra.mxu0 %v5789
    %5943 = vmatpush.bf16.msra.mxu0 %v5785
    %5944 = vmatpush.bf16.msra.mxu0 %v5781
    %5945 = vmatpush.bf16.msra.mxu0 %v5777
    %5946 = vmatpush.bf16.msra.mxu0 %v5773
    %5947 = vmatmul.bf16.gmra.mxu0 %v4432
    %v5948 = vpop.f32.mrf.mxu0
    %v5949 = vadd.f32 %v5930, %v5948
    %v5950 = vpop.f32.mrf.mxu0
    %v5951 = vadd.f32 %v5932, %v5950
    %5952 = vmatmul.bf16.gmra.mxu0 %v4435
    %v5953 = vpop.f32.mrf.mxu0
    %v5954 = vadd.f32 %v5935, %v5953
    %v5955 = vpop.f32.mrf.mxu0
    %v5956 = vadd.f32 %v5937, %v5955
    %5957 = vdwg.mxu0
    %5958 = vmatpush.bf16.msra.mxu0 %v5738
    %5959 = vmatpush.bf16.msra.mxu0 %v5734
    %5960 = vmatpush.bf16.msra.mxu0 %v5730
    %5961 = vmatpush.bf16.msra.mxu0 %v5726
    %5962 = vmatpush.bf16.msra.mxu0 %v5722
    %5963 = vmatpush.bf16.msra.mxu0 %v5718
    %5964 = vmatpush.bf16.msra.mxu0 %v5714
    %5965 = vmatpush.bf16.msra.mxu0 %v5710
    %5966 = vmatmul.bf16.gmra.mxu0 %v4430
    %v5967 = vpop.f32.mrf.mxu0
    %v5968 = vadd.f32 %v5298, %v5967
    %v5969 = vpop.f32.mrf.mxu0
    %v5970 = vadd.f32 %v5300, %v5969
    %5971 = vmatmul.bf16.gmra.mxu0 %v4433
    %v5972 = vpop.f32.mrf.mxu0
    %v5973 = vadd.f32 %v5303, %v5972
    %v5974 = vpop.f32.mrf.mxu0
    %v5975 = vadd.f32 %v5305, %v5974
    %5976 = vdwg.mxu0
    %5977 = vmatpush.bf16.msra.mxu0 %v5770
    %5978 = vmatpush.bf16.msra.mxu0 %v5766
    %5979 = vmatpush.bf16.msra.mxu0 %v5762
    %5980 = vmatpush.bf16.msra.mxu0 %v5758
    %5981 = vmatpush.bf16.msra.mxu0 %v5754
    %5982 = vmatpush.bf16.msra.mxu0 %v5750
    %5983 = vmatpush.bf16.msra.mxu0 %v5746
    %5984 = vmatpush.bf16.msra.mxu0 %v5742
    %5985 = vmatmul.bf16.gmra.mxu0 %v4431
    %v5986 = vpop.f32.mrf.mxu0
    %v5987 = vadd.f32 %v5968, %v5986
    %v5988 = vpop.f32.mrf.mxu0
    %v5989 = vadd.f32 %v5970, %v5988
    %5990 = vmatmul.bf16.gmra.mxu0 %v4434
    %v5991 = vpop.f32.mrf.mxu0
    %v5992 = vadd.f32 %v5973, %v5991
    %v5993 = vpop.f32.mrf.mxu0
    %v5994 = vadd.f32 %v5975, %v5993
    %5995 = vdwg.mxu0
    %5996 = vmatpush.bf16.msra.mxu0 %v5802
    %5997 = vmatpush.bf16.msra.mxu0 %v5798
    %5998 = vmatpush.bf16.msra.mxu0 %v5794
    %5999 = vmatpush.bf16.msra.mxu0 %v5790
    %6000 = vmatpush.bf16.msra.mxu0 %v5786
    %6001 = vmatpush.bf16.msra.mxu0 %v5782
    %6002 = vmatpush.bf16.msra.mxu0 %v5778
    %6003 = vmatpush.bf16.msra.mxu0 %v5774
    %6004 = vmatmul.bf16.gmra.mxu0 %v4432
    %v6005 = vpop.f32.mrf.mxu0
    %v6006 = vadd.f32 %v5987, %v6005
    %v6007 = vpop.f32.mrf.mxu0
    %v6008 = vadd.f32 %v5989, %v6007
    %6009 = vmatmul.bf16.gmra.mxu0 %v4435
    %v6010 = vpop.f32.mrf.mxu0
    %v6011 = vadd.f32 %v5992, %v6010
    %v6012 = vpop.f32.mrf.mxu0
    %v6013 = vadd.f32 %v5994, %v6012
    %6014 = vdwg.mxu0
    %6015 = vmatpush.bf16.msra.mxu0 %v5739
    %6016 = vmatpush.bf16.msra.mxu0 %v5735
    %6017 = vmatpush.bf16.msra.mxu0 %v5731
    %6018 = vmatpush.bf16.msra.mxu0 %v5727
    %6019 = vmatpush.bf16.msra.mxu0 %v5723
    %6020 = vmatpush.bf16.msra.mxu0 %v5719
    %6021 = vmatpush.bf16.msra.mxu0 %v5715
    %6022 = vmatpush.bf16.msra.mxu0 %v5711
    %6023 = vmatmul.bf16.gmra.mxu0 %v4430
    %v6024 = vpop.f32.mrf.mxu0
    %v6025 = vadd.f32 %v5355, %v6024
    %v6026 = vpop.f32.mrf.mxu0
    %v6027 = vadd.f32 %v5357, %v6026
    %6028 = vmatmul.bf16.gmra.mxu0 %v4433
    %v6029 = vpop.f32.mrf.mxu0
    %v6030 = vadd.f32 %v5360, %v6029
    %v6031 = vpop.f32.mrf.mxu0
    %v6032 = vadd.f32 %v5362, %v6031
    %6033 = vdwg.mxu0
    %6034 = vmatpush.bf16.msra.mxu0 %v5771
    %6035 = vmatpush.bf16.msra.mxu0 %v5767
    %6036 = vmatpush.bf16.msra.mxu0 %v5763
    %6037 = vmatpush.bf16.msra.mxu0 %v5759
    %6038 = vmatpush.bf16.msra.mxu0 %v5755
    %6039 = vmatpush.bf16.msra.mxu0 %v5751
    %6040 = vmatpush.bf16.msra.mxu0 %v5747
    %6041 = vmatpush.bf16.msra.mxu0 %v5743
    %6042 = vmatmul.bf16.gmra.mxu0 %v4431
    %v6043 = vpop.f32.mrf.mxu0
    %v6044 = vadd.f32 %v6025, %v6043
    %v6045 = vpop.f32.mrf.mxu0
    %v6046 = vadd.f32 %v6027, %v6045
    %6047 = vmatmul.bf16.gmra.mxu0 %v4434
    %v6048 = vpop.f32.mrf.mxu0
    %v6049 = vadd.f32 %v6030, %v6048
    %v6050 = vpop.f32.mrf.mxu0
    %v6051 = vadd.f32 %v6032, %v6050
    %6052 = vdwg.mxu0
    %6053 = vmatpush.bf16.msra.mxu0 %v5803
    %6054 = vmatpush.bf16.msra.mxu0 %v5799
    %6055 = vmatpush.bf16.msra.mxu0 %v5795
    %6056 = vmatpush.bf16.msra.mxu0 %v5791
    %6057 = vmatpush.bf16.msra.mxu0 %v5787
    %6058 = vmatpush.bf16.msra.mxu0 %v5783
    %6059 = vmatpush.bf16.msra.mxu0 %v5779
    %6060 = vmatpush.bf16.msra.mxu0 %v5775
    %6061 = vmatmul.bf16.gmra.mxu0 %v4432
    %v6062 = vpop.f32.mrf.mxu0
    %v6063 = vadd.f32 %v6044, %v6062
    %v6064 = vpop.f32.mrf.mxu0
    %v6065 = vadd.f32 %v6046, %v6064
    %6066 = vmatmul.bf16.gmra.mxu0 %v4435
    %v6067 = vpop.f32.mrf.mxu0
    %v6068 = vadd.f32 %v6049, %v6067
    %v6069 = vpop.f32.mrf.mxu0
    %v6070 = vadd.f32 %v6051, %v6069
    %6071 = vdwg.mxu0
    %6072 = vmatpush.bf16.msra.mxu0 %v5740
    %6073 = vmatpush.bf16.msra.mxu0 %v5736
    %6074 = vmatpush.bf16.msra.mxu0 %v5732
    %6075 = vmatpush.bf16.msra.mxu0 %v5728
    %6076 = vmatpush.bf16.msra.mxu0 %v5724
    %6077 = vmatpush.bf16.msra.mxu0 %v5720
    %6078 = vmatpush.bf16.msra.mxu0 %v5716
    %6079 = vmatpush.bf16.msra.mxu0 %v5712
    %6080 = vmatmul.bf16.gmra.mxu0 %v4430
    %v6081 = vpop.f32.mrf.mxu0
    %v6082 = vadd.f32 %v5412, %v6081
    %v6083 = vpop.f32.mrf.mxu0
    %v6084 = vadd.f32 %v5414, %v6083
    %6085 = vmatmul.bf16.gmra.mxu0 %v4433
    %v6086 = vpop.f32.mrf.mxu0
    %v6087 = vadd.f32 %v5417, %v6086
    %v6088 = vpop.f32.mrf.mxu0
    %v6089 = vadd.f32 %v5419, %v6088
    %6090 = vdwg.mxu0
    %6091 = vmatpush.bf16.msra.mxu0 %v5772
    %6092 = vmatpush.bf16.msra.mxu0 %v5768
    %6093 = vmatpush.bf16.msra.mxu0 %v5764
    %6094 = vmatpush.bf16.msra.mxu0 %v5760
    %6095 = vmatpush.bf16.msra.mxu0 %v5756
    %6096 = vmatpush.bf16.msra.mxu0 %v5752
    %6097 = vmatpush.bf16.msra.mxu0 %v5748
    %6098 = vmatpush.bf16.msra.mxu0 %v5744
    %6099 = vmatmul.bf16.gmra.mxu0 %v4431
    %v6100 = vpop.f32.mrf.mxu0
    %v6101 = vadd.f32 %v6082, %v6100
    %v6102 = vpop.f32.mrf.mxu0
    %v6103 = vadd.f32 %v6084, %v6102
    %6104 = vmatmul.bf16.gmra.mxu0 %v4434
    %v6105 = vpop.f32.mrf.mxu0
    %v6106 = vadd.f32 %v6087, %v6105
    %v6107 = vpop.f32.mrf.mxu0
    %v6108 = vadd.f32 %v6089, %v6107
    %6109 = vdwg.mxu0
    %6110 = vmatpush.bf16.msra.mxu0 %v5804
    %6111 = vmatpush.bf16.msra.mxu0 %v5800
    %6112 = vmatpush.bf16.msra.mxu0 %v5796
    %6113 = vmatpush.bf16.msra.mxu0 %v5792
    %6114 = vmatpush.bf16.msra.mxu0 %v5788
    %6115 = vmatpush.bf16.msra.mxu0 %v5784
    %6116 = vmatpush.bf16.msra.mxu0 %v5780
    %6117 = vmatpush.bf16.msra.mxu0 %v5776
    %6118 = vmatmul.bf16.gmra.mxu0 %v4432
    %v6119 = vpop.f32.mrf.mxu0
    %v6120 = vadd.f32 %v6101, %v6119
    %v6121 = vpop.f32.mrf.mxu0
    %v6122 = vadd.f32 %v6103, %v6121
    %6123 = vmatmul.bf16.gmra.mxu0 %v4435
    %v6124 = vpop.f32.mrf.mxu0
    %v6125 = vadd.f32 %v6106, %v6124
    %v6126 = vpop.f32.mrf.mxu0
    %v6127 = vadd.f32 %v6108, %v6126
    %6128 = vdwg.mxu0
    %s6129 = scalar_lea.vmem %s12, 32
    %v6130 = vld [vmem:[%s6129] sm:$0xf]
    %v6131 = vld [vmem:[%s6129 + $0x4] sm:$0xf]
    %v6132 = vld [vmem:[%s6129 + $0x8] sm:$0xf]
    %v6133 = vld [vmem:[%s6129 + $0xc] sm:$0x3]
    %v6138 = vunpack.c.l.b16 %v6130
    %v6139 = vunpack.c.l.b16 %v6131
    %v6140 = vunpack.c.l.b16 %v6132
    %v6141 = vunpack.c.l.b16 %v6133
    %v6142 = vpack.c.b16 %v6139, %v6138
    %v6143 = vpack.c.b16 %v6141, %v6140
    %v6145 = vsel %vm4357, %v6142, 0
    %v6148 = vsel %vm4357, %v6143, 0
    %6150 = vmatpush.bf16.msra.mxu0 0
    %6151 = vmatpush.bf16.msra.mxu0 0
    %6152 = vmatpush.bf16.msra.mxu0 0
    %6153 = vmatpush.bf16.msra.mxu0 0
    %6154 = vmatpush.bf16.msra.mxu0 0
    %6155 = vmatpush.bf16.msra.mxu0 0
    %6156 = vmatpush.bf16.msra.mxu0 0
    %6157 = vmatpush.bf16.msra.mxu0 %v4365
    %6158 = vmatmul.bf16.gmra.mxu0 %v6145
    %v6159 = vpop.f32.mrf.mxu0
    %v6160 = vadd.f32 0.0, %v6159
    %v6161 = vpop.f32.mrf.mxu0
    %v6162 = vadd.f32 0.0, %v6161
    %6163 = vmatmul.bf16.gmra.mxu0 %v6148
    %v6164 = vpop.f32.mrf.mxu0
    %v6165 = vadd.f32 0.0, %v6164
    %v6166 = vpop.f32.mrf.mxu0
    %v6167 = vadd.f32 0.0, %v6166
    %6168 = vdwg.mxu0
    %6169 = vmatpush.bf16.msra.mxu0 0
    %6170 = vmatpush.bf16.msra.mxu0 0
    %6171 = vmatpush.bf16.msra.mxu0 0
    %6172 = vmatpush.bf16.msra.mxu0 0
    %6173 = vmatpush.bf16.msra.mxu0 0
    %6174 = vmatpush.bf16.msra.mxu0 0
    %6175 = vmatpush.bf16.msra.mxu0 0
    %6176 = vmatpush.bf16.msra.mxu0 %v4368
    %6177 = vmatmul.bf16.gmra.mxu0 %v6145
    %v6178 = vpop.f32.mrf.mxu0
    %v6179 = vadd.f32 0.0, %v6178
    %v6180 = vpop.f32.mrf.mxu0
    %v6181 = vadd.f32 0.0, %v6180
    %6182 = vmatmul.bf16.gmra.mxu0 %v6148
    %v6183 = vpop.f32.mrf.mxu0
    %v6184 = vadd.f32 0.0, %v6183
    %v6185 = vpop.f32.mrf.mxu0
    %v6186 = vadd.f32 0.0, %v6185
    %6187 = vdwg.mxu0
    %6188 = vmatpush.bf16.msra.mxu0 0
    %6189 = vmatpush.bf16.msra.mxu0 0
    %6190 = vmatpush.bf16.msra.mxu0 0
    %6191 = vmatpush.bf16.msra.mxu0 0
    %6192 = vmatpush.bf16.msra.mxu0 0
    %6193 = vmatpush.bf16.msra.mxu0 0
    %6194 = vmatpush.bf16.msra.mxu0 0
    %6195 = vmatpush.bf16.msra.mxu0 %v4371
    %6196 = vmatmul.bf16.gmra.mxu0 %v6145
    %v6197 = vpop.f32.mrf.mxu0
    %v6198 = vadd.f32 0.0, %v6197
    %v6199 = vpop.f32.mrf.mxu0
    %v6200 = vadd.f32 0.0, %v6199
    %6201 = vmatmul.bf16.gmra.mxu0 %v6148
    %v6202 = vpop.f32.mrf.mxu0
    %v6203 = vadd.f32 0.0, %v6202
    %v6204 = vpop.f32.mrf.mxu0
    %v6205 = vadd.f32 0.0, %v6204
    %6206 = vdwg.mxu0
    %v6207 = vpack.c.bf16 %v6162, %v6160
    %v6208 = vpack.c.bf16 %v6181, %v6179
    %v6209 = vpack.c.bf16 %v6200, %v6198
    %v6210 = vpack.c.bf16 %v6167, %v6165
    %v6211 = vpack.c.bf16 %v6186, %v6184
    %v6212 = vpack.c.bf16 %v6205, %v6203
    %s6213 = scalar_lea.vmem %s13, 1536
    %v6214 = vld [vmem:[%s6213] sm:$0xff]
    %v6215 = vld [vmem:[%s6213 + $0x8] sm:$0xff]
    %v6216 = vld [vmem:[%s6213 + $0x10] sm:$0xff]
    %v6217 = vld [vmem:[%s6213 + $0x18] sm:$0xff]
    %v6218 = vld [vmem:[%s6213 + $0x20] sm:$0xff]
    %v6219 = vld [vmem:[%s6213 + $0x28] sm:$0xff]
    %v6220 = vld [vmem:[%s6213 + $0x30] sm:$0xff]
    %v6221 = vld [vmem:[%s6213 + $0x38] sm:$0xff]
    %v6222 = vld [vmem:[%s6213 + $0x40] sm:$0xff]
    %v6223 = vld [vmem:[%s6213 + $0x48] sm:$0xff]
    %v6224 = vld [vmem:[%s6213 + $0x50] sm:$0xff]
    %v6225 = vld [vmem:[%s6213 + $0x58] sm:$0xff]
    %v6226 = vld [vmem:[%s6213 + $0x60] sm:$0xff]
    %v6227 = vld [vmem:[%s6213 + $0x68] sm:$0xff]
    %v6228 = vld [vmem:[%s6213 + $0x70] sm:$0xff]
    %v6229 = vld [vmem:[%s6213 + $0x78] sm:$0xff]
    %v6230 = vld [vmem:[%s6213 + $0x80] sm:$0xff]
    %v6231 = vld [vmem:[%s6213 + $0x88] sm:$0xff]
    %v6232 = vld [vmem:[%s6213 + $0x90] sm:$0xff]
    %v6233 = vld [vmem:[%s6213 + $0x98] sm:$0xff]
    %v6234 = vld [vmem:[%s6213 + $0xa0] sm:$0xff]
    %v6235 = vld [vmem:[%s6213 + $0xa8] sm:$0xff]
    %v6236 = vld [vmem:[%s6213 + $0xb0] sm:$0xff]
    %v6237 = vld [vmem:[%s6213 + $0xb8] sm:$0xff]
    %v6238 = vld [vmem:[%s6213 + $0xc0] sm:$0xff]
    %v6239 = vld [vmem:[%s6213 + $0xc8] sm:$0xff]
    %v6240 = vld [vmem:[%s6213 + $0xd0] sm:$0xff]
    %v6241 = vld [vmem:[%s6213 + $0xd8] sm:$0xff]
    %v6242 = vld [vmem:[%s6213 + $0xe0] sm:$0xff]
    %v6243 = vld [vmem:[%s6213 + $0xe8] sm:$0xff]
    %v6244 = vld [vmem:[%s6213 + $0xf0] sm:$0xff]
    %v6245 = vld [vmem:[%s6213 + $0xf8] sm:$0xff]
    %v6246 = vld [vmem:[%s6213 + $0x100] sm:$0xff]
    %v6247 = vld [vmem:[%s6213 + $0x108] sm:$0xff]
    %v6248 = vld [vmem:[%s6213 + $0x110] sm:$0xff]
    %v6249 = vld [vmem:[%s6213 + $0x118] sm:$0xff]
    %v6250 = vld [vmem:[%s6213 + $0x120] sm:$0xff]
    %v6251 = vld [vmem:[%s6213 + $0x128] sm:$0xff]
    %v6252 = vld [vmem:[%s6213 + $0x130] sm:$0xff]
    %v6253 = vld [vmem:[%s6213 + $0x138] sm:$0xff]
    %v6254 = vld [vmem:[%s6213 + $0x140] sm:$0xff]
    %v6255 = vld [vmem:[%s6213 + $0x148] sm:$0xff]
    %v6256 = vld [vmem:[%s6213 + $0x150] sm:$0xff]
    %v6257 = vld [vmem:[%s6213 + $0x158] sm:$0xff]
    %v6258 = vld [vmem:[%s6213 + $0x160] sm:$0xff]
    %v6259 = vld [vmem:[%s6213 + $0x168] sm:$0xff]
    %v6260 = vld [vmem:[%s6213 + $0x170] sm:$0xff]
    %v6261 = vld [vmem:[%s6213 + $0x178] sm:$0xff]
    %v6262 = vld [vmem:[%s6213 + $0x180] sm:$0xff]
    %v6263 = vld [vmem:[%s6213 + $0x188] sm:$0xff]
    %v6264 = vld [vmem:[%s6213 + $0x190] sm:$0xff]
    %v6265 = vld [vmem:[%s6213 + $0x198] sm:$0xff]
    %v6266 = vld [vmem:[%s6213 + $0x1a0] sm:$0xff]
    %v6267 = vld [vmem:[%s6213 + $0x1a8] sm:$0xff]
    %v6268 = vld [vmem:[%s6213 + $0x1b0] sm:$0xff]
    %v6269 = vld [vmem:[%s6213 + $0x1b8] sm:$0xff]
    %v6270 = vld [vmem:[%s6213 + $0x1c0] sm:$0xff]
    %v6271 = vld [vmem:[%s6213 + $0x1c8] sm:$0xff]
    %v6272 = vld [vmem:[%s6213 + $0x1d0] sm:$0xff]
    %v6273 = vld [vmem:[%s6213 + $0x1d8] sm:$0xff]
    %v6274 = vld [vmem:[%s6213 + $0x1e0] sm:$0xff]
    %v6275 = vld [vmem:[%s6213 + $0x1e8] sm:$0xff]
    %v6276 = vld [vmem:[%s6213 + $0x1f0] sm:$0xff]
    %v6277 = vld [vmem:[%s6213 + $0x1f8] sm:$0xff]
    %v6278 = vld [vmem:[%s6213 + $0x200] sm:$0xff]
    %v6279 = vld [vmem:[%s6213 + $0x208] sm:$0xff]
    %v6280 = vld [vmem:[%s6213 + $0x210] sm:$0xff]
    %v6281 = vld [vmem:[%s6213 + $0x218] sm:$0xff]
    %v6282 = vld [vmem:[%s6213 + $0x220] sm:$0xff]
    %v6283 = vld [vmem:[%s6213 + $0x228] sm:$0xff]
    %v6284 = vld [vmem:[%s6213 + $0x230] sm:$0xff]
    %v6285 = vld [vmem:[%s6213 + $0x238] sm:$0xff]
    %v6286 = vld [vmem:[%s6213 + $0x240] sm:$0xff]
    %v6287 = vld [vmem:[%s6213 + $0x248] sm:$0xff]
    %v6288 = vld [vmem:[%s6213 + $0x250] sm:$0xff]
    %v6289 = vld [vmem:[%s6213 + $0x258] sm:$0xff]
    %v6290 = vld [vmem:[%s6213 + $0x260] sm:$0xff]
    %v6291 = vld [vmem:[%s6213 + $0x268] sm:$0xff]
    %v6292 = vld [vmem:[%s6213 + $0x270] sm:$0xff]
    %v6293 = vld [vmem:[%s6213 + $0x278] sm:$0xff]
    %v6294 = vld [vmem:[%s6213 + $0x280] sm:$0xff]
    %v6295 = vld [vmem:[%s6213 + $0x288] sm:$0xff]
    %v6296 = vld [vmem:[%s6213 + $0x290] sm:$0xff]
    %v6297 = vld [vmem:[%s6213 + $0x298] sm:$0xff]
    %v6298 = vld [vmem:[%s6213 + $0x2a0] sm:$0xff]
    %v6299 = vld [vmem:[%s6213 + $0x2a8] sm:$0xff]
    %v6300 = vld [vmem:[%s6213 + $0x2b0] sm:$0xff]
    %v6301 = vld [vmem:[%s6213 + $0x2b8] sm:$0xff]
    %v6302 = vld [vmem:[%s6213 + $0x2c0] sm:$0xff]
    %v6303 = vld [vmem:[%s6213 + $0x2c8] sm:$0xff]
    %v6304 = vld [vmem:[%s6213 + $0x2d0] sm:$0xff]
    %v6305 = vld [vmem:[%s6213 + $0x2d8] sm:$0xff]
    %v6306 = vld [vmem:[%s6213 + $0x2e0] sm:$0xff]
    %v6307 = vld [vmem:[%s6213 + $0x2e8] sm:$0xff]
    %v6308 = vld [vmem:[%s6213 + $0x2f0] sm:$0xff]
    %v6309 = vld [vmem:[%s6213 + $0x2f8] sm:$0xff]
    %v6406 = vunpack.c.l.b16 %v6214
    %v6407 = vunpack.c.h.b16 %v6214
    %v6408 = vunpack.c.l.b16 %v6215
    %v6409 = vunpack.c.h.b16 %v6215
    %v6410 = vunpack.c.l.b16 %v6216
    %v6411 = vunpack.c.h.b16 %v6216
    %v6412 = vunpack.c.l.b16 %v6217
    %v6413 = vunpack.c.h.b16 %v6217
    %v6414 = vunpack.c.l.b16 %v6218
    %v6415 = vunpack.c.h.b16 %v6218
    %v6416 = vunpack.c.l.b16 %v6219
    %v6417 = vunpack.c.h.b16 %v6219
    %v6418 = vunpack.c.l.b16 %v6220
    %v6419 = vunpack.c.h.b16 %v6220
    %v6420 = vunpack.c.l.b16 %v6221
    %v6421 = vunpack.c.h.b16 %v6221
    %v6422 = vunpack.c.l.b16 %v6222
    %v6423 = vunpack.c.h.b16 %v6222
    %v6424 = vunpack.c.l.b16 %v6223
    %v6425 = vunpack.c.h.b16 %v6223
    %v6426 = vunpack.c.l.b16 %v6224
    %v6427 = vunpack.c.h.b16 %v6224
    %v6428 = vunpack.c.l.b16 %v6225
    %v6429 = vunpack.c.h.b16 %v6225
    %v6430 = vunpack.c.l.b16 %v6226
    %v6431 = vunpack.c.h.b16 %v6226
    %v6432 = vunpack.c.l.b16 %v6227
    %v6433 = vunpack.c.h.b16 %v6227
    %v6434 = vunpack.c.l.b16 %v6228
    %v6435 = vunpack.c.h.b16 %v6228
    %v6436 = vunpack.c.l.b16 %v6229
    %v6437 = vunpack.c.h.b16 %v6229
    %v6438 = vunpack.c.l.b16 %v6230
    %v6439 = vunpack.c.h.b16 %v6230
    %v6440 = vunpack.c.l.b16 %v6231
    %v6441 = vunpack.c.h.b16 %v6231
    %v6442 = vunpack.c.l.b16 %v6232
    %v6443 = vunpack.c.h.b16 %v6232
    %v6444 = vunpack.c.l.b16 %v6233
    %v6445 = vunpack.c.h.b16 %v6233
    %v6446 = vunpack.c.l.b16 %v6234
    %v6447 = vunpack.c.h.b16 %v6234
    %v6448 = vunpack.c.l.b16 %v6235
    %v6449 = vunpack.c.h.b16 %v6235
    %v6450 = vunpack.c.l.b16 %v6236
    %v6451 = vunpack.c.h.b16 %v6236
    %v6452 = vunpack.c.l.b16 %v6237
    %v6453 = vunpack.c.h.b16 %v6237
    %v6454 = vunpack.c.l.b16 %v6238
    %v6455 = vunpack.c.h.b16 %v6238
    %v6456 = vunpack.c.l.b16 %v6239
    %v6457 = vunpack.c.h.b16 %v6239
    %v6458 = vunpack.c.l.b16 %v6240
    %v6459 = vunpack.c.h.b16 %v6240
    %v6460 = vunpack.c.l.b16 %v6241
    %v6461 = vunpack.c.h.b16 %v6241
    %v6462 = vunpack.c.l.b16 %v6242
    %v6463 = vunpack.c.h.b16 %v6242
    %v6464 = vunpack.c.l.b16 %v6243
    %v6465 = vunpack.c.h.b16 %v6243
    %v6466 = vunpack.c.l.b16 %v6244
    %v6467 = vunpack.c.h.b16 %v6244
    %v6468 = vunpack.c.l.b16 %v6245
    %v6469 = vunpack.c.h.b16 %v6245
    %v6470 = vunpack.c.l.b16 %v6246
    %v6471 = vunpack.c.h.b16 %v6246
    %v6472 = vunpack.c.l.b16 %v6247
    %v6473 = vunpack.c.h.b16 %v6247
    %v6474 = vunpack.c.l.b16 %v6248
    %v6475 = vunpack.c.h.b16 %v6248
    %v6476 = vunpack.c.l.b16 %v6249
    %v6477 = vunpack.c.h.b16 %v6249
    %v6478 = vunpack.c.l.b16 %v6250
    %v6479 = vunpack.c.h.b16 %v6250
    %v6480 = vunpack.c.l.b16 %v6251
    %v6481 = vunpack.c.h.b16 %v6251
    %v6482 = vunpack.c.l.b16 %v6252
    %v6483 = vunpack.c.h.b16 %v6252
    %v6484 = vunpack.c.l.b16 %v6253
    %v6485 = vunpack.c.h.b16 %v6253
    %v6486 = vunpack.c.l.b16 %v6254
    %v6487 = vunpack.c.h.b16 %v6254
    %v6488 = vunpack.c.l.b16 %v6255
    %v6489 = vunpack.c.h.b16 %v6255
    %v6490 = vunpack.c.l.b16 %v6256
    %v6491 = vunpack.c.h.b16 %v6256
    %v6492 = vunpack.c.l.b16 %v6257
    %v6493 = vunpack.c.h.b16 %v6257
    %v6494 = vunpack.c.l.b16 %v6258
    %v6495 = vunpack.c.h.b16 %v6258
    %v6496 = vunpack.c.l.b16 %v6259
    %v6497 = vunpack.c.h.b16 %v6259
    %v6498 = vunpack.c.l.b16 %v6260
    %v6499 = vunpack.c.h.b16 %v6260
    %v6500 = vunpack.c.l.b16 %v6261
    %v6501 = vunpack.c.h.b16 %v6261
    %v6502 = vunpack.c.l.b16 %v6262
    %v6503 = vunpack.c.h.b16 %v6262
    %v6504 = vunpack.c.l.b16 %v6263
    %v6505 = vunpack.c.h.b16 %v6263
    %v6506 = vunpack.c.l.b16 %v6264
    %v6507 = vunpack.c.h.b16 %v6264
    %v6508 = vunpack.c.l.b16 %v6265
    %v6509 = vunpack.c.h.b16 %v6265
    %v6510 = vunpack.c.l.b16 %v6266
    %v6511 = vunpack.c.h.b16 %v6266
    %v6512 = vunpack.c.l.b16 %v6267
    %v6513 = vunpack.c.h.b16 %v6267
    %v6514 = vunpack.c.l.b16 %v6268
    %v6515 = vunpack.c.h.b16 %v6268
    %v6516 = vunpack.c.l.b16 %v6269
    %v6517 = vunpack.c.h.b16 %v6269
    %v6518 = vunpack.c.l.b16 %v6270
    %v6519 = vunpack.c.h.b16 %v6270
    %v6520 = vunpack.c.l.b16 %v6271
    %v6521 = vunpack.c.h.b16 %v6271
    %v6522 = vunpack.c.l.b16 %v6272
    %v6523 = vunpack.c.h.b16 %v6272
    %v6524 = vunpack.c.l.b16 %v6273
    %v6525 = vunpack.c.h.b16 %v6273
    %v6526 = vunpack.c.l.b16 %v6274
    %v6527 = vunpack.c.h.b16 %v6274
    %v6528 = vunpack.c.l.b16 %v6275
    %v6529 = vunpack.c.h.b16 %v6275
    %v6530 = vunpack.c.l.b16 %v6276
    %v6531 = vunpack.c.h.b16 %v6276
    %v6532 = vunpack.c.l.b16 %v6277
    %v6533 = vunpack.c.h.b16 %v6277
    %v6534 = vunpack.c.l.b16 %v6278
    %v6535 = vunpack.c.h.b16 %v6278
    %v6536 = vunpack.c.l.b16 %v6279
    %v6537 = vunpack.c.h.b16 %v6279
    %v6538 = vunpack.c.l.b16 %v6280
    %v6539 = vunpack.c.h.b16 %v6280
    %v6540 = vunpack.c.l.b16 %v6281
    %v6541 = vunpack.c.h.b16 %v6281
    %v6542 = vunpack.c.l.b16 %v6282
    %v6543 = vunpack.c.h.b16 %v6282
    %v6544 = vunpack.c.l.b16 %v6283
    %v6545 = vunpack.c.h.b16 %v6283
    %v6546 = vunpack.c.l.b16 %v6284
    %v6547 = vunpack.c.h.b16 %v6284
    %v6548 = vunpack.c.l.b16 %v6285
    %v6549 = vunpack.c.h.b16 %v6285
    %v6550 = vunpack.c.l.b16 %v6286
    %v6551 = vunpack.c.h.b16 %v6286
    %v6552 = vunpack.c.l.b16 %v6287
    %v6553 = vunpack.c.h.b16 %v6287
    %v6554 = vunpack.c.l.b16 %v6288
    %v6555 = vunpack.c.h.b16 %v6288
    %v6556 = vunpack.c.l.b16 %v6289
    %v6557 = vunpack.c.h.b16 %v6289
    %v6558 = vunpack.c.l.b16 %v6290
    %v6559 = vunpack.c.h.b16 %v6290
    %v6560 = vunpack.c.l.b16 %v6291
    %v6561 = vunpack.c.h.b16 %v6291
    %v6562 = vunpack.c.l.b16 %v6292
    %v6563 = vunpack.c.h.b16 %v6292
    %v6564 = vunpack.c.l.b16 %v6293
    %v6565 = vunpack.c.h.b16 %v6293
    %v6566 = vunpack.c.l.b16 %v6294
    %v6567 = vunpack.c.h.b16 %v6294
    %v6568 = vunpack.c.l.b16 %v6295
    %v6569 = vunpack.c.h.b16 %v6295
    %v6570 = vunpack.c.l.b16 %v6296
    %v6571 = vunpack.c.h.b16 %v6296
    %v6572 = vunpack.c.l.b16 %v6297
    %v6573 = vunpack.c.h.b16 %v6297
    %v6574 = vunpack.c.l.b16 %v6298
    %v6575 = vunpack.c.h.b16 %v6298
    %v6576 = vunpack.c.l.b16 %v6299
    %v6577 = vunpack.c.h.b16 %v6299
    %v6578 = vunpack.c.l.b16 %v6300
    %v6579 = vunpack.c.h.b16 %v6300
    %v6580 = vunpack.c.l.b16 %v6301
    %v6581 = vunpack.c.h.b16 %v6301
    %v6582 = vunpack.c.l.b16 %v6302
    %v6583 = vunpack.c.h.b16 %v6302
    %v6584 = vunpack.c.l.b16 %v6303
    %v6585 = vunpack.c.h.b16 %v6303
    %v6586 = vunpack.c.l.b16 %v6304
    %v6587 = vunpack.c.h.b16 %v6304
    %v6588 = vunpack.c.l.b16 %v6305
    %v6589 = vunpack.c.h.b16 %v6305
    %v6590 = vunpack.c.l.b16 %v6306
    %v6591 = vunpack.c.h.b16 %v6306
    %v6592 = vunpack.c.l.b16 %v6307
    %v6593 = vunpack.c.h.b16 %v6307
    %v6594 = vunpack.c.l.b16 %v6308
    %v6595 = vunpack.c.h.b16 %v6308
    %v6596 = vunpack.c.l.b16 %v6309
    %v6597 = vunpack.c.h.b16 %v6309
    %v6598 = vpack.c.b16 %v6410, %v6406
    %v6599 = vpack.c.b16 %v6411, %v6407
    %v6600 = vpack.c.b16 %v6412, %v6408
    %v6601 = vpack.c.b16 %v6413, %v6409
    %v6602 = vpack.c.b16 %v6418, %v6414
    %v6603 = vpack.c.b16 %v6419, %v6415
    %v6604 = vpack.c.b16 %v6420, %v6416
    %v6605 = vpack.c.b16 %v6421, %v6417
    %v6606 = vpack.c.b16 %v6426, %v6422
    %v6607 = vpack.c.b16 %v6427, %v6423
    %v6608 = vpack.c.b16 %v6428, %v6424
    %v6609 = vpack.c.b16 %v6429, %v6425
    %v6610 = vpack.c.b16 %v6434, %v6430
    %v6611 = vpack.c.b16 %v6435, %v6431
    %v6612 = vpack.c.b16 %v6436, %v6432
    %v6613 = vpack.c.b16 %v6437, %v6433
    %v6614 = vpack.c.b16 %v6442, %v6438
    %v6615 = vpack.c.b16 %v6443, %v6439
    %v6616 = vpack.c.b16 %v6444, %v6440
    %v6617 = vpack.c.b16 %v6445, %v6441
    %v6618 = vpack.c.b16 %v6450, %v6446
    %v6619 = vpack.c.b16 %v6451, %v6447
    %v6620 = vpack.c.b16 %v6452, %v6448
    %v6621 = vpack.c.b16 %v6453, %v6449
    %v6622 = vpack.c.b16 %v6458, %v6454
    %v6623 = vpack.c.b16 %v6459, %v6455
    %v6624 = vpack.c.b16 %v6460, %v6456
    %v6625 = vpack.c.b16 %v6461, %v6457
    %v6626 = vpack.c.b16 %v6466, %v6462
    %v6627 = vpack.c.b16 %v6467, %v6463
    %v6628 = vpack.c.b16 %v6468, %v6464
    %v6629 = vpack.c.b16 %v6469, %v6465
    %v6630 = vpack.c.b16 %v6474, %v6470
    %v6631 = vpack.c.b16 %v6475, %v6471
    %v6632 = vpack.c.b16 %v6476, %v6472
    %v6633 = vpack.c.b16 %v6477, %v6473
    %v6634 = vpack.c.b16 %v6482, %v6478
    %v6635 = vpack.c.b16 %v6483, %v6479
    %v6636 = vpack.c.b16 %v6484, %v6480
    %v6637 = vpack.c.b16 %v6485, %v6481
    %v6638 = vpack.c.b16 %v6490, %v6486
    %v6639 = vpack.c.b16 %v6491, %v6487
    %v6640 = vpack.c.b16 %v6492, %v6488
    %v6641 = vpack.c.b16 %v6493, %v6489
    %v6642 = vpack.c.b16 %v6498, %v6494
    %v6643 = vpack.c.b16 %v6499, %v6495
    %v6644 = vpack.c.b16 %v6500, %v6496
    %v6645 = vpack.c.b16 %v6501, %v6497
    %v6646 = vpack.c.b16 %v6506, %v6502
    %v6647 = vpack.c.b16 %v6507, %v6503
    %v6648 = vpack.c.b16 %v6508, %v6504
    %v6649 = vpack.c.b16 %v6509, %v6505
    %v6650 = vpack.c.b16 %v6514, %v6510
    %v6651 = vpack.c.b16 %v6515, %v6511
    %v6652 = vpack.c.b16 %v6516, %v6512
    %v6653 = vpack.c.b16 %v6517, %v6513
    %v6654 = vpack.c.b16 %v6522, %v6518
    %v6655 = vpack.c.b16 %v6523, %v6519
    %v6656 = vpack.c.b16 %v6524, %v6520
    %v6657 = vpack.c.b16 %v6525, %v6521
    %v6658 = vpack.c.b16 %v6530, %v6526
    %v6659 = vpack.c.b16 %v6531, %v6527
    %v6660 = vpack.c.b16 %v6532, %v6528
    %v6661 = vpack.c.b16 %v6533, %v6529
    %v6662 = vpack.c.b16 %v6538, %v6534
    %v6663 = vpack.c.b16 %v6539, %v6535
    %v6664 = vpack.c.b16 %v6540, %v6536
    %v6665 = vpack.c.b16 %v6541, %v6537
    %v6666 = vpack.c.b16 %v6546, %v6542
    %v6667 = vpack.c.b16 %v6547, %v6543
    %v6668 = vpack.c.b16 %v6548, %v6544
    %v6669 = vpack.c.b16 %v6549, %v6545
    %v6670 = vpack.c.b16 %v6554, %v6550
    %v6671 = vpack.c.b16 %v6555, %v6551
    %v6672 = vpack.c.b16 %v6556, %v6552
    %v6673 = vpack.c.b16 %v6557, %v6553
    %v6674 = vpack.c.b16 %v6562, %v6558
    %v6675 = vpack.c.b16 %v6563, %v6559
    %v6676 = vpack.c.b16 %v6564, %v6560
    %v6677 = vpack.c.b16 %v6565, %v6561
    %v6678 = vpack.c.b16 %v6570, %v6566
    %v6679 = vpack.c.b16 %v6571, %v6567
    %v6680 = vpack.c.b16 %v6572, %v6568
    %v6681 = vpack.c.b16 %v6573, %v6569
    %v6682 = vpack.c.b16 %v6578, %v6574
    %v6683 = vpack.c.b16 %v6579, %v6575
    %v6684 = vpack.c.b16 %v6580, %v6576
    %v6685 = vpack.c.b16 %v6581, %v6577
    %v6686 = vpack.c.b16 %v6586, %v6582
    %v6687 = vpack.c.b16 %v6587, %v6583
    %v6688 = vpack.c.b16 %v6588, %v6584
    %v6689 = vpack.c.b16 %v6589, %v6585
    %v6690 = vpack.c.b16 %v6594, %v6590
    %v6691 = vpack.c.b16 %v6595, %v6591
    %v6692 = vpack.c.b16 %v6596, %v6592
    %v6693 = vpack.c.b16 %v6597, %v6593
    %6790 = vmatpush.bf16.msra.mxu0 %v6626
    %6791 = vmatpush.bf16.msra.mxu0 %v6622
    %6792 = vmatpush.bf16.msra.mxu0 %v6618
    %6793 = vmatpush.bf16.msra.mxu0 %v6614
    %6794 = vmatpush.bf16.msra.mxu0 %v6610
    %6795 = vmatpush.bf16.msra.mxu0 %v6606
    %6796 = vmatpush.bf16.msra.mxu0 %v6602
    %6797 = vmatpush.bf16.msra.mxu0 %v6598
    %6798 = vmatmul.bf16.gmra.mxu0 %v6207
    %v6799 = vpop.f32.mrf.mxu0
    %v6800 = vadd.f32 0.0, %v6799
    %v6801 = vpop.f32.mrf.mxu0
    %v6802 = vadd.f32 0.0, %v6801
    %6803 = vmatmul.bf16.gmra.mxu0 %v6210
    %v6804 = vpop.f32.mrf.mxu0
    %v6805 = vadd.f32 0.0, %v6804
    %v6806 = vpop.f32.mrf.mxu0
    %v6807 = vadd.f32 0.0, %v6806
    %6808 = vdwg.mxu0
    %6809 = vmatpush.bf16.msra.mxu0 %v6658
    %6810 = vmatpush.bf16.msra.mxu0 %v6654
    %6811 = vmatpush.bf16.msra.mxu0 %v6650
    %6812 = vmatpush.bf16.msra.mxu0 %v6646
    %6813 = vmatpush.bf16.msra.mxu0 %v6642
    %6814 = vmatpush.bf16.msra.mxu0 %v6638
    %6815 = vmatpush.bf16.msra.mxu0 %v6634
    %6816 = vmatpush.bf16.msra.mxu0 %v6630
    %6817 = vmatmul.bf16.gmra.mxu0 %v6208
    %v6818 = vpop.f32.mrf.mxu0
    %v6819 = vadd.f32 %v6800, %v6818
    %v6820 = vpop.f32.mrf.mxu0
    %v6821 = vadd.f32 %v6802, %v6820
    %6822 = vmatmul.bf16.gmra.mxu0 %v6211
    %v6823 = vpop.f32.mrf.mxu0
    %v6824 = vadd.f32 %v6805, %v6823
    %v6825 = vpop.f32.mrf.mxu0
    %v6826 = vadd.f32 %v6807, %v6825
    %6827 = vdwg.mxu0
    %6828 = vmatpush.bf16.msra.mxu0 %v6690
    %6829 = vmatpush.bf16.msra.mxu0 %v6686
    %6830 = vmatpush.bf16.msra.mxu0 %v6682
    %6831 = vmatpush.bf16.msra.mxu0 %v6678
    %6832 = vmatpush.bf16.msra.mxu0 %v6674
    %6833 = vmatpush.bf16.msra.mxu0 %v6670
    %6834 = vmatpush.bf16.msra.mxu0 %v6666
    %6835 = vmatpush.bf16.msra.mxu0 %v6662
    %6836 = vmatmul.bf16.gmra.mxu0 %v6209
    %v6837 = vpop.f32.mrf.mxu0
    %v6838 = vadd.f32 %v6819, %v6837
    %v6839 = vpop.f32.mrf.mxu0
    %v6840 = vadd.f32 %v6821, %v6839
    %6841 = vmatmul.bf16.gmra.mxu0 %v6212
    %v6842 = vpop.f32.mrf.mxu0
    %v6843 = vadd.f32 %v6824, %v6842
    %v6844 = vpop.f32.mrf.mxu0
    %v6845 = vadd.f32 %v6826, %v6844
    %6846 = vdwg.mxu0
    %6847 = vmatpush.bf16.msra.mxu0 %v6627
    %6848 = vmatpush.bf16.msra.mxu0 %v6623
    %6849 = vmatpush.bf16.msra.mxu0 %v6619
    %6850 = vmatpush.bf16.msra.mxu0 %v6615
    %6851 = vmatpush.bf16.msra.mxu0 %v6611
    %6852 = vmatpush.bf16.msra.mxu0 %v6607
    %6853 = vmatpush.bf16.msra.mxu0 %v6603
    %6854 = vmatpush.bf16.msra.mxu0 %v6599
    %6855 = vmatmul.bf16.gmra.mxu0 %v6207
    %v6856 = vpop.f32.mrf.mxu0
    %v6857 = vadd.f32 0.0, %v6856
    %v6858 = vpop.f32.mrf.mxu0
    %v6859 = vadd.f32 0.0, %v6858
    %6860 = vmatmul.bf16.gmra.mxu0 %v6210
    %v6861 = vpop.f32.mrf.mxu0
    %v6862 = vadd.f32 0.0, %v6861
    %v6863 = vpop.f32.mrf.mxu0
    %v6864 = vadd.f32 0.0, %v6863
    %6865 = vdwg.mxu0
    %6866 = vmatpush.bf16.msra.mxu0 %v6659
    %6867 = vmatpush.bf16.msra.mxu0 %v6655
    %6868 = vmatpush.bf16.msra.mxu0 %v6651
    %6869 = vmatpush.bf16.msra.mxu0 %v6647
    %6870 = vmatpush.bf16.msra.mxu0 %v6643
    %6871 = vmatpush.bf16.msra.mxu0 %v6639
    %6872 = vmatpush.bf16.msra.mxu0 %v6635
    %6873 = vmatpush.bf16.msra.mxu0 %v6631
    %6874 = vmatmul.bf16.gmra.mxu0 %v6208
    %v6875 = vpop.f32.mrf.mxu0
    %v6876 = vadd.f32 %v6857, %v6875
    %v6877 = vpop.f32.mrf.mxu0
    %v6878 = vadd.f32 %v6859, %v6877
    %6879 = vmatmul.bf16.gmra.mxu0 %v6211
    %v6880 = vpop.f32.mrf.mxu0
    %v6881 = vadd.f32 %v6862, %v6880
    %v6882 = vpop.f32.mrf.mxu0
    %v6883 = vadd.f32 %v6864, %v6882
    %6884 = vdwg.mxu0
    %6885 = vmatpush.bf16.msra.mxu0 %v6691
    %6886 = vmatpush.bf16.msra.mxu0 %v6687
    %6887 = vmatpush.bf16.msra.mxu0 %v6683
    %6888 = vmatpush.bf16.msra.mxu0 %v6679
    %6889 = vmatpush.bf16.msra.mxu0 %v6675
    %6890 = vmatpush.bf16.msra.mxu0 %v6671
    %6891 = vmatpush.bf16.msra.mxu0 %v6667
    %6892 = vmatpush.bf16.msra.mxu0 %v6663
    %6893 = vmatmul.bf16.gmra.mxu0 %v6209
    %v6894 = vpop.f32.mrf.mxu0
    %v6895 = vadd.f32 %v6876, %v6894
    %v6896 = vpop.f32.mrf.mxu0
    %v6897 = vadd.f32 %v6878, %v6896
    %6898 = vmatmul.bf16.gmra.mxu0 %v6212
    %v6899 = vpop.f32.mrf.mxu0
    %v6900 = vadd.f32 %v6881, %v6899
    %v6901 = vpop.f32.mrf.mxu0
    %v6902 = vadd.f32 %v6883, %v6901
    %6903 = vdwg.mxu0
    %6904 = vmatpush.bf16.msra.mxu0 %v6628
    %6905 = vmatpush.bf16.msra.mxu0 %v6624
    %6906 = vmatpush.bf16.msra.mxu0 %v6620
    %6907 = vmatpush.bf16.msra.mxu0 %v6616
    %6908 = vmatpush.bf16.msra.mxu0 %v6612
    %6909 = vmatpush.bf16.msra.mxu0 %v6608
    %6910 = vmatpush.bf16.msra.mxu0 %v6604
    %6911 = vmatpush.bf16.msra.mxu0 %v6600
    %6912 = vmatmul.bf16.gmra.mxu0 %v6207
    %v6913 = vpop.f32.mrf.mxu0
    %v6914 = vadd.f32 0.0, %v6913
    %v6915 = vpop.f32.mrf.mxu0
    %v6916 = vadd.f32 0.0, %v6915
    %6917 = vmatmul.bf16.gmra.mxu0 %v6210
    %v6918 = vpop.f32.mrf.mxu0
    %v6919 = vadd.f32 0.0, %v6918
    %v6920 = vpop.f32.mrf.mxu0
    %v6921 = vadd.f32 0.0, %v6920
    %6922 = vdwg.mxu0
    %6923 = vmatpush.bf16.msra.mxu0 %v6660
    %6924 = vmatpush.bf16.msra.mxu0 %v6656
    %6925 = vmatpush.bf16.msra.mxu0 %v6652
    %6926 = vmatpush.bf16.msra.mxu0 %v6648
    %6927 = vmatpush.bf16.msra.mxu0 %v6644
    %6928 = vmatpush.bf16.msra.mxu0 %v6640
    %6929 = vmatpush.bf16.msra.mxu0 %v6636
    %6930 = vmatpush.bf16.msra.mxu0 %v6632
    %6931 = vmatmul.bf16.gmra.mxu0 %v6208
    %v6932 = vpop.f32.mrf.mxu0
    %v6933 = vadd.f32 %v6914, %v6932
    %v6934 = vpop.f32.mrf.mxu0
    %v6935 = vadd.f32 %v6916, %v6934
    %6936 = vmatmul.bf16.gmra.mxu0 %v6211
    %v6937 = vpop.f32.mrf.mxu0
    %v6938 = vadd.f32 %v6919, %v6937
    %v6939 = vpop.f32.mrf.mxu0
    %v6940 = vadd.f32 %v6921, %v6939
    %6941 = vdwg.mxu0
    %6942 = vmatpush.bf16.msra.mxu0 %v6692
    %6943 = vmatpush.bf16.msra.mxu0 %v6688
    %6944 = vmatpush.bf16.msra.mxu0 %v6684
    %6945 = vmatpush.bf16.msra.mxu0 %v6680
    %6946 = vmatpush.bf16.msra.mxu0 %v6676
    %6947 = vmatpush.bf16.msra.mxu0 %v6672
    %6948 = vmatpush.bf16.msra.mxu0 %v6668
    %6949 = vmatpush.bf16.msra.mxu0 %v6664
    %6950 = vmatmul.bf16.gmra.mxu0 %v6209
    %v6951 = vpop.f32.mrf.mxu0
    %v6952 = vadd.f32 %v6933, %v6951
    %v6953 = vpop.f32.mrf.mxu0
    %v6954 = vadd.f32 %v6935, %v6953
    %6955 = vmatmul.bf16.gmra.mxu0 %v6212
    %v6956 = vpop.f32.mrf.mxu0
    %v6957 = vadd.f32 %v6938, %v6956
    %v6958 = vpop.f32.mrf.mxu0
    %v6959 = vadd.f32 %v6940, %v6958
    %6960 = vdwg.mxu0
    %6961 = vmatpush.bf16.msra.mxu0 %v6629
    %6962 = vmatpush.bf16.msra.mxu0 %v6625
    %6963 = vmatpush.bf16.msra.mxu0 %v6621
    %6964 = vmatpush.bf16.msra.mxu0 %v6617
    %6965 = vmatpush.bf16.msra.mxu0 %v6613
    %6966 = vmatpush.bf16.msra.mxu0 %v6609
    %6967 = vmatpush.bf16.msra.mxu0 %v6605
    %6968 = vmatpush.bf16.msra.mxu0 %v6601
    %6969 = vmatmul.bf16.gmra.mxu0 %v6207
    %v6970 = vpop.f32.mrf.mxu0
    %v6971 = vadd.f32 0.0, %v6970
    %v6972 = vpop.f32.mrf.mxu0
    %v6973 = vadd.f32 0.0, %v6972
    %6974 = vmatmul.bf16.gmra.mxu0 %v6210
    %v6975 = vpop.f32.mrf.mxu0
    %v6976 = vadd.f32 0.0, %v6975
    %v6977 = vpop.f32.mrf.mxu0
    %v6978 = vadd.f32 0.0, %v6977
    %6979 = vdwg.mxu0
    %6980 = vmatpush.bf16.msra.mxu0 %v6661
    %6981 = vmatpush.bf16.msra.mxu0 %v6657
    %6982 = vmatpush.bf16.msra.mxu0 %v6653
    %6983 = vmatpush.bf16.msra.mxu0 %v6649
    %6984 = vmatpush.bf16.msra.mxu0 %v6645
    %6985 = vmatpush.bf16.msra.mxu0 %v6641
    %6986 = vmatpush.bf16.msra.mxu0 %v6637
    %6987 = vmatpush.bf16.msra.mxu0 %v6633
    %6988 = vmatmul.bf16.gmra.mxu0 %v6208
    %v6989 = vpop.f32.mrf.mxu0
    %v6990 = vadd.f32 %v6971, %v6989
    %v6991 = vpop.f32.mrf.mxu0
    %v6992 = vadd.f32 %v6973, %v6991
    %6993 = vmatmul.bf16.gmra.mxu0 %v6211
    %v6994 = vpop.f32.mrf.mxu0
    %v6995 = vadd.f32 %v6976, %v6994
    %v6996 = vpop.f32.mrf.mxu0
    %v6997 = vadd.f32 %v6978, %v6996
    %6998 = vdwg.mxu0
    %6999 = vmatpush.bf16.msra.mxu0 %v6693
    %7000 = vmatpush.bf16.msra.mxu0 %v6689
    %7001 = vmatpush.bf16.msra.mxu0 %v6685
    %7002 = vmatpush.bf16.msra.mxu0 %v6681
    %7003 = vmatpush.bf16.msra.mxu0 %v6677
    %7004 = vmatpush.bf16.msra.mxu0 %v6673
    %7005 = vmatpush.bf16.msra.mxu0 %v6669
    %7006 = vmatpush.bf16.msra.mxu0 %v6665
    %7007 = vmatmul.bf16.gmra.mxu0 %v6209
    %v7008 = vpop.f32.mrf.mxu0
    %v7009 = vadd.f32 %v6990, %v7008
    %v7010 = vpop.f32.mrf.mxu0
    %v7011 = vadd.f32 %v6992, %v7010
    %7012 = vmatmul.bf16.gmra.mxu0 %v6212
    %v7013 = vpop.f32.mrf.mxu0
    %v7014 = vadd.f32 %v6995, %v7013
    %v7015 = vpop.f32.mrf.mxu0
    %v7016 = vadd.f32 %v6997, %v7015
    %7017 = vdwg.mxu0
    %v7018 = vadd.f32 %v5949, %v6838
    %v7019 = vadd.f32 %v6006, %v6895
    %v7020 = vadd.f32 %v6063, %v6952
    %v7021 = vadd.f32 %v6120, %v7009
    %v7022 = vadd.f32 %v5951, %v6840
    %v7023 = vadd.f32 %v6008, %v6897
    %v7024 = vadd.f32 %v6065, %v6954
    %v7025 = vadd.f32 %v6122, %v7011
    %v7026 = vadd.f32 %v5954, %v6843
    %v7027 = vadd.f32 %v6011, %v6900
    %v7028 = vadd.f32 %v6068, %v6957
    %v7029 = vadd.f32 %v6125, %v7014
    %v7030 = vadd.f32 %v5956, %v6845
    %v7031 = vadd.f32 %v6013, %v6902
    %v7032 = vadd.f32 %v6070, %v6959
    %v7033 = vadd.f32 %v6127, %v7016
    %s7034 = scalar_lea.vmem %s12, 48
    %v7035 = vld [vmem:[%s7034] sm:$0xf]
    %v7036 = vld [vmem:[%s7034 + $0x4] sm:$0xf]
    %v7037 = vld [vmem:[%s7034 + $0x8] sm:$0xf]
    %v7038 = vld [vmem:[%s7034 + $0xc] sm:$0x3]
    %v7043 = vunpack.c.l.b16 %v7035
    %v7044 = vunpack.c.l.b16 %v7036
    %v7045 = vunpack.c.l.b16 %v7037
    %v7046 = vunpack.c.l.b16 %v7038
    %v7047 = vpack.c.b16 %v7044, %v7043
    %v7048 = vpack.c.b16 %v7046, %v7045
    %v7050 = vsel %vm4357, %v7047, 0
    %v7053 = vsel %vm4357, %v7048, 0
    %7055 = vmatpush.bf16.msra.mxu0 0
    %7056 = vmatpush.bf16.msra.mxu0 0
    %7057 = vmatpush.bf16.msra.mxu0 0
    %7058 = vmatpush.bf16.msra.mxu0 0
    %7059 = vmatpush.bf16.msra.mxu0 0
    %7060 = vmatpush.bf16.msra.mxu0 0
    %7061 = vmatpush.bf16.msra.mxu0 0
    %7062 = vmatpush.bf16.msra.mxu0 %v4365
    %7063 = vmatmul.bf16.gmra.mxu0 %v7050
    %v7064 = vpop.f32.mrf.mxu0
    %v7065 = vadd.f32 0.0, %v7064
    %v7066 = vpop.f32.mrf.mxu0
    %v7067 = vadd.f32 0.0, %v7066
    %7068 = vmatmul.bf16.gmra.mxu0 %v7053
    %v7069 = vpop.f32.mrf.mxu0
    %v7070 = vadd.f32 0.0, %v7069
    %v7071 = vpop.f32.mrf.mxu0
    %v7072 = vadd.f32 0.0, %v7071
    %7073 = vdwg.mxu0
    %7074 = vmatpush.bf16.msra.mxu0 0
    %7075 = vmatpush.bf16.msra.mxu0 0
    %7076 = vmatpush.bf16.msra.mxu0 0
    %7077 = vmatpush.bf16.msra.mxu0 0
    %7078 = vmatpush.bf16.msra.mxu0 0
    %7079 = vmatpush.bf16.msra.mxu0 0
    %7080 = vmatpush.bf16.msra.mxu0 0
    %7081 = vmatpush.bf16.msra.mxu0 %v4368
    %7082 = vmatmul.bf16.gmra.mxu0 %v7050
    %v7083 = vpop.f32.mrf.mxu0
    %v7084 = vadd.f32 0.0, %v7083
    %v7085 = vpop.f32.mrf.mxu0
    %v7086 = vadd.f32 0.0, %v7085
    %7087 = vmatmul.bf16.gmra.mxu0 %v7053
    %v7088 = vpop.f32.mrf.mxu0
    %v7089 = vadd.f32 0.0, %v7088
    %v7090 = vpop.f32.mrf.mxu0
    %v7091 = vadd.f32 0.0, %v7090
    %7092 = vdwg.mxu0
    %7093 = vmatpush.bf16.msra.mxu0 0
    %7094 = vmatpush.bf16.msra.mxu0 0
    %7095 = vmatpush.bf16.msra.mxu0 0
    %7096 = vmatpush.bf16.msra.mxu0 0
    %7097 = vmatpush.bf16.msra.mxu0 0
    %7098 = vmatpush.bf16.msra.mxu0 0
    %7099 = vmatpush.bf16.msra.mxu0 0
    %7100 = vmatpush.bf16.msra.mxu0 %v4371
    %7101 = vmatmul.bf16.gmra.mxu0 %v7050
    %v7102 = vpop.f32.mrf.mxu0
    %v7103 = vadd.f32 0.0, %v7102
    %v7104 = vpop.f32.mrf.mxu0
    %v7105 = vadd.f32 0.0, %v7104
    %7106 = vmatmul.bf16.gmra.mxu0 %v7053
    %v7107 = vpop.f32.mrf.mxu0
    %v7108 = vadd.f32 0.0, %v7107
    %v7109 = vpop.f32.mrf.mxu0
    %v7110 = vadd.f32 0.0, %v7109
    %7111 = vdwg.mxu0
    %v7112 = vpack.c.bf16 %v7067, %v7065
    %v7113 = vpack.c.bf16 %v7086, %v7084
    %v7114 = vpack.c.bf16 %v7105, %v7103
    %v7115 = vpack.c.bf16 %v7072, %v7070
    %v7116 = vpack.c.bf16 %v7091, %v7089
    %v7117 = vpack.c.bf16 %v7110, %v7108
    %s7118 = scalar_lea.vmem %s13, 2304
    %v7119 = vld [vmem:[%s7118] sm:$0xff]
    %v7120 = vld [vmem:[%s7118 + $0x8] sm:$0xff]
    %v7121 = vld [vmem:[%s7118 + $0x10] sm:$0xff]
    %v7122 = vld [vmem:[%s7118 + $0x18] sm:$0xff]
    %v7123 = vld [vmem:[%s7118 + $0x20] sm:$0xff]
    %v7124 = vld [vmem:[%s7118 + $0x28] sm:$0xff]
    %v7125 = vld [vmem:[%s7118 + $0x30] sm:$0xff]
    %v7126 = vld [vmem:[%s7118 + $0x38] sm:$0xff]
    %v7127 = vld [vmem:[%s7118 + $0x40] sm:$0xff]
    %v7128 = vld [vmem:[%s7118 + $0x48] sm:$0xff]
    %v7129 = vld [vmem:[%s7118 + $0x50] sm:$0xff]
    %v7130 = vld [vmem:[%s7118 + $0x58] sm:$0xff]
    %v7131 = vld [vmem:[%s7118 + $0x60] sm:$0xff]
    %v7132 = vld [vmem:[%s7118 + $0x68] sm:$0xff]
    %v7133 = vld [vmem:[%s7118 + $0x70] sm:$0xff]
    %v7134 = vld [vmem:[%s7118 + $0x78] sm:$0xff]
    %v7135 = vld [vmem:[%s7118 + $0x80] sm:$0xff]
    %v7136 = vld [vmem:[%s7118 + $0x88] sm:$0xff]
    %v7137 = vld [vmem:[%s7118 + $0x90] sm:$0xff]
    %v7138 = vld [vmem:[%s7118 + $0x98] sm:$0xff]
    %v7139 = vld [vmem:[%s7118 + $0xa0] sm:$0xff]
    %v7140 = vld [vmem:[%s7118 + $0xa8] sm:$0xff]
    %v7141 = vld [vmem:[%s7118 + $0xb0] sm:$0xff]
    %v7142 = vld [vmem:[%s7118 + $0xb8] sm:$0xff]
    %v7143 = vld [vmem:[%s7118 + $0xc0] sm:$0xff]
    %v7144 = vld [vmem:[%s7118 + $0xc8] sm:$0xff]
    %v7145 = vld [vmem:[%s7118 + $0xd0] sm:$0xff]
    %v7146 = vld [vmem:[%s7118 + $0xd8] sm:$0xff]
    %v7147 = vld [vmem:[%s7118 + $0xe0] sm:$0xff]
    %v7148 = vld [vmem:[%s7118 + $0xe8] sm:$0xff]
    %v7149 = vld [vmem:[%s7118 + $0xf0] sm:$0xff]
    %v7150 = vld [vmem:[%s7118 + $0xf8] sm:$0xff]
    %v7151 = vld [vmem:[%s7118 + $0x100] sm:$0xff]
    %v7152 = vld [vmem:[%s7118 + $0x108] sm:$0xff]
    %v7153 = vld [vmem:[%s7118 + $0x110] sm:$0xff]
    %v7154 = vld [vmem:[%s7118 + $0x118] sm:$0xff]
    %v7155 = vld [vmem:[%s7118 + $0x120] sm:$0xff]
    %v7156 = vld [vmem:[%s7118 + $0x128] sm:$0xff]
    %v7157 = vld [vmem:[%s7118 + $0x130] sm:$0xff]
    %v7158 = vld [vmem:[%s7118 + $0x138] sm:$0xff]
    %v7159 = vld [vmem:[%s7118 + $0x140] sm:$0xff]
    %v7160 = vld [vmem:[%s7118 + $0x148] sm:$0xff]
    %v7161 = vld [vmem:[%s7118 + $0x150] sm:$0xff]
    %v7162 = vld [vmem:[%s7118 + $0x158] sm:$0xff]
    %v7163 = vld [vmem:[%s7118 + $0x160] sm:$0xff]
    %v7164 = vld [vmem:[%s7118 + $0x168] sm:$0xff]
    %v7165 = vld [vmem:[%s7118 + $0x170] sm:$0xff]
    %v7166 = vld [vmem:[%s7118 + $0x178] sm:$0xff]
    %v7167 = vld [vmem:[%s7118 + $0x180] sm:$0xff]
    %v7168 = vld [vmem:[%s7118 + $0x188] sm:$0xff]
    %v7169 = vld [vmem:[%s7118 + $0x190] sm:$0xff]
    %v7170 = vld [vmem:[%s7118 + $0x198] sm:$0xff]
    %v7171 = vld [vmem:[%s7118 + $0x1a0] sm:$0xff]
    %v7172 = vld [vmem:[%s7118 + $0x1a8] sm:$0xff]
    %v7173 = vld [vmem:[%s7118 + $0x1b0] sm:$0xff]
    %v7174 = vld [vmem:[%s7118 + $0x1b8] sm:$0xff]
    %v7175 = vld [vmem:[%s7118 + $0x1c0] sm:$0xff]
    %v7176 = vld [vmem:[%s7118 + $0x1c8] sm:$0xff]
    %v7177 = vld [vmem:[%s7118 + $0x1d0] sm:$0xff]
    %v7178 = vld [vmem:[%s7118 + $0x1d8] sm:$0xff]
    %v7179 = vld [vmem:[%s7118 + $0x1e0] sm:$0xff]
    %v7180 = vld [vmem:[%s7118 + $0x1e8] sm:$0xff]
    %v7181 = vld [vmem:[%s7118 + $0x1f0] sm:$0xff]
    %v7182 = vld [vmem:[%s7118 + $0x1f8] sm:$0xff]
    %v7183 = vld [vmem:[%s7118 + $0x200] sm:$0xff]
    %v7184 = vld [vmem:[%s7118 + $0x208] sm:$0xff]
    %v7185 = vld [vmem:[%s7118 + $0x210] sm:$0xff]
    %v7186 = vld [vmem:[%s7118 + $0x218] sm:$0xff]
    %v7187 = vld [vmem:[%s7118 + $0x220] sm:$0xff]
    %v7188 = vld [vmem:[%s7118 + $0x228] sm:$0xff]
    %v7189 = vld [vmem:[%s7118 + $0x230] sm:$0xff]
    %v7190 = vld [vmem:[%s7118 + $0x238] sm:$0xff]
    %v7191 = vld [vmem:[%s7118 + $0x240] sm:$0xff]
    %v7192 = vld [vmem:[%s7118 + $0x248] sm:$0xff]
    %v7193 = vld [vmem:[%s7118 + $0x250] sm:$0xff]
    %v7194 = vld [vmem:[%s7118 + $0x258] sm:$0xff]
    %v7195 = vld [vmem:[%s7118 + $0x260] sm:$0xff]
    %v7196 = vld [vmem:[%s7118 + $0x268] sm:$0xff]
    %v7197 = vld [vmem:[%s7118 + $0x270] sm:$0xff]
    %v7198 = vld [vmem:[%s7118 + $0x278] sm:$0xff]
    %v7199 = vld [vmem:[%s7118 + $0x280] sm:$0xff]
    %v7200 = vld [vmem:[%s7118 + $0x288] sm:$0xff]
    %v7201 = vld [vmem:[%s7118 + $0x290] sm:$0xff]
    %v7202 = vld [vmem:[%s7118 + $0x298] sm:$0xff]
    %v7203 = vld [vmem:[%s7118 + $0x2a0] sm:$0xff]
    %v7204 = vld [vmem:[%s7118 + $0x2a8] sm:$0xff]
    %v7205 = vld [vmem:[%s7118 + $0x2b0] sm:$0xff]
    %v7206 = vld [vmem:[%s7118 + $0x2b8] sm:$0xff]
    %v7207 = vld [vmem:[%s7118 + $0x2c0] sm:$0xff]
    %v7208 = vld [vmem:[%s7118 + $0x2c8] sm:$0xff]
    %v7209 = vld [vmem:[%s7118 + $0x2d0] sm:$0xff]
    %v7210 = vld [vmem:[%s7118 + $0x2d8] sm:$0xff]
    %v7211 = vld [vmem:[%s7118 + $0x2e0] sm:$0xff]
    %v7212 = vld [vmem:[%s7118 + $0x2e8] sm:$0xff]
    %v7213 = vld [vmem:[%s7118 + $0x2f0] sm:$0xff]
    %v7214 = vld [vmem:[%s7118 + $0x2f8] sm:$0xff]
    %v7311 = vunpack.c.l.b16 %v7119
    %v7312 = vunpack.c.h.b16 %v7119
    %v7313 = vunpack.c.l.b16 %v7120
    %v7314 = vunpack.c.h.b16 %v7120
    %v7315 = vunpack.c.l.b16 %v7121
    %v7316 = vunpack.c.h.b16 %v7121
    %v7317 = vunpack.c.l.b16 %v7122
    %v7318 = vunpack.c.h.b16 %v7122
    %v7319 = vunpack.c.l.b16 %v7123
    %v7320 = vunpack.c.h.b16 %v7123
    %v7321 = vunpack.c.l.b16 %v7124
    %v7322 = vunpack.c.h.b16 %v7124
    %v7323 = vunpack.c.l.b16 %v7125
    %v7324 = vunpack.c.h.b16 %v7125
    %v7325 = vunpack.c.l.b16 %v7126
    %v7326 = vunpack.c.h.b16 %v7126
    %v7327 = vunpack.c.l.b16 %v7127
    %v7328 = vunpack.c.h.b16 %v7127
    %v7329 = vunpack.c.l.b16 %v7128
    %v7330 = vunpack.c.h.b16 %v7128
    %v7331 = vunpack.c.l.b16 %v7129
    %v7332 = vunpack.c.h.b16 %v7129
    %v7333 = vunpack.c.l.b16 %v7130
    %v7334 = vunpack.c.h.b16 %v7130
    %v7335 = vunpack.c.l.b16 %v7131
    %v7336 = vunpack.c.h.b16 %v7131
    %v7337 = vunpack.c.l.b16 %v7132
    %v7338 = vunpack.c.h.b16 %v7132
    %v7339 = vunpack.c.l.b16 %v7133
    %v7340 = vunpack.c.h.b16 %v7133
    %v7341 = vunpack.c.l.b16 %v7134
    %v7342 = vunpack.c.h.b16 %v7134
    %v7343 = vunpack.c.l.b16 %v7135
    %v7344 = vunpack.c.h.b16 %v7135
    %v7345 = vunpack.c.l.b16 %v7136
    %v7346 = vunpack.c.h.b16 %v7136
    %v7347 = vunpack.c.l.b16 %v7137
    %v7348 = vunpack.c.h.b16 %v7137
    %v7349 = vunpack.c.l.b16 %v7138
    %v7350 = vunpack.c.h.b16 %v7138
    %v7351 = vunpack.c.l.b16 %v7139
    %v7352 = vunpack.c.h.b16 %v7139
    %v7353 = vunpack.c.l.b16 %v7140
    %v7354 = vunpack.c.h.b16 %v7140
    %v7355 = vunpack.c.l.b16 %v7141
    %v7356 = vunpack.c.h.b16 %v7141
    %v7357 = vunpack.c.l.b16 %v7142
    %v7358 = vunpack.c.h.b16 %v7142
    %v7359 = vunpack.c.l.b16 %v7143
    %v7360 = vunpack.c.h.b16 %v7143
    %v7361 = vunpack.c.l.b16 %v7144
    %v7362 = vunpack.c.h.b16 %v7144
    %v7363 = vunpack.c.l.b16 %v7145
    %v7364 = vunpack.c.h.b16 %v7145
    %v7365 = vunpack.c.l.b16 %v7146
    %v7366 = vunpack.c.h.b16 %v7146
    %v7367 = vunpack.c.l.b16 %v7147
    %v7368 = vunpack.c.h.b16 %v7147
    %v7369 = vunpack.c.l.b16 %v7148
    %v7370 = vunpack.c.h.b16 %v7148
    %v7371 = vunpack.c.l.b16 %v7149
    %v7372 = vunpack.c.h.b16 %v7149
    %v7373 = vunpack.c.l.b16 %v7150
    %v7374 = vunpack.c.h.b16 %v7150
    %v7375 = vunpack.c.l.b16 %v7151
    %v7376 = vunpack.c.h.b16 %v7151
    %v7377 = vunpack.c.l.b16 %v7152
    %v7378 = vunpack.c.h.b16 %v7152
    %v7379 = vunpack.c.l.b16 %v7153
    %v7380 = vunpack.c.h.b16 %v7153
    %v7381 = vunpack.c.l.b16 %v7154
    %v7382 = vunpack.c.h.b16 %v7154
    %v7383 = vunpack.c.l.b16 %v7155
    %v7384 = vunpack.c.h.b16 %v7155
    %v7385 = vunpack.c.l.b16 %v7156
    %v7386 = vunpack.c.h.b16 %v7156
    %v7387 = vunpack.c.l.b16 %v7157
    %v7388 = vunpack.c.h.b16 %v7157
    %v7389 = vunpack.c.l.b16 %v7158
    %v7390 = vunpack.c.h.b16 %v7158
    %v7391 = vunpack.c.l.b16 %v7159
    %v7392 = vunpack.c.h.b16 %v7159
    %v7393 = vunpack.c.l.b16 %v7160
    %v7394 = vunpack.c.h.b16 %v7160
    %v7395 = vunpack.c.l.b16 %v7161
    %v7396 = vunpack.c.h.b16 %v7161
    %v7397 = vunpack.c.l.b16 %v7162
    %v7398 = vunpack.c.h.b16 %v7162
    %v7399 = vunpack.c.l.b16 %v7163
    %v7400 = vunpack.c.h.b16 %v7163
    %v7401 = vunpack.c.l.b16 %v7164
    %v7402 = vunpack.c.h.b16 %v7164
    %v7403 = vunpack.c.l.b16 %v7165
    %v7404 = vunpack.c.h.b16 %v7165
    %v7405 = vunpack.c.l.b16 %v7166
    %v7406 = vunpack.c.h.b16 %v7166
    %v7407 = vunpack.c.l.b16 %v7167
    %v7408 = vunpack.c.h.b16 %v7167
    %v7409 = vunpack.c.l.b16 %v7168
    %v7410 = vunpack.c.h.b16 %v7168
    %v7411 = vunpack.c.l.b16 %v7169
    %v7412 = vunpack.c.h.b16 %v7169
    %v7413 = vunpack.c.l.b16 %v7170
    %v7414 = vunpack.c.h.b16 %v7170
    %v7415 = vunpack.c.l.b16 %v7171
    %v7416 = vunpack.c.h.b16 %v7171
    %v7417 = vunpack.c.l.b16 %v7172
    %v7418 = vunpack.c.h.b16 %v7172
    %v7419 = vunpack.c.l.b16 %v7173
    %v7420 = vunpack.c.h.b16 %v7173
    %v7421 = vunpack.c.l.b16 %v7174
    %v7422 = vunpack.c.h.b16 %v7174
    %v7423 = vunpack.c.l.b16 %v7175
    %v7424 = vunpack.c.h.b16 %v7175
    %v7425 = vunpack.c.l.b16 %v7176
    %v7426 = vunpack.c.h.b16 %v7176
    %v7427 = vunpack.c.l.b16 %v7177
    %v7428 = vunpack.c.h.b16 %v7177
    %v7429 = vunpack.c.l.b16 %v7178
    %v7430 = vunpack.c.h.b16 %v7178
    %v7431 = vunpack.c.l.b16 %v7179
    %v7432 = vunpack.c.h.b16 %v7179
    %v7433 = vunpack.c.l.b16 %v7180
    %v7434 = vunpack.c.h.b16 %v7180
    %v7435 = vunpack.c.l.b16 %v7181
    %v7436 = vunpack.c.h.b16 %v7181
    %v7437 = vunpack.c.l.b16 %v7182
    %v7438 = vunpack.c.h.b16 %v7182
    %v7439 = vunpack.c.l.b16 %v7183
    %v7440 = vunpack.c.h.b16 %v7183
    %v7441 = vunpack.c.l.b16 %v7184
    %v7442 = vunpack.c.h.b16 %v7184
    %v7443 = vunpack.c.l.b16 %v7185
    %v7444 = vunpack.c.h.b16 %v7185
    %v7445 = vunpack.c.l.b16 %v7186
    %v7446 = vunpack.c.h.b16 %v7186
    %v7447 = vunpack.c.l.b16 %v7187
    %v7448 = vunpack.c.h.b16 %v7187
    %v7449 = vunpack.c.l.b16 %v7188
    %v7450 = vunpack.c.h.b16 %v7188
    %v7451 = vunpack.c.l.b16 %v7189
    %v7452 = vunpack.c.h.b16 %v7189
    %v7453 = vunpack.c.l.b16 %v7190
    %v7454 = vunpack.c.h.b16 %v7190
    %v7455 = vunpack.c.l.b16 %v7191
    %v7456 = vunpack.c.h.b16 %v7191
    %v7457 = vunpack.c.l.b16 %v7192
    %v7458 = vunpack.c.h.b16 %v7192
    %v7459 = vunpack.c.l.b16 %v7193
    %v7460 = vunpack.c.h.b16 %v7193
    %v7461 = vunpack.c.l.b16 %v7194
    %v7462 = vunpack.c.h.b16 %v7194
    %v7463 = vunpack.c.l.b16 %v7195
    %v7464 = vunpack.c.h.b16 %v7195
    %v7465 = vunpack.c.l.b16 %v7196
    %v7466 = vunpack.c.h.b16 %v7196
    %v7467 = vunpack.c.l.b16 %v7197
    %v7468 = vunpack.c.h.b16 %v7197
    %v7469 = vunpack.c.l.b16 %v7198
    %v7470 = vunpack.c.h.b16 %v7198
    %v7471 = vunpack.c.l.b16 %v7199
    %v7472 = vunpack.c.h.b16 %v7199
    %v7473 = vunpack.c.l.b16 %v7200
    %v7474 = vunpack.c.h.b16 %v7200
    %v7475 = vunpack.c.l.b16 %v7201
    %v7476 = vunpack.c.h.b16 %v7201
    %v7477 = vunpack.c.l.b16 %v7202
    %v7478 = vunpack.c.h.b16 %v7202
    %v7479 = vunpack.c.l.b16 %v7203
    %v7480 = vunpack.c.h.b16 %v7203
    %v7481 = vunpack.c.l.b16 %v7204
    %v7482 = vunpack.c.h.b16 %v7204
    %v7483 = vunpack.c.l.b16 %v7205
    %v7484 = vunpack.c.h.b16 %v7205
    %v7485 = vunpack.c.l.b16 %v7206
    %v7486 = vunpack.c.h.b16 %v7206
    %v7487 = vunpack.c.l.b16 %v7207
    %v7488 = vunpack.c.h.b16 %v7207
    %v7489 = vunpack.c.l.b16 %v7208
    %v7490 = vunpack.c.h.b16 %v7208
    %v7491 = vunpack.c.l.b16 %v7209
    %v7492 = vunpack.c.h.b16 %v7209
    %v7493 = vunpack.c.l.b16 %v7210
    %v7494 = vunpack.c.h.b16 %v7210
    %v7495 = vunpack.c.l.b16 %v7211
    %v7496 = vunpack.c.h.b16 %v7211
    %v7497 = vunpack.c.l.b16 %v7212
    %v7498 = vunpack.c.h.b16 %v7212
    %v7499 = vunpack.c.l.b16 %v7213
    %v7500 = vunpack.c.h.b16 %v7213
    %v7501 = vunpack.c.l.b16 %v7214
    %v7502 = vunpack.c.h.b16 %v7214
    %v7503 = vpack.c.b16 %v7315, %v7311
    %v7504 = vpack.c.b16 %v7316, %v7312
    %v7505 = vpack.c.b16 %v7317, %v7313
    %v7506 = vpack.c.b16 %v7318, %v7314
    %v7507 = vpack.c.b16 %v7323, %v7319
    %v7508 = vpack.c.b16 %v7324, %v7320
    %v7509 = vpack.c.b16 %v7325, %v7321
    %v7510 = vpack.c.b16 %v7326, %v7322
    %v7511 = vpack.c.b16 %v7331, %v7327
    %v7512 = vpack.c.b16 %v7332, %v7328
    %v7513 = vpack.c.b16 %v7333, %v7329
    %v7514 = vpack.c.b16 %v7334, %v7330
    %v7515 = vpack.c.b16 %v7339, %v7335
    %v7516 = vpack.c.b16 %v7340, %v7336
    %v7517 = vpack.c.b16 %v7341, %v7337
    %v7518 = vpack.c.b16 %v7342, %v7338
    %v7519 = vpack.c.b16 %v7347, %v7343
    %v7520 = vpack.c.b16 %v7348, %v7344
    %v7521 = vpack.c.b16 %v7349, %v7345
    %v7522 = vpack.c.b16 %v7350, %v7346
    %v7523 = vpack.c.b16 %v7355, %v7351
    %v7524 = vpack.c.b16 %v7356, %v7352
    %v7525 = vpack.c.b16 %v7357, %v7353
    %v7526 = vpack.c.b16 %v7358, %v7354
    %v7527 = vpack.c.b16 %v7363, %v7359
    %v7528 = vpack.c.b16 %v7364, %v7360
    %v7529 = vpack.c.b16 %v7365, %v7361
    %v7530 = vpack.c.b16 %v7366, %v7362
    %v7531 = vpack.c.b16 %v7371, %v7367
    %v7532 = vpack.c.b16 %v7372, %v7368
    %v7533 = vpack.c.b16 %v7373, %v7369
    %v7534 = vpack.c.b16 %v7374, %v7370
    %v7535 = vpack.c.b16 %v7379, %v7375
    %v7536 = vpack.c.b16 %v7380, %v7376
    %v7537 = vpack.c.b16 %v7381, %v7377
    %v7538 = vpack.c.b16 %v7382, %v7378
    %v7539 = vpack.c.b16 %v7387, %v7383
    %v7540 = vpack.c.b16 %v7388, %v7384
    %v7541 = vpack.c.b16 %v7389, %v7385
    %v7542 = vpack.c.b16 %v7390, %v7386
    %v7543 = vpack.c.b16 %v7395, %v7391
    %v7544 = vpack.c.b16 %v7396, %v7392
    %v7545 = vpack.c.b16 %v7397, %v7393
    %v7546 = vpack.c.b16 %v7398, %v7394
    %v7547 = vpack.c.b16 %v7403, %v7399
    %v7548 = vpack.c.b16 %v7404, %v7400
    %v7549 = vpack.c.b16 %v7405, %v7401
    %v7550 = vpack.c.b16 %v7406, %v7402
    %v7551 = vpack.c.b16 %v7411, %v7407
    %v7552 = vpack.c.b16 %v7412, %v7408
    %v7553 = vpack.c.b16 %v7413, %v7409
    %v7554 = vpack.c.b16 %v7414, %v7410
    %v7555 = vpack.c.b16 %v7419, %v7415
    %v7556 = vpack.c.b16 %v7420, %v7416
    %v7557 = vpack.c.b16 %v7421, %v7417
    %v7558 = vpack.c.b16 %v7422, %v7418
    %v7559 = vpack.c.b16 %v7427, %v7423
    %v7560 = vpack.c.b16 %v7428, %v7424
    %v7561 = vpack.c.b16 %v7429, %v7425
    %v7562 = vpack.c.b16 %v7430, %v7426
    %v7563 = vpack.c.b16 %v7435, %v7431
    %v7564 = vpack.c.b16 %v7436, %v7432
    %v7565 = vpack.c.b16 %v7437, %v7433
    %v7566 = vpack.c.b16 %v7438, %v7434
    %v7567 = vpack.c.b16 %v7443, %v7439
    %v7568 = vpack.c.b16 %v7444, %v7440
    %v7569 = vpack.c.b16 %v7445, %v7441
    %v7570 = vpack.c.b16 %v7446, %v7442
    %v7571 = vpack.c.b16 %v7451, %v7447
    %v7572 = vpack.c.b16 %v7452, %v7448
    %v7573 = vpack.c.b16 %v7453, %v7449
    %v7574 = vpack.c.b16 %v7454, %v7450
    %v7575 = vpack.c.b16 %v7459, %v7455
    %v7576 = vpack.c.b16 %v7460, %v7456
    %v7577 = vpack.c.b16 %v7461, %v7457
    %v7578 = vpack.c.b16 %v7462, %v7458
    %v7579 = vpack.c.b16 %v7467, %v7463
    %v7580 = vpack.c.b16 %v7468, %v7464
    %v7581 = vpack.c.b16 %v7469, %v7465
    %v7582 = vpack.c.b16 %v7470, %v7466
    %v7583 = vpack.c.b16 %v7475, %v7471
    %v7584 = vpack.c.b16 %v7476, %v7472
    %v7585 = vpack.c.b16 %v7477, %v7473
    %v7586 = vpack.c.b16 %v7478, %v7474
    %v7587 = vpack.c.b16 %v7483, %v7479
    %v7588 = vpack.c.b16 %v7484, %v7480
    %v7589 = vpack.c.b16 %v7485, %v7481
    %v7590 = vpack.c.b16 %v7486, %v7482
    %v7591 = vpack.c.b16 %v7491, %v7487
    %v7592 = vpack.c.b16 %v7492, %v7488
    %v7593 = vpack.c.b16 %v7493, %v7489
    %v7594 = vpack.c.b16 %v7494, %v7490
    %v7595 = vpack.c.b16 %v7499, %v7495
    %v7596 = vpack.c.b16 %v7500, %v7496
    %v7597 = vpack.c.b16 %v7501, %v7497
    %v7598 = vpack.c.b16 %v7502, %v7498
    %7695 = vmatpush.bf16.msra.mxu0 %v7531
    %7696 = vmatpush.bf16.msra.mxu0 %v7527
    %7697 = vmatpush.bf16.msra.mxu0 %v7523
    %7698 = vmatpush.bf16.msra.mxu0 %v7519
    %7699 = vmatpush.bf16.msra.mxu0 %v7515
    %7700 = vmatpush.bf16.msra.mxu0 %v7511
    %7701 = vmatpush.bf16.msra.mxu0 %v7507
    %7702 = vmatpush.bf16.msra.mxu0 %v7503
    %7703 = vmatmul.bf16.gmra.mxu0 %v7112
    %v7704 = vpop.f32.mrf.mxu0
    %v7705 = vadd.f32 0.0, %v7704
    %v7706 = vpop.f32.mrf.mxu0
    %v7707 = vadd.f32 0.0, %v7706
    %7708 = vmatmul.bf16.gmra.mxu0 %v7115
    %v7709 = vpop.f32.mrf.mxu0
    %v7710 = vadd.f32 0.0, %v7709
    %v7711 = vpop.f32.mrf.mxu0
    %v7712 = vadd.f32 0.0, %v7711
    %7713 = vdwg.mxu0
    %7714 = vmatpush.bf16.msra.mxu0 %v7563
    %7715 = vmatpush.bf16.msra.mxu0 %v7559
    %7716 = vmatpush.bf16.msra.mxu0 %v7555
    %7717 = vmatpush.bf16.msra.mxu0 %v7551
    %7718 = vmatpush.bf16.msra.mxu0 %v7547
    %7719 = vmatpush.bf16.msra.mxu0 %v7543
    %7720 = vmatpush.bf16.msra.mxu0 %v7539
    %7721 = vmatpush.bf16.msra.mxu0 %v7535
    %7722 = vmatmul.bf16.gmra.mxu0 %v7113
    %v7723 = vpop.f32.mrf.mxu0
    %v7724 = vadd.f32 %v7705, %v7723
    %v7725 = vpop.f32.mrf.mxu0
    %v7726 = vadd.f32 %v7707, %v7725
    %7727 = vmatmul.bf16.gmra.mxu0 %v7116
    %v7728 = vpop.f32.mrf.mxu0
    %v7729 = vadd.f32 %v7710, %v7728
    %v7730 = vpop.f32.mrf.mxu0
    %v7731 = vadd.f32 %v7712, %v7730
    %7732 = vdwg.mxu0
    %7733 = vmatpush.bf16.msra.mxu0 %v7595
    %7734 = vmatpush.bf16.msra.mxu0 %v7591
    %7735 = vmatpush.bf16.msra.mxu0 %v7587
    %7736 = vmatpush.bf16.msra.mxu0 %v7583
    %7737 = vmatpush.bf16.msra.mxu0 %v7579
    %7738 = vmatpush.bf16.msra.mxu0 %v7575
    %7739 = vmatpush.bf16.msra.mxu0 %v7571
    %7740 = vmatpush.bf16.msra.mxu0 %v7567
    %7741 = vmatmul.bf16.gmra.mxu0 %v7114
    %v7742 = vpop.f32.mrf.mxu0
    %v7743 = vadd.f32 %v7724, %v7742
    %v7744 = vpop.f32.mrf.mxu0
    %v7745 = vadd.f32 %v7726, %v7744
    %7746 = vmatmul.bf16.gmra.mxu0 %v7117
    %v7747 = vpop.f32.mrf.mxu0
    %v7748 = vadd.f32 %v7729, %v7747
    %v7749 = vpop.f32.mrf.mxu0
    %v7750 = vadd.f32 %v7731, %v7749
    %7751 = vdwg.mxu0
    %7752 = vmatpush.bf16.msra.mxu0 %v7532
    %7753 = vmatpush.bf16.msra.mxu0 %v7528
    %7754 = vmatpush.bf16.msra.mxu0 %v7524
    %7755 = vmatpush.bf16.msra.mxu0 %v7520
    %7756 = vmatpush.bf16.msra.mxu0 %v7516
    %7757 = vmatpush.bf16.msra.mxu0 %v7512
    %7758 = vmatpush.bf16.msra.mxu0 %v7508
    %7759 = vmatpush.bf16.msra.mxu0 %v7504
    %7760 = vmatmul.bf16.gmra.mxu0 %v7112
    %v7761 = vpop.f32.mrf.mxu0
    %v7762 = vadd.f32 0.0, %v7761
    %v7763 = vpop.f32.mrf.mxu0
    %v7764 = vadd.f32 0.0, %v7763
    %7765 = vmatmul.bf16.gmra.mxu0 %v7115
    %v7766 = vpop.f32.mrf.mxu0
    %v7767 = vadd.f32 0.0, %v7766
    %v7768 = vpop.f32.mrf.mxu0
    %v7769 = vadd.f32 0.0, %v7768
    %7770 = vdwg.mxu0
    %7771 = vmatpush.bf16.msra.mxu0 %v7564
    %7772 = vmatpush.bf16.msra.mxu0 %v7560
    %7773 = vmatpush.bf16.msra.mxu0 %v7556
    %7774 = vmatpush.bf16.msra.mxu0 %v7552
    %7775 = vmatpush.bf16.msra.mxu0 %v7548
    %7776 = vmatpush.bf16.msra.mxu0 %v7544
    %7777 = vmatpush.bf16.msra.mxu0 %v7540
    %7778 = vmatpush.bf16.msra.mxu0 %v7536
    %7779 = vmatmul.bf16.gmra.mxu0 %v7113
    %v7780 = vpop.f32.mrf.mxu0
    %v7781 = vadd.f32 %v7762, %v7780
    %v7782 = vpop.f32.mrf.mxu0
    %v7783 = vadd.f32 %v7764, %v7782
    %7784 = vmatmul.bf16.gmra.mxu0 %v7116
    %v7785 = vpop.f32.mrf.mxu0
    %v7786 = vadd.f32 %v7767, %v7785
    %v7787 = vpop.f32.mrf.mxu0
    %v7788 = vadd.f32 %v7769, %v7787
    %7789 = vdwg.mxu0
    %7790 = vmatpush.bf16.msra.mxu0 %v7596
    %7791 = vmatpush.bf16.msra.mxu0 %v7592
    %7792 = vmatpush.bf16.msra.mxu0 %v7588
    %7793 = vmatpush.bf16.msra.mxu0 %v7584
    %7794 = vmatpush.bf16.msra.mxu0 %v7580
    %7795 = vmatpush.bf16.msra.mxu0 %v7576
    %7796 = vmatpush.bf16.msra.mxu0 %v7572
    %7797 = vmatpush.bf16.msra.mxu0 %v7568
    %7798 = vmatmul.bf16.gmra.mxu0 %v7114
    %v7799 = vpop.f32.mrf.mxu0
    %v7800 = vadd.f32 %v7781, %v7799
    %v7801 = vpop.f32.mrf.mxu0
    %v7802 = vadd.f32 %v7783, %v7801
    %7803 = vmatmul.bf16.gmra.mxu0 %v7117
    %v7804 = vpop.f32.mrf.mxu0
    %v7805 = vadd.f32 %v7786, %v7804
    %v7806 = vpop.f32.mrf.mxu0
    %v7807 = vadd.f32 %v7788, %v7806
    %7808 = vdwg.mxu0
    %7809 = vmatpush.bf16.msra.mxu0 %v7533
    %7810 = vmatpush.bf16.msra.mxu0 %v7529
    %7811 = vmatpush.bf16.msra.mxu0 %v7525
    %7812 = vmatpush.bf16.msra.mxu0 %v7521
    %7813 = vmatpush.bf16.msra.mxu0 %v7517
    %7814 = vmatpush.bf16.msra.mxu0 %v7513
    %7815 = vmatpush.bf16.msra.mxu0 %v7509
    %7816 = vmatpush.bf16.msra.mxu0 %v7505
    %7817 = vmatmul.bf16.gmra.mxu0 %v7112
    %v7818 = vpop.f32.mrf.mxu0
    %v7819 = vadd.f32 0.0, %v7818
    %v7820 = vpop.f32.mrf.mxu0
    %v7821 = vadd.f32 0.0, %v7820
    %7822 = vmatmul.bf16.gmra.mxu0 %v7115
    %v7823 = vpop.f32.mrf.mxu0
    %v7824 = vadd.f32 0.0, %v7823
    %v7825 = vpop.f32.mrf.mxu0
    %v7826 = vadd.f32 0.0, %v7825
    %7827 = vdwg.mxu0
    %7828 = vmatpush.bf16.msra.mxu0 %v7565
    %7829 = vmatpush.bf16.msra.mxu0 %v7561
    %7830 = vmatpush.bf16.msra.mxu0 %v7557
    %7831 = vmatpush.bf16.msra.mxu0 %v7553
    %7832 = vmatpush.bf16.msra.mxu0 %v7549
    %7833 = vmatpush.bf16.msra.mxu0 %v7545
    %7834 = vmatpush.bf16.msra.mxu0 %v7541
    %7835 = vmatpush.bf16.msra.mxu0 %v7537
    %7836 = vmatmul.bf16.gmra.mxu0 %v7113
    %v7837 = vpop.f32.mrf.mxu0
    %v7838 = vadd.f32 %v7819, %v7837
    %v7839 = vpop.f32.mrf.mxu0
    %v7840 = vadd.f32 %v7821, %v7839
    %7841 = vmatmul.bf16.gmra.mxu0 %v7116
    %v7842 = vpop.f32.mrf.mxu0
    %v7843 = vadd.f32 %v7824, %v7842
    %v7844 = vpop.f32.mrf.mxu0
    %v7845 = vadd.f32 %v7826, %v7844
    %7846 = vdwg.mxu0
    %7847 = vmatpush.bf16.msra.mxu0 %v7597
    %7848 = vmatpush.bf16.msra.mxu0 %v7593
    %7849 = vmatpush.bf16.msra.mxu0 %v7589
    %7850 = vmatpush.bf16.msra.mxu0 %v7585
    %7851 = vmatpush.bf16.msra.mxu0 %v7581
    %7852 = vmatpush.bf16.msra.mxu0 %v7577
    %7853 = vmatpush.bf16.msra.mxu0 %v7573
    %7854 = vmatpush.bf16.msra.mxu0 %v7569
    %7855 = vmatmul.bf16.gmra.mxu0 %v7114
    %v7856 = vpop.f32.mrf.mxu0
    %v7857 = vadd.f32 %v7838, %v7856
    %v7858 = vpop.f32.mrf.mxu0
    %v7859 = vadd.f32 %v7840, %v7858
    %7860 = vmatmul.bf16.gmra.mxu0 %v7117
    %v7861 = vpop.f32.mrf.mxu0
    %v7862 = vadd.f32 %v7843, %v7861
    %v7863 = vpop.f32.mrf.mxu0
    %v7864 = vadd.f32 %v7845, %v7863
    %7865 = vdwg.mxu0
    %7866 = vmatpush.bf16.msra.mxu0 %v7534
    %7867 = vmatpush.bf16.msra.mxu0 %v7530
    %7868 = vmatpush.bf16.msra.mxu0 %v7526
    %7869 = vmatpush.bf16.msra.mxu0 %v7522
    %7870 = vmatpush.bf16.msra.mxu0 %v7518
    %7871 = vmatpush.bf16.msra.mxu0 %v7514
    %7872 = vmatpush.bf16.msra.mxu0 %v7510
    %7873 = vmatpush.bf16.msra.mxu0 %v7506
    %7874 = vmatmul.bf16.gmra.mxu0 %v7112
    %v7875 = vpop.f32.mrf.mxu0
    %v7876 = vadd.f32 0.0, %v7875
    %v7877 = vpop.f32.mrf.mxu0
    %v7878 = vadd.f32 0.0, %v7877
    %7879 = vmatmul.bf16.gmra.mxu0 %v7115
    %v7880 = vpop.f32.mrf.mxu0
    %v7881 = vadd.f32 0.0, %v7880
    %v7882 = vpop.f32.mrf.mxu0
    %v7883 = vadd.f32 0.0, %v7882
    %7884 = vdwg.mxu0
    %7885 = vmatpush.bf16.msra.mxu0 %v7566
    %7886 = vmatpush.bf16.msra.mxu0 %v7562
    %7887 = vmatpush.bf16.msra.mxu0 %v7558
    %7888 = vmatpush.bf16.msra.mxu0 %v7554
    %7889 = vmatpush.bf16.msra.mxu0 %v7550
    %7890 = vmatpush.bf16.msra.mxu0 %v7546
    %7891 = vmatpush.bf16.msra.mxu0 %v7542
    %7892 = vmatpush.bf16.msra.mxu0 %v7538
    %7893 = vmatmul.bf16.gmra.mxu0 %v7113
    %v7894 = vpop.f32.mrf.mxu0
    %v7895 = vadd.f32 %v7876, %v7894
    %v7896 = vpop.f32.mrf.mxu0
    %v7897 = vadd.f32 %v7878, %v7896
    %7898 = vmatmul.bf16.gmra.mxu0 %v7116
    %v7899 = vpop.f32.mrf.mxu0
    %v7900 = vadd.f32 %v7881, %v7899
    %v7901 = vpop.f32.mrf.mxu0
    %v7902 = vadd.f32 %v7883, %v7901
    %7903 = vdwg.mxu0
    %7904 = vmatpush.bf16.msra.mxu0 %v7598
    %7905 = vmatpush.bf16.msra.mxu0 %v7594
    %7906 = vmatpush.bf16.msra.mxu0 %v7590
    %7907 = vmatpush.bf16.msra.mxu0 %v7586
    %7908 = vmatpush.bf16.msra.mxu0 %v7582
    %7909 = vmatpush.bf16.msra.mxu0 %v7578
    %7910 = vmatpush.bf16.msra.mxu0 %v7574
    %7911 = vmatpush.bf16.msra.mxu0 %v7570
    %7912 = vmatmul.bf16.gmra.mxu0 %v7114
    %v7913 = vpop.f32.mrf.mxu0
    %v7914 = vadd.f32 %v7895, %v7913
    %v7915 = vpop.f32.mrf.mxu0
    %v7916 = vadd.f32 %v7897, %v7915
    %7917 = vmatmul.bf16.gmra.mxu0 %v7117
    %v7918 = vpop.f32.mrf.mxu0
    %v7919 = vadd.f32 %v7900, %v7918
    %v7920 = vpop.f32.mrf.mxu0
    %v7921 = vadd.f32 %v7902, %v7920
    %7922 = vdwg.mxu0
    %v7923 = vadd.f32 %v7018, %v7743
    %v7924 = vadd.f32 %v7019, %v7800
    %v7925 = vadd.f32 %v7020, %v7857
    %v7926 = vadd.f32 %v7021, %v7914
    %v7927 = vadd.f32 %v7022, %v7745
    %v7928 = vadd.f32 %v7023, %v7802
    %v7929 = vadd.f32 %v7024, %v7859
    %v7930 = vadd.f32 %v7025, %v7916
    %v7931 = vadd.f32 %v7026, %v7748
    %v7932 = vadd.f32 %v7027, %v7805
    %v7933 = vadd.f32 %v7028, %v7862
    %v7934 = vadd.f32 %v7029, %v7919
    %v7935 = vadd.f32 %v7030, %v7750
    %v7936 = vadd.f32 %v7031, %v7807
    %v7937 = vadd.f32 %v7032, %v7864
    %v7938 = vadd.f32 %v7033, %v7921
    %v7939 = vld [vmem:[%s14] sm:$0xf]
    %v7941 = vperm.slane %v7939, 0
    %v7942 = vperm.slane %v7939, 1
    %v7943 = vperm.slane %v7939, 2
    %v7944 = vperm.slane %v7939, 3
    %v7949 = vadd.f32 %v7923, %v7941
    %v7950 = vadd.f32 %v7924, %v7942
    %v7951 = vadd.f32 %v7925, %v7943
    %v7952 = vadd.f32 %v7926, %v7944
    %v7953 = vadd.f32 %v7927, %v7941
    %v7954 = vadd.f32 %v7928, %v7942
    %v7955 = vadd.f32 %v7929, %v7943
    %v7956 = vadd.f32 %v7930, %v7944
    %v7957 = vadd.f32 %v7931, %v7941
    %v7958 = vadd.f32 %v7932, %v7942
    %v7959 = vadd.f32 %v7933, %v7943
    %v7960 = vadd.f32 %v7934, %v7944
    %v7961 = vadd.f32 %v7935, %v7941
    %v7962 = vadd.f32 %v7936, %v7942
    %v7963 = vadd.f32 %v7937, %v7943
    %v7964 = vadd.f32 %v7938, %v7944
    %v7965 = vmax.f32 %v7949, 0.0
    %v7966 = vmax.f32 %v7950, 0.0
    %v7967 = vmax.f32 %v7951, 0.0
    %v7968 = vmax.f32 %v7952, 0.0
    %v7969 = vmax.f32 %v7953, 0.0
    %v7970 = vmax.f32 %v7954, 0.0
    %v7971 = vmax.f32 %v7955, 0.0
    %v7972 = vmax.f32 %v7956, 0.0
    %v7973 = vmax.f32 %v7957, 0.0
    %v7974 = vmax.f32 %v7958, 0.0
    %v7975 = vmax.f32 %v7959, 0.0
    %v7976 = vmax.f32 %v7960, 0.0
    %v7977 = vmax.f32 %v7961, 0.0
    %v7978 = vmax.f32 %v7962, 0.0
    %v7979 = vmax.f32 %v7963, 0.0
    %v7980 = vmax.f32 %v7964, 0.0
    %v7981 = vpack.c.bf16 %v7969, %v7965
    %v7982 = vpack.c.bf16 %v7970, %v7966
    %v7983 = vpack.c.bf16 %v7971, %v7967
    %v7984 = vpack.c.bf16 %v7972, %v7968
    %v7985 = vpack.c.bf16 %v7977, %v7973
    %v7986 = vpack.c.bf16 %v7978, %v7974
    %v7987 = vpack.c.bf16 %v7979, %v7975
    %v7988 = vpack.c.bf16 %v7980, %v7976
    %v7989 = vld [vmem:[%s16] sm:$0xf]
    %v7990 = vld [vmem:[%s16 + $0x4] sm:$0xf]
    %v7991 = vld [vmem:[%s16 + $0x8] sm:$0xf]
    %v7992 = vld [vmem:[%s16 + $0xc] sm:$0xf]
    %v7993 = vld [vmem:[%s16 + $0x10] sm:$0xf]
    %v7994 = vld [vmem:[%s16 + $0x14] sm:$0xf]
    %v7995 = vld [vmem:[%s16 + $0x18] sm:$0xf]
    %v7996 = vld [vmem:[%s16 + $0x1c] sm:$0xf]
    %v7997 = vld [vmem:[%s16 + $0x20] sm:$0xf]
    %v7998 = vld [vmem:[%s16 + $0x24] sm:$0xf]
    %v7999 = vld [vmem:[%s16 + $0x28] sm:$0xf]
    %v8000 = vld [vmem:[%s16 + $0x2c] sm:$0xf]
    %v8001 = vld [vmem:[%s16 + $0x30] sm:$0xf]
    %v8002 = vld [vmem:[%s16 + $0x34] sm:$0xf]
    %v8003 = vld [vmem:[%s16 + $0x38] sm:$0xf]
    %v8004 = vld [vmem:[%s16 + $0x3c] sm:$0xf]
    %v8005 = vld [vmem:[%s16 + $0x40] sm:$0xf]
    %v8006 = vld [vmem:[%s16 + $0x44] sm:$0xf]
    %v8007 = vld [vmem:[%s16 + $0x48] sm:$0xf]
    %v8008 = vld [vmem:[%s16 + $0x4c] sm:$0xf]
    %v8009 = vld [vmem:[%s16 + $0x50] sm:$0xf]
    %v8010 = vld [vmem:[%s16 + $0x54] sm:$0xf]
    %v8011 = vld [vmem:[%s16 + $0x58] sm:$0xf]
    %v8012 = vld [vmem:[%s16 + $0x5c] sm:$0xf]
    %v8013 = vld [vmem:[%s16 + $0x60] sm:$0xf]
    %v8014 = vld [vmem:[%s16 + $0x64] sm:$0xf]
    %v8015 = vld [vmem:[%s16 + $0x68] sm:$0xf]
    %v8016 = vld [vmem:[%s16 + $0x6c] sm:$0xf]
    %v8017 = vld [vmem:[%s16 + $0x70] sm:$0xf]
    %v8018 = vld [vmem:[%s16 + $0x74] sm:$0xf]
    %v8019 = vld [vmem:[%s16 + $0x78] sm:$0xf]
    %v8020 = vld [vmem:[%s16 + $0x7c] sm:$0xf]
    %v8021 = vld [vmem:[%s16 + $0x80] sm:$0xf]
    %v8022 = vld [vmem:[%s16 + $0x84] sm:$0xf]
    %v8023 = vld [vmem:[%s16 + $0x88] sm:$0xf]
    %v8024 = vld [vmem:[%s16 + $0x8c] sm:$0xf]
    %v8025 = vld [vmem:[%s16 + $0x90] sm:$0xf]
    %v8026 = vld [vmem:[%s16 + $0x94] sm:$0xf]
    %v8027 = vld [vmem:[%s16 + $0x98] sm:$0xf]
    %v8028 = vld [vmem:[%s16 + $0x9c] sm:$0xf]
    %v8029 = vld [vmem:[%s16 + $0xa0] sm:$0xf]
    %v8030 = vld [vmem:[%s16 + $0xa4] sm:$0xf]
    %v8031 = vld [vmem:[%s16 + $0xa8] sm:$0xf]
    %v8032 = vld [vmem:[%s16 + $0xac] sm:$0xf]
    %v8033 = vld [vmem:[%s16 + $0xb0] sm:$0xf]
    %v8034 = vld [vmem:[%s16 + $0xb4] sm:$0xf]
    %v8035 = vld [vmem:[%s16 + $0xb8] sm:$0xf]
    %v8036 = vld [vmem:[%s16 + $0xbc] sm:$0xf]
    %v8037 = vld [vmem:[%s16 + $0xc0] sm:$0xf]
    %v8038 = vld [vmem:[%s16 + $0xc4] sm:$0xf]
    %v8039 = vld [vmem:[%s16 + $0xc8] sm:$0xf]
    %v8040 = vld [vmem:[%s16 + $0xcc] sm:$0xf]
    %v8041 = vld [vmem:[%s16 + $0xd0] sm:$0xf]
    %v8042 = vld [vmem:[%s16 + $0xd4] sm:$0xf]
    %v8043 = vld [vmem:[%s16 + $0xd8] sm:$0xf]
    %v8044 = vld [vmem:[%s16 + $0xdc] sm:$0xf]
    %v8101 = vunpack.c.l.b16 %v7989
    %v8102 = vunpack.c.l.b16 %v7990
    %v8103 = vunpack.c.l.b16 %v7991
    %v8104 = vunpack.c.l.b16 %v7992
    %v8105 = vunpack.c.l.b16 %v7993
    %v8106 = vunpack.c.l.b16 %v7994
    %v8107 = vunpack.c.l.b16 %v7995
    %v8108 = vunpack.c.l.b16 %v7996
    %v8109 = vunpack.c.l.b16 %v7997
    %v8110 = vunpack.c.l.b16 %v7998
    %v8111 = vunpack.c.l.b16 %v7999
    %v8112 = vunpack.c.l.b16 %v8000
    %v8113 = vunpack.c.l.b16 %v8001
    %v8114 = vunpack.c.l.b16 %v8002
    %v8115 = vunpack.c.l.b16 %v8003
    %v8116 = vunpack.c.l.b16 %v8004
    %v8117 = vunpack.c.l.b16 %v8005
    %v8118 = vunpack.c.l.b16 %v8006
    %v8119 = vunpack.c.l.b16 %v8007
    %v8120 = vunpack.c.l.b16 %v8008
    %v8121 = vunpack.c.l.b16 %v8009
    %v8122 = vunpack.c.l.b16 %v8010
    %v8123 = vunpack.c.l.b16 %v8011
    %v8124 = vunpack.c.l.b16 %v8012
    %v8125 = vunpack.c.l.b16 %v8013
    %v8126 = vunpack.c.l.b16 %v8014
    %v8127 = vunpack.c.l.b16 %v8015
    %v8128 = vunpack.c.l.b16 %v8016
    %v8129 = vunpack.c.l.b16 %v8017
    %v8130 = vunpack.c.l.b16 %v8018
    %v8131 = vunpack.c.l.b16 %v8019
    %v8132 = vunpack.c.l.b16 %v8020
    %v8133 = vunpack.c.l.b16 %v8021
    %v8134 = vunpack.c.l.b16 %v8022
    %v8135 = vunpack.c.l.b16 %v8023
    %v8136 = vunpack.c.l.b16 %v8024
    %v8137 = vunpack.c.l.b16 %v8025
    %v8138 = vunpack.c.l.b16 %v8026
    %v8139 = vunpack.c.l.b16 %v8027
    %v8140 = vunpack.c.l.b16 %v8028
    %v8141 = vunpack.c.l.b16 %v8029
    %v8142 = vunpack.c.l.b16 %v8030
    %v8143 = vunpack.c.l.b16 %v8031
    %v8144 = vunpack.c.l.b16 %v8032
    %v8145 = vunpack.c.l.b16 %v8033
    %v8146 = vunpack.c.l.b16 %v8034
    %v8147 = vunpack.c.l.b16 %v8035
    %v8148 = vunpack.c.l.b16 %v8036
    %v8149 = vunpack.c.l.b16 %v8037
    %v8150 = vunpack.c.l.b16 %v8038
    %v8151 = vunpack.c.l.b16 %v8039
    %v8152 = vunpack.c.l.b16 %v8040
    %v8153 = vunpack.c.l.b16 %v8041
    %v8154 = vunpack.c.l.b16 %v8042
    %v8155 = vunpack.c.l.b16 %v8043
    %v8156 = vunpack.c.l.b16 %v8044
    %v8157 = vpack.c.b16 %v8102, %v8101
    %v8158 = vpack.c.b16 %v8104, %v8103
    %v8159 = vpack.c.b16 %v8106, %v8105
    %v8160 = vpack.c.b16 %v8108, %v8107
    %v8161 = vpack.c.b16 %v8110, %v8109
    %v8162 = vpack.c.b16 %v8112, %v8111
    %v8163 = vpack.c.b16 %v8114, %v8113
    %v8164 = vpack.c.b16 %v8116, %v8115
    %v8165 = vpack.c.b16 %v8118, %v8117
    %v8166 = vpack.c.b16 %v8120, %v8119
    %v8167 = vpack.c.b16 %v8122, %v8121
    %v8168 = vpack.c.b16 %v8124, %v8123
    %v8169 = vpack.c.b16 %v8126, %v8125
    %v8170 = vpack.c.b16 %v8128, %v8127
    %v8171 = vpack.c.b16 %v8130, %v8129
    %v8172 = vpack.c.b16 %v8132, %v8131
    %v8173 = vpack.c.b16 %v8134, %v8133
    %v8174 = vpack.c.b16 %v8136, %v8135
    %v8175 = vpack.c.b16 %v8138, %v8137
    %v8176 = vpack.c.b16 %v8140, %v8139
    %v8177 = vpack.c.b16 %v8142, %v8141
    %v8178 = vpack.c.b16 %v8144, %v8143
    %v8179 = vpack.c.b16 %v8146, %v8145
    %v8180 = vpack.c.b16 %v8148, %v8147
    %v8181 = vpack.c.b16 %v8150, %v8149
    %v8182 = vpack.c.b16 %v8152, %v8151
    %v8183 = vpack.c.b16 %v8154, %v8153
    %v8184 = vpack.c.b16 %v8156, %v8155
    %v8214 = vsel %vm4022, %v7984, 0
    %v8217 = vsel %vm4022, %v7988, 0
    %8219 = vmatpush.bf16.msra.mxu0 %v8164
    %8220 = vmatpush.bf16.msra.mxu0 %v8163
    %8221 = vmatpush.bf16.msra.mxu0 %v8162
    %8222 = vmatpush.bf16.msra.mxu0 %v8161
    %8223 = vmatpush.bf16.msra.mxu0 %v8160
    %8224 = vmatpush.bf16.msra.mxu0 %v8159
    %8225 = vmatpush.bf16.msra.mxu0 %v8158
    %8226 = vmatpush.bf16.msra.mxu0 %v8157
    %8227 = vmatmul.bf16.gmra.mxu0 %v7981
    %v8228 = vpop.f32.mrf.mxu0
    %v8229 = vadd.f32 0.0, %v8228
    %v8230 = vpop.f32.mrf.mxu0
    %v8231 = vadd.f32 0.0, %v8230
    %8232 = vmatmul.bf16.gmra.mxu0 %v7985
    %v8233 = vpop.f32.mrf.mxu0
    %v8234 = vadd.f32 0.0, %v8233
    %v8235 = vpop.f32.mrf.mxu0
    %v8236 = vadd.f32 0.0, %v8235
    %8237 = vdwg.mxu0
    %8238 = vmatpush.bf16.msra.mxu0 %v8172
    %8239 = vmatpush.bf16.msra.mxu0 %v8171
    %8240 = vmatpush.bf16.msra.mxu0 %v8170
    %8241 = vmatpush.bf16.msra.mxu0 %v8169
    %8242 = vmatpush.bf16.msra.mxu0 %v8168
    %8243 = vmatpush.bf16.msra.mxu0 %v8167
    %8244 = vmatpush.bf16.msra.mxu0 %v8166
    %8245 = vmatpush.bf16.msra.mxu0 %v8165
    %8246 = vmatmul.bf16.gmra.mxu0 %v7982
    %v8247 = vpop.f32.mrf.mxu0
    %v8248 = vadd.f32 %v8229, %v8247
    %v8249 = vpop.f32.mrf.mxu0
    %v8250 = vadd.f32 %v8231, %v8249
    %8251 = vmatmul.bf16.gmra.mxu0 %v7986
    %v8252 = vpop.f32.mrf.mxu0
    %v8253 = vadd.f32 %v8234, %v8252
    %v8254 = vpop.f32.mrf.mxu0
    %v8255 = vadd.f32 %v8236, %v8254
    %8256 = vdwg.mxu0
    %8257 = vmatpush.bf16.msra.mxu0 %v8180
    %8258 = vmatpush.bf16.msra.mxu0 %v8179
    %8259 = vmatpush.bf16.msra.mxu0 %v8178
    %8260 = vmatpush.bf16.msra.mxu0 %v8177
    %8261 = vmatpush.bf16.msra.mxu0 %v8176
    %8262 = vmatpush.bf16.msra.mxu0 %v8175
    %8263 = vmatpush.bf16.msra.mxu0 %v8174
    %8264 = vmatpush.bf16.msra.mxu0 %v8173
    %8265 = vmatmul.bf16.gmra.mxu0 %v7983
    %v8266 = vpop.f32.mrf.mxu0
    %v8267 = vadd.f32 %v8248, %v8266
    %v8268 = vpop.f32.mrf.mxu0
    %v8269 = vadd.f32 %v8250, %v8268
    %8270 = vmatmul.bf16.gmra.mxu0 %v7987
    %v8271 = vpop.f32.mrf.mxu0
    %v8272 = vadd.f32 %v8253, %v8271
    %v8273 = vpop.f32.mrf.mxu0
    %v8274 = vadd.f32 %v8255, %v8273
    %8275 = vdwg.mxu0
    %8276 = vmatpush.bf16.msra.mxu0 0
    %8277 = vmatpush.bf16.msra.mxu0 0
    %8278 = vmatpush.bf16.msra.mxu0 0
    %8279 = vmatpush.bf16.msra.mxu0 0
    %8280 = vmatpush.bf16.msra.mxu0 %v8184
    %8281 = vmatpush.bf16.msra.mxu0 %v8183
    %8282 = vmatpush.bf16.msra.mxu0 %v8182
    %8283 = vmatpush.bf16.msra.mxu0 %v8181
    %8284 = vmatmul.bf16.gmra.mxu0 %v8214
    %v8285 = vpop.f32.mrf.mxu0
    %v8286 = vadd.f32 %v8267, %v8285
    %v8287 = vpop.f32.mrf.mxu0
    %v8288 = vadd.f32 %v8269, %v8287
    %8289 = vmatmul.bf16.gmra.mxu0 %v8217
    %v8290 = vpop.f32.mrf.mxu0
    %v8291 = vadd.f32 %v8272, %v8290
    %v8292 = vpop.f32.mrf.mxu0
    %v8293 = vadd.f32 %v8274, %v8292
    %8294 = vdwg.mxu0
    %v8295 = vpack.c.bf16 %v8288, %v8286
    %v8296 = vpack.c.bf16 %v8293, %v8291
    %v8297 = vld [vmem:[%s15] sm:$0xf]
    %v8298 = vld [vmem:[%s15 + $0x4] sm:$0xf]
    %v8299 = vld [vmem:[%s15 + $0x8] sm:$0xf]
    %v8300 = vld [vmem:[%s15 + $0xc] sm:$0xf]
    %v8301 = vld [vmem:[%s15 + $0x10] sm:$0xf]
    %v8302 = vld [vmem:[%s15 + $0x14] sm:$0xf]
    %v8303 = vld [vmem:[%s15 + $0x18] sm:$0xf]
    %s8304 = scalar_lea.vmem %s15, 28
    %v8305 = vld [vmem:[%s8304] sm:$0xf]
    %v8306 = vld [vmem:[%s8304 + $0x4] sm:$0xf]
    %v8307 = vld [vmem:[%s8304 + $0x8] sm:$0xf]
    %v8308 = vld [vmem:[%s8304 + $0xc] sm:$0xf]
    %v8309 = vld [vmem:[%s8304 + $0x10] sm:$0xf]
    %v8310 = vld [vmem:[%s8304 + $0x14] sm:$0xf]
    %v8311 = vld [vmem:[%s8304 + $0x18] sm:$0xf]
    %v8319 = vunpack.c.l.b16 %v8305
    %v8320 = vunpack.c.l.b16 %v8306
    %v8321 = vunpack.c.l.b16 %v8307
    %v8322 = vunpack.c.l.b16 %v8308
    %v8323 = vunpack.c.l.b16 %v8309
    %v8324 = vunpack.c.l.b16 %v8310
    %v8325 = vunpack.c.l.b16 %v8311
    %v8326 = vpack.c.b16 %v8320, %v8319
    %v8327 = vpack.c.b16 %v8322, %v8321
    %v8328 = vpack.c.b16 %v8324, %v8323
    %v8329 = vpack.c.b16 %v8325, %v8325
    %8332 = vrot.lane.b32.xlu0 %v8295, 100
    %v8333 = vpop.permute.xlu0 %8332
    %8334 = vrot.lane.b32.xlu0 %v8296, 100
    %v8335 = vpop.permute.xlu0 %8334
    %v8338 = vsel %vm215, %v8326, 0
    %v8341 = vsel %vm215, %v8327, 0
    %v8344 = vsel %vm215, %v8328, 0
    %v8347 = vsel %vm215, %v8329, 0
    %v8350 = vsel %vm222, %v8335, 0
    %8352 = vmatpush.bf16.msra.mxu0 0
    %8353 = vmatpush.bf16.msra.mxu0 0
    %8354 = vmatpush.bf16.msra.mxu0 0
    %8355 = vmatpush.bf16.msra.mxu0 0
    %8356 = vmatpush.bf16.msra.mxu0 0
    %8357 = vmatpush.bf16.msra.mxu0 0
    %8358 = vmatpush.bf16.msra.mxu0 %v8350
    %8359 = vmatpush.bf16.msra.mxu0 %v8333
    %8360 = vmatmul.bf16.gmra.mxu0 %v8338
    %v8361 = vpop.f32.mrf.mxu0
    %v8362 = vadd.f32 0.0, %v8361
    %v8363 = vpop.f32.mrf.mxu0
    %v8364 = vadd.f32 0.0, %v8363
    %8365 = vmatmul.bf16.gmra.mxu0 %v8341
    %v8366 = vpop.f32.mrf.mxu0
    %v8367 = vadd.f32 0.0, %v8366
    %v8368 = vpop.f32.mrf.mxu0
    %v8369 = vadd.f32 0.0, %v8368
    %8370 = vmatmul.bf16.gmra.mxu0 %v8344
    %v8371 = vpop.f32.mrf.mxu0
    %v8372 = vadd.f32 0.0, %v8371
    %v8373 = vpop.f32.mrf.mxu0
    %v8374 = vadd.f32 0.0, %v8373
    %8375 = vmatmul.bf16.gmra.mxu0 %v8347
    %v8376 = vpop.f32.mrf.mxu0
    %v8377 = vadd.f32 0.0, %v8376
    %v8378 = vpop.f32.mrf.mxu0
    %8379 = vdwg.mxu0
    %v8387 = vunpack.c.l.b16 %v8297
    %v8388 = vunpack.c.l.b16 %v8298
    %v8389 = vunpack.c.l.b16 %v8299
    %v8390 = vunpack.c.l.b16 %v8300
    %v8391 = vunpack.c.l.b16 %v8301
    %v8392 = vunpack.c.l.b16 %v8302
    %v8393 = vunpack.c.l.b16 %v8303
    %v8394 = vpack.c.b16 %v8388, %v8387
    %v8395 = vpack.c.b16 %v8390, %v8389
    %v8396 = vpack.c.b16 %v8392, %v8391
    %v8397 = vpack.c.b16 %v8393, %v8393
    %v8399 = vsel %vm215, %v8394, 0
    %v8402 = vsel %vm215, %v8395, 0
    %v8405 = vsel %vm215, %v8396, 0
    %v8408 = vsel %vm215, %v8397, 0
    %v8411 = vsel %vm222, %v8296, 0
    %8413 = vmatpush.bf16.msra.mxu0 0
    %8414 = vmatpush.bf16.msra.mxu0 0
    %8415 = vmatpush.bf16.msra.mxu0 0
    %8416 = vmatpush.bf16.msra.mxu0 0
    %8417 = vmatpush.bf16.msra.mxu0 0
    %8418 = vmatpush.bf16.msra.mxu0 0
    %8419 = vmatpush.bf16.msra.mxu0 %v8411
    %8420 = vmatpush.bf16.msra.mxu0 %v8295
    %8421 = vmatmul.bf16.gmra.mxu0 %v8399
    %v8422 = vpop.f32.mrf.mxu0
    %v8423 = vadd.f32 %v8362, %v8422
    %v8424 = vpop.f32.mrf.mxu0
    %v8425 = vadd.f32 %v8364, %v8424
    %8426 = vmatmul.bf16.gmra.mxu0 %v8402
    %v8427 = vpop.f32.mrf.mxu0
    %v8428 = vadd.f32 %v8367, %v8427
    %v8429 = vpop.f32.mrf.mxu0
    %v8430 = vadd.f32 %v8369, %v8429
    %8431 = vmatmul.bf16.gmra.mxu0 %v8405
    %v8432 = vpop.f32.mrf.mxu0
    %v8433 = vadd.f32 %v8372, %v8432
    %v8434 = vpop.f32.mrf.mxu0
    %v8435 = vadd.f32 %v8374, %v8434
    %8436 = vmatmul.bf16.gmra.mxu0 %v8408
    %v8437 = vpop.f32.mrf.mxu0
    %v8438 = vadd.f32 %v8377, %v8437
    %v8439 = vpop.f32.mrf.mxu0
    %8440 = vdwg.mxu0
    %s8441 = scalar_lea.vmem %s15, 56
    %v8442 = vld [vmem:[%s8441] sm:$0xf]
    %v8443 = vld [vmem:[%s8441 + $0x4] sm:$0xf]
    %v8444 = vld [vmem:[%s8441 + $0x8] sm:$0xf]
    %v8445 = vld [vmem:[%s8441 + $0xc] sm:$0xf]
    %v8446 = vld [vmem:[%s8441 + $0x10] sm:$0xf]
    %v8447 = vld [vmem:[%s8441 + $0x14] sm:$0xf]
    %v8448 = vld [vmem:[%s8441 + $0x18] sm:$0xf]
    %v8456 = vunpack.c.l.b16 %v8442
    %v8457 = vunpack.c.l.b16 %v8443
    %v8458 = vunpack.c.l.b16 %v8444
    %v8459 = vunpack.c.l.b16 %v8445
    %v8460 = vunpack.c.l.b16 %v8446
    %v8461 = vunpack.c.l.b16 %v8447
    %v8462 = vunpack.c.l.b16 %v8448
    %v8463 = vpack.c.b16 %v8457, %v8456
    %v8464 = vpack.c.b16 %v8459, %v8458
    %v8465 = vpack.c.b16 %v8461, %v8460
    %v8466 = vpack.c.b16 %v8462, %v8462
    %8467 = vrot.lane.b32.xlu0 %v8295, 72
    %v8468 = vpop.permute.xlu0 %8467
    %8469 = vrot.lane.b32.xlu0 %v8296, 72
    %v8470 = vpop.permute.xlu0 %8469
    %v8473 = vsel %vm215, %v8463, 0
    %v8476 = vsel %vm215, %v8464, 0
    %v8479 = vsel %vm215, %v8465, 0
    %v8482 = vsel %vm215, %v8466, 0
    %v8485 = vsel %vm222, %v8470, 0
    %8487 = vmatpush.bf16.msra.mxu0 0
    %8488 = vmatpush.bf16.msra.mxu0 0
    %8489 = vmatpush.bf16.msra.mxu0 0
    %8490 = vmatpush.bf16.msra.mxu0 0
    %8491 = vmatpush.bf16.msra.mxu0 0
    %8492 = vmatpush.bf16.msra.mxu0 0
    %8493 = vmatpush.bf16.msra.mxu0 %v8485
    %8494 = vmatpush.bf16.msra.mxu0 %v8468
    %8495 = vmatmul.bf16.gmra.mxu0 %v8473
    %v8496 = vpop.f32.mrf.mxu0
    %v8497 = vadd.f32 0.0, %v8496
    %v8498 = vpop.f32.mrf.mxu0
    %v8499 = vadd.f32 0.0, %v8498
    %8500 = vmatmul.bf16.gmra.mxu0 %v8476
    %v8501 = vpop.f32.mrf.mxu0
    %v8502 = vadd.f32 0.0, %v8501
    %v8503 = vpop.f32.mrf.mxu0
    %v8504 = vadd.f32 0.0, %v8503
    %8505 = vmatmul.bf16.gmra.mxu0 %v8479
    %v8506 = vpop.f32.mrf.mxu0
    %v8507 = vadd.f32 0.0, %v8506
    %v8508 = vpop.f32.mrf.mxu0
    %v8509 = vadd.f32 0.0, %v8508
    %8510 = vmatmul.bf16.gmra.mxu0 %v8482
    %v8511 = vpop.f32.mrf.mxu0
    %v8512 = vadd.f32 0.0, %v8511
    %v8513 = vpop.f32.mrf.mxu0
    %8514 = vdwg.mxu0
    %v8515 = vadd.f32 %v8423, %v8497
    %v8516 = vadd.f32 %v8425, %v8499
    %v8517 = vadd.f32 %v8428, %v8502
    %v8518 = vadd.f32 %v8430, %v8504
    %v8519 = vadd.f32 %v8433, %v8507
    %v8520 = vadd.f32 %v8435, %v8509
    %v8521 = vadd.f32 %v8438, %v8512
    %s8522 = scalar_lea.vmem %s15, 84
    %v8523 = vld [vmem:[%s8522] sm:$0xf]
    %v8524 = vld [vmem:[%s8522 + $0x4] sm:$0xf]
    %v8525 = vld [vmem:[%s8522 + $0x8] sm:$0xf]
    %v8526 = vld [vmem:[%s8522 + $0xc] sm:$0xf]
    %v8527 = vld [vmem:[%s8522 + $0x10] sm:$0xf]
    %v8528 = vld [vmem:[%s8522 + $0x14] sm:$0xf]
    %v8529 = vld [vmem:[%s8522 + $0x18] sm:$0xf]
    %v8537 = vunpack.c.l.b16 %v8523
    %v8538 = vunpack.c.l.b16 %v8524
    %v8539 = vunpack.c.l.b16 %v8525
    %v8540 = vunpack.c.l.b16 %v8526
    %v8541 = vunpack.c.l.b16 %v8527
    %v8542 = vunpack.c.l.b16 %v8528
    %v8543 = vunpack.c.l.b16 %v8529
    %v8544 = vpack.c.b16 %v8538, %v8537
    %v8545 = vpack.c.b16 %v8540, %v8539
    %v8546 = vpack.c.b16 %v8542, %v8541
    %v8547 = vpack.c.b16 %v8543, %v8543
    %8548 = vrot.lane.b32.xlu0 %v8295, 44
    %v8549 = vpop.permute.xlu0 %8548
    %8550 = vrot.lane.b32.xlu0 %v8296, 44
    %v8551 = vpop.permute.xlu0 %8550
    %v8554 = vsel %vm215, %v8544, 0
    %v8557 = vsel %vm215, %v8545, 0
    %v8560 = vsel %vm215, %v8546, 0
    %v8563 = vsel %vm215, %v8547, 0
    %v8566 = vsel %vm222, %v8551, 0
    %8568 = vmatpush.bf16.msra.mxu0 0
    %8569 = vmatpush.bf16.msra.mxu0 0
    %8570 = vmatpush.bf16.msra.mxu0 0
    %8571 = vmatpush.bf16.msra.mxu0 0
    %8572 = vmatpush.bf16.msra.mxu0 0
    %8573 = vmatpush.bf16.msra.mxu0 0
    %8574 = vmatpush.bf16.msra.mxu0 %v8566
    %8575 = vmatpush.bf16.msra.mxu0 %v8549
    %8576 = vmatmul.bf16.gmra.mxu0 %v8554
    %v8577 = vpop.f32.mrf.mxu0
    %v8578 = vadd.f32 0.0, %v8577
    %v8579 = vpop.f32.mrf.mxu0
    %v8580 = vadd.f32 0.0, %v8579
    %8581 = vmatmul.bf16.gmra.mxu0 %v8557
    %v8582 = vpop.f32.mrf.mxu0
    %v8583 = vadd.f32 0.0, %v8582
    %v8584 = vpop.f32.mrf.mxu0
    %v8585 = vadd.f32 0.0, %v8584
    %8586 = vmatmul.bf16.gmra.mxu0 %v8560
    %v8587 = vpop.f32.mrf.mxu0
    %v8588 = vadd.f32 0.0, %v8587
    %v8589 = vpop.f32.mrf.mxu0
    %v8590 = vadd.f32 0.0, %v8589
    %8591 = vmatmul.bf16.gmra.mxu0 %v8563
    %v8592 = vpop.f32.mrf.mxu0
    %v8593 = vadd.f32 0.0, %v8592
    %v8594 = vpop.f32.mrf.mxu0
    %8595 = vdwg.mxu0
    %v8596 = vadd.f32 %v8515, %v8578
    %v8597 = vadd.f32 %v8516, %v8580
    %v8598 = vadd.f32 %v8517, %v8583
    %v8599 = vadd.f32 %v8518, %v8585
    %v8600 = vadd.f32 %v8519, %v8588
    %v8601 = vadd.f32 %v8520, %v8590
    %v8602 = vadd.f32 %v8521, %v8593
    %v8603 = vld [vmem:[%s17] sm:$0x1]
    %v8605 = vperm.slane %v8603, 0
    %v8607 = vadd.f32 %v8596, %v8605
    %v8608 = vadd.f32 %v8597, %v8605
    %v8609 = vadd.f32 %v8598, %v8605
    %v8610 = vadd.f32 %v8599, %v8605
    %v8611 = vadd.f32 %v8600, %v8605
    %v8612 = vadd.f32 %v8601, %v8605
    %v8613 = vadd.f32 %v8602, %v8605
    %v8614 = vsub.f32 0.0, %v8607
    %v8615 = vsub.f32 0.0, %v8608
    %v8616 = vsub.f32 0.0, %v8609
    %v8617 = vsub.f32 0.0, %v8610
    %v8618 = vsub.f32 0.0, %v8611
    %v8619 = vsub.f32 0.0, %v8612
    %v8620 = vsub.f32 0.0, %v8613
    %v8621 = vmul.f32 %v8614, 1.442695
    %v8622 = vpow.pop %v8621
    %v8623 = vmul.f32 %v8615, 1.442695
    %v8624 = vpow.pop %v8623
    %v8625 = vmul.f32 %v8616, 1.442695
    %v8626 = vpow.pop %v8625
    %v8627 = vmul.f32 %v8617, 1.442695
    %v8628 = vpow.pop %v8627
    %v8629 = vmul.f32 %v8618, 1.442695
    %v8630 = vpow.pop %v8629
    %v8631 = vmul.f32 %v8619, 1.442695
    %v8632 = vpow.pop %v8631
    %v8633 = vmul.f32 %v8620, 1.442695
    %v8634 = vpow.pop %v8633
    %v8635 = vadd.f32 %v8622, 1.0
    %v8636 = vadd.f32 %v8624, 1.0
    %v8637 = vadd.f32 %v8626, 1.0
    %v8638 = vadd.f32 %v8628, 1.0
    %v8639 = vadd.f32 %v8630, 1.0
    %v8640 = vadd.f32 %v8632, 1.0
    %v8641 = vadd.f32 %v8634, 1.0
    %v8642 = vrcp.pop %v8635
    %v8643 = vrcp.pop %v8636
    %v8644 = vrcp.pop %v8637
    %v8645 = vrcp.pop %v8638
    %v8646 = vrcp.pop %v8639
    %v8647 = vrcp.pop %v8640
    %v8648 = vrcp.pop %v8641
    %v8649 = vmin.f32 %v8642, 1.0
    %v8650 = vmin.f32 %v8643, 1.0
    %v8651 = vmin.f32 %v8644, 1.0
    %v8652 = vmin.f32 %v8645, 1.0
    %v8653 = vmin.f32 %v8646, 1.0
    %v8654 = vmin.f32 %v8647, 1.0
    %v8655 = vmin.f32 %v8648, 1.0
    %8656 = vst.msk [vmem:[#allocation2] sm:$0xff] %vm215, %v8649
    %8657 = vst.msk [vmem:[#allocation2 + $0x8] sm:$0xff] %vm215, %v8650
    %8658 = vst.msk [vmem:[#allocation2 + $0x10] sm:$0xff] %vm215, %v8651
    %8659 = vst.msk [vmem:[#allocation2 + $0x18] sm:$0xff] %vm215, %v8652
    %8660 = vst.msk [vmem:[#allocation2 + $0x20] sm:$0xff] %vm215, %v8653
    %8661 = vst.msk [vmem:[#allocation2 + $0x28] sm:$0xff] %vm215, %v8654
    %8662 = vst.msk [vmem:[#allocation2 + $0x30] sm:$0xff] %vm215, %v8655
    // Predicated region
    $region74: #{conv_vae_forward.1} parent=1 // pred_check
      _
    $region75: #{conv_vae_forward.1} parent=1 // pred_check_branch
      %8664 = sbr.rel (0) target = $region77
    $region76: #{conv_vae_forward.1} parent=1 // pred_region
      %8666 = vsyncadd [#allocation3], 0
      %s8667 = sshll.u32 [#allocation2], 4
      %s8668 = int_to_ptr.vmem [resolvable:$true] %s8667
      %s8669 = sshll.u32 %s18, 4
      %s8670 = int_to_ptr.hbm [resolvable:$true] %s8669
      %8675 = dma.vmem_to_hbm [thread:$0]  %s8668, 896, %s8670, [#allocation3], 128, 128, 8
    $region77: #{conv_vae_forward.1} parent=1 // pred_fallthru
      _
    // Predicated region
    $region78: #{conv_vae_forward.1} parent=1 // pred_check
      _
    $region79: #{conv_vae_forward.1} parent=1 // pred_check_branch
      %8677 = sbr.rel (0) target = $region81
    $region80: #{conv_vae_forward.1} parent=1 // pred_region
      _
    $region81: #{conv_vae_forward.1} parent=1 // pred_fallthru
      _
    // Predicated region
    $region82: #{conv_vae_forward.1} parent=1 // pred_check
      _
    $region83: #{conv_vae_forward.1} parent=1 // pred_check_branch
      %8679 = sbr.rel (0) target = $region85
    $region84: #{conv_vae_forward.1} parent=1 // pred_region
      %8681 = dma.done [#allocation3], 896
    $region85: #{conv_vae_forward.1} parent=1 // pred_fallthru
      _
    // Predicated region
    $region86: #{conv_vae_forward.1} parent=1 // pred_check
      _
    $region87: #{conv_vae_forward.1} parent=1 // pred_check_branch
      %8683 = sbr.rel (0) target = $region89
    $region88: #{conv_vae_forward.1} parent=1 // pred_region
      _
    $region89: #{conv_vae_forward.1} parent=1 // pred_fallthru
      _
    %8684 = vsyncpa [#allocation3], 1

</llo_original>
